<compile_context>
chip_gen: v5e
topology: v5e:2x2
jax: 0.10.0
libtpu: 0.0.40
codegen_flags: <defaults>
</compile_context>

<pallas_src>
import math

import jax
import jax.numpy as jnp
from jax.experimental import pallas as pl
from jax.experimental.pallas import tpu as pltpu

IN_CHANNELS = 6
SEQ_LEN = 16
TIME_EMB_DIM = 128
HIDDEN_DIMS = [64, 128, 256]
BN_EPS = 1e-5

_WCOLS = 256        # lane width of the packed slabs
_WROW_ALIGN = 16    # bf16 sublane tile is (16, 128) -> keep weight blocks tile-aligned

_VMEM = pl.BlockSpec(memory_space=pltpu.MemorySpace.VMEM)


# ------------------------------- static config --------------------------------

def _block_cfg():
    hd = HIDDEN_DIMS
    cfg = [(hd[i], hd[i + 1]) for i in range(len(hd) - 1)]            # down
    cfg.append((hd[-1], hd[-1]))                                      # middle
    cfg += [(hd[i], hd[i - 1]) for i in range(len(hd) - 1, 0, -1)]    # up
    return cfg


_CFG = _block_cfg()


def _round_up(n, m):
    return ((n + m - 1) // m) * m


def _make_layout(cfg):
    """Static offsets for the packed weight slab, vector slab and fused tproj."""
    w, off = {}, 0

    def add_w(name, r, c):
        nonlocal off
        w[name] = (off, r, c)
        off += _round_up(r, _WROW_ALIGN)

    add_w("time_w1", TIME_EMB_DIM // 4, TIME_EMB_DIM)
    add_w("time_w2", TIME_EMB_DIM, TIME_EMB_DIM)
    for k in range(3):
        add_w(f"in_conv_k{k}", IN_CHANNELS, HIDDEN_DIMS[0])
    for bi, (cin, cout) in enumerate(cfg):
        for k in range(3):
            add_w(f"b{bi}_c1_k{k}", cin, cout)
        for k in range(3):
            add_w(f"b{bi}_c2_k{k}", cout, cout)
        if cin != cout:
            add_w(f"b{bi}_res", cin, cout)
    for k in range(3):
        add_w(f"out_conv_k{k}", HIDDEN_DIMS[0], IN_CHANNELS)
    w_rows = _round_up(off, _WROW_ALIGN)

    v, row = {}, 0

    def add_v(name, c):
        nonlocal row
        v[name] = (row, c)
        row += 1

    add_v("time_b1", TIME_EMB_DIM)
    add_v("time_b2", TIME_EMB_DIM)
    add_v("in_conv_b", HIDDEN_DIMS[0])
    for bi, (cin, cout) in enumerate(cfg):
        for nm in ("b1", "g1", "be1", "bt", "b2", "g2", "be2"):
            add_v(f"b{bi}_{nm}", cout)
        if cin != cout:
            add_v(f"b{bi}_br", cout)
    add_v("out_conv_b", IN_CHANNELS)
    v_rows = _round_up(row, 8)

    t_off, c = {}, 0
    for bi, (_, cout) in enumerate(cfg):
        t_off[bi] = (c, cout)
        c += cout
    return dict(w=w, w_rows=w_rows, v=v, v_rows=v_rows, t_off=t_off, t_cols=c)


_LAYOUT = _make_layout(_CFG)


# ------------------------------ in-kernel helpers ------------------------------

def _gelu(x):
    # exact erf-based GELU (torch F.gelu default), f32 math
    return 0.5 * x * (1.0 + jax.lax.erf(x * jnp.float32(0.7071067811865476)))


# --------------------------------- fused kernel --------------------------------

def _make_kernel(B, T):
    cfg, L = _CFG, _LAYOUT
    BT = B * T
    half = TIME_EMB_DIM // 8
    neg_scale = -math.log(10000.0) / (half - 1)
    bf16, f32 = jnp.bfloat16, jnp.float32

    def kernel(x_ref, t_ref, w_ref, wt_ref, v_ref, out_ref):
        def W(name):
            off, r, c = L["w"][name]
            return w_ref[off:off + r, :c]            # bf16 [r, c], static slice

        def V(name):
            row, c = L["v"][name]
            return v_ref[row:row + 1, :c]            # f32 [1, c], static slice

        # time index of each row of the flattened [B*T, C] activations
        row_t = jax.lax.broadcasted_iota(jnp.int32, (BT, 1), 0) % T

        def conv3(h2, wname, bname):
            """Conv1d(k=3, padding=1) on channels-last [B*T, C]; time shifts
            via XLU roll + mask (mask also zeroes the batch seam)."""
            hp = jnp.where(row_t == 0, 0.0, pltpu.roll(h2, shift=1, axis=0))
            hn = jnp.where(row_t == T - 1, 0.0,
                           pltpu.roll(h2, shift=BT - 1, axis=0))
            out = jnp.dot(hp.astype(bf16), W(wname + "_k0"),
                          preferred_element_type=f32)
            out = out + jnp.dot(h2.astype(bf16), W(wname + "_k1"),
                                preferred_element_type=f32)
            out = out + jnp.dot(hn.astype(bf16), W(wname + "_k2"),
                                preferred_element_type=f32)
            return out + V(bname)

        def bn_gelu(h2, gname, bename):
            # training-mode BatchNorm1d (biased batch stats over B*T) + GELU, f32
            mean = jnp.mean(h2, axis=0, keepdims=True)
            var = jnp.maximum(
                jnp.mean(h2 * h2, axis=0, keepdims=True) - mean * mean, 0.0)
            scale = V(gname) * jax.lax.rsqrt(var + jnp.float32(BN_EPS))
            shift = V(bename) - mean * scale
            return _gelu(h2 * scale + shift)

        # ---- sinusoidal time features (concat-free) + time MLP ----
        t = t_ref[...]                                               # [B, 1]
        k2 = jax.lax.broadcasted_iota(jnp.int32, (1, 2 * half), 1)   # [1, 2*half]
        freqs = jnp.exp((k2 % half).astype(f32) * jnp.float32(neg_scale))
        ang = t * freqs                                              # [B, 2*half]
        sincos = jnp.where(k2 < half, jnp.sin(ang), jnp.cos(ang))
        e = _gelu(jnp.dot(sincos.astype(bf16), W("time_w1"),
                          preferred_element_type=f32) + V("time_b1"))
        t_emb = jnp.dot(e.astype(bf16), W("time_w2"),
                        preferred_element_type=f32) + V("time_b2")   # [B, 128]

        # ---- all per-block time projections fused into ONE matmul ----
        tproj_all = jnp.dot(t_emb.astype(bf16), wt_ref[...],
                            preferred_element_type=f32)              # [B, 832]

        # ---- input conv ----
        x2 = x_ref[...].reshape(BT, IN_CHANNELS)
        h2 = conv3(x2, "in_conv", "in_conv_b")                        # [BT, 64]

        # ---- diffusion blocks (down, middle, up; h_down is never reused) ----
        for bi, (cin, cout) in enumerate(cfg):
            hin = h2
            a = conv3(hin, f"b{bi}_c1", f"b{bi}_b1")
            a = bn_gelu(a, f"b{bi}_g1", f"b{bi}_be1")
            toff, tc = L["t_off"][bi]
            tp = _gelu(tproj_all[:, toff:toff + tc] + V(f"b{bi}_bt"))   # [B, cout]
            a = a + jnp.broadcast_to(tp[:, None, :], (B, T, cout)).reshape(BT, cout)
            a = conv3(a, f"b{bi}_c2", f"b{bi}_b2")
            a = bn_gelu(a, f"b{bi}_g2", f"b{bi}_be2")
            if cin != cout:
                res = jnp.dot(hin.astype(bf16), W(f"b{bi}_res"),
                              preferred_element_type=f32) + V(f"b{bi}_br")
            else:
                res = hin
            h2 = a + res

        # ---- output conv ----
        out2 = conv3(h2, "out_conv", "out_conv_b")                    # [BT, 6]
        out_ref[...] = out2.reshape(B, T, IN_CHANNELS)

    return kernel


# ------------------------------ params & packing -------------------------------

def init_params(key):
    keys = iter(jax.random.split(key, 256))

    def nrm(shape, scale=0.1):
        return jax.random.normal(next(keys), shape, jnp.float32) * scale

    def block_params(cin, cout):
        p = dict(
            w1=nrm((3, cin, cout)), b1=nrm((cout,)),
            g1=jnp.ones((cout,), jnp.float32), be1=jnp.zeros((cout,), jnp.float32),
            wt=nrm((TIME_EMB_DIM, cout)), bt=nrm((cout,)),
            w2=nrm((3, cout, cout)), b2=nrm((cout,)),
            g2=jnp.ones((cout,), jnp.float32), be2=jnp.zeros((cout,), jnp.float32),
        )
        if cin != cout:
            p["wr"] = nrm((cin, cout))
            p["br"] = nrm((cout,))
        return p

    hd = HIDDEN_DIMS
    return dict(
        time=dict(w1=nrm((TIME_EMB_DIM // 4, TIME_EMB_DIM)), b1=nrm((TIME_EMB_DIM,)),
                  w2=nrm((TIME_EMB_DIM, TIME_EMB_DIM)), b2=nrm((TIME_EMB_DIM,))),
        input_conv=dict(w=nrm((3, IN_CHANNELS, hd[0])), b=nrm((hd[0],))),
        blocks=[block_params(cin, cout) for (cin, cout) in _CFG],
        output_conv=dict(w=nrm((3, hd[0], IN_CHANNELS)), b=nrm((IN_CHANNELS,))),
    )


def pack_params(params):
    """Pack all parameters into 3 kernel inputs (call once, outside the hot path):
       bf16 weight slab, bf16 fused time-proj weights, f32 bias/gamma/beta slab."""
    L = _LAYOUT
    w = jnp.zeros((L["w_rows"], _WCOLS), jnp.float32)
    v = jnp.zeros((L["v_rows"], _WCOLS), jnp.float32)

    def put_w(w, name, mat):
        off, r, c = L["w"][name]
        return w.at[off:off + r, :c].set(mat)

    def put_v(v, name, vec):
        row, c = L["v"][name]
        return v.at[row, :c].set(vec)

    w = put_w(w, "time_w1", params["time"]["w1"])
    w = put_w(w, "time_w2", params["time"]["w2"])
    v = put_v(v, "time_b1", params["time"]["b1"])
    v = put_v(v, "time_b2", params["time"]["b2"])
    for k in range(3):
        w = put_w(w, f"in_conv_k{k}", params["input_conv"]["w"][k])
    v = put_v(v, "in_conv_b", params["input_conv"]["b"])
    for bi, (cin, cout) in enumerate(_CFG):
        p = params["blocks"][bi]
        for k in range(3):
            w = put_w(w, f"b{bi}_c1_k{k}", p["w1"][k])
            w = put_w(w, f"b{bi}_c2_k{k}", p["w2"][k])
        if cin != cout:
            w = put_w(w, f"b{bi}_res", p["wr"])
            v = put_v(v, f"b{bi}_br", p["br"])
        for nm in ("b1", "g1", "be1", "bt", "b2", "g2", "be2"):
            v = put_v(v, f"b{bi}_{nm}", p[nm])
    for k in range(3):
        w = put_w(w, f"out_conv_k{k}", params["output_conv"]["w"][k])
    v = put_v(v, "out_conv_b", params["output_conv"]["b"])

    wt_all = jnp.concatenate(
        [params["blocks"][bi]["wt"] for bi in range(len(_CFG))], axis=1)

    return dict(w=w.astype(jnp.bfloat16),
                wt=wt_all.astype(jnp.bfloat16),
                v=v)


# ----------------------------------- wrapper -----------------------------------

@jax.jit
def diffusion_forward(packed, x, t):
    """x: [B, C, T] (NCT, PyTorch layout), t: [B] float timesteps -> [B, C, T]."""
    B, Cin, T = x.shape
    x_btc = jnp.transpose(x, (0, 2, 1)).astype(jnp.float32)   # -> [B, T, C]
    t2 = t.astype(jnp.float32).reshape(B, 1)

    out_btc = pl.pallas_call(
        _make_kernel(B, T),
        out_shape=jax.ShapeDtypeStruct((B, T, Cin), jnp.float32),
        in_specs=[_VMEM] * 5,
        out_specs=_VMEM,
        compiler_params=pltpu.CompilerParams(
            vmem_limit_bytes=16 * 1024 * 1024),
    )(x_btc, t2, packed["w"], packed["wt"], packed["v"])
    return jnp.transpose(out_btc, (0, 2, 1))                  # -> [B, C, T]


if __name__ == "__main__":
    key = jax.random.PRNGKey(0)
    k_param, k_x, k_t = jax.random.split(key, 3)

    params = init_params(k_param)
    packed = pack_params(params)

    x = jax.random.normal(k_x, (2, IN_CHANNELS, SEQ_LEN), jnp.float32)
    t = jax.random.randint(k_t, (2,), 0, 1000).astype(jnp.float32)

    y = diffusion_forward(packed, x, t)
    y = jax.block_until_ready(y)
    assert y.shape == (2, IN_CHANNELS, SEQ_LEN), y.shape
    assert bool(jnp.all(jnp.isfinite(y)))
    print("KERNEL_OK")
</pallas_src>

<mosaic_0001>
module attributes {stable_mosaic.version = 11 : i64} {
  func.func @kernel(%arg0: memref<2x16x6xf32, #tpu.memory_space<vmem>>, %arg1: memref<2x1xf32, #tpu.memory_space<vmem>>, %arg2: memref<5968x256xbf16, #tpu.memory_space<vmem>>, %arg3: memref<128x832xbf16, #tpu.memory_space<vmem>>, %arg4: memref<48x256xf32, #tpu.memory_space<vmem>>, %arg5: memref<2x16x6xf32, #tpu.memory_space<vmem>>) attributes {dimension_semantics = [], scalar_prefetch = 0 : i64, scratch_operands = 0 : i64, tpu.core_type = #tpu.core_type<tc>} {
    %0 = tpu.iota {dimensions = array<i32: 0>} : vector<32x1xi32>
    %c16_i32 = arith.constant 16 : i32
    %c0_i32 = arith.constant 0 : i32
    %1 = arith.cmpi eq, %c16_i32, %c0_i32 : i32
    %c1_i32 = arith.constant 1 : i32
    %2 = arith.select %1, %c1_i32, %c16_i32 : i32
    %3 = vector.broadcast %2 : i32 to vector<32x1xi32>
    %4 = arith.remsi %0, %3 : vector<32x1xi32>
    %c0_i32_0 = arith.constant 0 : i32
    %5 = vector.broadcast %c0_i32_0 : i32 to vector<32x1xi32>
    %6 = arith.cmpi ne, %4, %5 : vector<32x1xi32>
    %c0_i32_1 = arith.constant 0 : i32
    %7 = vector.broadcast %c0_i32_1 : i32 to vector<32x1xi32>
    %8 = arith.cmpi slt, %4, %7 : vector<32x1xi32>
    %c0_i32_2 = arith.constant 0 : i32
    %9 = arith.cmpi slt, %2, %c0_i32_2 : i32
    %10 = vector.broadcast %9 : i1 to vector<32x1xi1>
    %11 = vector.broadcast %10 : vector<32x1xi1> to vector<32x1xi1>
    %12 = arith.xori %8, %11 : vector<32x1xi1>
    %13 = arith.andi %12, %6 : vector<32x1xi1>
    %14 = vector.broadcast %2 : i32 to vector<32x1xi32>
    %15 = arith.addi %4, %14 : vector<32x1xi32>
    %16 = arith.select %13, %15, %4 : vector<32x1xi1>, vector<32x1xi32>
    %c0 = arith.constant 0 : index
    %c0_3 = arith.constant 0 : index
    %17 = vector.load %arg1[%c0, %c0_3] : memref<2x1xf32, #tpu.memory_space<vmem>>, vector<2x1xf32>
    %18 = tpu.iota {dimensions = array<i32: 1>} : vector<1x32xi32>
    %c16_i32_4 = arith.constant 16 : i32
    %c0_i32_5 = arith.constant 0 : i32
    %19 = arith.cmpi eq, %c16_i32_4, %c0_i32_5 : i32
    %c1_i32_6 = arith.constant 1 : i32
    %20 = arith.select %19, %c1_i32_6, %c16_i32_4 : i32
    %21 = vector.broadcast %20 : i32 to vector<1x32xi32>
    %22 = arith.remsi %18, %21 : vector<1x32xi32>
    %c0_i32_7 = arith.constant 0 : i32
    %23 = vector.broadcast %c0_i32_7 : i32 to vector<1x32xi32>
    %24 = arith.cmpi ne, %22, %23 : vector<1x32xi32>
    %c0_i32_8 = arith.constant 0 : i32
    %25 = vector.broadcast %c0_i32_8 : i32 to vector<1x32xi32>
    %26 = arith.cmpi slt, %22, %25 : vector<1x32xi32>
    %c0_i32_9 = arith.constant 0 : i32
    %27 = arith.cmpi slt, %20, %c0_i32_9 : i32
    %28 = vector.broadcast %27 : i1 to vector<1x32xi1>
    %29 = vector.broadcast %28 : vector<1x32xi1> to vector<1x32xi1>
    %30 = arith.xori %26, %29 : vector<1x32xi1>
    %31 = arith.andi %30, %24 : vector<1x32xi1>
    %32 = vector.broadcast %20 : i32 to vector<1x32xi32>
    %33 = arith.addi %22, %32 : vector<1x32xi32>
    %34 = arith.select %31, %33, %22 : vector<1x32xi1>, vector<1x32xi32>
    %35 = arith.sitofp %34 : vector<1x32xi32> to vector<1x32xf32>
    %cst = arith.constant -0.614022672 : f32
    %36 = vector.broadcast %cst : f32 to vector<1x32xf32>
    %37 = arith.mulf %35, %36 : vector<1x32xf32>
    %38 = math.exp %37 : vector<1x32xf32>
    %39 = vector.broadcast %17 : vector<2x1xf32> to vector<2x32xf32>
    %40 = vector.broadcast %38 : vector<1x32xf32> to vector<2x32xf32>
    %41 = arith.mulf %39, %40 : vector<2x32xf32>
    %c16_i32_10 = arith.constant 16 : i32
    %42 = vector.broadcast %c16_i32_10 : i32 to vector<1x32xi32>
    %43 = arith.cmpi slt, %18, %42 : vector<1x32xi32>
    %44 = math.sin %41 : vector<2x32xf32>
    %45 = math.cos %41 : vector<2x32xf32>
    %46 = vector.shape_cast %43 : vector<1x32xi1> to vector<1x32xi1>
    %47 = vector.broadcast %46 : vector<1x32xi1> to vector<2x32xi1>
    %48 = arith.select %47, %44, %45 : vector<2x32xi1>, vector<2x32xf32>
    %49 = arith.truncf %48 : vector<2x32xf32> to vector<2x32xbf16>
    %c0_11 = arith.constant 0 : index
    %c0_12 = arith.constant 0 : index
    %50 = vector.load %arg2[%c0_11, %c0_12] : memref<5968x256xbf16, #tpu.memory_space<vmem>>, vector<32x128xbf16>
    %cst_13 = arith.constant dense<0.000000e+00> : vector<2x128xf32>
    %51 = tpu.matmul %49, %50, %cst_13 {dimension_numbers = #tpu.dot_dimension_numbers<[1], [0], [0], [1], [0, 0, 1, 1], [], []>} : vector<2x32xbf16>, vector<32x128xbf16>, vector<2x128xf32> -> vector<2x128xf32>
    %c0_14 = arith.constant 0 : index
    %c0_15 = arith.constant 0 : index
    %52 = vector.load %arg4[%c0_14, %c0_15] : memref<48x256xf32, #tpu.memory_space<vmem>>, vector<1x128xf32>
    %53 = vector.broadcast %52 : vector<1x128xf32> to vector<2x128xf32>
    %54 = arith.addf %51, %53 : vector<2x128xf32>
    %cst_16 = arith.constant 5.000000e-01 : f32
    %55 = vector.broadcast %cst_16 : f32 to vector<2x128xf32>
    %56 = arith.mulf %55, %54 : vector<2x128xf32>
    %cst_17 = arith.constant 0.707106769 : f32
    %57 = vector.broadcast %cst_17 : f32 to vector<2x128xf32>
    %58 = arith.mulf %54, %57 : vector<2x128xf32>
    %59 = math.erf %58 : vector<2x128xf32>
    %cst_18 = arith.constant 1.000000e+00 : f32
    %60 = vector.broadcast %cst_18 : f32 to vector<2x128xf32>
    %61 = arith.addf %60, %59 : vector<2x128xf32>
    %62 = arith.mulf %56, %61 : vector<2x128xf32>
    %63 = arith.truncf %62 : vector<2x128xf32> to vector<2x128xbf16>
    %c32 = arith.constant 32 : index
    %c0_19 = arith.constant 0 : index
    %64 = vector.load %arg2[%c32, %c0_19] : memref<5968x256xbf16, #tpu.memory_space<vmem>>, vector<128x128xbf16>
    %cst_20 = arith.constant dense<0.000000e+00> : vector<2x128xf32>
    %65 = tpu.matmul %63, %64, %cst_20 {dimension_numbers = #tpu.dot_dimension_numbers<[1], [0], [0], [1], [0, 0, 1, 1], [], []>} : vector<2x128xbf16>, vector<128x128xbf16>, vector<2x128xf32> -> vector<2x128xf32>
    %c1 = arith.constant 1 : index
    %c0_21 = arith.constant 0 : index
    %66 = vector.load %arg4[%c1, %c0_21] : memref<48x256xf32, #tpu.memory_space<vmem>>, vector<1x128xf32>
    %67 = vector.broadcast %66 : vector<1x128xf32> to vector<2x128xf32>
    %68 = arith.addf %65, %67 : vector<2x128xf32>
    %69 = arith.truncf %68 : vector<2x128xf32> to vector<2x128xbf16>
    %c0_22 = arith.constant 0 : index
    %c0_23 = arith.constant 0 : index
    %70 = vector.load %arg3[%c0_22, %c0_23] : memref<128x832xbf16, #tpu.memory_space<vmem>>, vector<128x832xbf16>
    %cst_24 = arith.constant dense<0.000000e+00> : vector<2x832xf32>
    %71 = tpu.matmul %69, %70, %cst_24 {dimension_numbers = #tpu.dot_dimension_numbers<[1], [0], [0], [1], [0, 0, 1, 1], [], []>} : vector<2x128xbf16>, vector<128x832xbf16>, vector<2x832xf32> -> vector<2x832xf32>
    %c0_25 = arith.constant 0 : index
    %c0_26 = arith.constant 0 : index
    %c0_27 = arith.constant 0 : index
    %72 = vector.load %arg0[%c0_25, %c0_26, %c0_27] : memref<2x16x6xf32, #tpu.memory_space<vmem>>, vector<2x16x6xf32>
    %73 = vector.shape_cast %72 : vector<2x16x6xf32> to vector<32x6xf32>
    %c0_i32_28 = arith.constant 0 : i32
    %74 = vector.broadcast %c0_i32_28 : i32 to vector<32x1xi32>
    %75 = arith.cmpi eq, %16, %74 : vector<32x1xi32>
    %c1_i32_29 = arith.constant 1 : i32
    %76 = tpu.dynamic_rotate %73 by %c1_i32_29 dim 0 : vector<32x6xf32>, i32 -> vector<32x6xf32>
    %cst_30 = arith.constant 0.000000e+00 : f32
    %77 = vector.shape_cast %75 : vector<32x1xi1> to vector<32x1xi1>
    %78 = vector.broadcast %77 : vector<32x1xi1> to vector<32x6xi1>
    %79 = vector.broadcast %cst_30 : f32 to vector<32x6xf32>
    %80 = arith.select %78, %79, %76 : vector<32x6xi1>, vector<32x6xf32>
    %c15_i32 = arith.constant 15 : i32
    %81 = vector.broadcast %c15_i32 : i32 to vector<32x1xi32>
    %82 = arith.cmpi eq, %16, %81 : vector<32x1xi32>
    %c31_i32 = arith.constant 31 : i32
    %83 = tpu.dynamic_rotate %73 by %c31_i32 dim 0 : vector<32x6xf32>, i32 -> vector<32x6xf32>
    %cst_31 = arith.constant 0.000000e+00 : f32
    %84 = vector.shape_cast %82 : vector<32x1xi1> to vector<32x1xi1>
    %85 = vector.broadcast %84 : vector<32x1xi1> to vector<32x6xi1>
    %86 = vector.broadcast %cst_31 : f32 to vector<32x6xf32>
    %87 = arith.select %85, %86, %83 : vector<32x6xi1>, vector<32x6xf32>
    %88 = arith.truncf %80 : vector<32x6xf32> to vector<32x6xbf16>
    %c160 = arith.constant 160 : index
    %c0_32 = arith.constant 0 : index
    %89 = vector.load %arg2[%c160, %c0_32] : memref<5968x256xbf16, #tpu.memory_space<vmem>>, vector<6x64xbf16>
    %cst_33 = arith.constant dense<0.000000e+00> : vector<32x64xf32>
    %90 = tpu.matmul %88, %89, %cst_33 {dimension_numbers = #tpu.dot_dimension_numbers<[1], [0], [0], [1], [0, 0, 1, 1], [], []>} : vector<32x6xbf16>, vector<6x64xbf16>, vector<32x64xf32> -> vector<32x64xf32>
    %91 = arith.truncf %73 : vector<32x6xf32> to vector<32x6xbf16>
    %c176 = arith.constant 176 : index
    %c0_34 = arith.constant 0 : index
    %92 = vector.load %arg2[%c176, %c0_34] : memref<5968x256xbf16, #tpu.memory_space<vmem>>, vector<6x64xbf16>
    %cst_35 = arith.constant dense<0.000000e+00> : vector<32x64xf32>
    %93 = tpu.matmul %91, %92, %cst_35 {dimension_numbers = #tpu.dot_dimension_numbers<[1], [0], [0], [1], [0, 0, 1, 1], [], []>} : vector<32x6xbf16>, vector<6x64xbf16>, vector<32x64xf32> -> vector<32x64xf32>
    %94 = arith.addf %90, %93 : vector<32x64xf32>
    %95 = arith.truncf %87 : vector<32x6xf32> to vector<32x6xbf16>
    %c192 = arith.constant 192 : index
    %c0_36 = arith.constant 0 : index
    %96 = vector.load %arg2[%c192, %c0_36] : memref<5968x256xbf16, #tpu.memory_space<vmem>>, vector<6x64xbf16>
    %cst_37 = arith.constant dense<0.000000e+00> : vector<32x64xf32>
    %97 = tpu.matmul %95, %96, %cst_37 {dimension_numbers = #tpu.dot_dimension_numbers<[1], [0], [0], [1], [0, 0, 1, 1], [], []>} : vector<32x6xbf16>, vector<6x64xbf16>, vector<32x64xf32> -> vector<32x64xf32>
    %98 = arith.addf %94, %97 : vector<32x64xf32>
    %c2 = arith.constant 2 : index
    %c0_38 = arith.constant 0 : index
    %99 = vector.load %arg4[%c2, %c0_38] : memref<48x256xf32, #tpu.memory_space<vmem>>, vector<1x64xf32>
    %100 = vector.broadcast %99 : vector<1x64xf32> to vector<32x64xf32>
    %101 = arith.addf %98, %100 : vector<32x64xf32>
    %c0_i32_39 = arith.constant 0 : i32
    %102 = vector.broadcast %c0_i32_39 : i32 to vector<32x1xi32>
    %103 = arith.cmpi eq, %16, %102 : vector<32x1xi32>
    %c1_i32_40 = arith.constant 1 : i32
    %104 = tpu.dynamic_rotate %101 by %c1_i32_40 dim 0 : vector<32x64xf32>, i32 -> vector<32x64xf32>
    %cst_41 = arith.constant 0.000000e+00 : f32
    %105 = vector.shape_cast %103 : vector<32x1xi1> to vector<32x1xi1>
    %106 = vector.broadcast %105 : vector<32x1xi1> to vector<32x64xi1>
    %107 = vector.broadcast %cst_41 : f32 to vector<32x64xf32>
    %108 = arith.select %106, %107, %104 : vector<32x64xi1>, vector<32x64xf32>
    %c15_i32_42 = arith.constant 15 : i32
    %109 = vector.broadcast %c15_i32_42 : i32 to vector<32x1xi32>
    %110 = arith.cmpi eq, %16, %109 : vector<32x1xi32>
    %c31_i32_43 = arith.constant 31 : i32
    %111 = tpu.dynamic_rotate %101 by %c31_i32_43 dim 0 : vector<32x64xf32>, i32 -> vector<32x64xf32>
    %cst_44 = arith.constant 0.000000e+00 : f32
    %112 = vector.shape_cast %110 : vector<32x1xi1> to vector<32x1xi1>
    %113 = vector.broadcast %112 : vector<32x1xi1> to vector<32x64xi1>
    %114 = vector.broadcast %cst_44 : f32 to vector<32x64xf32>
    %115 = arith.select %113, %114, %111 : vector<32x64xi1>, vector<32x64xf32>
    %116 = arith.truncf %108 : vector<32x64xf32> to vector<32x64xbf16>
    %c208 = arith.constant 208 : index
    %c0_45 = arith.constant 0 : index
    %117 = vector.load %arg2[%c208, %c0_45] : memref<5968x256xbf16, #tpu.memory_space<vmem>>, vector<64x128xbf16>
    %cst_46 = arith.constant dense<0.000000e+00> : vector<32x128xf32>
    %118 = tpu.matmul %116, %117, %cst_46 {dimension_numbers = #tpu.dot_dimension_numbers<[1], [0], [0], [1], [0, 0, 1, 1], [], []>} : vector<32x64xbf16>, vector<64x128xbf16>, vector<32x128xf32> -> vector<32x128xf32>
    %119 = arith.truncf %101 : vector<32x64xf32> to vector<32x64xbf16>
    %c272 = arith.constant 272 : index
    %c0_47 = arith.constant 0 : index
    %120 = vector.load %arg2[%c272, %c0_47] : memref<5968x256xbf16, #tpu.memory_space<vmem>>, vector<64x128xbf16>
    %cst_48 = arith.constant dense<0.000000e+00> : vector<32x128xf32>
    %121 = tpu.matmul %119, %120, %cst_48 {dimension_numbers = #tpu.dot_dimension_numbers<[1], [0], [0], [1], [0, 0, 1, 1], [], []>} : vector<32x64xbf16>, vector<64x128xbf16>, vector<32x128xf32> -> vector<32x128xf32>
    %122 = arith.addf %118, %121 : vector<32x128xf32>
    %123 = arith.truncf %115 : vector<32x64xf32> to vector<32x64xbf16>
    %c336 = arith.constant 336 : index
    %c0_49 = arith.constant 0 : index
    %124 = vector.load %arg2[%c336, %c0_49] : memref<5968x256xbf16, #tpu.memory_space<vmem>>, vector<64x128xbf16>
    %cst_50 = arith.constant dense<0.000000e+00> : vector<32x128xf32>
    %125 = tpu.matmul %123, %124, %cst_50 {dimension_numbers = #tpu.dot_dimension_numbers<[1], [0], [0], [1], [0, 0, 1, 1], [], []>} : vector<32x64xbf16>, vector<64x128xbf16>, vector<32x128xf32> -> vector<32x128xf32>
    %126 = arith.addf %122, %125 : vector<32x128xf32>
    %c3 = arith.constant 3 : index
    %c0_51 = arith.constant 0 : index
    %127 = vector.load %arg4[%c3, %c0_51] : memref<48x256xf32, #tpu.memory_space<vmem>>, vector<1x128xf32>
    %128 = vector.broadcast %127 : vector<1x128xf32> to vector<32x128xf32>
    %129 = arith.addf %126, %128 : vector<32x128xf32>
    %cst_52 = arith.constant dense<0.000000e+00> : vector<128xf32>
    %130 = vector.multi_reduction <add>, %129, %cst_52 [0] : vector<32x128xf32> to vector<128xf32>
    %131 = vector.shape_cast %130 : vector<128xf32> to vector<1x128xf32>
    %cst_53 = arith.constant 3.200000e+01 : f32
    %132 = vector.broadcast %cst_53 : f32 to vector<1x128xf32>
    %133 = arith.divf %131, %132 : vector<1x128xf32>
    %134 = arith.mulf %129, %129 : vector<32x128xf32>
    %cst_54 = arith.constant dense<0.000000e+00> : vector<128xf32>
    %135 = vector.multi_reduction <add>, %134, %cst_54 [0] : vector<32x128xf32> to vector<128xf32>
    %136 = vector.shape_cast %135 : vector<128xf32> to vector<1x128xf32>
    %cst_55 = arith.constant 3.200000e+01 : f32
    %137 = vector.broadcast %cst_55 : f32 to vector<1x128xf32>
    %138 = arith.divf %136, %137 : vector<1x128xf32>
    %139 = arith.mulf %133, %133 : vector<1x128xf32>
    %140 = arith.subf %138, %139 : vector<1x128xf32>
    %cst_56 = arith.constant 0.000000e+00 : f32
    %141 = vector.broadcast %cst_56 : f32 to vector<1x128xf32>
    %142 = arith.maximumf %140, %141 : vector<1x128xf32>
    %c4 = arith.constant 4 : index
    %c0_57 = arith.constant 0 : index
    %143 = vector.load %arg4[%c4, %c0_57] : memref<48x256xf32, #tpu.memory_space<vmem>>, vector<1x128xf32>
    %cst_58 = arith.constant 9.99999974E-6 : f32
    %144 = vector.broadcast %cst_58 : f32 to vector<1x128xf32>
    %145 = arith.addf %142, %144 : vector<1x128xf32>
    %146 = math.rsqrt %145 : vector<1x128xf32>
    %147 = arith.mulf %143, %146 : vector<1x128xf32>
    %c5 = arith.constant 5 : index
    %c0_59 = arith.constant 0 : index
    %148 = vector.load %arg4[%c5, %c0_59] : memref<48x256xf32, #tpu.memory_space<vmem>>, vector<1x128xf32>
    %149 = arith.mulf %133, %147 : vector<1x128xf32>
    %150 = arith.subf %148, %149 : vector<1x128xf32>
    %151 = vector.broadcast %147 : vector<1x128xf32> to vector<32x128xf32>
    %152 = arith.mulf %129, %151 : vector<32x128xf32>
    %153 = vector.broadcast %150 : vector<1x128xf32> to vector<32x128xf32>
    %154 = arith.addf %152, %153 : vector<32x128xf32>
    %cst_60 = arith.constant 5.000000e-01 : f32
    %155 = vector.broadcast %cst_60 : f32 to vector<32x128xf32>
    %156 = arith.mulf %155, %154 : vector<32x128xf32>
    %cst_61 = arith.constant 0.707106769 : f32
    %157 = vector.broadcast %cst_61 : f32 to vector<32x128xf32>
    %158 = arith.mulf %154, %157 : vector<32x128xf32>
    %159 = math.erf %158 : vector<32x128xf32>
    %cst_62 = arith.constant 1.000000e+00 : f32
    %160 = vector.broadcast %cst_62 : f32 to vector<32x128xf32>
    %161 = arith.addf %160, %159 : vector<32x128xf32>
    %162 = arith.mulf %156, %161 : vector<32x128xf32>
    %163 = vector.extract_strided_slice %71 {offsets = [0, 0], sizes = [2, 128], strides = [1, 1]} : vector<2x832xf32> to vector<2x128xf32>
    %c6 = arith.constant 6 : index
    %c0_63 = arith.constant 0 : index
    %164 = vector.load %arg4[%c6, %c0_63] : memref<48x256xf32, #tpu.memory_space<vmem>>, vector<1x128xf32>
    %165 = vector.broadcast %164 : vector<1x128xf32> to vector<2x128xf32>
    %166 = arith.addf %163, %165 : vector<2x128xf32>
    %cst_64 = arith.constant 5.000000e-01 : f32
    %167 = vector.broadcast %cst_64 : f32 to vector<2x128xf32>
    %168 = arith.mulf %167, %166 : vector<2x128xf32>
    %cst_65 = arith.constant 0.707106769 : f32
    %169 = vector.broadcast %cst_65 : f32 to vector<2x128xf32>
    %170 = arith.mulf %166, %169 : vector<2x128xf32>
    %171 = math.erf %170 : vector<2x128xf32>
    %cst_66 = arith.constant 1.000000e+00 : f32
    %172 = vector.broadcast %cst_66 : f32 to vector<2x128xf32>
    %173 = arith.addf %172, %171 : vector<2x128xf32>
    %174 = arith.mulf %168, %173 : vector<2x128xf32>
    %175 = vector.shape_cast %174 : vector<2x128xf32> to vector<2x1x128xf32>
    %176 = vector.shape_cast %175 : vector<2x1x128xf32> to vector<2x1x128xf32>
    %177 = vector.broadcast %176 : vector<2x1x128xf32> to vector<2x16x128xf32>
    %178 = vector.shape_cast %177 : vector<2x16x128xf32> to vector<32x128xf32>
    %179 = arith.addf %162, %178 : vector<32x128xf32>
    %c0_i32_67 = arith.constant 0 : i32
    %180 = vector.broadcast %c0_i32_67 : i32 to vector<32x1xi32>
    %181 = arith.cmpi eq, %16, %180 : vector<32x1xi32>
    %c1_i32_68 = arith.constant 1 : i32
    %182 = tpu.dynamic_rotate %179 by %c1_i32_68 dim 0 : vector<32x128xf32>, i32 -> vector<32x128xf32>
    %cst_69 = arith.constant 0.000000e+00 : f32
    %183 = vector.shape_cast %181 : vector<32x1xi1> to vector<32x1xi1>
    %184 = vector.broadcast %183 : vector<32x1xi1> to vector<32x128xi1>
    %185 = vector.broadcast %cst_69 : f32 to vector<32x128xf32>
    %186 = arith.select %184, %185, %182 : vector<32x128xi1>, vector<32x128xf32>
    %c15_i32_70 = arith.constant 15 : i32
    %187 = vector.broadcast %c15_i32_70 : i32 to vector<32x1xi32>
    %188 = arith.cmpi eq, %16, %187 : vector<32x1xi32>
    %c31_i32_71 = arith.constant 31 : i32
    %189 = tpu.dynamic_rotate %179 by %c31_i32_71 dim 0 : vector<32x128xf32>, i32 -> vector<32x128xf32>
    %cst_72 = arith.constant 0.000000e+00 : f32
    %190 = vector.shape_cast %188 : vector<32x1xi1> to vector<32x1xi1>
    %191 = vector.broadcast %190 : vector<32x1xi1> to vector<32x128xi1>
    %192 = vector.broadcast %cst_72 : f32 to vector<32x128xf32>
    %193 = arith.select %191, %192, %189 : vector<32x128xi1>, vector<32x128xf32>
    %194 = arith.truncf %186 : vector<32x128xf32> to vector<32x128xbf16>
    %c400 = arith.constant 400 : index
    %c0_73 = arith.constant 0 : index
    %195 = vector.load %arg2[%c400, %c0_73] : memref<5968x256xbf16, #tpu.memory_space<vmem>>, vector<128x128xbf16>
    %cst_74 = arith.constant dense<0.000000e+00> : vector<32x128xf32>
    %196 = tpu.matmul %194, %195, %cst_74 {dimension_numbers = #tpu.dot_dimension_numbers<[1], [0], [0], [1], [0, 0, 1, 1], [], []>} : vector<32x128xbf16>, vector<128x128xbf16>, vector<32x128xf32> -> vector<32x128xf32>
    %197 = arith.truncf %179 : vector<32x128xf32> to vector<32x128xbf16>
    %c528 = arith.constant 528 : index
    %c0_75 = arith.constant 0 : index
    %198 = vector.load %arg2[%c528, %c0_75] : memref<5968x256xbf16, #tpu.memory_space<vmem>>, vector<128x128xbf16>
    %cst_76 = arith.constant dense<0.000000e+00> : vector<32x128xf32>
    %199 = tpu.matmul %197, %198, %cst_76 {dimension_numbers = #tpu.dot_dimension_numbers<[1], [0], [0], [1], [0, 0, 1, 1], [], []>} : vector<32x128xbf16>, vector<128x128xbf16>, vector<32x128xf32> -> vector<32x128xf32>
    %200 = arith.addf %196, %199 : vector<32x128xf32>
    %201 = arith.truncf %193 : vector<32x128xf32> to vector<32x128xbf16>
    %c656 = arith.constant 656 : index
    %c0_77 = arith.constant 0 : index
    %202 = vector.load %arg2[%c656, %c0_77] : memref<5968x256xbf16, #tpu.memory_space<vmem>>, vector<128x128xbf16>
    %cst_78 = arith.constant dense<0.000000e+00> : vector<32x128xf32>
    %203 = tpu.matmul %201, %202, %cst_78 {dimension_numbers = #tpu.dot_dimension_numbers<[1], [0], [0], [1], [0, 0, 1, 1], [], []>} : vector<32x128xbf16>, vector<128x128xbf16>, vector<32x128xf32> -> vector<32x128xf32>
    %204 = arith.addf %200, %203 : vector<32x128xf32>
    %c7 = arith.constant 7 : index
    %c0_79 = arith.constant 0 : index
    %205 = vector.load %arg4[%c7, %c0_79] : memref<48x256xf32, #tpu.memory_space<vmem>>, vector<1x128xf32>
    %206 = vector.broadcast %205 : vector<1x128xf32> to vector<32x128xf32>
    %207 = arith.addf %204, %206 : vector<32x128xf32>
    %cst_80 = arith.constant dense<0.000000e+00> : vector<128xf32>
    %208 = vector.multi_reduction <add>, %207, %cst_80 [0] : vector<32x128xf32> to vector<128xf32>
    %209 = vector.shape_cast %208 : vector<128xf32> to vector<1x128xf32>
    %cst_81 = arith.constant 3.200000e+01 : f32
    %210 = vector.broadcast %cst_81 : f32 to vector<1x128xf32>
    %211 = arith.divf %209, %210 : vector<1x128xf32>
    %212 = arith.mulf %207, %207 : vector<32x128xf32>
    %cst_82 = arith.constant dense<0.000000e+00> : vector<128xf32>
    %213 = vector.multi_reduction <add>, %212, %cst_82 [0] : vector<32x128xf32> to vector<128xf32>
    %214 = vector.shape_cast %213 : vector<128xf32> to vector<1x128xf32>
    %cst_83 = arith.constant 3.200000e+01 : f32
    %215 = vector.broadcast %cst_83 : f32 to vector<1x128xf32>
    %216 = arith.divf %214, %215 : vector<1x128xf32>
    %217 = arith.mulf %211, %211 : vector<1x128xf32>
    %218 = arith.subf %216, %217 : vector<1x128xf32>
    %cst_84 = arith.constant 0.000000e+00 : f32
    %219 = vector.broadcast %cst_84 : f32 to vector<1x128xf32>
    %220 = arith.maximumf %218, %219 : vector<1x128xf32>
    %c8 = arith.constant 8 : index
    %c0_85 = arith.constant 0 : index
    %221 = vector.load %arg4[%c8, %c0_85] : memref<48x256xf32, #tpu.memory_space<vmem>>, vector<1x128xf32>
    %cst_86 = arith.constant 9.99999974E-6 : f32
    %222 = vector.broadcast %cst_86 : f32 to vector<1x128xf32>
    %223 = arith.addf %220, %222 : vector<1x128xf32>
    %224 = math.rsqrt %223 : vector<1x128xf32>
    %225 = arith.mulf %221, %224 : vector<1x128xf32>
    %c9 = arith.constant 9 : index
    %c0_87 = arith.constant 0 : index
    %226 = vector.load %arg4[%c9, %c0_87] : memref<48x256xf32, #tpu.memory_space<vmem>>, vector<1x128xf32>
    %227 = arith.mulf %211, %225 : vector<1x128xf32>
    %228 = arith.subf %226, %227 : vector<1x128xf32>
    %229 = vector.broadcast %225 : vector<1x128xf32> to vector<32x128xf32>
    %230 = arith.mulf %207, %229 : vector<32x128xf32>
    %231 = vector.broadcast %228 : vector<1x128xf32> to vector<32x128xf32>
    %232 = arith.addf %230, %231 : vector<32x128xf32>
    %cst_88 = arith.constant 5.000000e-01 : f32
    %233 = vector.broadcast %cst_88 : f32 to vector<32x128xf32>
    %234 = arith.mulf %233, %232 : vector<32x128xf32>
    %cst_89 = arith.constant 0.707106769 : f32
    %235 = vector.broadcast %cst_89 : f32 to vector<32x128xf32>
    %236 = arith.mulf %232, %235 : vector<32x128xf32>
    %237 = math.erf %236 : vector<32x128xf32>
    %cst_90 = arith.constant 1.000000e+00 : f32
    %238 = vector.broadcast %cst_90 : f32 to vector<32x128xf32>
    %239 = arith.addf %238, %237 : vector<32x128xf32>
    %240 = arith.mulf %234, %239 : vector<32x128xf32>
    %241 = arith.truncf %101 : vector<32x64xf32> to vector<32x64xbf16>
    %c784 = arith.constant 784 : index
    %c0_91 = arith.constant 0 : index
    %242 = vector.load %arg2[%c784, %c0_91] : memref<5968x256xbf16, #tpu.memory_space<vmem>>, vector<64x128xbf16>
    %cst_92 = arith.constant dense<0.000000e+00> : vector<32x128xf32>
    %243 = tpu.matmul %241, %242, %cst_92 {dimension_numbers = #tpu.dot_dimension_numbers<[1], [0], [0], [1], [0, 0, 1, 1], [], []>} : vector<32x64xbf16>, vector<64x128xbf16>, vector<32x128xf32> -> vector<32x128xf32>
    %c10 = arith.constant 10 : index
    %c0_93 = arith.constant 0 : index
    %244 = vector.load %arg4[%c10, %c0_93] : memref<48x256xf32, #tpu.memory_space<vmem>>, vector<1x128xf32>
    %245 = vector.broadcast %244 : vector<1x128xf32> to vector<32x128xf32>
    %246 = arith.addf %243, %245 : vector<32x128xf32>
    %247 = arith.addf %240, %246 : vector<32x128xf32>
    %c0_i32_94 = arith.constant 0 : i32
    %248 = vector.broadcast %c0_i32_94 : i32 to vector<32x1xi32>
    %249 = arith.cmpi eq, %16, %248 : vector<32x1xi32>
    %c1_i32_95 = arith.constant 1 : i32
    %250 = tpu.dynamic_rotate %247 by %c1_i32_95 dim 0 : vector<32x128xf32>, i32 -> vector<32x128xf32>
    %cst_96 = arith.constant 0.000000e+00 : f32
    %251 = vector.shape_cast %249 : vector<32x1xi1> to vector<32x1xi1>
    %252 = vector.broadcast %251 : vector<32x1xi1> to vector<32x128xi1>
    %253 = vector.broadcast %cst_96 : f32 to vector<32x128xf32>
    %254 = arith.select %252, %253, %250 : vector<32x128xi1>, vector<32x128xf32>
    %c15_i32_97 = arith.constant 15 : i32
    %255 = vector.broadcast %c15_i32_97 : i32 to vector<32x1xi32>
    %256 = arith.cmpi eq, %16, %255 : vector<32x1xi32>
    %c31_i32_98 = arith.constant 31 : i32
    %257 = tpu.dynamic_rotate %247 by %c31_i32_98 dim 0 : vector<32x128xf32>, i32 -> vector<32x128xf32>
    %cst_99 = arith.constant 0.000000e+00 : f32
    %258 = vector.shape_cast %256 : vector<32x1xi1> to vector<32x1xi1>
    %259 = vector.broadcast %258 : vector<32x1xi1> to vector<32x128xi1>
    %260 = vector.broadcast %cst_99 : f32 to vector<32x128xf32>
    %261 = arith.select %259, %260, %257 : vector<32x128xi1>, vector<32x128xf32>
    %262 = arith.truncf %254 : vector<32x128xf32> to vector<32x128xbf16>
    %c848 = arith.constant 848 : index
    %c0_100 = arith.constant 0 : index
    %263 = vector.load %arg2[%c848, %c0_100] : memref<5968x256xbf16, #tpu.memory_space<vmem>>, vector<128x256xbf16>
    %cst_101 = arith.constant dense<0.000000e+00> : vector<32x256xf32>
    %264 = tpu.matmul %262, %263, %cst_101 {dimension_numbers = #tpu.dot_dimension_numbers<[1], [0], [0], [1], [0, 0, 1, 1], [], []>} : vector<32x128xbf16>, vector<128x256xbf16>, vector<32x256xf32> -> vector<32x256xf32>
    %265 = arith.truncf %247 : vector<32x128xf32> to vector<32x128xbf16>
    %c976 = arith.constant 976 : index
    %c0_102 = arith.constant 0 : index
    %266 = vector.load %arg2[%c976, %c0_102] : memref<5968x256xbf16, #tpu.memory_space<vmem>>, vector<128x256xbf16>
    %cst_103 = arith.constant dense<0.000000e+00> : vector<32x256xf32>
    %267 = tpu.matmul %265, %266, %cst_103 {dimension_numbers = #tpu.dot_dimension_numbers<[1], [0], [0], [1], [0, 0, 1, 1], [], []>} : vector<32x128xbf16>, vector<128x256xbf16>, vector<32x256xf32> -> vector<32x256xf32>
    %268 = arith.addf %264, %267 : vector<32x256xf32>
    %269 = arith.truncf %261 : vector<32x128xf32> to vector<32x128xbf16>
    %c1104 = arith.constant 1104 : index
    %c0_104 = arith.constant 0 : index
    %270 = vector.load %arg2[%c1104, %c0_104] : memref<5968x256xbf16, #tpu.memory_space<vmem>>, vector<128x256xbf16>
    %cst_105 = arith.constant dense<0.000000e+00> : vector<32x256xf32>
    %271 = tpu.matmul %269, %270, %cst_105 {dimension_numbers = #tpu.dot_dimension_numbers<[1], [0], [0], [1], [0, 0, 1, 1], [], []>} : vector<32x128xbf16>, vector<128x256xbf16>, vector<32x256xf32> -> vector<32x256xf32>
    %272 = arith.addf %268, %271 : vector<32x256xf32>
    %c11 = arith.constant 11 : index
    %c0_106 = arith.constant 0 : index
    %273 = vector.load %arg4[%c11, %c0_106] : memref<48x256xf32, #tpu.memory_space<vmem>>, vector<1x256xf32>
    %274 = vector.broadcast %273 : vector<1x256xf32> to vector<32x256xf32>
    %275 = arith.addf %272, %274 : vector<32x256xf32>
    %cst_107 = arith.constant dense<0.000000e+00> : vector<256xf32>
    %276 = vector.multi_reduction <add>, %275, %cst_107 [0] : vector<32x256xf32> to vector<256xf32>
    %277 = vector.shape_cast %276 : vector<256xf32> to vector<1x256xf32>
    %cst_108 = arith.constant 3.200000e+01 : f32
    %278 = vector.broadcast %cst_108 : f32 to vector<1x256xf32>
    %279 = arith.divf %277, %278 : vector<1x256xf32>
    %280 = arith.mulf %275, %275 : vector<32x256xf32>
    %cst_109 = arith.constant dense<0.000000e+00> : vector<256xf32>
    %281 = vector.multi_reduction <add>, %280, %cst_109 [0] : vector<32x256xf32> to vector<256xf32>
    %282 = vector.shape_cast %281 : vector<256xf32> to vector<1x256xf32>
    %cst_110 = arith.constant 3.200000e+01 : f32
    %283 = vector.broadcast %cst_110 : f32 to vector<1x256xf32>
    %284 = arith.divf %282, %283 : vector<1x256xf32>
    %285 = arith.mulf %279, %279 : vector<1x256xf32>
    %286 = arith.subf %284, %285 : vector<1x256xf32>
    %cst_111 = arith.constant 0.000000e+00 : f32
    %287 = vector.broadcast %cst_111 : f32 to vector<1x256xf32>
    %288 = arith.maximumf %286, %287 : vector<1x256xf32>
    %c12 = arith.constant 12 : index
    %c0_112 = arith.constant 0 : index
    %289 = vector.load %arg4[%c12, %c0_112] : memref<48x256xf32, #tpu.memory_space<vmem>>, vector<1x256xf32>
    %cst_113 = arith.constant 9.99999974E-6 : f32
    %290 = vector.broadcast %cst_113 : f32 to vector<1x256xf32>
    %291 = arith.addf %288, %290 : vector<1x256xf32>
    %292 = math.rsqrt %291 : vector<1x256xf32>
    %293 = arith.mulf %289, %292 : vector<1x256xf32>
    %c13 = arith.constant 13 : index
    %c0_114 = arith.constant 0 : index
    %294 = vector.load %arg4[%c13, %c0_114] : memref<48x256xf32, #tpu.memory_space<vmem>>, vector<1x256xf32>
    %295 = arith.mulf %279, %293 : vector<1x256xf32>
    %296 = arith.subf %294, %295 : vector<1x256xf32>
    %297 = vector.broadcast %293 : vector<1x256xf32> to vector<32x256xf32>
    %298 = arith.mulf %275, %297 : vector<32x256xf32>
    %299 = vector.broadcast %296 : vector<1x256xf32> to vector<32x256xf32>
    %300 = arith.addf %298, %299 : vector<32x256xf32>
    %cst_115 = arith.constant 5.000000e-01 : f32
    %301 = vector.broadcast %cst_115 : f32 to vector<32x256xf32>
    %302 = arith.mulf %301, %300 : vector<32x256xf32>
    %cst_116 = arith.constant 0.707106769 : f32
    %303 = vector.broadcast %cst_116 : f32 to vector<32x256xf32>
    %304 = arith.mulf %300, %303 : vector<32x256xf32>
    %305 = math.erf %304 : vector<32x256xf32>
    %cst_117 = arith.constant 1.000000e+00 : f32
    %306 = vector.broadcast %cst_117 : f32 to vector<32x256xf32>
    %307 = arith.addf %306, %305 : vector<32x256xf32>
    %308 = arith.mulf %302, %307 : vector<32x256xf32>
    %309 = vector.extract_strided_slice %71 {offsets = [0, 128], sizes = [2, 256], strides = [1, 1]} : vector<2x832xf32> to vector<2x256xf32>
    %c14 = arith.constant 14 : index
    %c0_118 = arith.constant 0 : index
    %310 = vector.load %arg4[%c14, %c0_118] : memref<48x256xf32, #tpu.memory_space<vmem>>, vector<1x256xf32>
    %311 = vector.broadcast %310 : vector<1x256xf32> to vector<2x256xf32>
    %312 = arith.addf %309, %311 : vector<2x256xf32>
    %cst_119 = arith.constant 5.000000e-01 : f32
    %313 = vector.broadcast %cst_119 : f32 to vector<2x256xf32>
    %314 = arith.mulf %313, %312 : vector<2x256xf32>
    %cst_120 = arith.constant 0.707106769 : f32
    %315 = vector.broadcast %cst_120 : f32 to vector<2x256xf32>
    %316 = arith.mulf %312, %315 : vector<2x256xf32>
    %317 = math.erf %316 : vector<2x256xf32>
    %cst_121 = arith.constant 1.000000e+00 : f32
    %318 = vector.broadcast %cst_121 : f32 to vector<2x256xf32>
    %319 = arith.addf %318, %317 : vector<2x256xf32>
    %320 = arith.mulf %314, %319 : vector<2x256xf32>
    %321 = vector.shape_cast %320 : vector<2x256xf32> to vector<2x1x256xf32>
    %322 = vector.shape_cast %321 : vector<2x1x256xf32> to vector<2x1x256xf32>
    %323 = vector.broadcast %322 : vector<2x1x256xf32> to vector<2x16x256xf32>
    %324 = vector.shape_cast %323 : vector<2x16x256xf32> to vector<32x256xf32>
    %325 = arith.addf %308, %324 : vector<32x256xf32>
    %c0_i32_122 = arith.constant 0 : i32
    %326 = vector.broadcast %c0_i32_122 : i32 to vector<32x1xi32>
    %327 = arith.cmpi eq, %16, %326 : vector<32x1xi32>
    %c1_i32_123 = arith.constant 1 : i32
    %328 = tpu.dynamic_rotate %325 by %c1_i32_123 dim 0 : vector<32x256xf32>, i32 -> vector<32x256xf32>
    %cst_124 = arith.constant 0.000000e+00 : f32
    %329 = vector.shape_cast %327 : vector<32x1xi1> to vector<32x1xi1>
    %330 = vector.broadcast %329 : vector<32x1xi1> to vector<32x256xi1>
    %331 = vector.broadcast %cst_124 : f32 to vector<32x256xf32>
    %332 = arith.select %330, %331, %328 : vector<32x256xi1>, vector<32x256xf32>
    %c15_i32_125 = arith.constant 15 : i32
    %333 = vector.broadcast %c15_i32_125 : i32 to vector<32x1xi32>
    %334 = arith.cmpi eq, %16, %333 : vector<32x1xi32>
    %c31_i32_126 = arith.constant 31 : i32
    %335 = tpu.dynamic_rotate %325 by %c31_i32_126 dim 0 : vector<32x256xf32>, i32 -> vector<32x256xf32>
    %cst_127 = arith.constant 0.000000e+00 : f32
    %336 = vector.shape_cast %334 : vector<32x1xi1> to vector<32x1xi1>
    %337 = vector.broadcast %336 : vector<32x1xi1> to vector<32x256xi1>
    %338 = vector.broadcast %cst_127 : f32 to vector<32x256xf32>
    %339 = arith.select %337, %338, %335 : vector<32x256xi1>, vector<32x256xf32>
    %340 = arith.truncf %332 : vector<32x256xf32> to vector<32x256xbf16>
    %c1232 = arith.constant 1232 : index
    %c0_128 = arith.constant 0 : index
    %341 = vector.load %arg2[%c1232, %c0_128] : memref<5968x256xbf16, #tpu.memory_space<vmem>>, vector<256x256xbf16>
    %cst_129 = arith.constant dense<0.000000e+00> : vector<32x256xf32>
    %342 = tpu.matmul %340, %341, %cst_129 {dimension_numbers = #tpu.dot_dimension_numbers<[1], [0], [0], [1], [0, 0, 1, 1], [], []>} : vector<32x256xbf16>, vector<256x256xbf16>, vector<32x256xf32> -> vector<32x256xf32>
    %343 = arith.truncf %325 : vector<32x256xf32> to vector<32x256xbf16>
    %c1488 = arith.constant 1488 : index
    %c0_130 = arith.constant 0 : index
    %344 = vector.load %arg2[%c1488, %c0_130] : memref<5968x256xbf16, #tpu.memory_space<vmem>>, vector<256x256xbf16>
    %cst_131 = arith.constant dense<0.000000e+00> : vector<32x256xf32>
    %345 = tpu.matmul %343, %344, %cst_131 {dimension_numbers = #tpu.dot_dimension_numbers<[1], [0], [0], [1], [0, 0, 1, 1], [], []>} : vector<32x256xbf16>, vector<256x256xbf16>, vector<32x256xf32> -> vector<32x256xf32>
    %346 = arith.addf %342, %345 : vector<32x256xf32>
    %347 = arith.truncf %339 : vector<32x256xf32> to vector<32x256xbf16>
    %c1744 = arith.constant 1744 : index
    %c0_132 = arith.constant 0 : index
    %348 = vector.load %arg2[%c1744, %c0_132] : memref<5968x256xbf16, #tpu.memory_space<vmem>>, vector<256x256xbf16>
    %cst_133 = arith.constant dense<0.000000e+00> : vector<32x256xf32>
    %349 = tpu.matmul %347, %348, %cst_133 {dimension_numbers = #tpu.dot_dimension_numbers<[1], [0], [0], [1], [0, 0, 1, 1], [], []>} : vector<32x256xbf16>, vector<256x256xbf16>, vector<32x256xf32> -> vector<32x256xf32>
    %350 = arith.addf %346, %349 : vector<32x256xf32>
    %c15 = arith.constant 15 : index
    %c0_134 = arith.constant 0 : index
    %351 = vector.load %arg4[%c15, %c0_134] : memref<48x256xf32, #tpu.memory_space<vmem>>, vector<1x256xf32>
    %352 = vector.broadcast %351 : vector<1x256xf32> to vector<32x256xf32>
    %353 = arith.addf %350, %352 : vector<32x256xf32>
    %cst_135 = arith.constant dense<0.000000e+00> : vector<256xf32>
    %354 = vector.multi_reduction <add>, %353, %cst_135 [0] : vector<32x256xf32> to vector<256xf32>
    %355 = vector.shape_cast %354 : vector<256xf32> to vector<1x256xf32>
    %cst_136 = arith.constant 3.200000e+01 : f32
    %356 = vector.broadcast %cst_136 : f32 to vector<1x256xf32>
    %357 = arith.divf %355, %356 : vector<1x256xf32>
    %358 = arith.mulf %353, %353 : vector<32x256xf32>
    %cst_137 = arith.constant dense<0.000000e+00> : vector<256xf32>
    %359 = vector.multi_reduction <add>, %358, %cst_137 [0] : vector<32x256xf32> to vector<256xf32>
    %360 = vector.shape_cast %359 : vector<256xf32> to vector<1x256xf32>
    %cst_138 = arith.constant 3.200000e+01 : f32
    %361 = vector.broadcast %cst_138 : f32 to vector<1x256xf32>
    %362 = arith.divf %360, %361 : vector<1x256xf32>
    %363 = arith.mulf %357, %357 : vector<1x256xf32>
    %364 = arith.subf %362, %363 : vector<1x256xf32>
    %cst_139 = arith.constant 0.000000e+00 : f32
    %365 = vector.broadcast %cst_139 : f32 to vector<1x256xf32>
    %366 = arith.maximumf %364, %365 : vector<1x256xf32>
    %c16 = arith.constant 16 : index
    %c0_140 = arith.constant 0 : index
    %367 = vector.load %arg4[%c16, %c0_140] : memref<48x256xf32, #tpu.memory_space<vmem>>, vector<1x256xf32>
    %cst_141 = arith.constant 9.99999974E-6 : f32
    %368 = vector.broadcast %cst_141 : f32 to vector<1x256xf32>
    %369 = arith.addf %366, %368 : vector<1x256xf32>
    %370 = math.rsqrt %369 : vector<1x256xf32>
    %371 = arith.mulf %367, %370 : vector<1x256xf32>
    %c17 = arith.constant 17 : index
    %c0_142 = arith.constant 0 : index
    %372 = vector.load %arg4[%c17, %c0_142] : memref<48x256xf32, #tpu.memory_space<vmem>>, vector<1x256xf32>
    %373 = arith.mulf %357, %371 : vector<1x256xf32>
    %374 = arith.subf %372, %373 : vector<1x256xf32>
    %375 = vector.broadcast %371 : vector<1x256xf32> to vector<32x256xf32>
    %376 = arith.mulf %353, %375 : vector<32x256xf32>
    %377 = vector.broadcast %374 : vector<1x256xf32> to vector<32x256xf32>
    %378 = arith.addf %376, %377 : vector<32x256xf32>
    %cst_143 = arith.constant 5.000000e-01 : f32
    %379 = vector.broadcast %cst_143 : f32 to vector<32x256xf32>
    %380 = arith.mulf %379, %378 : vector<32x256xf32>
    %cst_144 = arith.constant 0.707106769 : f32
    %381 = vector.broadcast %cst_144 : f32 to vector<32x256xf32>
    %382 = arith.mulf %378, %381 : vector<32x256xf32>
    %383 = math.erf %382 : vector<32x256xf32>
    %cst_145 = arith.constant 1.000000e+00 : f32
    %384 = vector.broadcast %cst_145 : f32 to vector<32x256xf32>
    %385 = arith.addf %384, %383 : vector<32x256xf32>
    %386 = arith.mulf %380, %385 : vector<32x256xf32>
    %387 = arith.truncf %247 : vector<32x128xf32> to vector<32x128xbf16>
    %c2000 = arith.constant 2000 : index
    %c0_146 = arith.constant 0 : index
    %388 = vector.load %arg2[%c2000, %c0_146] : memref<5968x256xbf16, #tpu.memory_space<vmem>>, vector<128x256xbf16>
    %cst_147 = arith.constant dense<0.000000e+00> : vector<32x256xf32>
    %389 = tpu.matmul %387, %388, %cst_147 {dimension_numbers = #tpu.dot_dimension_numbers<[1], [0], [0], [1], [0, 0, 1, 1], [], []>} : vector<32x128xbf16>, vector<128x256xbf16>, vector<32x256xf32> -> vector<32x256xf32>
    %c18 = arith.constant 18 : index
    %c0_148 = arith.constant 0 : index
    %390 = vector.load %arg4[%c18, %c0_148] : memref<48x256xf32, #tpu.memory_space<vmem>>, vector<1x256xf32>
    %391 = vector.broadcast %390 : vector<1x256xf32> to vector<32x256xf32>
    %392 = arith.addf %389, %391 : vector<32x256xf32>
    %393 = arith.addf %386, %392 : vector<32x256xf32>
    %c0_i32_149 = arith.constant 0 : i32
    %394 = vector.broadcast %c0_i32_149 : i32 to vector<32x1xi32>
    %395 = arith.cmpi eq, %16, %394 : vector<32x1xi32>
    %c1_i32_150 = arith.constant 1 : i32
    %396 = tpu.dynamic_rotate %393 by %c1_i32_150 dim 0 : vector<32x256xf32>, i32 -> vector<32x256xf32>
    %cst_151 = arith.constant 0.000000e+00 : f32
    %397 = vector.shape_cast %395 : vector<32x1xi1> to vector<32x1xi1>
    %398 = vector.broadcast %397 : vector<32x1xi1> to vector<32x256xi1>
    %399 = vector.broadcast %cst_151 : f32 to vector<32x256xf32>
    %400 = arith.select %398, %399, %396 : vector<32x256xi1>, vector<32x256xf32>
    %c15_i32_152 = arith.constant 15 : i32
    %401 = vector.broadcast %c15_i32_152 : i32 to vector<32x1xi32>
    %402 = arith.cmpi eq, %16, %401 : vector<32x1xi32>
    %c31_i32_153 = arith.constant 31 : i32
    %403 = tpu.dynamic_rotate %393 by %c31_i32_153 dim 0 : vector<32x256xf32>, i32 -> vector<32x256xf32>
    %cst_154 = arith.constant 0.000000e+00 : f32
    %404 = vector.shape_cast %402 : vector<32x1xi1> to vector<32x1xi1>
    %405 = vector.broadcast %404 : vector<32x1xi1> to vector<32x256xi1>
    %406 = vector.broadcast %cst_154 : f32 to vector<32x256xf32>
    %407 = arith.select %405, %406, %403 : vector<32x256xi1>, vector<32x256xf32>
    %408 = arith.truncf %400 : vector<32x256xf32> to vector<32x256xbf16>
    %c2128 = arith.constant 2128 : index
    %c0_155 = arith.constant 0 : index
    %409 = vector.load %arg2[%c2128, %c0_155] : memref<5968x256xbf16, #tpu.memory_space<vmem>>, vector<256x256xbf16>
    %cst_156 = arith.constant dense<0.000000e+00> : vector<32x256xf32>
    %410 = tpu.matmul %408, %409, %cst_156 {dimension_numbers = #tpu.dot_dimension_numbers<[1], [0], [0], [1], [0, 0, 1, 1], [], []>} : vector<32x256xbf16>, vector<256x256xbf16>, vector<32x256xf32> -> vector<32x256xf32>
    %411 = arith.truncf %393 : vector<32x256xf32> to vector<32x256xbf16>
    %c2384 = arith.constant 2384 : index
    %c0_157 = arith.constant 0 : index
    %412 = vector.load %arg2[%c2384, %c0_157] : memref<5968x256xbf16, #tpu.memory_space<vmem>>, vector<256x256xbf16>
    %cst_158 = arith.constant dense<0.000000e+00> : vector<32x256xf32>
    %413 = tpu.matmul %411, %412, %cst_158 {dimension_numbers = #tpu.dot_dimension_numbers<[1], [0], [0], [1], [0, 0, 1, 1], [], []>} : vector<32x256xbf16>, vector<256x256xbf16>, vector<32x256xf32> -> vector<32x256xf32>
    %414 = arith.addf %410, %413 : vector<32x256xf32>
    %415 = arith.truncf %407 : vector<32x256xf32> to vector<32x256xbf16>
    %c2640 = arith.constant 2640 : index
    %c0_159 = arith.constant 0 : index
    %416 = vector.load %arg2[%c2640, %c0_159] : memref<5968x256xbf16, #tpu.memory_space<vmem>>, vector<256x256xbf16>
    %cst_160 = arith.constant dense<0.000000e+00> : vector<32x256xf32>
    %417 = tpu.matmul %415, %416, %cst_160 {dimension_numbers = #tpu.dot_dimension_numbers<[1], [0], [0], [1], [0, 0, 1, 1], [], []>} : vector<32x256xbf16>, vector<256x256xbf16>, vector<32x256xf32> -> vector<32x256xf32>
    %418 = arith.addf %414, %417 : vector<32x256xf32>
    %c19 = arith.constant 19 : index
    %c0_161 = arith.constant 0 : index
    %419 = vector.load %arg4[%c19, %c0_161] : memref<48x256xf32, #tpu.memory_space<vmem>>, vector<1x256xf32>
    %420 = vector.broadcast %419 : vector<1x256xf32> to vector<32x256xf32>
    %421 = arith.addf %418, %420 : vector<32x256xf32>
    %cst_162 = arith.constant dense<0.000000e+00> : vector<256xf32>
    %422 = vector.multi_reduction <add>, %421, %cst_162 [0] : vector<32x256xf32> to vector<256xf32>
    %423 = vector.shape_cast %422 : vector<256xf32> to vector<1x256xf32>
    %cst_163 = arith.constant 3.200000e+01 : f32
    %424 = vector.broadcast %cst_163 : f32 to vector<1x256xf32>
    %425 = arith.divf %423, %424 : vector<1x256xf32>
    %426 = arith.mulf %421, %421 : vector<32x256xf32>
    %cst_164 = arith.constant dense<0.000000e+00> : vector<256xf32>
    %427 = vector.multi_reduction <add>, %426, %cst_164 [0] : vector<32x256xf32> to vector<256xf32>
    %428 = vector.shape_cast %427 : vector<256xf32> to vector<1x256xf32>
    %cst_165 = arith.constant 3.200000e+01 : f32
    %429 = vector.broadcast %cst_165 : f32 to vector<1x256xf32>
    %430 = arith.divf %428, %429 : vector<1x256xf32>
    %431 = arith.mulf %425, %425 : vector<1x256xf32>
    %432 = arith.subf %430, %431 : vector<1x256xf32>
    %cst_166 = arith.constant 0.000000e+00 : f32
    %433 = vector.broadcast %cst_166 : f32 to vector<1x256xf32>
    %434 = arith.maximumf %432, %433 : vector<1x256xf32>
    %c20 = arith.constant 20 : index
    %c0_167 = arith.constant 0 : index
    %435 = vector.load %arg4[%c20, %c0_167] : memref<48x256xf32, #tpu.memory_space<vmem>>, vector<1x256xf32>
    %cst_168 = arith.constant 9.99999974E-6 : f32
    %436 = vector.broadcast %cst_168 : f32 to vector<1x256xf32>
    %437 = arith.addf %434, %436 : vector<1x256xf32>
    %438 = math.rsqrt %437 : vector<1x256xf32>
    %439 = arith.mulf %435, %438 : vector<1x256xf32>
    %c21 = arith.constant 21 : index
    %c0_169 = arith.constant 0 : index
    %440 = vector.load %arg4[%c21, %c0_169] : memref<48x256xf32, #tpu.memory_space<vmem>>, vector<1x256xf32>
    %441 = arith.mulf %425, %439 : vector<1x256xf32>
    %442 = arith.subf %440, %441 : vector<1x256xf32>
    %443 = vector.broadcast %439 : vector<1x256xf32> to vector<32x256xf32>
    %444 = arith.mulf %421, %443 : vector<32x256xf32>
    %445 = vector.broadcast %442 : vector<1x256xf32> to vector<32x256xf32>
    %446 = arith.addf %444, %445 : vector<32x256xf32>
    %cst_170 = arith.constant 5.000000e-01 : f32
    %447 = vector.broadcast %cst_170 : f32 to vector<32x256xf32>
    %448 = arith.mulf %447, %446 : vector<32x256xf32>
    %cst_171 = arith.constant 0.707106769 : f32
    %449 = vector.broadcast %cst_171 : f32 to vector<32x256xf32>
    %450 = arith.mulf %446, %449 : vector<32x256xf32>
    %451 = math.erf %450 : vector<32x256xf32>
    %cst_172 = arith.constant 1.000000e+00 : f32
    %452 = vector.broadcast %cst_172 : f32 to vector<32x256xf32>
    %453 = arith.addf %452, %451 : vector<32x256xf32>
    %454 = arith.mulf %448, %453 : vector<32x256xf32>
    %455 = vector.extract_strided_slice %71 {offsets = [0, 384], sizes = [2, 256], strides = [1, 1]} : vector<2x832xf32> to vector<2x256xf32>
    %c22 = arith.constant 22 : index
    %c0_173 = arith.constant 0 : index
    %456 = vector.load %arg4[%c22, %c0_173] : memref<48x256xf32, #tpu.memory_space<vmem>>, vector<1x256xf32>
    %457 = vector.broadcast %456 : vector<1x256xf32> to vector<2x256xf32>
    %458 = arith.addf %455, %457 : vector<2x256xf32>
    %cst_174 = arith.constant 5.000000e-01 : f32
    %459 = vector.broadcast %cst_174 : f32 to vector<2x256xf32>
    %460 = arith.mulf %459, %458 : vector<2x256xf32>
    %cst_175 = arith.constant 0.707106769 : f32
    %461 = vector.broadcast %cst_175 : f32 to vector<2x256xf32>
    %462 = arith.mulf %458, %461 : vector<2x256xf32>
    %463 = math.erf %462 : vector<2x256xf32>
    %cst_176 = arith.constant 1.000000e+00 : f32
    %464 = vector.broadcast %cst_176 : f32 to vector<2x256xf32>
    %465 = arith.addf %464, %463 : vector<2x256xf32>
    %466 = arith.mulf %460, %465 : vector<2x256xf32>
    %467 = vector.shape_cast %466 : vector<2x256xf32> to vector<2x1x256xf32>
    %468 = vector.shape_cast %467 : vector<2x1x256xf32> to vector<2x1x256xf32>
    %469 = vector.broadcast %468 : vector<2x1x256xf32> to vector<2x16x256xf32>
    %470 = vector.shape_cast %469 : vector<2x16x256xf32> to vector<32x256xf32>
    %471 = arith.addf %454, %470 : vector<32x256xf32>
    %c0_i32_177 = arith.constant 0 : i32
    %472 = vector.broadcast %c0_i32_177 : i32 to vector<32x1xi32>
    %473 = arith.cmpi eq, %16, %472 : vector<32x1xi32>
    %c1_i32_178 = arith.constant 1 : i32
    %474 = tpu.dynamic_rotate %471 by %c1_i32_178 dim 0 : vector<32x256xf32>, i32 -> vector<32x256xf32>
    %cst_179 = arith.constant 0.000000e+00 : f32
    %475 = vector.shape_cast %473 : vector<32x1xi1> to vector<32x1xi1>
    %476 = vector.broadcast %475 : vector<32x1xi1> to vector<32x256xi1>
    %477 = vector.broadcast %cst_179 : f32 to vector<32x256xf32>
    %478 = arith.select %476, %477, %474 : vector<32x256xi1>, vector<32x256xf32>
    %c15_i32_180 = arith.constant 15 : i32
    %479 = vector.broadcast %c15_i32_180 : i32 to vector<32x1xi32>
    %480 = arith.cmpi eq, %16, %479 : vector<32x1xi32>
    %c31_i32_181 = arith.constant 31 : i32
    %481 = tpu.dynamic_rotate %471 by %c31_i32_181 dim 0 : vector<32x256xf32>, i32 -> vector<32x256xf32>
    %cst_182 = arith.constant 0.000000e+00 : f32
    %482 = vector.shape_cast %480 : vector<32x1xi1> to vector<32x1xi1>
    %483 = vector.broadcast %482 : vector<32x1xi1> to vector<32x256xi1>
    %484 = vector.broadcast %cst_182 : f32 to vector<32x256xf32>
    %485 = arith.select %483, %484, %481 : vector<32x256xi1>, vector<32x256xf32>
    %486 = arith.truncf %478 : vector<32x256xf32> to vector<32x256xbf16>
    %c2896 = arith.constant 2896 : index
    %c0_183 = arith.constant 0 : index
    %487 = vector.load %arg2[%c2896, %c0_183] : memref<5968x256xbf16, #tpu.memory_space<vmem>>, vector<256x256xbf16>
    %cst_184 = arith.constant dense<0.000000e+00> : vector<32x256xf32>
    %488 = tpu.matmul %486, %487, %cst_184 {dimension_numbers = #tpu.dot_dimension_numbers<[1], [0], [0], [1], [0, 0, 1, 1], [], []>} : vector<32x256xbf16>, vector<256x256xbf16>, vector<32x256xf32> -> vector<32x256xf32>
    %489 = arith.truncf %471 : vector<32x256xf32> to vector<32x256xbf16>
    %c3152 = arith.constant 3152 : index
    %c0_185 = arith.constant 0 : index
    %490 = vector.load %arg2[%c3152, %c0_185] : memref<5968x256xbf16, #tpu.memory_space<vmem>>, vector<256x256xbf16>
    %cst_186 = arith.constant dense<0.000000e+00> : vector<32x256xf32>
    %491 = tpu.matmul %489, %490, %cst_186 {dimension_numbers = #tpu.dot_dimension_numbers<[1], [0], [0], [1], [0, 0, 1, 1], [], []>} : vector<32x256xbf16>, vector<256x256xbf16>, vector<32x256xf32> -> vector<32x256xf32>
    %492 = arith.addf %488, %491 : vector<32x256xf32>
    %493 = arith.truncf %485 : vector<32x256xf32> to vector<32x256xbf16>
    %c3408 = arith.constant 3408 : index
    %c0_187 = arith.constant 0 : index
    %494 = vector.load %arg2[%c3408, %c0_187] : memref<5968x256xbf16, #tpu.memory_space<vmem>>, vector<256x256xbf16>
    %cst_188 = arith.constant dense<0.000000e+00> : vector<32x256xf32>
    %495 = tpu.matmul %493, %494, %cst_188 {dimension_numbers = #tpu.dot_dimension_numbers<[1], [0], [0], [1], [0, 0, 1, 1], [], []>} : vector<32x256xbf16>, vector<256x256xbf16>, vector<32x256xf32> -> vector<32x256xf32>
    %496 = arith.addf %492, %495 : vector<32x256xf32>
    %c23 = arith.constant 23 : index
    %c0_189 = arith.constant 0 : index
    %497 = vector.load %arg4[%c23, %c0_189] : memref<48x256xf32, #tpu.memory_space<vmem>>, vector<1x256xf32>
    %498 = vector.broadcast %497 : vector<1x256xf32> to vector<32x256xf32>
    %499 = arith.addf %496, %498 : vector<32x256xf32>
    %cst_190 = arith.constant dense<0.000000e+00> : vector<256xf32>
    %500 = vector.multi_reduction <add>, %499, %cst_190 [0] : vector<32x256xf32> to vector<256xf32>
    %501 = vector.shape_cast %500 : vector<256xf32> to vector<1x256xf32>
    %cst_191 = arith.constant 3.200000e+01 : f32
    %502 = vector.broadcast %cst_191 : f32 to vector<1x256xf32>
    %503 = arith.divf %501, %502 : vector<1x256xf32>
    %504 = arith.mulf %499, %499 : vector<32x256xf32>
    %cst_192 = arith.constant dense<0.000000e+00> : vector<256xf32>
    %505 = vector.multi_reduction <add>, %504, %cst_192 [0] : vector<32x256xf32> to vector<256xf32>
    %506 = vector.shape_cast %505 : vector<256xf32> to vector<1x256xf32>
    %cst_193 = arith.constant 3.200000e+01 : f32
    %507 = vector.broadcast %cst_193 : f32 to vector<1x256xf32>
    %508 = arith.divf %506, %507 : vector<1x256xf32>
    %509 = arith.mulf %503, %503 : vector<1x256xf32>
    %510 = arith.subf %508, %509 : vector<1x256xf32>
    %cst_194 = arith.constant 0.000000e+00 : f32
    %511 = vector.broadcast %cst_194 : f32 to vector<1x256xf32>
    %512 = arith.maximumf %510, %511 : vector<1x256xf32>
    %c24 = arith.constant 24 : index
    %c0_195 = arith.constant 0 : index
    %513 = vector.load %arg4[%c24, %c0_195] : memref<48x256xf32, #tpu.memory_space<vmem>>, vector<1x256xf32>
    %cst_196 = arith.constant 9.99999974E-6 : f32
    %514 = vector.broadcast %cst_196 : f32 to vector<1x256xf32>
    %515 = arith.addf %512, %514 : vector<1x256xf32>
    %516 = math.rsqrt %515 : vector<1x256xf32>
    %517 = arith.mulf %513, %516 : vector<1x256xf32>
    %c25 = arith.constant 25 : index
    %c0_197 = arith.constant 0 : index
    %518 = vector.load %arg4[%c25, %c0_197] : memref<48x256xf32, #tpu.memory_space<vmem>>, vector<1x256xf32>
    %519 = arith.mulf %503, %517 : vector<1x256xf32>
    %520 = arith.subf %518, %519 : vector<1x256xf32>
    %521 = vector.broadcast %517 : vector<1x256xf32> to vector<32x256xf32>
    %522 = arith.mulf %499, %521 : vector<32x256xf32>
    %523 = vector.broadcast %520 : vector<1x256xf32> to vector<32x256xf32>
    %524 = arith.addf %522, %523 : vector<32x256xf32>
    %cst_198 = arith.constant 5.000000e-01 : f32
    %525 = vector.broadcast %cst_198 : f32 to vector<32x256xf32>
    %526 = arith.mulf %525, %524 : vector<32x256xf32>
    %cst_199 = arith.constant 0.707106769 : f32
    %527 = vector.broadcast %cst_199 : f32 to vector<32x256xf32>
    %528 = arith.mulf %524, %527 : vector<32x256xf32>
    %529 = math.erf %528 : vector<32x256xf32>
    %cst_200 = arith.constant 1.000000e+00 : f32
    %530 = vector.broadcast %cst_200 : f32 to vector<32x256xf32>
    %531 = arith.addf %530, %529 : vector<32x256xf32>
    %532 = arith.mulf %526, %531 : vector<32x256xf32>
    %533 = arith.addf %532, %393 : vector<32x256xf32>
    %c0_i32_201 = arith.constant 0 : i32
    %534 = vector.broadcast %c0_i32_201 : i32 to vector<32x1xi32>
    %535 = arith.cmpi eq, %16, %534 : vector<32x1xi32>
    %c1_i32_202 = arith.constant 1 : i32
    %536 = tpu.dynamic_rotate %533 by %c1_i32_202 dim 0 : vector<32x256xf32>, i32 -> vector<32x256xf32>
    %cst_203 = arith.constant 0.000000e+00 : f32
    %537 = vector.shape_cast %535 : vector<32x1xi1> to vector<32x1xi1>
    %538 = vector.broadcast %537 : vector<32x1xi1> to vector<32x256xi1>
    %539 = vector.broadcast %cst_203 : f32 to vector<32x256xf32>
    %540 = arith.select %538, %539, %536 : vector<32x256xi1>, vector<32x256xf32>
    %c15_i32_204 = arith.constant 15 : i32
    %541 = vector.broadcast %c15_i32_204 : i32 to vector<32x1xi32>
    %542 = arith.cmpi eq, %16, %541 : vector<32x1xi32>
    %c31_i32_205 = arith.constant 31 : i32
    %543 = tpu.dynamic_rotate %533 by %c31_i32_205 dim 0 : vector<32x256xf32>, i32 -> vector<32x256xf32>
    %cst_206 = arith.constant 0.000000e+00 : f32
    %544 = vector.shape_cast %542 : vector<32x1xi1> to vector<32x1xi1>
    %545 = vector.broadcast %544 : vector<32x1xi1> to vector<32x256xi1>
    %546 = vector.broadcast %cst_206 : f32 to vector<32x256xf32>
    %547 = arith.select %545, %546, %543 : vector<32x256xi1>, vector<32x256xf32>
    %548 = arith.truncf %540 : vector<32x256xf32> to vector<32x256xbf16>
    %c3664 = arith.constant 3664 : index
    %c0_207 = arith.constant 0 : index
    %549 = vector.load %arg2[%c3664, %c0_207] : memref<5968x256xbf16, #tpu.memory_space<vmem>>, vector<256x128xbf16>
    %cst_208 = arith.constant dense<0.000000e+00> : vector<32x128xf32>
    %550 = tpu.matmul %548, %549, %cst_208 {dimension_numbers = #tpu.dot_dimension_numbers<[1], [0], [0], [1], [0, 0, 1, 1], [], []>} : vector<32x256xbf16>, vector<256x128xbf16>, vector<32x128xf32> -> vector<32x128xf32>
    %551 = arith.truncf %533 : vector<32x256xf32> to vector<32x256xbf16>
    %c3920 = arith.constant 3920 : index
    %c0_209 = arith.constant 0 : index
    %552 = vector.load %arg2[%c3920, %c0_209] : memref<5968x256xbf16, #tpu.memory_space<vmem>>, vector<256x128xbf16>
    %cst_210 = arith.constant dense<0.000000e+00> : vector<32x128xf32>
    %553 = tpu.matmul %551, %552, %cst_210 {dimension_numbers = #tpu.dot_dimension_numbers<[1], [0], [0], [1], [0, 0, 1, 1], [], []>} : vector<32x256xbf16>, vector<256x128xbf16>, vector<32x128xf32> -> vector<32x128xf32>
    %554 = arith.addf %550, %553 : vector<32x128xf32>
    %555 = arith.truncf %547 : vector<32x256xf32> to vector<32x256xbf16>
    %c4176 = arith.constant 4176 : index
    %c0_211 = arith.constant 0 : index
    %556 = vector.load %arg2[%c4176, %c0_211] : memref<5968x256xbf16, #tpu.memory_space<vmem>>, vector<256x128xbf16>
    %cst_212 = arith.constant dense<0.000000e+00> : vector<32x128xf32>
    %557 = tpu.matmul %555, %556, %cst_212 {dimension_numbers = #tpu.dot_dimension_numbers<[1], [0], [0], [1], [0, 0, 1, 1], [], []>} : vector<32x256xbf16>, vector<256x128xbf16>, vector<32x128xf32> -> vector<32x128xf32>
    %558 = arith.addf %554, %557 : vector<32x128xf32>
    %c26 = arith.constant 26 : index
    %c0_213 = arith.constant 0 : index
    %559 = vector.load %arg4[%c26, %c0_213] : memref<48x256xf32, #tpu.memory_space<vmem>>, vector<1x128xf32>
    %560 = vector.broadcast %559 : vector<1x128xf32> to vector<32x128xf32>
    %561 = arith.addf %558, %560 : vector<32x128xf32>
    %cst_214 = arith.constant dense<0.000000e+00> : vector<128xf32>
    %562 = vector.multi_reduction <add>, %561, %cst_214 [0] : vector<32x128xf32> to vector<128xf32>
    %563 = vector.shape_cast %562 : vector<128xf32> to vector<1x128xf32>
    %cst_215 = arith.constant 3.200000e+01 : f32
    %564 = vector.broadcast %cst_215 : f32 to vector<1x128xf32>
    %565 = arith.divf %563, %564 : vector<1x128xf32>
    %566 = arith.mulf %561, %561 : vector<32x128xf32>
    %cst_216 = arith.constant dense<0.000000e+00> : vector<128xf32>
    %567 = vector.multi_reduction <add>, %566, %cst_216 [0] : vector<32x128xf32> to vector<128xf32>
    %568 = vector.shape_cast %567 : vector<128xf32> to vector<1x128xf32>
    %cst_217 = arith.constant 3.200000e+01 : f32
    %569 = vector.broadcast %cst_217 : f32 to vector<1x128xf32>
    %570 = arith.divf %568, %569 : vector<1x128xf32>
    %571 = arith.mulf %565, %565 : vector<1x128xf32>
    %572 = arith.subf %570, %571 : vector<1x128xf32>
    %cst_218 = arith.constant 0.000000e+00 : f32
    %573 = vector.broadcast %cst_218 : f32 to vector<1x128xf32>
    %574 = arith.maximumf %572, %573 : vector<1x128xf32>
    %c27 = arith.constant 27 : index
    %c0_219 = arith.constant 0 : index
    %575 = vector.load %arg4[%c27, %c0_219] : memref<48x256xf32, #tpu.memory_space<vmem>>, vector<1x128xf32>
    %cst_220 = arith.constant 9.99999974E-6 : f32
    %576 = vector.broadcast %cst_220 : f32 to vector<1x128xf32>
    %577 = arith.addf %574, %576 : vector<1x128xf32>
    %578 = math.rsqrt %577 : vector<1x128xf32>
    %579 = arith.mulf %575, %578 : vector<1x128xf32>
    %c28 = arith.constant 28 : index
    %c0_221 = arith.constant 0 : index
    %580 = vector.load %arg4[%c28, %c0_221] : memref<48x256xf32, #tpu.memory_space<vmem>>, vector<1x128xf32>
    %581 = arith.mulf %565, %579 : vector<1x128xf32>
    %582 = arith.subf %580, %581 : vector<1x128xf32>
    %583 = vector.broadcast %579 : vector<1x128xf32> to vector<32x128xf32>
    %584 = arith.mulf %561, %583 : vector<32x128xf32>
    %585 = vector.broadcast %582 : vector<1x128xf32> to vector<32x128xf32>
    %586 = arith.addf %584, %585 : vector<32x128xf32>
    %cst_222 = arith.constant 5.000000e-01 : f32
    %587 = vector.broadcast %cst_222 : f32 to vector<32x128xf32>
    %588 = arith.mulf %587, %586 : vector<32x128xf32>
    %cst_223 = arith.constant 0.707106769 : f32
    %589 = vector.broadcast %cst_223 : f32 to vector<32x128xf32>
    %590 = arith.mulf %586, %589 : vector<32x128xf32>
    %591 = math.erf %590 : vector<32x128xf32>
    %cst_224 = arith.constant 1.000000e+00 : f32
    %592 = vector.broadcast %cst_224 : f32 to vector<32x128xf32>
    %593 = arith.addf %592, %591 : vector<32x128xf32>
    %594 = arith.mulf %588, %593 : vector<32x128xf32>
    %595 = vector.extract_strided_slice %71 {offsets = [0, 640], sizes = [2, 128], strides = [1, 1]} : vector<2x832xf32> to vector<2x128xf32>
    %c29 = arith.constant 29 : index
    %c0_225 = arith.constant 0 : index
    %596 = vector.load %arg4[%c29, %c0_225] : memref<48x256xf32, #tpu.memory_space<vmem>>, vector<1x128xf32>
    %597 = vector.broadcast %596 : vector<1x128xf32> to vector<2x128xf32>
    %598 = arith.addf %595, %597 : vector<2x128xf32>
    %cst_226 = arith.constant 5.000000e-01 : f32
    %599 = vector.broadcast %cst_226 : f32 to vector<2x128xf32>
    %600 = arith.mulf %599, %598 : vector<2x128xf32>
    %cst_227 = arith.constant 0.707106769 : f32
    %601 = vector.broadcast %cst_227 : f32 to vector<2x128xf32>
    %602 = arith.mulf %598, %601 : vector<2x128xf32>
    %603 = math.erf %602 : vector<2x128xf32>
    %cst_228 = arith.constant 1.000000e+00 : f32
    %604 = vector.broadcast %cst_228 : f32 to vector<2x128xf32>
    %605 = arith.addf %604, %603 : vector<2x128xf32>
    %606 = arith.mulf %600, %605 : vector<2x128xf32>
    %607 = vector.shape_cast %606 : vector<2x128xf32> to vector<2x1x128xf32>
    %608 = vector.shape_cast %607 : vector<2x1x128xf32> to vector<2x1x128xf32>
    %609 = vector.broadcast %608 : vector<2x1x128xf32> to vector<2x16x128xf32>
    %610 = vector.shape_cast %609 : vector<2x16x128xf32> to vector<32x128xf32>
    %611 = arith.addf %594, %610 : vector<32x128xf32>
    %c0_i32_229 = arith.constant 0 : i32
    %612 = vector.broadcast %c0_i32_229 : i32 to vector<32x1xi32>
    %613 = arith.cmpi eq, %16, %612 : vector<32x1xi32>
    %c1_i32_230 = arith.constant 1 : i32
    %614 = tpu.dynamic_rotate %611 by %c1_i32_230 dim 0 : vector<32x128xf32>, i32 -> vector<32x128xf32>
    %cst_231 = arith.constant 0.000000e+00 : f32
    %615 = vector.shape_cast %613 : vector<32x1xi1> to vector<32x1xi1>
    %616 = vector.broadcast %615 : vector<32x1xi1> to vector<32x128xi1>
    %617 = vector.broadcast %cst_231 : f32 to vector<32x128xf32>
    %618 = arith.select %616, %617, %614 : vector<32x128xi1>, vector<32x128xf32>
    %c15_i32_232 = arith.constant 15 : i32
    %619 = vector.broadcast %c15_i32_232 : i32 to vector<32x1xi32>
    %620 = arith.cmpi eq, %16, %619 : vector<32x1xi32>
    %c31_i32_233 = arith.constant 31 : i32
    %621 = tpu.dynamic_rotate %611 by %c31_i32_233 dim 0 : vector<32x128xf32>, i32 -> vector<32x128xf32>
    %cst_234 = arith.constant 0.000000e+00 : f32
    %622 = vector.shape_cast %620 : vector<32x1xi1> to vector<32x1xi1>
    %623 = vector.broadcast %622 : vector<32x1xi1> to vector<32x128xi1>
    %624 = vector.broadcast %cst_234 : f32 to vector<32x128xf32>
    %625 = arith.select %623, %624, %621 : vector<32x128xi1>, vector<32x128xf32>
    %626 = arith.truncf %618 : vector<32x128xf32> to vector<32x128xbf16>
    %c4432 = arith.constant 4432 : index
    %c0_235 = arith.constant 0 : index
    %627 = vector.load %arg2[%c4432, %c0_235] : memref<5968x256xbf16, #tpu.memory_space<vmem>>, vector<128x128xbf16>
    %cst_236 = arith.constant dense<0.000000e+00> : vector<32x128xf32>
    %628 = tpu.matmul %626, %627, %cst_236 {dimension_numbers = #tpu.dot_dimension_numbers<[1], [0], [0], [1], [0, 0, 1, 1], [], []>} : vector<32x128xbf16>, vector<128x128xbf16>, vector<32x128xf32> -> vector<32x128xf32>
    %629 = arith.truncf %611 : vector<32x128xf32> to vector<32x128xbf16>
    %c4560 = arith.constant 4560 : index
    %c0_237 = arith.constant 0 : index
    %630 = vector.load %arg2[%c4560, %c0_237] : memref<5968x256xbf16, #tpu.memory_space<vmem>>, vector<128x128xbf16>
    %cst_238 = arith.constant dense<0.000000e+00> : vector<32x128xf32>
    %631 = tpu.matmul %629, %630, %cst_238 {dimension_numbers = #tpu.dot_dimension_numbers<[1], [0], [0], [1], [0, 0, 1, 1], [], []>} : vector<32x128xbf16>, vector<128x128xbf16>, vector<32x128xf32> -> vector<32x128xf32>
    %632 = arith.addf %628, %631 : vector<32x128xf32>
    %633 = arith.truncf %625 : vector<32x128xf32> to vector<32x128xbf16>
    %c4688 = arith.constant 4688 : index
    %c0_239 = arith.constant 0 : index
    %634 = vector.load %arg2[%c4688, %c0_239] : memref<5968x256xbf16, #tpu.memory_space<vmem>>, vector<128x128xbf16>
    %cst_240 = arith.constant dense<0.000000e+00> : vector<32x128xf32>
    %635 = tpu.matmul %633, %634, %cst_240 {dimension_numbers = #tpu.dot_dimension_numbers<[1], [0], [0], [1], [0, 0, 1, 1], [], []>} : vector<32x128xbf16>, vector<128x128xbf16>, vector<32x128xf32> -> vector<32x128xf32>
    %636 = arith.addf %632, %635 : vector<32x128xf32>
    %c30 = arith.constant 30 : index
    %c0_241 = arith.constant 0 : index
    %637 = vector.load %arg4[%c30, %c0_241] : memref<48x256xf32, #tpu.memory_space<vmem>>, vector<1x128xf32>
    %638 = vector.broadcast %637 : vector<1x128xf32> to vector<32x128xf32>
    %639 = arith.addf %636, %638 : vector<32x128xf32>
    %cst_242 = arith.constant dense<0.000000e+00> : vector<128xf32>
    %640 = vector.multi_reduction <add>, %639, %cst_242 [0] : vector<32x128xf32> to vector<128xf32>
    %641 = vector.shape_cast %640 : vector<128xf32> to vector<1x128xf32>
    %cst_243 = arith.constant 3.200000e+01 : f32
    %642 = vector.broadcast %cst_243 : f32 to vector<1x128xf32>
    %643 = arith.divf %641, %642 : vector<1x128xf32>
    %644 = arith.mulf %639, %639 : vector<32x128xf32>
    %cst_244 = arith.constant dense<0.000000e+00> : vector<128xf32>
    %645 = vector.multi_reduction <add>, %644, %cst_244 [0] : vector<32x128xf32> to vector<128xf32>
    %646 = vector.shape_cast %645 : vector<128xf32> to vector<1x128xf32>
    %cst_245 = arith.constant 3.200000e+01 : f32
    %647 = vector.broadcast %cst_245 : f32 to vector<1x128xf32>
    %648 = arith.divf %646, %647 : vector<1x128xf32>
    %649 = arith.mulf %643, %643 : vector<1x128xf32>
    %650 = arith.subf %648, %649 : vector<1x128xf32>
    %cst_246 = arith.constant 0.000000e+00 : f32
    %651 = vector.broadcast %cst_246 : f32 to vector<1x128xf32>
    %652 = arith.maximumf %650, %651 : vector<1x128xf32>
    %c31 = arith.constant 31 : index
    %c0_247 = arith.constant 0 : index
    %653 = vector.load %arg4[%c31, %c0_247] : memref<48x256xf32, #tpu.memory_space<vmem>>, vector<1x128xf32>
    %cst_248 = arith.constant 9.99999974E-6 : f32
    %654 = vector.broadcast %cst_248 : f32 to vector<1x128xf32>
    %655 = arith.addf %652, %654 : vector<1x128xf32>
    %656 = math.rsqrt %655 : vector<1x128xf32>
    %657 = arith.mulf %653, %656 : vector<1x128xf32>
    %c32_249 = arith.constant 32 : index
    %c0_250 = arith.constant 0 : index
    %658 = vector.load %arg4[%c32_249, %c0_250] : memref<48x256xf32, #tpu.memory_space<vmem>>, vector<1x128xf32>
    %659 = arith.mulf %643, %657 : vector<1x128xf32>
    %660 = arith.subf %658, %659 : vector<1x128xf32>
    %661 = vector.broadcast %657 : vector<1x128xf32> to vector<32x128xf32>
    %662 = arith.mulf %639, %661 : vector<32x128xf32>
    %663 = vector.broadcast %660 : vector<1x128xf32> to vector<32x128xf32>
    %664 = arith.addf %662, %663 : vector<32x128xf32>
    %cst_251 = arith.constant 5.000000e-01 : f32
    %665 = vector.broadcast %cst_251 : f32 to vector<32x128xf32>
    %666 = arith.mulf %665, %664 : vector<32x128xf32>
    %cst_252 = arith.constant 0.707106769 : f32
    %667 = vector.broadcast %cst_252 : f32 to vector<32x128xf32>
    %668 = arith.mulf %664, %667 : vector<32x128xf32>
    %669 = math.erf %668 : vector<32x128xf32>
    %cst_253 = arith.constant 1.000000e+00 : f32
    %670 = vector.broadcast %cst_253 : f32 to vector<32x128xf32>
    %671 = arith.addf %670, %669 : vector<32x128xf32>
    %672 = arith.mulf %666, %671 : vector<32x128xf32>
    %673 = arith.truncf %533 : vector<32x256xf32> to vector<32x256xbf16>
    %c4816 = arith.constant 4816 : index
    %c0_254 = arith.constant 0 : index
    %674 = vector.load %arg2[%c4816, %c0_254] : memref<5968x256xbf16, #tpu.memory_space<vmem>>, vector<256x128xbf16>
    %cst_255 = arith.constant dense<0.000000e+00> : vector<32x128xf32>
    %675 = tpu.matmul %673, %674, %cst_255 {dimension_numbers = #tpu.dot_dimension_numbers<[1], [0], [0], [1], [0, 0, 1, 1], [], []>} : vector<32x256xbf16>, vector<256x128xbf16>, vector<32x128xf32> -> vector<32x128xf32>
    %c33 = arith.constant 33 : index
    %c0_256 = arith.constant 0 : index
    %676 = vector.load %arg4[%c33, %c0_256] : memref<48x256xf32, #tpu.memory_space<vmem>>, vector<1x128xf32>
    %677 = vector.broadcast %676 : vector<1x128xf32> to vector<32x128xf32>
    %678 = arith.addf %675, %677 : vector<32x128xf32>
    %679 = arith.addf %672, %678 : vector<32x128xf32>
    %c0_i32_257 = arith.constant 0 : i32
    %680 = vector.broadcast %c0_i32_257 : i32 to vector<32x1xi32>
    %681 = arith.cmpi eq, %16, %680 : vector<32x1xi32>
    %c1_i32_258 = arith.constant 1 : i32
    %682 = tpu.dynamic_rotate %679 by %c1_i32_258 dim 0 : vector<32x128xf32>, i32 -> vector<32x128xf32>
    %cst_259 = arith.constant 0.000000e+00 : f32
    %683 = vector.shape_cast %681 : vector<32x1xi1> to vector<32x1xi1>
    %684 = vector.broadcast %683 : vector<32x1xi1> to vector<32x128xi1>
    %685 = vector.broadcast %cst_259 : f32 to vector<32x128xf32>
    %686 = arith.select %684, %685, %682 : vector<32x128xi1>, vector<32x128xf32>
    %c15_i32_260 = arith.constant 15 : i32
    %687 = vector.broadcast %c15_i32_260 : i32 to vector<32x1xi32>
    %688 = arith.cmpi eq, %16, %687 : vector<32x1xi32>
    %c31_i32_261 = arith.constant 31 : i32
    %689 = tpu.dynamic_rotate %679 by %c31_i32_261 dim 0 : vector<32x128xf32>, i32 -> vector<32x128xf32>
    %cst_262 = arith.constant 0.000000e+00 : f32
    %690 = vector.shape_cast %688 : vector<32x1xi1> to vector<32x1xi1>
    %691 = vector.broadcast %690 : vector<32x1xi1> to vector<32x128xi1>
    %692 = vector.broadcast %cst_262 : f32 to vector<32x128xf32>
    %693 = arith.select %691, %692, %689 : vector<32x128xi1>, vector<32x128xf32>
    %694 = arith.truncf %686 : vector<32x128xf32> to vector<32x128xbf16>
    %c5072 = arith.constant 5072 : index
    %c0_263 = arith.constant 0 : index
    %695 = vector.load %arg2[%c5072, %c0_263] : memref<5968x256xbf16, #tpu.memory_space<vmem>>, vector<128x64xbf16>
    %cst_264 = arith.constant dense<0.000000e+00> : vector<32x64xf32>
    %696 = tpu.matmul %694, %695, %cst_264 {dimension_numbers = #tpu.dot_dimension_numbers<[1], [0], [0], [1], [0, 0, 1, 1], [], []>} : vector<32x128xbf16>, vector<128x64xbf16>, vector<32x64xf32> -> vector<32x64xf32>
    %697 = arith.truncf %679 : vector<32x128xf32> to vector<32x128xbf16>
    %c5200 = arith.constant 5200 : index
    %c0_265 = arith.constant 0 : index
    %698 = vector.load %arg2[%c5200, %c0_265] : memref<5968x256xbf16, #tpu.memory_space<vmem>>, vector<128x64xbf16>
    %cst_266 = arith.constant dense<0.000000e+00> : vector<32x64xf32>
    %699 = tpu.matmul %697, %698, %cst_266 {dimension_numbers = #tpu.dot_dimension_numbers<[1], [0], [0], [1], [0, 0, 1, 1], [], []>} : vector<32x128xbf16>, vector<128x64xbf16>, vector<32x64xf32> -> vector<32x64xf32>
    %700 = arith.addf %696, %699 : vector<32x64xf32>
    %701 = arith.truncf %693 : vector<32x128xf32> to vector<32x128xbf16>
    %c5328 = arith.constant 5328 : index
    %c0_267 = arith.constant 0 : index
    %702 = vector.load %arg2[%c5328, %c0_267] : memref<5968x256xbf16, #tpu.memory_space<vmem>>, vector<128x64xbf16>
    %cst_268 = arith.constant dense<0.000000e+00> : vector<32x64xf32>
    %703 = tpu.matmul %701, %702, %cst_268 {dimension_numbers = #tpu.dot_dimension_numbers<[1], [0], [0], [1], [0, 0, 1, 1], [], []>} : vector<32x128xbf16>, vector<128x64xbf16>, vector<32x64xf32> -> vector<32x64xf32>
    %704 = arith.addf %700, %703 : vector<32x64xf32>
    %c34 = arith.constant 34 : index
    %c0_269 = arith.constant 0 : index
    %705 = vector.load %arg4[%c34, %c0_269] : memref<48x256xf32, #tpu.memory_space<vmem>>, vector<1x64xf32>
    %706 = vector.broadcast %705 : vector<1x64xf32> to vector<32x64xf32>
    %707 = arith.addf %704, %706 : vector<32x64xf32>
    %cst_270 = arith.constant dense<0.000000e+00> : vector<64xf32>
    %708 = vector.multi_reduction <add>, %707, %cst_270 [0] : vector<32x64xf32> to vector<64xf32>
    %709 = vector.shape_cast %708 : vector<64xf32> to vector<1x64xf32>
    %cst_271 = arith.constant 3.200000e+01 : f32
    %710 = vector.broadcast %cst_271 : f32 to vector<1x64xf32>
    %711 = arith.divf %709, %710 : vector<1x64xf32>
    %712 = arith.mulf %707, %707 : vector<32x64xf32>
    %cst_272 = arith.constant dense<0.000000e+00> : vector<64xf32>
    %713 = vector.multi_reduction <add>, %712, %cst_272 [0] : vector<32x64xf32> to vector<64xf32>
    %714 = vector.shape_cast %713 : vector<64xf32> to vector<1x64xf32>
    %cst_273 = arith.constant 3.200000e+01 : f32
    %715 = vector.broadcast %cst_273 : f32 to vector<1x64xf32>
    %716 = arith.divf %714, %715 : vector<1x64xf32>
    %717 = arith.mulf %711, %711 : vector<1x64xf32>
    %718 = arith.subf %716, %717 : vector<1x64xf32>
    %cst_274 = arith.constant 0.000000e+00 : f32
    %719 = vector.broadcast %cst_274 : f32 to vector<1x64xf32>
    %720 = arith.maximumf %718, %719 : vector<1x64xf32>
    %c35 = arith.constant 35 : index
    %c0_275 = arith.constant 0 : index
    %721 = vector.load %arg4[%c35, %c0_275] : memref<48x256xf32, #tpu.memory_space<vmem>>, vector<1x64xf32>
    %cst_276 = arith.constant 9.99999974E-6 : f32
    %722 = vector.broadcast %cst_276 : f32 to vector<1x64xf32>
    %723 = arith.addf %720, %722 : vector<1x64xf32>
    %724 = math.rsqrt %723 : vector<1x64xf32>
    %725 = arith.mulf %721, %724 : vector<1x64xf32>
    %c36 = arith.constant 36 : index
    %c0_277 = arith.constant 0 : index
    %726 = vector.load %arg4[%c36, %c0_277] : memref<48x256xf32, #tpu.memory_space<vmem>>, vector<1x64xf32>
    %727 = arith.mulf %711, %725 : vector<1x64xf32>
    %728 = arith.subf %726, %727 : vector<1x64xf32>
    %729 = vector.broadcast %725 : vector<1x64xf32> to vector<32x64xf32>
    %730 = arith.mulf %707, %729 : vector<32x64xf32>
    %731 = vector.broadcast %728 : vector<1x64xf32> to vector<32x64xf32>
    %732 = arith.addf %730, %731 : vector<32x64xf32>
    %cst_278 = arith.constant 5.000000e-01 : f32
    %733 = vector.broadcast %cst_278 : f32 to vector<32x64xf32>
    %734 = arith.mulf %733, %732 : vector<32x64xf32>
    %cst_279 = arith.constant 0.707106769 : f32
    %735 = vector.broadcast %cst_279 : f32 to vector<32x64xf32>
    %736 = arith.mulf %732, %735 : vector<32x64xf32>
    %737 = math.erf %736 : vector<32x64xf32>
    %cst_280 = arith.constant 1.000000e+00 : f32
    %738 = vector.broadcast %cst_280 : f32 to vector<32x64xf32>
    %739 = arith.addf %738, %737 : vector<32x64xf32>
    %740 = arith.mulf %734, %739 : vector<32x64xf32>
    %741 = vector.extract_strided_slice %71 {offsets = [0, 768], sizes = [2, 64], strides = [1, 1]} : vector<2x832xf32> to vector<2x64xf32>
    %c37 = arith.constant 37 : index
    %c0_281 = arith.constant 0 : index
    %742 = vector.load %arg4[%c37, %c0_281] : memref<48x256xf32, #tpu.memory_space<vmem>>, vector<1x64xf32>
    %743 = vector.broadcast %742 : vector<1x64xf32> to vector<2x64xf32>
    %744 = arith.addf %741, %743 : vector<2x64xf32>
    %cst_282 = arith.constant 5.000000e-01 : f32
    %745 = vector.broadcast %cst_282 : f32 to vector<2x64xf32>
    %746 = arith.mulf %745, %744 : vector<2x64xf32>
    %cst_283 = arith.constant 0.707106769 : f32
    %747 = vector.broadcast %cst_283 : f32 to vector<2x64xf32>
    %748 = arith.mulf %744, %747 : vector<2x64xf32>
    %749 = math.erf %748 : vector<2x64xf32>
    %cst_284 = arith.constant 1.000000e+00 : f32
    %750 = vector.broadcast %cst_284 : f32 to vector<2x64xf32>
    %751 = arith.addf %750, %749 : vector<2x64xf32>
    %752 = arith.mulf %746, %751 : vector<2x64xf32>
    %753 = vector.shape_cast %752 : vector<2x64xf32> to vector<2x1x64xf32>
    %754 = vector.shape_cast %753 : vector<2x1x64xf32> to vector<2x1x64xf32>
    %755 = vector.broadcast %754 : vector<2x1x64xf32> to vector<2x16x64xf32>
    %756 = vector.shape_cast %755 : vector<2x16x64xf32> to vector<32x64xf32>
    %757 = arith.addf %740, %756 : vector<32x64xf32>
    %c0_i32_285 = arith.constant 0 : i32
    %758 = vector.broadcast %c0_i32_285 : i32 to vector<32x1xi32>
    %759 = arith.cmpi eq, %16, %758 : vector<32x1xi32>
    %c1_i32_286 = arith.constant 1 : i32
    %760 = tpu.dynamic_rotate %757 by %c1_i32_286 dim 0 : vector<32x64xf32>, i32 -> vector<32x64xf32>
    %cst_287 = arith.constant 0.000000e+00 : f32
    %761 = vector.shape_cast %759 : vector<32x1xi1> to vector<32x1xi1>
    %762 = vector.broadcast %761 : vector<32x1xi1> to vector<32x64xi1>
    %763 = vector.broadcast %cst_287 : f32 to vector<32x64xf32>
    %764 = arith.select %762, %763, %760 : vector<32x64xi1>, vector<32x64xf32>
    %c15_i32_288 = arith.constant 15 : i32
    %765 = vector.broadcast %c15_i32_288 : i32 to vector<32x1xi32>
    %766 = arith.cmpi eq, %16, %765 : vector<32x1xi32>
    %c31_i32_289 = arith.constant 31 : i32
    %767 = tpu.dynamic_rotate %757 by %c31_i32_289 dim 0 : vector<32x64xf32>, i32 -> vector<32x64xf32>
    %cst_290 = arith.constant 0.000000e+00 : f32
    %768 = vector.shape_cast %766 : vector<32x1xi1> to vector<32x1xi1>
    %769 = vector.broadcast %768 : vector<32x1xi1> to vector<32x64xi1>
    %770 = vector.broadcast %cst_290 : f32 to vector<32x64xf32>
    %771 = arith.select %769, %770, %767 : vector<32x64xi1>, vector<32x64xf32>
    %772 = arith.truncf %764 : vector<32x64xf32> to vector<32x64xbf16>
    %c5456 = arith.constant 5456 : index
    %c0_291 = arith.constant 0 : index
    %773 = vector.load %arg2[%c5456, %c0_291] : memref<5968x256xbf16, #tpu.memory_space<vmem>>, vector<64x64xbf16>
    %cst_292 = arith.constant dense<0.000000e+00> : vector<32x64xf32>
    %774 = tpu.matmul %772, %773, %cst_292 {dimension_numbers = #tpu.dot_dimension_numbers<[1], [0], [0], [1], [0, 0, 1, 1], [], []>} : vector<32x64xbf16>, vector<64x64xbf16>, vector<32x64xf32> -> vector<32x64xf32>
    %775 = arith.truncf %757 : vector<32x64xf32> to vector<32x64xbf16>
    %c5520 = arith.constant 5520 : index
    %c0_293 = arith.constant 0 : index
    %776 = vector.load %arg2[%c5520, %c0_293] : memref<5968x256xbf16, #tpu.memory_space<vmem>>, vector<64x64xbf16>
    %cst_294 = arith.constant dense<0.000000e+00> : vector<32x64xf32>
    %777 = tpu.matmul %775, %776, %cst_294 {dimension_numbers = #tpu.dot_dimension_numbers<[1], [0], [0], [1], [0, 0, 1, 1], [], []>} : vector<32x64xbf16>, vector<64x64xbf16>, vector<32x64xf32> -> vector<32x64xf32>
    %778 = arith.addf %774, %777 : vector<32x64xf32>
    %779 = arith.truncf %771 : vector<32x64xf32> to vector<32x64xbf16>
    %c5584 = arith.constant 5584 : index
    %c0_295 = arith.constant 0 : index
    %780 = vector.load %arg2[%c5584, %c0_295] : memref<5968x256xbf16, #tpu.memory_space<vmem>>, vector<64x64xbf16>
    %cst_296 = arith.constant dense<0.000000e+00> : vector<32x64xf32>
    %781 = tpu.matmul %779, %780, %cst_296 {dimension_numbers = #tpu.dot_dimension_numbers<[1], [0], [0], [1], [0, 0, 1, 1], [], []>} : vector<32x64xbf16>, vector<64x64xbf16>, vector<32x64xf32> -> vector<32x64xf32>
    %782 = arith.addf %778, %781 : vector<32x64xf32>
    %c38 = arith.constant 38 : index
    %c0_297 = arith.constant 0 : index
    %783 = vector.load %arg4[%c38, %c0_297] : memref<48x256xf32, #tpu.memory_space<vmem>>, vector<1x64xf32>
    %784 = vector.broadcast %783 : vector<1x64xf32> to vector<32x64xf32>
    %785 = arith.addf %782, %784 : vector<32x64xf32>
    %cst_298 = arith.constant dense<0.000000e+00> : vector<64xf32>
    %786 = vector.multi_reduction <add>, %785, %cst_298 [0] : vector<32x64xf32> to vector<64xf32>
    %787 = vector.shape_cast %786 : vector<64xf32> to vector<1x64xf32>
    %cst_299 = arith.constant 3.200000e+01 : f32
    %788 = vector.broadcast %cst_299 : f32 to vector<1x64xf32>
    %789 = arith.divf %787, %788 : vector<1x64xf32>
    %790 = arith.mulf %785, %785 : vector<32x64xf32>
    %cst_300 = arith.constant dense<0.000000e+00> : vector<64xf32>
    %791 = vector.multi_reduction <add>, %790, %cst_300 [0] : vector<32x64xf32> to vector<64xf32>
    %792 = vector.shape_cast %791 : vector<64xf32> to vector<1x64xf32>
    %cst_301 = arith.constant 3.200000e+01 : f32
    %793 = vector.broadcast %cst_301 : f32 to vector<1x64xf32>
    %794 = arith.divf %792, %793 : vector<1x64xf32>
    %795 = arith.mulf %789, %789 : vector<1x64xf32>
    %796 = arith.subf %794, %795 : vector<1x64xf32>
    %cst_302 = arith.constant 0.000000e+00 : f32
    %797 = vector.broadcast %cst_302 : f32 to vector<1x64xf32>
    %798 = arith.maximumf %796, %797 : vector<1x64xf32>
    %c39 = arith.constant 39 : index
    %c0_303 = arith.constant 0 : index
    %799 = vector.load %arg4[%c39, %c0_303] : memref<48x256xf32, #tpu.memory_space<vmem>>, vector<1x64xf32>
    %cst_304 = arith.constant 9.99999974E-6 : f32
    %800 = vector.broadcast %cst_304 : f32 to vector<1x64xf32>
    %801 = arith.addf %798, %800 : vector<1x64xf32>
    %802 = math.rsqrt %801 : vector<1x64xf32>
    %803 = arith.mulf %799, %802 : vector<1x64xf32>
    %c40 = arith.constant 40 : index
    %c0_305 = arith.constant 0 : index
    %804 = vector.load %arg4[%c40, %c0_305] : memref<48x256xf32, #tpu.memory_space<vmem>>, vector<1x64xf32>
    %805 = arith.mulf %789, %803 : vector<1x64xf32>
    %806 = arith.subf %804, %805 : vector<1x64xf32>
    %807 = vector.broadcast %803 : vector<1x64xf32> to vector<32x64xf32>
    %808 = arith.mulf %785, %807 : vector<32x64xf32>
    %809 = vector.broadcast %806 : vector<1x64xf32> to vector<32x64xf32>
    %810 = arith.addf %808, %809 : vector<32x64xf32>
    %cst_306 = arith.constant 5.000000e-01 : f32
    %811 = vector.broadcast %cst_306 : f32 to vector<32x64xf32>
    %812 = arith.mulf %811, %810 : vector<32x64xf32>
    %cst_307 = arith.constant 0.707106769 : f32
    %813 = vector.broadcast %cst_307 : f32 to vector<32x64xf32>
    %814 = arith.mulf %810, %813 : vector<32x64xf32>
    %815 = math.erf %814 : vector<32x64xf32>
    %cst_308 = arith.constant 1.000000e+00 : f32
    %816 = vector.broadcast %cst_308 : f32 to vector<32x64xf32>
    %817 = arith.addf %816, %815 : vector<32x64xf32>
    %818 = arith.mulf %812, %817 : vector<32x64xf32>
    %819 = arith.truncf %679 : vector<32x128xf32> to vector<32x128xbf16>
    %c5648 = arith.constant 5648 : index
    %c0_309 = arith.constant 0 : index
    %820 = vector.load %arg2[%c5648, %c0_309] : memref<5968x256xbf16, #tpu.memory_space<vmem>>, vector<128x64xbf16>
    %cst_310 = arith.constant dense<0.000000e+00> : vector<32x64xf32>
    %821 = tpu.matmul %819, %820, %cst_310 {dimension_numbers = #tpu.dot_dimension_numbers<[1], [0], [0], [1], [0, 0, 1, 1], [], []>} : vector<32x128xbf16>, vector<128x64xbf16>, vector<32x64xf32> -> vector<32x64xf32>
    %c41 = arith.constant 41 : index
    %c0_311 = arith.constant 0 : index
    %822 = vector.load %arg4[%c41, %c0_311] : memref<48x256xf32, #tpu.memory_space<vmem>>, vector<1x64xf32>
    %823 = vector.broadcast %822 : vector<1x64xf32> to vector<32x64xf32>
    %824 = arith.addf %821, %823 : vector<32x64xf32>
    %825 = arith.addf %818, %824 : vector<32x64xf32>
    %c0_i32_312 = arith.constant 0 : i32
    %826 = vector.broadcast %c0_i32_312 : i32 to vector<32x1xi32>
    %827 = arith.cmpi eq, %16, %826 : vector<32x1xi32>
    %c1_i32_313 = arith.constant 1 : i32
    %828 = tpu.dynamic_rotate %825 by %c1_i32_313 dim 0 : vector<32x64xf32>, i32 -> vector<32x64xf32>
    %cst_314 = arith.constant 0.000000e+00 : f32
    %829 = vector.shape_cast %827 : vector<32x1xi1> to vector<32x1xi1>
    %830 = vector.broadcast %829 : vector<32x1xi1> to vector<32x64xi1>
    %831 = vector.broadcast %cst_314 : f32 to vector<32x64xf32>
    %832 = arith.select %830, %831, %828 : vector<32x64xi1>, vector<32x64xf32>
    %c15_i32_315 = arith.constant 15 : i32
    %833 = vector.broadcast %c15_i32_315 : i32 to vector<32x1xi32>
    %834 = arith.cmpi eq, %16, %833 : vector<32x1xi32>
    %c31_i32_316 = arith.constant 31 : i32
    %835 = tpu.dynamic_rotate %825 by %c31_i32_316 dim 0 : vector<32x64xf32>, i32 -> vector<32x64xf32>
    %cst_317 = arith.constant 0.000000e+00 : f32
    %836 = vector.shape_cast %834 : vector<32x1xi1> to vector<32x1xi1>
    %837 = vector.broadcast %836 : vector<32x1xi1> to vector<32x64xi1>
    %838 = vector.broadcast %cst_317 : f32 to vector<32x64xf32>
    %839 = arith.select %837, %838, %835 : vector<32x64xi1>, vector<32x64xf32>
    %840 = arith.truncf %832 : vector<32x64xf32> to vector<32x64xbf16>
    %c5776 = arith.constant 5776 : index
    %c0_318 = arith.constant 0 : index
    %841 = vector.load %arg2[%c5776, %c0_318] : memref<5968x256xbf16, #tpu.memory_space<vmem>>, vector<64x6xbf16>
    %cst_319 = arith.constant dense<0.000000e+00> : vector<32x6xf32>
    %842 = tpu.matmul %840, %841, %cst_319 {dimension_numbers = #tpu.dot_dimension_numbers<[1], [0], [0], [1], [0, 0, 1, 1], [], []>} : vector<32x64xbf16>, vector<64x6xbf16>, vector<32x6xf32> -> vector<32x6xf32>
    %843 = arith.truncf %825 : vector<32x64xf32> to vector<32x64xbf16>
    %c5840 = arith.constant 5840 : index
    %c0_320 = arith.constant 0 : index
    %844 = vector.load %arg2[%c5840, %c0_320] : memref<5968x256xbf16, #tpu.memory_space<vmem>>, vector<64x6xbf16>
    %cst_321 = arith.constant dense<0.000000e+00> : vector<32x6xf32>
    %845 = tpu.matmul %843, %844, %cst_321 {dimension_numbers = #tpu.dot_dimension_numbers<[1], [0], [0], [1], [0, 0, 1, 1], [], []>} : vector<32x64xbf16>, vector<64x6xbf16>, vector<32x6xf32> -> vector<32x6xf32>
    %846 = arith.addf %842, %845 : vector<32x6xf32>
    %847 = arith.truncf %839 : vector<32x64xf32> to vector<32x64xbf16>
    %c5904 = arith.constant 5904 : index
    %c0_322 = arith.constant 0 : index
    %848 = vector.load %arg2[%c5904, %c0_322] : memref<5968x256xbf16, #tpu.memory_space<vmem>>, vector<64x6xbf16>
    %cst_323 = arith.constant dense<0.000000e+00> : vector<32x6xf32>
    %849 = tpu.matmul %847, %848, %cst_323 {dimension_numbers = #tpu.dot_dimension_numbers<[1], [0], [0], [1], [0, 0, 1, 1], [], []>} : vector<32x64xbf16>, vector<64x6xbf16>, vector<32x6xf32> -> vector<32x6xf32>
    %850 = arith.addf %846, %849 : vector<32x6xf32>
    %c42 = arith.constant 42 : index
    %c0_324 = arith.constant 0 : index
    %851 = vector.load %arg4[%c42, %c0_324] : memref<48x256xf32, #tpu.memory_space<vmem>>, vector<1x6xf32>
    %852 = vector.broadcast %851 : vector<1x6xf32> to vector<32x6xf32>
    %853 = arith.addf %850, %852 : vector<32x6xf32>
    %854 = vector.shape_cast %853 : vector<32x6xf32> to vector<2x16x6xf32>
    %c0_325 = arith.constant 0 : index
    %c0_326 = arith.constant 0 : index
    %c0_327 = arith.constant 0 : index
    %855 = vector.load %arg5[%c0_325, %c0_326, %c0_327] : memref<2x16x6xf32, #tpu.memory_space<vmem>>, vector<2x16x6xf32>
    tpu.vector_store %arg5[%c0_325, %c0_326, %c0_327], %854 {strides = array<i32>} : memref<2x16x6xf32, #tpu.memory_space<vmem>>, vector<2x16x6xf32>,
    return
  }
}

</mosaic_0001>

<llo_original>
// kernel: diffusion_forward.1
$region0: #{diffusion_forward.1}
  #allocation0 [shape = 'u32[]', space=smem, size = 0x4, offset = 0x4, fixed_abs, tag = 'smem constant byte address 0x4 - core index']
  #allocation1 [shape = 'u32[72,128]{1,0:T(1,128)}', space=vmem, size = 0x9000, scoped, tag = 'internal scratch']
  %s0 = inlined_call_operand.vmem [shape: f32[2,16,6], index: 0, kind: input, shape index: {}]
  %s1 = inlined_call_operand.vmem [shape: f32[2,1], index: 1, kind: input, shape index: {}]
  %s2 = inlined_call_operand.hbm [shape: bf16[5968,256], index: 2, kind: input, shape index: {}]
  %s3 = inlined_call_operand.vmem [shape: bf16[128,832], index: 3, kind: input, shape index: {}]
  %s4 = inlined_call_operand.hbm [shape: f32[48,256], index: 4, kind: input, shape index: {}]
  %s5 = inlined_call_operand.vmem [shape: f32[2,16,6], index: 5, kind: output, shape index: {}]
  %s6 = sld [smem:[#allocation0]]
  $region38: #{diffusion_forward.1} parent=0
    _
  %s8 = ssub.s32 1, %s6
  %s9 = scalar_select 0, %s8, %s6
  $region1: #{diffusion_forward.1} parent=0
    #allocation2 [shape = 'u8[3055616]{0}', space=vmem, size = 0x2ea000, scoped, tag = 'input window, operand 2, single buffered']
    #allocation3 [shape = 's32[1]{0}', space=sflag, size = 0x4, scoped, tag = 'scoped memory for diffusion_forward.1']
    #allocation4 [shape = 'u8[49152]{0}', space=vmem, size = 0xc000, scoped, tag = 'input window, operand 4, single buffered']
    #allocation5 [shape = 's32[1]{0}', space=sflag, size = 0x4, scoped, tag = 'scoped memory for diffusion_forward.1']
    %10 = vsyncpa [#allocation3], 0
    %11 = vsyncpa [#allocation5], 0
    // Predicated region
    $region2: #{diffusion_forward.1} parent=1 // pred_check
      _
    $region3: #{diffusion_forward.1} parent=1 // pred_check_branch
      %13 = sbr.rel (0) target = $region5
    $region4: #{diffusion_forward.1} parent=1 // pred_region
      _
    $region5: #{diffusion_forward.1} parent=1 // pred_fallthru
      _
    // Predicated region
    $region6: #{diffusion_forward.1} parent=1 // pred_check
      _
    $region7: #{diffusion_forward.1} parent=1 // pred_check_branch
      %15 = sbr.rel (0) target = $region9
    $region8: #{diffusion_forward.1} parent=1 // pred_region
      _
    $region9: #{diffusion_forward.1} parent=1 // pred_fallthru
      _
    // Predicated region
    $region10: #{diffusion_forward.1} parent=1 // pred_check
      _
    $region11: #{diffusion_forward.1} parent=1 // pred_check_branch
      %17 = sbr.rel (0) target = $region13
    $region12: #{diffusion_forward.1} parent=1 // pred_region
      %19 = vsyncadd [#allocation3], 0
      %s20 = sshll.u32 %s2, 4
      %s21 = int_to_ptr.hbm [resolvable:$true] %s20
      %s22 = sshll.u32 [#allocation2], 4
      %s23 = int_to_ptr.vmem [resolvable:$true] %s22
      %28 = dma.hbm_to_vmem [thread:$0]  %s21, 95488, %s23, [#allocation3], 128, 128, 8
    $region13: #{diffusion_forward.1} parent=1 // pred_fallthru
      _
    // Predicated region
    $region14: #{diffusion_forward.1} parent=1 // pred_check
      _
    $region15: #{diffusion_forward.1} parent=1 // pred_check_branch
      %30 = sbr.rel (0) target = $region17
    $region16: #{diffusion_forward.1} parent=1 // pred_region
      _
    $region17: #{diffusion_forward.1} parent=1 // pred_fallthru
      _
    // Predicated region
    $region18: #{diffusion_forward.1} parent=1 // pred_check
      _
    $region19: #{diffusion_forward.1} parent=1 // pred_check_branch
      %32 = sbr.rel (0) target = $region21
    $region20: #{diffusion_forward.1} parent=1 // pred_region
      %34 = vsyncadd [#allocation5], 0
      %s35 = sshll.u32 %s4, 4
      %s36 = int_to_ptr.hbm [resolvable:$true] %s35
      %s37 = sshll.u32 [#allocation4], 4
      %s38 = int_to_ptr.vmem [resolvable:$true] %s37
      %43 = dma.hbm_to_vmem [thread:$0]  %s36, 1536, %s38, [#allocation5], 256, 256, 16
    $region21: #{diffusion_forward.1} parent=1 // pred_fallthru
      _
    // Predicated region
    $region22: #{diffusion_forward.1} parent=1 // pred_check
      _
    $region23: #{diffusion_forward.1} parent=1 // pred_check_branch
      %45 = sbr.rel (0) target = $region25
    $region24: #{diffusion_forward.1} parent=1 // pred_region
      %47 = dma.done [#allocation3], 95488
    $region25: #{diffusion_forward.1} parent=1 // pred_fallthru
      _
    // Predicated region
    $region26: #{diffusion_forward.1} parent=1 // pred_check
      _
    $region27: #{diffusion_forward.1} parent=1 // pred_check_branch
      %49 = sbr.rel (0) target = $region29
    $region28: #{diffusion_forward.1} parent=1 // pred_region
      %51 = dma.done [#allocation5], 1536
    $region29: #{diffusion_forward.1} parent=1 // pred_fallthru
      _
    %v53 = vlaneseq
    %v54 = vshrl.u32 %v53, 7
    %v55 = vadd.s32 %v54, 8
    %v56 = vadd.s32 %v54, 16
    %v57 = vadd.s32 %v54, 24
    %vm58 = vcmp.lt.s32.totalorder %v54, 0
    %v59 = vsub.s32 0, %v54
    %v60 = vsel %vm58, %v59, %v54
    %v61 = vshrl.u32 %v60, 4
    %v62 = vand.u32 %v60, 15
    %v63 = vsub.s32 0, %v62
    %v64 = vsel %vm58, %v63, %v62
    %vm65 = vcmp.lt.s32.totalorder %v55, 0
    %v66 = vsub.s32 0, %v55
    %v67 = vsel %vm65, %v66, %v55
    %v68 = vshrl.u32 %v67, 4
    %v69 = vand.u32 %v67, 15
    %v70 = vsub.s32 0, %v69
    %v71 = vsel %vm65, %v70, %v69
    %vm72 = vcmp.lt.s32.totalorder %v56, 0
    %v73 = vsub.s32 0, %v56
    %v74 = vsel %vm72, %v73, %v56
    %v75 = vshrl.u32 %v74, 4
    %v76 = vand.u32 %v74, 15
    %v77 = vsub.s32 0, %v76
    %v78 = vsel %vm72, %v77, %v76
    %vm79 = vcmp.lt.s32.totalorder %v57, 0
    %v80 = vsub.s32 0, %v57
    %v81 = vsel %vm79, %v80, %v57
    %v82 = vshrl.u32 %v81, 4
    %v83 = vand.u32 %v81, 15
    %v84 = vsub.s32 0, %v83
    %v85 = vsel %vm79, %v84, %v83
    %vm86 = vcmp.ne.s32.totalorder %v64, 0
    %vm87 = vcmp.ne.s32.totalorder %v71, 0
    %vm88 = vcmp.ne.s32.totalorder %v78, 0
    %vm89 = vcmp.ne.s32.totalorder %v85, 0
    %vm90 = vcmp.lt.s32.totalorder %v64, 0
    %vm91 = vcmp.lt.s32.totalorder %v71, 0
    %vm92 = vcmp.lt.s32.totalorder %v78, 0
    %vm93 = vcmp.lt.s32.totalorder %v85, 0
    %vm94 = vmand %vm90, %vm86
    %vm95 = vmand %vm91, %vm87
    %vm96 = vmand %vm92, %vm88
    %vm97 = vmand %vm93, %vm89
    %v98 = vadd.s32 %v64, 16
    %v99 = vadd.s32 %v71, 16
    %v100 = vadd.s32 %v78, 16
    %v101 = vadd.s32 %v85, 16
    %v102 = vsel %vm94, %v98, %v64
    %v103 = vsel %vm95, %v99, %v71
    %v104 = vsel %vm96, %v100, %v78
    %v105 = vsel %vm97, %v101, %v85
    %v106 = vld [vmem:[%s1] sm:$0x3]
    %v107 = vlaneseq
    %v108 = vand.u32 %v107, 127
    %vm109 = vcmp.lt.s32.totalorder %v108, 0
    %v110 = vsub.s32 0, %v108
    %v111 = vsel %vm109, %v110, %v108
    %v112 = vshrl.u32 %v111, 4
    %v113 = vand.u32 %v111, 15
    %v114 = vsub.s32 0, %v113
    %v115 = vsel %vm109, %v114, %v113
    %vm116 = vcmp.ne.s32.totalorder %v115, 0
    %vm117 = vcmp.lt.s32.totalorder %v115, 0
    %vm118 = vmand %vm117, %vm116
    %v119 = vadd.s32 %v115, 16
    %v120 = vsel %vm118, %v119, %v115
    %v121 = vcvt.s32.f32 %v120
    %v122 = vmul.f32 %v121, -0.6140227
    %v123 = vmul.f32 %v122, 1.442695
    %v124 = vpow.pop %v123
    %126 = vset.pattern.permute.xlu0 0
    %127 = vperm.xlu0 %126, %v106
    %v128 = vpop.permute.xlu0 %127
    %v130 = vmul.f32 %v128, %v124
    %vm131 = vcmp.lt.s32.totalorder %v108, 16
    %v132 = vand.u32 2147483647, %v130
    %vm133 = vcmp.le.f32.partialorder %v132, 0.7853982
    %vm134 = vcmp.lt.s32.totalorder %v130, 0
    %v135 = vand.u32 %v130, 2139095040
    %v136 = vshrl.u32 %v135, 23
    %v137 = vsub.s32 %v136, 127
    %v138 = vand.u32 2147483647, %v130
    %v139 = vand.u32 %v138, 8388607
    %v140 = vor.u32 %v139, 8388608
    %v141 = vsub.s32 0, %v140
    %v142 = vadd.s32 %v137, 1
    %vm143 = vcmp.gt.s32.totalorder %v142, 0
    %v144 = vsel %vm143, %v142, 0
    %v145 = vshrl.u32 %v144, 5
    %v146 = vand.u32 %v144, 31
    %v147 = vsub.s32 32, %v146
    %v148 = vshrl.u32 683565275, %v147
    %v149 = vshll.u32 683565275, %v146
    %v150 = vshrl.u32 2475754826, %v147
    %v151 = vor.u32 %v149, %v150
    %v152 = vshll.u32 2475754826, %v146
    %v153 = vshrl.u32 2131351028, %v147
    %v154 = vor.u32 %v152, %v153
    %v155 = vshll.u32 2131351028, %v146
    %v156 = vshrl.u32 2102212464, %v147
    %v157 = vor.u32 %v155, %v156
    %v158 = vshll.u32 2102212464, %v146
    %v159 = vshrl.u32 920167782, %v147
    %v160 = vor.u32 %v158, %v159
    %v161 = vshll.u32 920167782, %v146
    %v162 = vshrl.u32 1326507024, %v147
    %v163 = vor.u32 %v161, %v162
    %vm164 = vcmp.lt.s32.totalorder %v145, 1
    %vm165 = vcmp.lt.s32.totalorder %v145, 2
    %vm166 = vcmp.lt.s32.totalorder %v145, 3
    %vm167 = vcmp.lt.s32.totalorder %v145, 4
    %v168 = vsel %vm164, %v148, %v151
    %v169 = vsel %vm167, %v157, 2102212464
    %v170 = vsel %vm166, %v154, %v169
    %v171 = vsel %vm165, %v168, %v170
    %v172 = vsel %vm164, %v151, %v154
    %v173 = vsel %vm167, %v160, 920167782
    %v174 = vsel %vm166, %v157, %v173
    %v175 = vsel %vm165, %v172, %v174
    %v176 = vsel %vm164, %v154, %v157
    %v177 = vsel %vm167, %v163, 1326507024
    %v178 = vsel %vm166, %v160, %v177
    %v179 = vsel %vm165, %v176, %v178
    %v180 = vshll.u32 %v140, 8
    %v181 = vand.u32 %v180, 65535
    %v182 = vshrl.u32 %v180, 16
    %v183 = vand.u32 %v179, 65535
    %v184 = vshrl.u32 %v179, 16
    %v185 = vmul.u32 %v181, %v183
    %v186 = vmul.u32 %v181, %v184
    %v187 = vmul.u32 %v182, %v183
    %v188 = vmul.u32 %v182, %v184
    %v189 = vshll.u32 %v186, 16
    %v190 = vshrl.u32 %v186, 16
    %v191 = vshll.u32 %v187, 16
    %v192 = vshrl.u32 %v187, 16
    %vm193 = vc.u32 %v185, %v189
    %v194 = vsel %vm193, 1, 0
    %v195 = vadd.s32 %v185, %v189
    %v196 = vadd.s32 %v188, %v194
    %vm197 = vc.u32 %v195, %v191
    %v198 = vsel %vm197, 1, 0
    %v199 = vadd.s32 %v195, %v191
    %v200 = vadd.s32 %v196, %v198
    %v201 = vadd.s32 %v200, %v190
    %v202 = vadd.s32 %v201, %v192
    %v203 = vand.u32 %v180, 65535
    %v204 = vshrl.u32 %v180, 16
    %v205 = vand.u32 %v175, 65535
    %v206 = vshrl.u32 %v175, 16
    %v207 = vmul.u32 %v203, %v205
    %v208 = vmul.u32 %v203, %v206
    %v209 = vmul.u32 %v204, %v205
    %v210 = vmul.u32 %v204, %v206
    %v211 = vshll.u32 %v208, 16
    %v212 = vshrl.u32 %v208, 16
    %v213 = vshll.u32 %v209, 16
    %v214 = vshrl.u32 %v209, 16
    %vm215 = vc.u32 %v207, %v211
    %v216 = vsel %vm215, 1, 0
    %v217 = vadd.s32 %v207, %v211
    %v218 = vadd.s32 %v210, %v216
    %vm219 = vc.u32 %v217, %v213
    %v220 = vsel %vm219, 1, 0
    %v221 = vadd.s32 %v217, %v213
    %v222 = vadd.s32 %v218, %v220
    %v223 = vadd.s32 %v222, %v212
    %v224 = vadd.s32 %v223, %v214
    %v225 = vmul.u32 %v180, %v171
    %v226 = vadd.s32 %v202, %v221
    %vm227 = vc.u32 %v202, %v221
    %v228 = vadd.s32 %v224, 1
    %v229 = vsel %vm227, %v228, %v224
    %v230 = vadd.s32 %v225, %v229
    %v231 = vadd.s32 %v230, 536870912
    %v232 = vshrl.u32 %v231, 30
    %v233 = vshll.u32 %v232, 30
    %v234 = vsub.s32 %v230, %v233
    %vm235 = vcmp.lt.s32.totalorder %v234, 0
    %v236 = vsub.s32 0, %v234
    %v237 = vsel %vm235, %v236, %v234
    %v238 = vclz %v237
    %v239 = vsub.s32 %v238, 2
    %vm240 = vcmp.gt.s32.totalorder 0, %v239
    %v241 = vsel %vm240, 0, %v239
    %v242 = vsub.s32 32, %v241
    %v243 = vshll.u32 %v234, %v241
    %v244 = vshrl.u32 %v226, %v242
    %v245 = vor.u32 %v243, %v244
    %v246 = vsub.s32 4294967266, %v241
    %v247 = vadd.s32 %v246, 127
    %v248 = vshll.u32 %v247, 23
    %v249 = vor.u32 4788187, %v248
    %v250 = vand.u32 2147483647, %v249
    %v252 = vcvt.s32.f32 %v245
    %v253 = vmul.f32 %v252, %v250
    %v254 = vxor.u32 %v253, 2147483648
    %v255 = vsel %vm134, %v254, %v253
    %v256 = vsub.s32 4, %v232
    %v257 = vsel %vm134, %v256, %v232
    %v258 = vsel %vm133, %v130, %v255
    %v259 = vsel %vm133, 0, %v257
    %v260 = vmul.f32 %v258, %v258
    %v261 = vmul.f32 %v260, -0.001358992
    %v262 = vadd.f32 %v261, 0.041655596
    %v263 = vmul.f32 %v260, %v262
    %v264 = vadd.f32 %v263, -0.4999988
    %v265 = vmul.f32 %v260, %v264
    %v266 = vadd.f32 1.0, %v265
    %v267 = vmul.f32 %v258, %v258
    %v268 = vmul.f32 %v267, -0.00019511016
    %v269 = vadd.f32 %v268, 0.008332121
    %v270 = vmul.f32 %v267, %v269
    %v271 = vadd.f32 %v270, -0.16666654
    %v272 = vmul.f32 %v267, %v271
    %v273 = vadd.f32 %v272, 1.0
    %v274 = vmul.f32 %v273, %v258
    %vm275 = vweird.f32 %v130
    %v276 = vadd.s32 %v259, 3
    %v277 = vand.u32 %v276, 3
    %vm278 = vcmp.lt.s32.totalorder %v277, 2
    %vm279 = vcmp.eq.s32.totalorder %v277, 0
    %v280 = vxor.u32 %v274, 2147483648
    %v281 = vsel %vm279, %v266, %v280
    %vm282 = vcmp.eq.s32.totalorder %v277, 2
    %v283 = vxor.u32 %v266, 2147483648
    %v284 = vsel %vm282, %v283, %v274
    %v285 = vsel %vm278, %v281, %v284
    %v286 = vsel %vm275, nan, %v285
    %v287 = vand.u32 2147483647, %v130
    %vm288 = vcmp.le.f32.partialorder %v287, 0.7853982
    %vm289 = vcmp.lt.s32.totalorder %v130, 0
    %v290 = vand.u32 %v130, 2139095040
    %v291 = vshrl.u32 %v290, 23
    %v292 = vsub.s32 %v291, 127
    %v293 = vand.u32 2147483647, %v130
    %v294 = vand.u32 %v293, 8388607
    %v295 = vor.u32 %v294, 8388608
    %v296 = vsub.s32 0, %v295
    %v297 = vadd.s32 %v292, 1
    %vm298 = vcmp.gt.s32.totalorder %v297, 0
    %v299 = vsel %vm298, %v297, 0
    %v300 = vshrl.u32 %v299, 5
    %v301 = vand.u32 %v299, 31
    %v302 = vsub.s32 32, %v301
    %v303 = vshrl.u32 683565275, %v302
    %v304 = vshll.u32 683565275, %v301
    %v305 = vshrl.u32 2475754826, %v302
    %v306 = vor.u32 %v304, %v305
    %v307 = vshll.u32 2475754826, %v301
    %v308 = vshrl.u32 2131351028, %v302
    %v309 = vor.u32 %v307, %v308
    %v310 = vshll.u32 2131351028, %v301
    %v311 = vshrl.u32 2102212464, %v302
    %v312 = vor.u32 %v310, %v311
    %v313 = vshll.u32 2102212464, %v301
    %v314 = vshrl.u32 920167782, %v302
    %v315 = vor.u32 %v313, %v314
    %v316 = vshll.u32 920167782, %v301
    %v317 = vshrl.u32 1326507024, %v302
    %v318 = vor.u32 %v316, %v317
    %vm319 = vcmp.lt.s32.totalorder %v300, 1
    %vm320 = vcmp.lt.s32.totalorder %v300, 2
    %vm321 = vcmp.lt.s32.totalorder %v300, 3
    %vm322 = vcmp.lt.s32.totalorder %v300, 4
    %v323 = vsel %vm319, %v303, %v306
    %v324 = vsel %vm322, %v312, 2102212464
    %v325 = vsel %vm321, %v309, %v324
    %v326 = vsel %vm320, %v323, %v325
    %v327 = vsel %vm319, %v306, %v309
    %v328 = vsel %vm322, %v315, 920167782
    %v329 = vsel %vm321, %v312, %v328
    %v330 = vsel %vm320, %v327, %v329
    %v331 = vsel %vm319, %v309, %v312
    %v332 = vsel %vm322, %v318, 1326507024
    %v333 = vsel %vm321, %v315, %v332
    %v334 = vsel %vm320, %v331, %v333
    %v335 = vshll.u32 %v295, 8
    %v336 = vand.u32 %v335, 65535
    %v337 = vshrl.u32 %v335, 16
    %v338 = vand.u32 %v334, 65535
    %v339 = vshrl.u32 %v334, 16
    %v340 = vmul.u32 %v336, %v338
    %v341 = vmul.u32 %v336, %v339
    %v342 = vmul.u32 %v337, %v338
    %v343 = vmul.u32 %v337, %v339
    %v344 = vshll.u32 %v341, 16
    %v345 = vshrl.u32 %v341, 16
    %v346 = vshll.u32 %v342, 16
    %v347 = vshrl.u32 %v342, 16
    %vm348 = vc.u32 %v340, %v344
    %v349 = vsel %vm348, 1, 0
    %v350 = vadd.s32 %v340, %v344
    %v351 = vadd.s32 %v343, %v349
    %vm352 = vc.u32 %v350, %v346
    %v353 = vsel %vm352, 1, 0
    %v354 = vadd.s32 %v350, %v346
    %v355 = vadd.s32 %v351, %v353
    %v356 = vadd.s32 %v355, %v345
    %v357 = vadd.s32 %v356, %v347
    %v358 = vand.u32 %v335, 65535
    %v359 = vshrl.u32 %v335, 16
    %v360 = vand.u32 %v330, 65535
    %v361 = vshrl.u32 %v330, 16
    %v362 = vmul.u32 %v358, %v360
    %v363 = vmul.u32 %v358, %v361
    %v364 = vmul.u32 %v359, %v360
    %v365 = vmul.u32 %v359, %v361
    %v366 = vshll.u32 %v363, 16
    %v367 = vshrl.u32 %v363, 16
    %v368 = vshll.u32 %v364, 16
    %v369 = vshrl.u32 %v364, 16
    %vm370 = vc.u32 %v362, %v366
    %v371 = vsel %vm370, 1, 0
    %v372 = vadd.s32 %v362, %v366
    %v373 = vadd.s32 %v365, %v371
    %vm374 = vc.u32 %v372, %v368
    %v375 = vsel %vm374, 1, 0
    %v376 = vadd.s32 %v372, %v368
    %v377 = vadd.s32 %v373, %v375
    %v378 = vadd.s32 %v377, %v367
    %v379 = vadd.s32 %v378, %v369
    %v380 = vmul.u32 %v335, %v326
    %v381 = vadd.s32 %v357, %v376
    %vm382 = vc.u32 %v357, %v376
    %v383 = vadd.s32 %v379, 1
    %v384 = vsel %vm382, %v383, %v379
    %v385 = vadd.s32 %v380, %v384
    %v386 = vadd.s32 %v385, 536870912
    %v387 = vshrl.u32 %v386, 30
    %v388 = vshll.u32 %v387, 30
    %v389 = vsub.s32 %v385, %v388
    %vm390 = vcmp.lt.s32.totalorder %v389, 0
    %v391 = vsub.s32 0, %v389
    %v392 = vsel %vm390, %v391, %v389
    %v393 = vclz %v392
    %v394 = vsub.s32 %v393, 2
    %vm395 = vcmp.gt.s32.totalorder 0, %v394
    %v396 = vsel %vm395, 0, %v394
    %v397 = vsub.s32 32, %v396
    %v398 = vshll.u32 %v389, %v396
    %v399 = vshrl.u32 %v381, %v397
    %v400 = vor.u32 %v398, %v399
    %v401 = vsub.s32 4294967266, %v396
    %v402 = vadd.s32 %v401, 127
    %v403 = vshll.u32 %v402, 23
    %v404 = vor.u32 4788187, %v403
    %v405 = vand.u32 2147483647, %v404
    %v407 = vcvt.s32.f32 %v400
    %v408 = vmul.f32 %v407, %v405
    %v409 = vxor.u32 %v408, 2147483648
    %v410 = vsel %vm289, %v409, %v408
    %v411 = vsub.s32 4, %v387
    %v412 = vsel %vm289, %v411, %v387
    %v413 = vsel %vm288, %v130, %v410
    %v414 = vsel %vm288, 0, %v412
    %v415 = vmul.f32 %v413, %v413
    %v416 = vmul.f32 %v415, -0.001358992
    %v417 = vadd.f32 %v416, 0.041655596
    %v418 = vmul.f32 %v415, %v417
    %v419 = vadd.f32 %v418, -0.4999988
    %v420 = vmul.f32 %v415, %v419
    %v421 = vadd.f32 1.0, %v420
    %v422 = vmul.f32 %v413, %v413
    %v423 = vmul.f32 %v422, -0.00019511016
    %v424 = vadd.f32 %v423, 0.008332121
    %v425 = vmul.f32 %v422, %v424
    %v426 = vadd.f32 %v425, -0.16666654
    %v427 = vmul.f32 %v422, %v426
    %v428 = vadd.f32 %v427, 1.0
    %v429 = vmul.f32 %v428, %v413
    %vm430 = vweird.f32 %v130
    %v431 = vand.u32 %v414, 3
    %vm432 = vcmp.lt.s32.totalorder %v431, 2
    %vm433 = vcmp.eq.s32.totalorder %v431, 0
    %v434 = vxor.u32 %v429, 2147483648
    %v435 = vsel %vm433, %v421, %v434
    %vm436 = vcmp.eq.s32.totalorder %v431, 2
    %v437 = vxor.u32 %v421, 2147483648
    %v438 = vsel %vm436, %v437, %v429
    %v439 = vsel %vm432, %v435, %v438
    %v440 = vsel %vm430, nan, %v439
    %v441 = vsel %vm131, 1, 0
    %vm442 = vcmp.eq.s32.totalorder %v441, 1
    %v443 = vsel %vm442, %v286, %v440
    %v444 = vpack.c.bf16 %v443, %v443
    %v445 = vld [vmem:[#allocation2] sm:$0xf]
    %v446 = vld [vmem:[#allocation2 + $0x8] sm:$0xf]
    %v447 = vld [vmem:[#allocation2 + $0x10] sm:$0xf]
    %v448 = vld [vmem:[#allocation2 + $0x18] sm:$0xf]
    %v449 = vld [vmem:[#allocation4] ss:$0 sm:$0xff]
    %v454 = vunpack.c.l.b16 %v445
    %v455 = vunpack.c.l.b16 %v446
    %v456 = vunpack.c.l.b16 %v447
    %v457 = vunpack.c.l.b16 %v448
    %v458 = vpack.c.b16 %v455, %v454
    %v459 = vpack.c.b16 %v457, %v456
    %vm462 = vcmask 261120
    %v464 = vsel %vm462, %v444, 0
    %466 = vmatpush.bf16.msra.mxu0 0
    %467 = vmatpush.bf16.msra.mxu0 0
    %468 = vmatpush.bf16.msra.mxu0 0
    %469 = vmatpush.bf16.msra.mxu0 0
    %470 = vmatpush.bf16.msra.mxu0 0
    %471 = vmatpush.bf16.msra.mxu0 0
    %472 = vmatpush.bf16.msra.mxu0 %v459
    %473 = vmatpush.bf16.msra.mxu0 %v458
    %474 = vmatmul.bf16.gmra.mxu0 %v464
    %v475 = vpop.f32.mrf.mxu0
    %v476 = vadd.f32 %v449, %v475
    %v477 = vpop.f32.mrf.mxu0
    %478 = vdwg.mxu0
    %v479 = vmul.f32 %v476, 0.5
    %v480 = vmul.f32 %v476, 0.70710677
    %v481 = vmul.f32 %v480, %v480
    %v482 = vmin.f32 16.0, %v481
    %v483 = vmul.f32 %v482, 2.1237322e-06
    %v484 = vadd.f32 %v483, 0.00028619796
    %v485 = vmul.f32 %v482, %v484
    %v486 = vadd.f32 %v485, 0.0036580483
    %v487 = vmul.f32 %v482, %v486
    %v488 = vadd.f32 %v487, 0.05243302
    %v489 = vmul.f32 %v482, %v488
    %v490 = vadd.f32 %v489, 0.18741608
    %v491 = vmul.f32 %v482, %v490
    %v492 = vadd.f32 %v491, 1.1283791
    %v493 = vmul.f32 %v480, %v492
    %v494 = vmul.f32 %v482, 3.8918573e-05
    %v495 = vadd.f32 %v494, 0.001143296
    %v496 = vmul.f32 %v482, %v495
    %v497 = vadd.f32 %v496, 0.014752088
    %v498 = vmul.f32 %v482, %v497
    %v499 = vadd.f32 %v498, 0.112945676
    %v500 = vmul.f32 %v482, %v499
    %v501 = vadd.f32 %v500, 0.4994258
    %v502 = vmul.f32 %v482, %v501
    %v503 = vadd.f32 %v502, 1.0
    %v504 = vrcp.pop %v503
    %v505 = vmul.f32 %v503, %v504
    %v506 = vsub.f32 1.0, %v505
    %v507 = vmul.f32 %v504, %v506
    %v508 = vadd.f32 %v504, %v507
    %vm509 = vweird.f32 %v503
    %vm510 = vweird.f32 %v504
    %vm511 = vmor %vm509, %vm510
    %v512 = vsel %vm511, %v504, %v508
    %v513 = vand.u32 2147483647, %v503
    %vm514 = vcmp.eq.f32.partialorder %v513, 8.507059e+37
    %v515 = vand.u32 %v503, 2147483648
    %v516 = vor.u32 1.1754944e-38, %v515
    %v517 = vsel %vm514, %v516, %v512
    %v518 = vmul.f32 %v493, %v517
    %v519 = vmin.f32 %v518, 1.0
    %v520 = vmax.f32 %v519, -1.0
    %v521 = vadd.f32 %v520, 1.0
    %v522 = vmul.f32 %v479, %v521
    %v523 = vpack.c.bf16 %v522, %v522
    %v524 = vld [vmem:[#allocation2 + $0x20] sm:$0xf]
    %v525 = vld [vmem:[#allocation2 + $0x28] sm:$0xf]
    %v526 = vld [vmem:[#allocation2 + $0x30] sm:$0xf]
    %v527 = vld [vmem:[#allocation2 + $0x38] sm:$0xf]
    %v528 = vld [vmem:[#allocation2 + $0x40] sm:$0xf]
    %v529 = vld [vmem:[#allocation2 + $0x48] sm:$0xf]
    %v530 = vld [vmem:[#allocation2 + $0x50] sm:$0xf]
    %v531 = vld [vmem:[#allocation2 + $0x58] sm:$0xf]
    %v532 = vld [vmem:[#allocation2 + $0x60] sm:$0xf]
    %v533 = vld [vmem:[#allocation2 + $0x68] sm:$0xf]
    %v534 = vld [vmem:[#allocation2 + $0x70] sm:$0xf]
    %v535 = vld [vmem:[#allocation2 + $0x78] sm:$0xf]
    %v536 = vld [vmem:[#allocation2 + $0x80] sm:$0xf]
    %v537 = vld [vmem:[#allocation2 + $0x88] sm:$0xf]
    %v538 = vld [vmem:[#allocation2 + $0x90] sm:$0xf]
    %v539 = vld [vmem:[#allocation2 + $0x98] sm:$0xf]
    %v540 = vld [vmem:[#allocation4 + $0x1] ss:$0 sm:$0xff]
    %v557 = vunpack.c.l.b16 %v524
    %v558 = vunpack.c.l.b16 %v525
    %v559 = vunpack.c.l.b16 %v526
    %v560 = vunpack.c.l.b16 %v527
    %v561 = vunpack.c.l.b16 %v528
    %v562 = vunpack.c.l.b16 %v529
    %v563 = vunpack.c.l.b16 %v530
    %v564 = vunpack.c.l.b16 %v531
    %v565 = vunpack.c.l.b16 %v532
    %v566 = vunpack.c.l.b16 %v533
    %v567 = vunpack.c.l.b16 %v534
    %v568 = vunpack.c.l.b16 %v535
    %v569 = vunpack.c.l.b16 %v536
    %v570 = vunpack.c.l.b16 %v537
    %v571 = vunpack.c.l.b16 %v538
    %v572 = vunpack.c.l.b16 %v539
    %v573 = vpack.c.b16 %v558, %v557
    %v574 = vpack.c.b16 %v560, %v559
    %v575 = vpack.c.b16 %v562, %v561
    %v576 = vpack.c.b16 %v564, %v563
    %v577 = vpack.c.b16 %v566, %v565
    %v578 = vpack.c.b16 %v568, %v567
    %v579 = vpack.c.b16 %v570, %v569
    %v580 = vpack.c.b16 %v572, %v571
    %589 = vmatpush.bf16.msra.mxu0 %v580
    %590 = vmatpush.bf16.msra.mxu0 %v579
    %591 = vmatpush.bf16.msra.mxu0 %v578
    %592 = vmatpush.bf16.msra.mxu0 %v577
    %593 = vmatpush.bf16.msra.mxu0 %v576
    %594 = vmatpush.bf16.msra.mxu0 %v575
    %595 = vmatpush.bf16.msra.mxu0 %v574
    %596 = vmatpush.bf16.msra.mxu0 %v573
    %597 = vmatmul.bf16.gmra.mxu0 %v523
    %v598 = vpop.f32.mrf.mxu0
    %v599 = vadd.f32 %v540, %v598
    %v600 = vpop.f32.mrf.mxu0
    %601 = vdwg.mxu0
    %v602 = vpack.c.bf16 %v599, %v599
    %v603 = vld [vmem:[%s3] sm:$0xff]
    %v604 = vld [vmem:[%s3 + $0x8] sm:$0xff]
    %v605 = vld [vmem:[%s3 + $0x10] sm:$0xff]
    %v606 = vld [vmem:[%s3 + $0x18] sm:$0xf]
    %v607 = vld [vmem:[%s3 + $0x1c] sm:$0xff]
    %v608 = vld [vmem:[%s3 + $0x24] sm:$0xff]
    %v609 = vld [vmem:[%s3 + $0x2c] sm:$0xff]
    %v610 = vld [vmem:[%s3 + $0x34] sm:$0xf]
    %v611 = vld [vmem:[%s3 + $0x38] sm:$0xff]
    %v612 = vld [vmem:[%s3 + $0x40] sm:$0xff]
    %v613 = vld [vmem:[%s3 + $0x48] sm:$0xff]
    %v614 = vld [vmem:[%s3 + $0x50] sm:$0xf]
    %v615 = vld [vmem:[%s3 + $0x54] sm:$0xff]
    %v616 = vld [vmem:[%s3 + $0x5c] sm:$0xff]
    %v617 = vld [vmem:[%s3 + $0x64] sm:$0xff]
    %v618 = vld [vmem:[%s3 + $0x6c] sm:$0xf]
    %v619 = vld [vmem:[%s3 + $0x70] sm:$0xff]
    %v620 = vld [vmem:[%s3 + $0x78] sm:$0xff]
    %v621 = vld [vmem:[%s3 + $0x80] sm:$0xff]
    %v622 = vld [vmem:[%s3 + $0x88] sm:$0xf]
    %v623 = vld [vmem:[%s3 + $0x8c] sm:$0xff]
    %v624 = vld [vmem:[%s3 + $0x94] sm:$0xff]
    %v625 = vld [vmem:[%s3 + $0x9c] sm:$0xff]
    %v626 = vld [vmem:[%s3 + $0xa4] sm:$0xf]
    %v627 = vld [vmem:[%s3 + $0xa8] sm:$0xff]
    %v628 = vld [vmem:[%s3 + $0xb0] sm:$0xff]
    %v629 = vld [vmem:[%s3 + $0xb8] sm:$0xff]
    %v630 = vld [vmem:[%s3 + $0xc0] sm:$0xf]
    %v631 = vld [vmem:[%s3 + $0xc4] sm:$0xff]
    %v632 = vld [vmem:[%s3 + $0xcc] sm:$0xff]
    %v633 = vld [vmem:[%s3 + $0xd4] sm:$0xff]
    %v634 = vld [vmem:[%s3 + $0xdc] sm:$0xf]
    %v635 = vld [vmem:[%s3 + $0xe0] sm:$0xff]
    %v636 = vld [vmem:[%s3 + $0xe8] sm:$0xff]
    %v637 = vld [vmem:[%s3 + $0xf0] sm:$0xff]
    %v638 = vld [vmem:[%s3 + $0xf8] sm:$0xf]
    %v639 = vld [vmem:[%s3 + $0xfc] sm:$0xff]
    %v640 = vld [vmem:[%s3 + $0x104] sm:$0xff]
    %v641 = vld [vmem:[%s3 + $0x10c] sm:$0xff]
    %v642 = vld [vmem:[%s3 + $0x114] sm:$0xf]
    %v643 = vld [vmem:[%s3 + $0x118] sm:$0xff]
    %v644 = vld [vmem:[%s3 + $0x120] sm:$0xff]
    %v645 = vld [vmem:[%s3 + $0x128] sm:$0xff]
    %v646 = vld [vmem:[%s3 + $0x130] sm:$0xf]
    %v647 = vld [vmem:[%s3 + $0x134] sm:$0xff]
    %v648 = vld [vmem:[%s3 + $0x13c] sm:$0xff]
    %v649 = vld [vmem:[%s3 + $0x144] sm:$0xff]
    %v650 = vld [vmem:[%s3 + $0x14c] sm:$0xf]
    %v651 = vld [vmem:[%s3 + $0x150] sm:$0xff]
    %v652 = vld [vmem:[%s3 + $0x158] sm:$0xff]
    %v653 = vld [vmem:[%s3 + $0x160] sm:$0xff]
    %v654 = vld [vmem:[%s3 + $0x168] sm:$0xf]
    %v655 = vld [vmem:[%s3 + $0x16c] sm:$0xff]
    %v656 = vld [vmem:[%s3 + $0x174] sm:$0xff]
    %v657 = vld [vmem:[%s3 + $0x17c] sm:$0xff]
    %v658 = vld [vmem:[%s3 + $0x184] sm:$0xf]
    %v659 = vld [vmem:[%s3 + $0x188] sm:$0xff]
    %v660 = vld [vmem:[%s3 + $0x190] sm:$0xff]
    %v661 = vld [vmem:[%s3 + $0x198] sm:$0xff]
    %v662 = vld [vmem:[%s3 + $0x1a0] sm:$0xf]
    %v663 = vld [vmem:[%s3 + $0x1a4] sm:$0xff]
    %v664 = vld [vmem:[%s3 + $0x1ac] sm:$0xff]
    %v665 = vld [vmem:[%s3 + $0x1b4] sm:$0xff]
    %v666 = vld [vmem:[%s3 + $0x1bc] sm:$0xf]
    %v731 = vunpack.c.l.b16 %v603
    %v732 = vunpack.c.h.b16 %v603
    %v733 = vunpack.c.l.b16 %v604
    %v734 = vunpack.c.h.b16 %v604
    %v735 = vunpack.c.l.b16 %v605
    %v736 = vunpack.c.h.b16 %v605
    %v737 = vunpack.c.l.b16 %v606
    %v738 = vunpack.c.l.b16 %v607
    %v739 = vunpack.c.h.b16 %v607
    %v740 = vunpack.c.l.b16 %v608
    %v741 = vunpack.c.h.b16 %v608
    %v742 = vunpack.c.l.b16 %v609
    %v743 = vunpack.c.h.b16 %v609
    %v744 = vunpack.c.l.b16 %v610
    %v745 = vunpack.c.l.b16 %v611
    %v746 = vunpack.c.h.b16 %v611
    %v747 = vunpack.c.l.b16 %v612
    %v748 = vunpack.c.h.b16 %v612
    %v749 = vunpack.c.l.b16 %v613
    %v750 = vunpack.c.h.b16 %v613
    %v751 = vunpack.c.l.b16 %v614
    %v752 = vunpack.c.l.b16 %v615
    %v753 = vunpack.c.h.b16 %v615
    %v754 = vunpack.c.l.b16 %v616
    %v755 = vunpack.c.h.b16 %v616
    %v756 = vunpack.c.l.b16 %v617
    %v757 = vunpack.c.h.b16 %v617
    %v758 = vunpack.c.l.b16 %v618
    %v759 = vunpack.c.l.b16 %v619
    %v760 = vunpack.c.h.b16 %v619
    %v761 = vunpack.c.l.b16 %v620
    %v762 = vunpack.c.h.b16 %v620
    %v763 = vunpack.c.l.b16 %v621
    %v764 = vunpack.c.h.b16 %v621
    %v765 = vunpack.c.l.b16 %v622
    %v766 = vunpack.c.l.b16 %v623
    %v767 = vunpack.c.h.b16 %v623
    %v768 = vunpack.c.l.b16 %v624
    %v769 = vunpack.c.h.b16 %v624
    %v770 = vunpack.c.l.b16 %v625
    %v771 = vunpack.c.h.b16 %v625
    %v772 = vunpack.c.l.b16 %v626
    %v773 = vunpack.c.l.b16 %v627
    %v774 = vunpack.c.h.b16 %v627
    %v775 = vunpack.c.l.b16 %v628
    %v776 = vunpack.c.h.b16 %v628
    %v777 = vunpack.c.l.b16 %v629
    %v778 = vunpack.c.h.b16 %v629
    %v779 = vunpack.c.l.b16 %v630
    %v780 = vunpack.c.l.b16 %v631
    %v781 = vunpack.c.h.b16 %v631
    %v782 = vunpack.c.l.b16 %v632
    %v783 = vunpack.c.h.b16 %v632
    %v784 = vunpack.c.l.b16 %v633
    %v785 = vunpack.c.h.b16 %v633
    %v786 = vunpack.c.l.b16 %v634
    %v787 = vunpack.c.l.b16 %v635
    %v788 = vunpack.c.h.b16 %v635
    %v789 = vunpack.c.l.b16 %v636
    %v790 = vunpack.c.h.b16 %v636
    %v791 = vunpack.c.l.b16 %v637
    %v792 = vunpack.c.h.b16 %v637
    %v793 = vunpack.c.l.b16 %v638
    %v794 = vunpack.c.l.b16 %v639
    %v795 = vunpack.c.h.b16 %v639
    %v796 = vunpack.c.l.b16 %v640
    %v797 = vunpack.c.h.b16 %v640
    %v798 = vunpack.c.l.b16 %v641
    %v799 = vunpack.c.h.b16 %v641
    %v800 = vunpack.c.l.b16 %v642
    %v801 = vunpack.c.l.b16 %v643
    %v802 = vunpack.c.h.b16 %v643
    %v803 = vunpack.c.l.b16 %v644
    %v804 = vunpack.c.h.b16 %v644
    %v805 = vunpack.c.l.b16 %v645
    %v806 = vunpack.c.h.b16 %v645
    %v807 = vunpack.c.l.b16 %v646
    %v808 = vunpack.c.l.b16 %v647
    %v809 = vunpack.c.h.b16 %v647
    %v810 = vunpack.c.l.b16 %v648
    %v811 = vunpack.c.h.b16 %v648
    %v812 = vunpack.c.l.b16 %v649
    %v813 = vunpack.c.h.b16 %v649
    %v814 = vunpack.c.l.b16 %v650
    %v815 = vunpack.c.l.b16 %v651
    %v816 = vunpack.c.h.b16 %v651
    %v817 = vunpack.c.l.b16 %v652
    %v818 = vunpack.c.h.b16 %v652
    %v819 = vunpack.c.l.b16 %v653
    %v820 = vunpack.c.h.b16 %v653
    %v821 = vunpack.c.l.b16 %v654
    %v822 = vunpack.c.l.b16 %v655
    %v823 = vunpack.c.h.b16 %v655
    %v824 = vunpack.c.l.b16 %v656
    %v825 = vunpack.c.h.b16 %v656
    %v826 = vunpack.c.l.b16 %v657
    %v827 = vunpack.c.h.b16 %v657
    %v828 = vunpack.c.l.b16 %v658
    %v829 = vunpack.c.l.b16 %v659
    %v830 = vunpack.c.h.b16 %v659
    %v831 = vunpack.c.l.b16 %v660
    %v832 = vunpack.c.h.b16 %v660
    %v833 = vunpack.c.l.b16 %v661
    %v834 = vunpack.c.h.b16 %v661
    %v835 = vunpack.c.l.b16 %v662
    %v836 = vunpack.c.l.b16 %v663
    %v837 = vunpack.c.h.b16 %v663
    %v838 = vunpack.c.l.b16 %v664
    %v839 = vunpack.c.h.b16 %v664
    %v840 = vunpack.c.l.b16 %v665
    %v841 = vunpack.c.h.b16 %v665
    %v842 = vunpack.c.l.b16 %v666
    %v843 = vpack.c.b16 %v738, %v731
    %v844 = vpack.c.b16 %v739, %v732
    %v845 = vpack.c.b16 %v740, %v733
    %v846 = vpack.c.b16 %v741, %v734
    %v847 = vpack.c.b16 %v742, %v735
    %v848 = vpack.c.b16 %v743, %v736
    %v849 = vpack.c.b16 %v744, %v737
    %v850 = vpack.c.b16 %v752, %v745
    %v851 = vpack.c.b16 %v753, %v746
    %v852 = vpack.c.b16 %v754, %v747
    %v853 = vpack.c.b16 %v755, %v748
    %v854 = vpack.c.b16 %v756, %v749
    %v855 = vpack.c.b16 %v757, %v750
    %v856 = vpack.c.b16 %v758, %v751
    %v857 = vpack.c.b16 %v766, %v759
    %v858 = vpack.c.b16 %v767, %v760
    %v859 = vpack.c.b16 %v768, %v761
    %v860 = vpack.c.b16 %v769, %v762
    %v861 = vpack.c.b16 %v770, %v763
    %v862 = vpack.c.b16 %v771, %v764
    %v863 = vpack.c.b16 %v772, %v765
    %v864 = vpack.c.b16 %v780, %v773
    %v865 = vpack.c.b16 %v781, %v774
    %v866 = vpack.c.b16 %v782, %v775
    %v867 = vpack.c.b16 %v783, %v776
    %v868 = vpack.c.b16 %v784, %v777
    %v869 = vpack.c.b16 %v785, %v778
    %v870 = vpack.c.b16 %v786, %v779
    %v871 = vpack.c.b16 %v794, %v787
    %v872 = vpack.c.b16 %v795, %v788
    %v873 = vpack.c.b16 %v796, %v789
    %v874 = vpack.c.b16 %v797, %v790
    %v875 = vpack.c.b16 %v798, %v791
    %v876 = vpack.c.b16 %v799, %v792
    %v877 = vpack.c.b16 %v800, %v793
    %v878 = vpack.c.b16 %v808, %v801
    %v879 = vpack.c.b16 %v809, %v802
    %v880 = vpack.c.b16 %v810, %v803
    %v881 = vpack.c.b16 %v811, %v804
    %v882 = vpack.c.b16 %v812, %v805
    %v883 = vpack.c.b16 %v813, %v806
    %v884 = vpack.c.b16 %v814, %v807
    %v885 = vpack.c.b16 %v822, %v815
    %v886 = vpack.c.b16 %v823, %v816
    %v887 = vpack.c.b16 %v824, %v817
    %v888 = vpack.c.b16 %v825, %v818
    %v889 = vpack.c.b16 %v826, %v819
    %v890 = vpack.c.b16 %v827, %v820
    %v891 = vpack.c.b16 %v828, %v821
    %v892 = vpack.c.b16 %v836, %v829
    %v893 = vpack.c.b16 %v837, %v830
    %v894 = vpack.c.b16 %v838, %v831
    %v895 = vpack.c.b16 %v839, %v832
    %v896 = vpack.c.b16 %v840, %v833
    %v897 = vpack.c.b16 %v841, %v834
    %v898 = vpack.c.b16 %v842, %v835
    %955 = vmatpush.bf16.msra.mxu0 %v892
    %956 = vmatpush.bf16.msra.mxu0 %v885
    %957 = vmatpush.bf16.msra.mxu0 %v878
    %958 = vmatpush.bf16.msra.mxu0 %v871
    %959 = vmatpush.bf16.msra.mxu0 %v864
    %960 = vmatpush.bf16.msra.mxu0 %v857
    %961 = vmatpush.bf16.msra.mxu0 %v850
    %962 = vmatpush.bf16.msra.mxu0 %v843
    %963 = vmatmul.bf16.gmra.mxu0 %v602
    %v964 = vpop.f32.mrf.mxu0
    %v965 = vadd.f32 0.0, %v964
    %v966 = vpop.f32.mrf.mxu0
    %967 = vdwg.mxu0
    %968 = vmatpush.bf16.msra.mxu0 %v893
    %969 = vmatpush.bf16.msra.mxu0 %v886
    %970 = vmatpush.bf16.msra.mxu0 %v879
    %971 = vmatpush.bf16.msra.mxu0 %v872
    %972 = vmatpush.bf16.msra.mxu0 %v865
    %973 = vmatpush.bf16.msra.mxu0 %v858
    %974 = vmatpush.bf16.msra.mxu0 %v851
    %975 = vmatpush.bf16.msra.mxu0 %v844
    %976 = vmatmul.bf16.gmra.mxu0 %v602
    %v977 = vpop.f32.mrf.mxu0
    %v978 = vadd.f32 0.0, %v977
    %v979 = vpop.f32.mrf.mxu0
    %980 = vdwg.mxu0
    %981 = vmatpush.bf16.msra.mxu0 %v894
    %982 = vmatpush.bf16.msra.mxu0 %v887
    %983 = vmatpush.bf16.msra.mxu0 %v880
    %984 = vmatpush.bf16.msra.mxu0 %v873
    %985 = vmatpush.bf16.msra.mxu0 %v866
    %986 = vmatpush.bf16.msra.mxu0 %v859
    %987 = vmatpush.bf16.msra.mxu0 %v852
    %988 = vmatpush.bf16.msra.mxu0 %v845
    %989 = vmatmul.bf16.gmra.mxu0 %v602
    %v990 = vpop.f32.mrf.mxu0
    %v991 = vadd.f32 0.0, %v990
    %v992 = vpop.f32.mrf.mxu0
    %993 = vdwg.mxu0
    %994 = vmatpush.bf16.msra.mxu0 %v895
    %995 = vmatpush.bf16.msra.mxu0 %v888
    %996 = vmatpush.bf16.msra.mxu0 %v881
    %997 = vmatpush.bf16.msra.mxu0 %v874
    %998 = vmatpush.bf16.msra.mxu0 %v867
    %999 = vmatpush.bf16.msra.mxu0 %v860
    %1000 = vmatpush.bf16.msra.mxu0 %v853
    %1001 = vmatpush.bf16.msra.mxu0 %v846
    %1002 = vmatmul.bf16.gmra.mxu0 %v602
    %v1003 = vpop.f32.mrf.mxu0
    %v1004 = vadd.f32 0.0, %v1003
    %v1005 = vpop.f32.mrf.mxu0
    %1006 = vdwg.mxu0
    %1007 = vmatpush.bf16.msra.mxu0 %v896
    %1008 = vmatpush.bf16.msra.mxu0 %v889
    %1009 = vmatpush.bf16.msra.mxu0 %v882
    %1010 = vmatpush.bf16.msra.mxu0 %v875
    %1011 = vmatpush.bf16.msra.mxu0 %v868
    %1012 = vmatpush.bf16.msra.mxu0 %v861
    %1013 = vmatpush.bf16.msra.mxu0 %v854
    %1014 = vmatpush.bf16.msra.mxu0 %v847
    %1015 = vmatmul.bf16.gmra.mxu0 %v602
    %v1016 = vpop.f32.mrf.mxu0
    %v1017 = vadd.f32 0.0, %v1016
    %v1018 = vpop.f32.mrf.mxu0
    %1019 = vdwg.mxu0
    %1020 = vmatpush.bf16.msra.mxu0 %v897
    %1021 = vmatpush.bf16.msra.mxu0 %v890
    %1022 = vmatpush.bf16.msra.mxu0 %v883
    %1023 = vmatpush.bf16.msra.mxu0 %v876
    %1024 = vmatpush.bf16.msra.mxu0 %v869
    %1025 = vmatpush.bf16.msra.mxu0 %v862
    %1026 = vmatpush.bf16.msra.mxu0 %v855
    %1027 = vmatpush.bf16.msra.mxu0 %v848
    %1028 = vmatmul.bf16.gmra.mxu0 %v602
    %v1029 = vpop.f32.mrf.mxu0
    %v1030 = vadd.f32 0.0, %v1029
    %v1031 = vpop.f32.mrf.mxu0
    %1032 = vdwg.mxu0
    %1033 = vmatpush.bf16.msra.mxu0 %v898
    %1034 = vmatpush.bf16.msra.mxu0 %v891
    %1035 = vmatpush.bf16.msra.mxu0 %v884
    %1036 = vmatpush.bf16.msra.mxu0 %v877
    %1037 = vmatpush.bf16.msra.mxu0 %v870
    %1038 = vmatpush.bf16.msra.mxu0 %v863
    %1039 = vmatpush.bf16.msra.mxu0 %v856
    %1040 = vmatpush.bf16.msra.mxu0 %v849
    %1041 = vmatmul.bf16.gmra.mxu0 %v602
    %v1042 = vpop.f32.mrf.mxu0
    %v1043 = vadd.f32 0.0, %v1042
    %v1044 = vpop.f32.mrf.mxu0
    %1045 = vdwg.mxu0
    %v1046 = vld [vmem:[%s0] sm:$0xff]
    %v1047 = vld [vmem:[%s0 + $0x8] sm:$0xff]
    %v1048 = vld [vmem:[%s0 + $0x10] sm:$0xff]
    %v1049 = vld [vmem:[%s0 + $0x18] sm:$0xff]
    %vm1050 = vcmp.eq.s32.totalorder %v102, 0
    %vm1051 = vcmp.eq.s32.totalorder %v103, 0
    %vm1052 = vcmp.eq.s32.totalorder %v104, 0
    %vm1053 = vcmp.eq.s32.totalorder %v105, 0
    %v1054 = vrot.slane %v1046, 7
    %v1055 = vrot.slane %v1047, 7
    %v1056 = vrot.slane %v1048, 7
    %v1057 = vrot.slane %v1049, 7
    %vm1058 = vcmp.lt.s32.totalorder %v54, 1
    %v1059 = vsel %vm1058, %v1056, %v1057
    %v1060 = vsel %vm1058, %v1055, %v1056
    %v1061 = vsel %vm1058, %v1054, %v1055
    %v1062 = vsel %vm1058, %v1057, %v1054
    %v1063 = vsel %vm1050, 1, 0
    %v1064 = vsel %vm1051, 1, 0
    %v1065 = vsel %vm1052, 1, 0
    %v1066 = vsel %vm1053, 1, 0
    %vm1067 = vcmp.eq.s32.totalorder %v1063, 1
    %vm1068 = vcmp.eq.s32.totalorder %v1064, 1
    %vm1069 = vcmp.eq.s32.totalorder %v1065, 1
    %vm1070 = vcmp.eq.s32.totalorder %v1066, 1
    %v1071 = vsel %vm1067, 0.0, %v1062
    %v1072 = vsel %vm1068, 0.0, %v1061
    %v1073 = vsel %vm1069, 0.0, %v1060
    %v1074 = vsel %vm1070, 0.0, %v1059
    %vm1075 = vcmp.eq.s32.totalorder %v102, 15
    %vm1076 = vcmp.eq.s32.totalorder %v103, 15
    %vm1077 = vcmp.eq.s32.totalorder %v104, 15
    %vm1078 = vcmp.eq.s32.totalorder %v105, 15
    %v1079 = vrot.slane %v1046, 1
    %v1080 = vrot.slane %v1047, 1
    %v1081 = vrot.slane %v1048, 1
    %v1082 = vrot.slane %v1049, 1
    %vm1083 = vcmp.lt.s32.totalorder %v54, 7
    %v1084 = vsel %vm1083, %v1081, %v1082
    %v1085 = vsel %vm1083, %v1080, %v1081
    %v1086 = vsel %vm1083, %v1079, %v1080
    %v1087 = vsel %vm1083, %v1082, %v1079
    %v1088 = vsel %vm1075, 1, 0
    %v1089 = vsel %vm1076, 1, 0
    %v1090 = vsel %vm1077, 1, 0
    %v1091 = vsel %vm1078, 1, 0
    %vm1092 = vcmp.eq.s32.totalorder %v1088, 1
    %vm1093 = vcmp.eq.s32.totalorder %v1089, 1
    %vm1094 = vcmp.eq.s32.totalorder %v1090, 1
    %vm1095 = vcmp.eq.s32.totalorder %v1091, 1
    %v1096 = vsel %vm1092, 0.0, %v1086
    %v1097 = vsel %vm1093, 0.0, %v1085
    %v1098 = vsel %vm1094, 0.0, %v1084
    %v1099 = vsel %vm1095, 0.0, %v1087
    %v1100 = vpack.c.bf16 %v1072, %v1071
    %v1101 = vpack.c.bf16 %v1074, %v1073
    %v1102 = vld [vmem:[#allocation2 + $0xa0] sm:$0x7]
    %v1103 = vpack.c.bf16 %v1047, %v1046
    %v1104 = vpack.c.bf16 %v1049, %v1048
    %v1105 = vld [vmem:[#allocation2 + $0xb0] sm:$0x7]
    %vm1106 = vcmask 48128
    %v1108 = vsel %vm1106, %v1103, 0
    %v1111 = vsel %vm1106, %v1104, 0
    %vm1113 = vcmask 1042432
    %v1115 = vsel %vm1113, %v1105, 0
    %1117 = vmatpush.bf16.msra.mxu0 0
    %1118 = vmatpush.bf16.msra.mxu0 0
    %1119 = vmatpush.bf16.msra.mxu0 0
    %1120 = vmatpush.bf16.msra.mxu0 0
    %1121 = vmatpush.bf16.msra.mxu0 0
    %1122 = vmatpush.bf16.msra.mxu0 0
    %1123 = vmatpush.bf16.msra.mxu0 0
    %1124 = vmatpush.bf16.msra.mxu0 %v1115
    %1125 = vmatmul.bf16.gmra.mxu0 %v1108
    %v1126 = vpop.f32.mrf.mxu0
    %v1127 = vadd.f32 0.0, %v1126
    %v1128 = vpop.f32.mrf.mxu0
    %v1129 = vadd.f32 0.0, %v1128
    %1130 = vmatmul.bf16.gmra.mxu0 %v1111
    %v1131 = vpop.f32.mrf.mxu0
    %v1132 = vadd.f32 0.0, %v1131
    %v1133 = vpop.f32.mrf.mxu0
    %v1134 = vadd.f32 0.0, %v1133
    %1135 = vdwg.mxu0
    %v1137 = vsel %vm1106, %v1100, 0
    %v1140 = vsel %vm1106, %v1101, 0
    %v1143 = vsel %vm1113, %v1102, 0
    %1145 = vmatpush.bf16.msra.mxu0 0
    %1146 = vmatpush.bf16.msra.mxu0 0
    %1147 = vmatpush.bf16.msra.mxu0 0
    %1148 = vmatpush.bf16.msra.mxu0 0
    %1149 = vmatpush.bf16.msra.mxu0 0
    %1150 = vmatpush.bf16.msra.mxu0 0
    %1151 = vmatpush.bf16.msra.mxu0 0
    %1152 = vmatpush.bf16.msra.mxu0 %v1143
    %1153 = vmatmul.bf16.gmra.mxu0 %v1137
    %v1154 = vpop.f32.mrf.mxu0
    %v1155 = vadd.f32 %v1127, %v1154
    %v1156 = vpop.f32.mrf.mxu0
    %v1157 = vadd.f32 %v1129, %v1156
    %1158 = vmatmul.bf16.gmra.mxu0 %v1140
    %v1159 = vpop.f32.mrf.mxu0
    %v1160 = vadd.f32 %v1132, %v1159
    %v1161 = vpop.f32.mrf.mxu0
    %v1162 = vadd.f32 %v1134, %v1161
    %1163 = vdwg.mxu0
    %v1164 = vpack.c.bf16 %v1097, %v1096
    %v1165 = vpack.c.bf16 %v1099, %v1098
    %v1166 = vld [vmem:[#allocation2 + $0xc0] sm:$0x7]
    %v1168 = vsel %vm1106, %v1164, 0
    %v1171 = vsel %vm1106, %v1165, 0
    %v1174 = vsel %vm1113, %v1166, 0
    %1176 = vmatpush.bf16.msra.mxu0 0
    %1177 = vmatpush.bf16.msra.mxu0 0
    %1178 = vmatpush.bf16.msra.mxu0 0
    %1179 = vmatpush.bf16.msra.mxu0 0
    %1180 = vmatpush.bf16.msra.mxu0 0
    %1181 = vmatpush.bf16.msra.mxu0 0
    %1182 = vmatpush.bf16.msra.mxu0 0
    %1183 = vmatpush.bf16.msra.mxu0 %v1174
    %1184 = vmatmul.bf16.gmra.mxu0 %v1168
    %v1185 = vpop.f32.mrf.mxu0
    %v1186 = vadd.f32 0.0, %v1185
    %v1187 = vpop.f32.mrf.mxu0
    %v1188 = vadd.f32 0.0, %v1187
    %1189 = vmatmul.bf16.gmra.mxu0 %v1171
    %v1190 = vpop.f32.mrf.mxu0
    %v1191 = vadd.f32 0.0, %v1190
    %v1192 = vpop.f32.mrf.mxu0
    %v1193 = vadd.f32 0.0, %v1192
    %1194 = vdwg.mxu0
    %v1195 = vadd.f32 %v1155, %v1186
    %v1196 = vadd.f32 %v1157, %v1188
    %v1197 = vadd.f32 %v1160, %v1191
    %v1198 = vadd.f32 %v1162, %v1193
    %v1199 = vld [vmem:[#allocation4 + $0x2] ss:$0 sm:$0xff]
    %v1200 = vadd.f32 %v1195, %v1199
    %v1201 = vadd.f32 %v1196, %v1199
    %v1202 = vadd.f32 %v1197, %v1199
    %v1203 = vadd.f32 %v1198, %v1199
    %v1204 = vrot.slane %v1200, 7
    %v1205 = vrot.slane %v1201, 7
    %v1206 = vrot.slane %v1202, 7
    %v1207 = vrot.slane %v1203, 7
    %v1208 = vsel %vm1058, %v1206, %v1207
    %v1209 = vsel %vm1058, %v1205, %v1206
    %v1210 = vsel %vm1058, %v1204, %v1205
    %v1211 = vsel %vm1058, %v1207, %v1204
    %v1212 = vsel %vm1067, 0.0, %v1211
    %v1213 = vsel %vm1068, 0.0, %v1210
    %v1214 = vsel %vm1069, 0.0, %v1209
    %v1215 = vsel %vm1070, 0.0, %v1208
    %v1216 = vrot.slane %v1200, 1
    %v1217 = vrot.slane %v1201, 1
    %v1218 = vrot.slane %v1202, 1
    %v1219 = vrot.slane %v1203, 1
    %v1220 = vsel %vm1083, %v1218, %v1219
    %v1221 = vsel %vm1083, %v1217, %v1218
    %v1222 = vsel %vm1083, %v1216, %v1217
    %v1223 = vsel %vm1083, %v1219, %v1216
    %v1224 = vsel %vm1092, 0.0, %v1222
    %v1225 = vsel %vm1093, 0.0, %v1221
    %v1226 = vsel %vm1094, 0.0, %v1220
    %v1227 = vsel %vm1095, 0.0, %v1223
    %v1228 = vpack.c.bf16 %v1213, %v1212
    %v1229 = vpack.c.bf16 %v1215, %v1214
    %v1230 = vld [vmem:[#allocation2 + $0xd0] sm:$0xf]
    %v1231 = vld [vmem:[#allocation2 + $0xd8] sm:$0xf]
    %v1232 = vld [vmem:[#allocation2 + $0xe0] sm:$0xf]
    %v1233 = vld [vmem:[#allocation2 + $0xe8] sm:$0xf]
    %v1234 = vld [vmem:[#allocation2 + $0xf0] sm:$0xf]
    %v1235 = vld [vmem:[#allocation2 + $0xf8] sm:$0xf]
    %v1236 = vld [vmem:[#allocation2 + $0x100] sm:$0xf]
    %v1237 = vld [vmem:[#allocation2 + $0x108] sm:$0xf]
    %v1238 = vpack.c.bf16 %v1201, %v1200
    %v1239 = vpack.c.bf16 %v1203, %v1202
    %v1240 = vld [vmem:[#allocation2 + $0x110] sm:$0xf]
    %v1241 = vld [vmem:[#allocation2 + $0x118] sm:$0xf]
    %v1242 = vld [vmem:[#allocation2 + $0x120] sm:$0xf]
    %v1243 = vld [vmem:[#allocation2 + $0x128] sm:$0xf]
    %v1244 = vld [vmem:[#allocation2 + $0x130] sm:$0xf]
    %v1245 = vld [vmem:[#allocation2 + $0x138] sm:$0xf]
    %v1246 = vld [vmem:[#allocation2 + $0x140] sm:$0xf]
    %v1247 = vld [vmem:[#allocation2 + $0x148] sm:$0xf]
    %v1256 = vunpack.c.l.b16 %v1240
    %v1257 = vunpack.c.l.b16 %v1241
    %v1258 = vunpack.c.l.b16 %v1242
    %v1259 = vunpack.c.l.b16 %v1243
    %v1260 = vunpack.c.l.b16 %v1244
    %v1261 = vunpack.c.l.b16 %v1245
    %v1262 = vunpack.c.l.b16 %v1246
    %v1263 = vunpack.c.l.b16 %v1247
    %v1264 = vpack.c.b16 %v1257, %v1256
    %v1265 = vpack.c.b16 %v1259, %v1258
    %v1266 = vpack.c.b16 %v1261, %v1260
    %v1267 = vpack.c.b16 %v1263, %v1262
    %vm1272 = vcmask 523264
    %v1274 = vsel %vm1272, %v1238, 0
    %v1277 = vsel %vm1272, %v1239, 0
    %1279 = vmatpush.bf16.msra.mxu0 0
    %1280 = vmatpush.bf16.msra.mxu0 0
    %1281 = vmatpush.bf16.msra.mxu0 0
    %1282 = vmatpush.bf16.msra.mxu0 0
    %1283 = vmatpush.bf16.msra.mxu0 %v1267
    %1284 = vmatpush.bf16.msra.mxu0 %v1266
    %1285 = vmatpush.bf16.msra.mxu0 %v1265
    %1286 = vmatpush.bf16.msra.mxu0 %v1264
    %1287 = vmatmul.bf16.gmra.mxu0 %v1274
    %v1288 = vpop.f32.mrf.mxu0
    %v1289 = vadd.f32 0.0, %v1288
    %v1290 = vpop.f32.mrf.mxu0
    %v1291 = vadd.f32 0.0, %v1290
    %1292 = vmatmul.bf16.gmra.mxu0 %v1277
    %v1293 = vpop.f32.mrf.mxu0
    %v1294 = vadd.f32 0.0, %v1293
    %v1295 = vpop.f32.mrf.mxu0
    %v1296 = vadd.f32 0.0, %v1295
    %1297 = vdwg.mxu0
    %v1306 = vunpack.c.l.b16 %v1230
    %v1307 = vunpack.c.l.b16 %v1231
    %v1308 = vunpack.c.l.b16 %v1232
    %v1309 = vunpack.c.l.b16 %v1233
    %v1310 = vunpack.c.l.b16 %v1234
    %v1311 = vunpack.c.l.b16 %v1235
    %v1312 = vunpack.c.l.b16 %v1236
    %v1313 = vunpack.c.l.b16 %v1237
    %v1314 = vpack.c.b16 %v1307, %v1306
    %v1315 = vpack.c.b16 %v1309, %v1308
    %v1316 = vpack.c.b16 %v1311, %v1310
    %v1317 = vpack.c.b16 %v1313, %v1312
    %v1323 = vsel %vm1272, %v1228, 0
    %v1326 = vsel %vm1272, %v1229, 0
    %1328 = vmatpush.bf16.msra.mxu0 0
    %1329 = vmatpush.bf16.msra.mxu0 0
    %1330 = vmatpush.bf16.msra.mxu0 0
    %1331 = vmatpush.bf16.msra.mxu0 0
    %1332 = vmatpush.bf16.msra.mxu0 %v1317
    %1333 = vmatpush.bf16.msra.mxu0 %v1316
    %1334 = vmatpush.bf16.msra.mxu0 %v1315
    %1335 = vmatpush.bf16.msra.mxu0 %v1314
    %1336 = vmatmul.bf16.gmra.mxu0 %v1323
    %v1337 = vpop.f32.mrf.mxu0
    %v1338 = vadd.f32 %v1289, %v1337
    %v1339 = vpop.f32.mrf.mxu0
    %v1340 = vadd.f32 %v1291, %v1339
    %1341 = vmatmul.bf16.gmra.mxu0 %v1326
    %v1342 = vpop.f32.mrf.mxu0
    %v1343 = vadd.f32 %v1294, %v1342
    %v1344 = vpop.f32.mrf.mxu0
    %v1345 = vadd.f32 %v1296, %v1344
    %1346 = vdwg.mxu0
    %v1347 = vpack.c.bf16 %v1225, %v1224
    %v1348 = vpack.c.bf16 %v1227, %v1226
    %v1349 = vld [vmem:[#allocation2 + $0x150] sm:$0xf]
    %v1350 = vld [vmem:[#allocation2 + $0x158] sm:$0xf]
    %v1351 = vld [vmem:[#allocation2 + $0x160] sm:$0xf]
    %v1352 = vld [vmem:[#allocation2 + $0x168] sm:$0xf]
    %v1353 = vld [vmem:[#allocation2 + $0x170] sm:$0xf]
    %v1354 = vld [vmem:[#allocation2 + $0x178] sm:$0xf]
    %v1355 = vld [vmem:[#allocation2 + $0x180] sm:$0xf]
    %v1356 = vld [vmem:[#allocation2 + $0x188] sm:$0xf]
    %v1365 = vunpack.c.l.b16 %v1349
    %v1366 = vunpack.c.l.b16 %v1350
    %v1367 = vunpack.c.l.b16 %v1351
    %v1368 = vunpack.c.l.b16 %v1352
    %v1369 = vunpack.c.l.b16 %v1353
    %v1370 = vunpack.c.l.b16 %v1354
    %v1371 = vunpack.c.l.b16 %v1355
    %v1372 = vunpack.c.l.b16 %v1356
    %v1373 = vpack.c.b16 %v1366, %v1365
    %v1374 = vpack.c.b16 %v1368, %v1367
    %v1375 = vpack.c.b16 %v1370, %v1369
    %v1376 = vpack.c.b16 %v1372, %v1371
    %v1382 = vsel %vm1272, %v1347, 0
    %v1385 = vsel %vm1272, %v1348, 0
    %1387 = vmatpush.bf16.msra.mxu0 0
    %1388 = vmatpush.bf16.msra.mxu0 0
    %1389 = vmatpush.bf16.msra.mxu0 0
    %1390 = vmatpush.bf16.msra.mxu0 0
    %1391 = vmatpush.bf16.msra.mxu0 %v1376
    %1392 = vmatpush.bf16.msra.mxu0 %v1375
    %1393 = vmatpush.bf16.msra.mxu0 %v1374
    %1394 = vmatpush.bf16.msra.mxu0 %v1373
    %1395 = vmatmul.bf16.gmra.mxu0 %v1382
    %v1396 = vpop.f32.mrf.mxu0
    %v1397 = vadd.f32 0.0, %v1396
    %v1398 = vpop.f32.mrf.mxu0
    %v1399 = vadd.f32 0.0, %v1398
    %1400 = vmatmul.bf16.gmra.mxu0 %v1385
    %v1401 = vpop.f32.mrf.mxu0
    %v1402 = vadd.f32 0.0, %v1401
    %v1403 = vpop.f32.mrf.mxu0
    %v1404 = vadd.f32 0.0, %v1403
    %1405 = vdwg.mxu0
    %v1406 = vadd.f32 %v1338, %v1397
    %v1407 = vadd.f32 %v1340, %v1399
    %v1408 = vadd.f32 %v1343, %v1402
    %v1409 = vadd.f32 %v1345, %v1404
    %v1410 = vld [vmem:[#allocation4 + $0x3] ss:$0 sm:$0xff]
    %v1411 = vadd.f32 %v1406, %v1410
    %v1412 = vadd.f32 %v1407, %v1410
    %v1413 = vadd.f32 %v1408, %v1410
    %v1414 = vadd.f32 %v1409, %v1410
    %v1415 = vadd.f32 %v1411, %v1412
    %v1416 = vadd.f32 %v1415, %v1413
    %v1417 = vadd.f32 %v1416, %v1414
    %v1418 = vrot.slane %v1417, 4
    %v1419 = vadd.f32 %v1417, %v1418
    %v1420 = vrot.slane %v1419, 2
    %v1421 = vadd.f32 %v1419, %v1420
    %v1422 = vrot.slane %v1421, 1
    %v1423 = vadd.f32 %v1421, %v1422
    %v1424 = vrcp.pop 32.0
    %v1425 = vmul.f32 32.0, %v1424
    %v1426 = vsub.f32 1.0, %v1425
    %v1427 = vmul.f32 %v1424, %v1426
    %v1428 = vadd.f32 %v1424, %v1427
    %vm1429 = vweird.f32 %v1424
    %v1430 = vsel %vm1429, %v1424, %v1428
    %v1431 = vmul.f32 %v1423, %v1430
    %v1432 = vmul.f32 %v1411, %v1411
    %v1433 = vmul.f32 %v1412, %v1412
    %v1434 = vmul.f32 %v1413, %v1413
    %v1435 = vmul.f32 %v1414, %v1414
    %v1436 = vadd.f32 %v1432, %v1433
    %v1437 = vadd.f32 %v1436, %v1434
    %v1438 = vadd.f32 %v1437, %v1435
    %v1439 = vrot.slane %v1438, 4
    %v1440 = vadd.f32 %v1438, %v1439
    %v1441 = vrot.slane %v1440, 2
    %v1442 = vadd.f32 %v1440, %v1441
    %v1443 = vrot.slane %v1442, 1
    %v1444 = vadd.f32 %v1442, %v1443
    %v1445 = vmul.f32 %v1444, %v1430
    %v1446 = vmul.f32 %v1431, %v1431
    %v1447 = vsub.f32 %v1445, %v1446
    %v1448 = vmax.f32 %v1447, 0.0
    %v1449 = vld [vmem:[#allocation4 + $0x4] ss:$0 sm:$0xff]
    %v1450 = vadd.f32 %v1448, 1e-05
    %v1451 = vrsqrt.pop %v1450
    %v1452 = vmul.f32 %v1451, %v1450
    %v1453 = vmul.f32 %v1452, %v1451
    %v1454 = vmul.f32 0.5, %v1453
    %v1455 = vsub.f32 1.5, %v1454
    %v1456 = vmul.f32 %v1451, %v1455
    %vm1457 = vweird.f32 %v1450
    %vm1458 = vweird.f32 %v1451
    %vm1459 = vmor %vm1457, %vm1458
    %v1460 = vsel %vm1459, %v1451, %v1456
    %v1461 = vmul.f32 %v1449, %v1460
    %v1462 = vld [vmem:[#allocation4 + $0x5] ss:$0 sm:$0xff]
    %v1463 = vmul.f32 %v1431, %v1461
    %v1464 = vsub.f32 %v1462, %v1463
    %v1465 = vmul.f32 %v1411, %v1461
    %v1466 = vmul.f32 %v1412, %v1461
    %v1467 = vmul.f32 %v1413, %v1461
    %v1468 = vmul.f32 %v1414, %v1461
    %v1469 = vadd.f32 %v1465, %v1464
    %v1470 = vadd.f32 %v1466, %v1464
    %v1471 = vadd.f32 %v1467, %v1464
    %v1472 = vadd.f32 %v1468, %v1464
    %v1473 = vmul.f32 %v1469, 0.5
    %v1474 = vmul.f32 %v1470, 0.5
    %v1475 = vmul.f32 %v1471, 0.5
    %v1476 = vmul.f32 %v1472, 0.5
    %v1477 = vmul.f32 %v1469, 0.70710677
    %v1478 = vmul.f32 %v1470, 0.70710677
    %v1479 = vmul.f32 %v1471, 0.70710677
    %v1480 = vmul.f32 %v1472, 0.70710677
    %v1481 = vmul.f32 %v1477, %v1477
    %v1482 = vmin.f32 16.0, %v1481
    %v1483 = vmul.f32 %v1482, 2.1237322e-06
    %v1484 = vadd.f32 %v1483, 0.00028619796
    %v1485 = vmul.f32 %v1482, %v1484
    %v1486 = vadd.f32 %v1485, 0.0036580483
    %v1487 = vmul.f32 %v1482, %v1486
    %v1488 = vadd.f32 %v1487, 0.05243302
    %v1489 = vmul.f32 %v1482, %v1488
    %v1490 = vadd.f32 %v1489, 0.18741608
    %v1491 = vmul.f32 %v1482, %v1490
    %v1492 = vadd.f32 %v1491, 1.1283791
    %v1493 = vmul.f32 %v1477, %v1492
    %v1494 = vmul.f32 %v1482, 3.8918573e-05
    %v1495 = vadd.f32 %v1494, 0.001143296
    %v1496 = vmul.f32 %v1482, %v1495
    %v1497 = vadd.f32 %v1496, 0.014752088
    %v1498 = vmul.f32 %v1482, %v1497
    %v1499 = vadd.f32 %v1498, 0.112945676
    %v1500 = vmul.f32 %v1482, %v1499
    %v1501 = vadd.f32 %v1500, 0.4994258
    %v1502 = vmul.f32 %v1482, %v1501
    %v1503 = vadd.f32 %v1502, 1.0
    %v1504 = vrcp.pop %v1503
    %v1505 = vmul.f32 %v1503, %v1504
    %v1506 = vsub.f32 1.0, %v1505
    %v1507 = vmul.f32 %v1504, %v1506
    %v1508 = vadd.f32 %v1504, %v1507
    %vm1509 = vweird.f32 %v1503
    %vm1510 = vweird.f32 %v1504
    %vm1511 = vmor %vm1509, %vm1510
    %v1512 = vsel %vm1511, %v1504, %v1508
    %v1513 = vand.u32 2147483647, %v1503
    %vm1514 = vcmp.eq.f32.partialorder %v1513, 8.507059e+37
    %v1515 = vand.u32 %v1503, 2147483648
    %v1516 = vor.u32 1.1754944e-38, %v1515
    %v1517 = vsel %vm1514, %v1516, %v1512
    %v1518 = vmul.f32 %v1493, %v1517
    %v1519 = vmin.f32 %v1518, 1.0
    %v1520 = vmax.f32 %v1519, -1.0
    %v1521 = vmul.f32 %v1478, %v1478
    %v1522 = vmin.f32 16.0, %v1521
    %v1523 = vmul.f32 %v1522, 2.1237322e-06
    %v1524 = vadd.f32 %v1523, 0.00028619796
    %v1525 = vmul.f32 %v1522, %v1524
    %v1526 = vadd.f32 %v1525, 0.0036580483
    %v1527 = vmul.f32 %v1522, %v1526
    %v1528 = vadd.f32 %v1527, 0.05243302
    %v1529 = vmul.f32 %v1522, %v1528
    %v1530 = vadd.f32 %v1529, 0.18741608
    %v1531 = vmul.f32 %v1522, %v1530
    %v1532 = vadd.f32 %v1531, 1.1283791
    %v1533 = vmul.f32 %v1478, %v1532
    %v1534 = vmul.f32 %v1522, 3.8918573e-05
    %v1535 = vadd.f32 %v1534, 0.001143296
    %v1536 = vmul.f32 %v1522, %v1535
    %v1537 = vadd.f32 %v1536, 0.014752088
    %v1538 = vmul.f32 %v1522, %v1537
    %v1539 = vadd.f32 %v1538, 0.112945676
    %v1540 = vmul.f32 %v1522, %v1539
    %v1541 = vadd.f32 %v1540, 0.4994258
    %v1542 = vmul.f32 %v1522, %v1541
    %v1543 = vadd.f32 %v1542, 1.0
    %v1544 = vrcp.pop %v1543
    %v1545 = vmul.f32 %v1543, %v1544
    %v1546 = vsub.f32 1.0, %v1545
    %v1547 = vmul.f32 %v1544, %v1546
    %v1548 = vadd.f32 %v1544, %v1547
    %vm1549 = vweird.f32 %v1543
    %vm1550 = vweird.f32 %v1544
    %vm1551 = vmor %vm1549, %vm1550
    %v1552 = vsel %vm1551, %v1544, %v1548
    %v1553 = vand.u32 2147483647, %v1543
    %vm1554 = vcmp.eq.f32.partialorder %v1553, 8.507059e+37
    %v1555 = vand.u32 %v1543, 2147483648
    %v1556 = vor.u32 1.1754944e-38, %v1555
    %v1557 = vsel %vm1554, %v1556, %v1552
    %v1558 = vmul.f32 %v1533, %v1557
    %v1559 = vmin.f32 %v1558, 1.0
    %v1560 = vmax.f32 %v1559, -1.0
    %v1561 = vmul.f32 %v1479, %v1479
    %v1562 = vmin.f32 16.0, %v1561
    %v1563 = vmul.f32 %v1562, 2.1237322e-06
    %v1564 = vadd.f32 %v1563, 0.00028619796
    %v1565 = vmul.f32 %v1562, %v1564
    %v1566 = vadd.f32 %v1565, 0.0036580483
    %v1567 = vmul.f32 %v1562, %v1566
    %v1568 = vadd.f32 %v1567, 0.05243302
    %v1569 = vmul.f32 %v1562, %v1568
    %v1570 = vadd.f32 %v1569, 0.18741608
    %v1571 = vmul.f32 %v1562, %v1570
    %v1572 = vadd.f32 %v1571, 1.1283791
    %v1573 = vmul.f32 %v1479, %v1572
    %v1574 = vmul.f32 %v1562, 3.8918573e-05
    %v1575 = vadd.f32 %v1574, 0.001143296
    %v1576 = vmul.f32 %v1562, %v1575
    %v1577 = vadd.f32 %v1576, 0.014752088
    %v1578 = vmul.f32 %v1562, %v1577
    %v1579 = vadd.f32 %v1578, 0.112945676
    %v1580 = vmul.f32 %v1562, %v1579
    %v1581 = vadd.f32 %v1580, 0.4994258
    %v1582 = vmul.f32 %v1562, %v1581
    %v1583 = vadd.f32 %v1582, 1.0
    %v1584 = vrcp.pop %v1583
    %v1585 = vmul.f32 %v1583, %v1584
    %v1586 = vsub.f32 1.0, %v1585
    %v1587 = vmul.f32 %v1584, %v1586
    %v1588 = vadd.f32 %v1584, %v1587
    %vm1589 = vweird.f32 %v1583
    %vm1590 = vweird.f32 %v1584
    %vm1591 = vmor %vm1589, %vm1590
    %v1592 = vsel %vm1591, %v1584, %v1588
    %v1593 = vand.u32 2147483647, %v1583
    %vm1594 = vcmp.eq.f32.partialorder %v1593, 8.507059e+37
    %v1595 = vand.u32 %v1583, 2147483648
    %v1596 = vor.u32 1.1754944e-38, %v1595
    %v1597 = vsel %vm1594, %v1596, %v1592
    %v1598 = vmul.f32 %v1573, %v1597
    %v1599 = vmin.f32 %v1598, 1.0
    %v1600 = vmax.f32 %v1599, -1.0
    %v1601 = vmul.f32 %v1480, %v1480
    %v1602 = vmin.f32 16.0, %v1601
    %v1603 = vmul.f32 %v1602, 2.1237322e-06
    %v1604 = vadd.f32 %v1603, 0.00028619796
    %v1605 = vmul.f32 %v1602, %v1604
    %v1606 = vadd.f32 %v1605, 0.0036580483
    %v1607 = vmul.f32 %v1602, %v1606
    %v1608 = vadd.f32 %v1607, 0.05243302
    %v1609 = vmul.f32 %v1602, %v1608
    %v1610 = vadd.f32 %v1609, 0.18741608
    %v1611 = vmul.f32 %v1602, %v1610
    %v1612 = vadd.f32 %v1611, 1.1283791
    %v1613 = vmul.f32 %v1480, %v1612
    %v1614 = vmul.f32 %v1602, 3.8918573e-05
    %v1615 = vadd.f32 %v1614, 0.001143296
    %v1616 = vmul.f32 %v1602, %v1615
    %v1617 = vadd.f32 %v1616, 0.014752088
    %v1618 = vmul.f32 %v1602, %v1617
    %v1619 = vadd.f32 %v1618, 0.112945676
    %v1620 = vmul.f32 %v1602, %v1619
    %v1621 = vadd.f32 %v1620, 0.4994258
    %v1622 = vmul.f32 %v1602, %v1621
    %v1623 = vadd.f32 %v1622, 1.0
    %v1624 = vrcp.pop %v1623
    %v1625 = vmul.f32 %v1623, %v1624
    %v1626 = vsub.f32 1.0, %v1625
    %v1627 = vmul.f32 %v1624, %v1626
    %v1628 = vadd.f32 %v1624, %v1627
    %vm1629 = vweird.f32 %v1623
    %vm1630 = vweird.f32 %v1624
    %vm1631 = vmor %vm1629, %vm1630
    %v1632 = vsel %vm1631, %v1624, %v1628
    %v1633 = vand.u32 2147483647, %v1623
    %vm1634 = vcmp.eq.f32.partialorder %v1633, 8.507059e+37
    %v1635 = vand.u32 %v1623, 2147483648
    %v1636 = vor.u32 1.1754944e-38, %v1635
    %v1637 = vsel %vm1634, %v1636, %v1632
    %v1638 = vmul.f32 %v1613, %v1637
    %v1639 = vmin.f32 %v1638, 1.0
    %v1640 = vmax.f32 %v1639, -1.0
    %v1641 = vadd.f32 %v1520, 1.0
    %v1642 = vadd.f32 %v1560, 1.0
    %v1643 = vadd.f32 %v1600, 1.0
    %v1644 = vadd.f32 %v1640, 1.0
    %v1645 = vmul.f32 %v1473, %v1641
    %v1646 = vmul.f32 %v1474, %v1642
    %v1647 = vmul.f32 %v1475, %v1643
    %v1648 = vmul.f32 %v1476, %v1644
    %v1649 = vld [vmem:[#allocation4 + $0x6] ss:$0 sm:$0xff]
    %v1650 = vadd.f32 %v965, %v1649
    %v1651 = vmul.f32 %v1650, 0.5
    %v1652 = vmul.f32 %v1650, 0.70710677
    %v1653 = vmul.f32 %v1652, %v1652
    %v1654 = vmin.f32 16.0, %v1653
    %v1655 = vmul.f32 %v1654, 2.1237322e-06
    %v1656 = vadd.f32 %v1655, 0.00028619796
    %v1657 = vmul.f32 %v1654, %v1656
    %v1658 = vadd.f32 %v1657, 0.0036580483
    %v1659 = vmul.f32 %v1654, %v1658
    %v1660 = vadd.f32 %v1659, 0.05243302
    %v1661 = vmul.f32 %v1654, %v1660
    %v1662 = vadd.f32 %v1661, 0.18741608
    %v1663 = vmul.f32 %v1654, %v1662
    %v1664 = vadd.f32 %v1663, 1.1283791
    %v1665 = vmul.f32 %v1652, %v1664
    %v1666 = vmul.f32 %v1654, 3.8918573e-05
    %v1667 = vadd.f32 %v1666, 0.001143296
    %v1668 = vmul.f32 %v1654, %v1667
    %v1669 = vadd.f32 %v1668, 0.014752088
    %v1670 = vmul.f32 %v1654, %v1669
    %v1671 = vadd.f32 %v1670, 0.112945676
    %v1672 = vmul.f32 %v1654, %v1671
    %v1673 = vadd.f32 %v1672, 0.4994258
    %v1674 = vmul.f32 %v1654, %v1673
    %v1675 = vadd.f32 %v1674, 1.0
    %v1676 = vrcp.pop %v1675
    %v1677 = vmul.f32 %v1675, %v1676
    %v1678 = vsub.f32 1.0, %v1677
    %v1679 = vmul.f32 %v1676, %v1678
    %v1680 = vadd.f32 %v1676, %v1679
    %vm1681 = vweird.f32 %v1675
    %vm1682 = vweird.f32 %v1676
    %vm1683 = vmor %vm1681, %vm1682
    %v1684 = vsel %vm1683, %v1676, %v1680
    %v1685 = vand.u32 2147483647, %v1675
    %vm1686 = vcmp.eq.f32.partialorder %v1685, 8.507059e+37
    %v1687 = vand.u32 %v1675, 2147483648
    %v1688 = vor.u32 1.1754944e-38, %v1687
    %v1689 = vsel %vm1686, %v1688, %v1684
    %v1690 = vmul.f32 %v1665, %v1689
    %v1691 = vmin.f32 %v1690, 1.0
    %v1692 = vmax.f32 %v1691, -1.0
    %v1693 = vadd.f32 %v1692, 1.0
    %v1694 = vmul.f32 %v1651, %v1693
    %v1696 = vrot.slane %v1694, 1
    %v1697 = vperm.slane %v1694, 0
    %v1698 = vperm.slane %v1696, 0
    %v1701 = vadd.f32 %v1645, %v1697
    %v1702 = vadd.f32 %v1646, %v1697
    %v1703 = vadd.f32 %v1647, %v1698
    %v1704 = vadd.f32 %v1648, %v1698
    %v1705 = vrot.slane %v1701, 7
    %v1706 = vrot.slane %v1702, 7
    %v1707 = vrot.slane %v1703, 7
    %v1708 = vrot.slane %v1704, 7
    %v1709 = vsel %vm1058, %v1707, %v1708
    %v1710 = vsel %vm1058, %v1706, %v1707
    %v1711 = vsel %vm1058, %v1705, %v1706
    %v1712 = vsel %vm1058, %v1708, %v1705
    %v1713 = vsel %vm1067, 0.0, %v1712
    %v1714 = vsel %vm1068, 0.0, %v1711
    %v1715 = vsel %vm1069, 0.0, %v1710
    %v1716 = vsel %vm1070, 0.0, %v1709
    %v1717 = vrot.slane %v1701, 1
    %v1718 = vrot.slane %v1702, 1
    %v1719 = vrot.slane %v1703, 1
    %v1720 = vrot.slane %v1704, 1
    %v1721 = vsel %vm1083, %v1719, %v1720
    %v1722 = vsel %vm1083, %v1718, %v1719
    %v1723 = vsel %vm1083, %v1717, %v1718
    %v1724 = vsel %vm1083, %v1720, %v1717
    %v1725 = vsel %vm1092, 0.0, %v1723
    %v1726 = vsel %vm1093, 0.0, %v1722
    %v1727 = vsel %vm1094, 0.0, %v1721
    %v1728 = vsel %vm1095, 0.0, %v1724
    %v1729 = vpack.c.bf16 %v1714, %v1713
    %v1730 = vpack.c.bf16 %v1716, %v1715
    %v1731 = vld [vmem:[#allocation2 + $0x190] sm:$0xf]
    %v1732 = vld [vmem:[#allocation2 + $0x198] sm:$0xf]
    %v1733 = vld [vmem:[#allocation2 + $0x1a0] sm:$0xf]
    %v1734 = vld [vmem:[#allocation2 + $0x1a8] sm:$0xf]
    %v1735 = vld [vmem:[#allocation2 + $0x1b0] sm:$0xf]
    %v1736 = vld [vmem:[#allocation2 + $0x1b8] sm:$0xf]
    %v1737 = vld [vmem:[#allocation2 + $0x1c0] sm:$0xf]
    %v1738 = vld [vmem:[#allocation2 + $0x1c8] sm:$0xf]
    %v1739 = vld [vmem:[#allocation2 + $0x1d0] sm:$0xf]
    %v1740 = vld [vmem:[#allocation2 + $0x1d8] sm:$0xf]
    %v1741 = vld [vmem:[#allocation2 + $0x1e0] sm:$0xf]
    %v1742 = vld [vmem:[#allocation2 + $0x1e8] sm:$0xf]
    %v1743 = vld [vmem:[#allocation2 + $0x1f0] sm:$0xf]
    %v1744 = vld [vmem:[#allocation2 + $0x1f8] sm:$0xf]
    %v1745 = vld [vmem:[#allocation2 + $0x200] sm:$0xf]
    %v1746 = vld [vmem:[#allocation2 + $0x208] sm:$0xf]
    %v1747 = vpack.c.bf16 %v1702, %v1701
    %v1748 = vpack.c.bf16 %v1704, %v1703
    %v1749 = vld [vmem:[#allocation2 + $0x210] sm:$0xf]
    %v1750 = vld [vmem:[#allocation2 + $0x218] sm:$0xf]
    %v1751 = vld [vmem:[#allocation2 + $0x220] sm:$0xf]
    %v1752 = vld [vmem:[#allocation2 + $0x228] sm:$0xf]
    %v1753 = vld [vmem:[#allocation2 + $0x230] sm:$0xf]
    %v1754 = vld [vmem:[#allocation2 + $0x238] sm:$0xf]
    %v1755 = vld [vmem:[#allocation2 + $0x240] sm:$0xf]
    %v1756 = vld [vmem:[#allocation2 + $0x248] sm:$0xf]
    %v1757 = vld [vmem:[#allocation2 + $0x250] sm:$0xf]
    %v1758 = vld [vmem:[#allocation2 + $0x258] sm:$0xf]
    %v1759 = vld [vmem:[#allocation2 + $0x260] sm:$0xf]
    %v1760 = vld [vmem:[#allocation2 + $0x268] sm:$0xf]
    %v1761 = vld [vmem:[#allocation2 + $0x270] sm:$0xf]
    %v1762 = vld [vmem:[#allocation2 + $0x278] sm:$0xf]
    %v1763 = vld [vmem:[#allocation2 + $0x280] sm:$0xf]
    %v1764 = vld [vmem:[#allocation2 + $0x288] sm:$0xf]
    %v1781 = vunpack.c.l.b16 %v1749
    %v1782 = vunpack.c.l.b16 %v1750
    %v1783 = vunpack.c.l.b16 %v1751
    %v1784 = vunpack.c.l.b16 %v1752
    %v1785 = vunpack.c.l.b16 %v1753
    %v1786 = vunpack.c.l.b16 %v1754
    %v1787 = vunpack.c.l.b16 %v1755
    %v1788 = vunpack.c.l.b16 %v1756
    %v1789 = vunpack.c.l.b16 %v1757
    %v1790 = vunpack.c.l.b16 %v1758
    %v1791 = vunpack.c.l.b16 %v1759
    %v1792 = vunpack.c.l.b16 %v1760
    %v1793 = vunpack.c.l.b16 %v1761
    %v1794 = vunpack.c.l.b16 %v1762
    %v1795 = vunpack.c.l.b16 %v1763
    %v1796 = vunpack.c.l.b16 %v1764
    %v1797 = vpack.c.b16 %v1782, %v1781
    %v1798 = vpack.c.b16 %v1784, %v1783
    %v1799 = vpack.c.b16 %v1786, %v1785
    %v1800 = vpack.c.b16 %v1788, %v1787
    %v1801 = vpack.c.b16 %v1790, %v1789
    %v1802 = vpack.c.b16 %v1792, %v1791
    %v1803 = vpack.c.b16 %v1794, %v1793
    %v1804 = vpack.c.b16 %v1796, %v1795
    %1813 = vmatpush.bf16.msra.mxu0 %v1804
    %1814 = vmatpush.bf16.msra.mxu0 %v1803
    %1815 = vmatpush.bf16.msra.mxu0 %v1802
    %1816 = vmatpush.bf16.msra.mxu0 %v1801
    %1817 = vmatpush.bf16.msra.mxu0 %v1800
    %1818 = vmatpush.bf16.msra.mxu0 %v1799
    %1819 = vmatpush.bf16.msra.mxu0 %v1798
    %1820 = vmatpush.bf16.msra.mxu0 %v1797
    %1821 = vmatmul.bf16.gmra.mxu0 %v1747
    %v1822 = vpop.f32.mrf.mxu0
    %v1823 = vadd.f32 0.0, %v1822
    %v1824 = vpop.f32.mrf.mxu0
    %v1825 = vadd.f32 0.0, %v1824
    %1826 = vmatmul.bf16.gmra.mxu0 %v1748
    %v1827 = vpop.f32.mrf.mxu0
    %v1828 = vadd.f32 0.0, %v1827
    %v1829 = vpop.f32.mrf.mxu0
    %v1830 = vadd.f32 0.0, %v1829
    %1831 = vdwg.mxu0
    %v1848 = vunpack.c.l.b16 %v1731
    %v1849 = vunpack.c.l.b16 %v1732
    %v1850 = vunpack.c.l.b16 %v1733
    %v1851 = vunpack.c.l.b16 %v1734
    %v1852 = vunpack.c.l.b16 %v1735
    %v1853 = vunpack.c.l.b16 %v1736
    %v1854 = vunpack.c.l.b16 %v1737
    %v1855 = vunpack.c.l.b16 %v1738
    %v1856 = vunpack.c.l.b16 %v1739
    %v1857 = vunpack.c.l.b16 %v1740
    %v1858 = vunpack.c.l.b16 %v1741
    %v1859 = vunpack.c.l.b16 %v1742
    %v1860 = vunpack.c.l.b16 %v1743
    %v1861 = vunpack.c.l.b16 %v1744
    %v1862 = vunpack.c.l.b16 %v1745
    %v1863 = vunpack.c.l.b16 %v1746
    %v1864 = vpack.c.b16 %v1849, %v1848
    %v1865 = vpack.c.b16 %v1851, %v1850
    %v1866 = vpack.c.b16 %v1853, %v1852
    %v1867 = vpack.c.b16 %v1855, %v1854
    %v1868 = vpack.c.b16 %v1857, %v1856
    %v1869 = vpack.c.b16 %v1859, %v1858
    %v1870 = vpack.c.b16 %v1861, %v1860
    %v1871 = vpack.c.b16 %v1863, %v1862
    %1880 = vmatpush.bf16.msra.mxu0 %v1871
    %1881 = vmatpush.bf16.msra.mxu0 %v1870
    %1882 = vmatpush.bf16.msra.mxu0 %v1869
    %1883 = vmatpush.bf16.msra.mxu0 %v1868
    %1884 = vmatpush.bf16.msra.mxu0 %v1867
    %1885 = vmatpush.bf16.msra.mxu0 %v1866
    %1886 = vmatpush.bf16.msra.mxu0 %v1865
    %1887 = vmatpush.bf16.msra.mxu0 %v1864
    %1888 = vmatmul.bf16.gmra.mxu0 %v1729
    %v1889 = vpop.f32.mrf.mxu0
    %v1890 = vadd.f32 %v1823, %v1889
    %v1891 = vpop.f32.mrf.mxu0
    %v1892 = vadd.f32 %v1825, %v1891
    %1893 = vmatmul.bf16.gmra.mxu0 %v1730
    %v1894 = vpop.f32.mrf.mxu0
    %v1895 = vadd.f32 %v1828, %v1894
    %v1896 = vpop.f32.mrf.mxu0
    %v1897 = vadd.f32 %v1830, %v1896
    %1898 = vdwg.mxu0
    %v1899 = vpack.c.bf16 %v1726, %v1725
    %v1900 = vpack.c.bf16 %v1728, %v1727
    %v1901 = vld [vmem:[#allocation2 + $0x290] sm:$0xf]
    %v1902 = vld [vmem:[#allocation2 + $0x298] sm:$0xf]
    %v1903 = vld [vmem:[#allocation2 + $0x2a0] sm:$0xf]
    %v1904 = vld [vmem:[#allocation2 + $0x2a8] sm:$0xf]
    %v1905 = vld [vmem:[#allocation2 + $0x2b0] sm:$0xf]
    %v1906 = vld [vmem:[#allocation2 + $0x2b8] sm:$0xf]
    %v1907 = vld [vmem:[#allocation2 + $0x2c0] sm:$0xf]
    %v1908 = vld [vmem:[#allocation2 + $0x2c8] sm:$0xf]
    %v1909 = vld [vmem:[#allocation2 + $0x2d0] sm:$0xf]
    %v1910 = vld [vmem:[#allocation2 + $0x2d8] sm:$0xf]
    %v1911 = vld [vmem:[#allocation2 + $0x2e0] sm:$0xf]
    %v1912 = vld [vmem:[#allocation2 + $0x2e8] sm:$0xf]
    %v1913 = vld [vmem:[#allocation2 + $0x2f0] sm:$0xf]
    %v1914 = vld [vmem:[#allocation2 + $0x2f8] sm:$0xf]
    %v1915 = vld [vmem:[#allocation2 + $0x300] sm:$0xf]
    %v1916 = vld [vmem:[#allocation2 + $0x308] sm:$0xf]
    %v1933 = vunpack.c.l.b16 %v1901
    %v1934 = vunpack.c.l.b16 %v1902
    %v1935 = vunpack.c.l.b16 %v1903
    %v1936 = vunpack.c.l.b16 %v1904
    %v1937 = vunpack.c.l.b16 %v1905
    %v1938 = vunpack.c.l.b16 %v1906
    %v1939 = vunpack.c.l.b16 %v1907
    %v1940 = vunpack.c.l.b16 %v1908
    %v1941 = vunpack.c.l.b16 %v1909
    %v1942 = vunpack.c.l.b16 %v1910
    %v1943 = vunpack.c.l.b16 %v1911
    %v1944 = vunpack.c.l.b16 %v1912
    %v1945 = vunpack.c.l.b16 %v1913
    %v1946 = vunpack.c.l.b16 %v1914
    %v1947 = vunpack.c.l.b16 %v1915
    %v1948 = vunpack.c.l.b16 %v1916
    %v1949 = vpack.c.b16 %v1934, %v1933
    %v1950 = vpack.c.b16 %v1936, %v1935
    %v1951 = vpack.c.b16 %v1938, %v1937
    %v1952 = vpack.c.b16 %v1940, %v1939
    %v1953 = vpack.c.b16 %v1942, %v1941
    %v1954 = vpack.c.b16 %v1944, %v1943
    %v1955 = vpack.c.b16 %v1946, %v1945
    %v1956 = vpack.c.b16 %v1948, %v1947
    %1965 = vmatpush.bf16.msra.mxu0 %v1956
    %1966 = vmatpush.bf16.msra.mxu0 %v1955
    %1967 = vmatpush.bf16.msra.mxu0 %v1954
    %1968 = vmatpush.bf16.msra.mxu0 %v1953
    %1969 = vmatpush.bf16.msra.mxu0 %v1952
    %1970 = vmatpush.bf16.msra.mxu0 %v1951
    %1971 = vmatpush.bf16.msra.mxu0 %v1950
    %1972 = vmatpush.bf16.msra.mxu0 %v1949
    %1973 = vmatmul.bf16.gmra.mxu0 %v1899
    %v1974 = vpop.f32.mrf.mxu0
    %v1975 = vadd.f32 0.0, %v1974
    %v1976 = vpop.f32.mrf.mxu0
    %v1977 = vadd.f32 0.0, %v1976
    %1978 = vmatmul.bf16.gmra.mxu0 %v1900
    %v1979 = vpop.f32.mrf.mxu0
    %v1980 = vadd.f32 0.0, %v1979
    %v1981 = vpop.f32.mrf.mxu0
    %v1982 = vadd.f32 0.0, %v1981
    %1983 = vdwg.mxu0
    %v1984 = vadd.f32 %v1890, %v1975
    %v1985 = vadd.f32 %v1892, %v1977
    %v1986 = vadd.f32 %v1895, %v1980
    %v1987 = vadd.f32 %v1897, %v1982
    %v1988 = vld [vmem:[#allocation4 + $0x7] ss:$0 sm:$0xff]
    %v1989 = vadd.f32 %v1984, %v1988
    %v1990 = vadd.f32 %v1985, %v1988
    %v1991 = vadd.f32 %v1986, %v1988
    %v1992 = vadd.f32 %v1987, %v1988
    %v1993 = vadd.f32 %v1989, %v1990
    %v1994 = vadd.f32 %v1993, %v1991
    %v1995 = vadd.f32 %v1994, %v1992
    %v1996 = vrot.slane %v1995, 4
    %v1997 = vadd.f32 %v1995, %v1996
    %v1998 = vrot.slane %v1997, 2
    %v1999 = vadd.f32 %v1997, %v1998
    %v2000 = vrot.slane %v1999, 1
    %v2001 = vadd.f32 %v1999, %v2000
    %v2002 = vmul.f32 %v2001, %v1430
    %v2003 = vmul.f32 %v1989, %v1989
    %v2004 = vmul.f32 %v1990, %v1990
    %v2005 = vmul.f32 %v1991, %v1991
    %v2006 = vmul.f32 %v1992, %v1992
    %v2007 = vadd.f32 %v2003, %v2004
    %v2008 = vadd.f32 %v2007, %v2005
    %v2009 = vadd.f32 %v2008, %v2006
    %v2010 = vrot.slane %v2009, 4
    %v2011 = vadd.f32 %v2009, %v2010
    %v2012 = vrot.slane %v2011, 2
    %v2013 = vadd.f32 %v2011, %v2012
    %v2014 = vrot.slane %v2013, 1
    %v2015 = vadd.f32 %v2013, %v2014
    %v2016 = vmul.f32 %v2015, %v1430
    %v2017 = vmul.f32 %v2002, %v2002
    %v2018 = vsub.f32 %v2016, %v2017
    %v2019 = vmax.f32 %v2018, 0.0
    %v2020 = vld [vmem:[#allocation4 + $0x10] ss:$0 sm:$0xff]
    %v2021 = vadd.f32 %v2019, 1e-05
    %v2022 = vrsqrt.pop %v2021
    %v2023 = vmul.f32 %v2022, %v2021
    %v2024 = vmul.f32 %v2023, %v2022
    %v2025 = vmul.f32 0.5, %v2024
    %v2026 = vsub.f32 1.5, %v2025
    %v2027 = vmul.f32 %v2022, %v2026
    %vm2028 = vweird.f32 %v2021
    %vm2029 = vweird.f32 %v2022
    %vm2030 = vmor %vm2028, %vm2029
    %v2031 = vsel %vm2030, %v2022, %v2027
    %v2032 = vmul.f32 %v2020, %v2031
    %v2033 = vld [vmem:[#allocation4 + $0x11] ss:$0 sm:$0xff]
    %v2034 = vmul.f32 %v2002, %v2032
    %v2035 = vsub.f32 %v2033, %v2034
    %v2036 = vmul.f32 %v1989, %v2032
    %v2037 = vmul.f32 %v1990, %v2032
    %v2038 = vmul.f32 %v1991, %v2032
    %v2039 = vmul.f32 %v1992, %v2032
    %v2040 = vadd.f32 %v2036, %v2035
    %v2041 = vadd.f32 %v2037, %v2035
    %v2042 = vadd.f32 %v2038, %v2035
    %v2043 = vadd.f32 %v2039, %v2035
    %v2044 = vmul.f32 %v2040, 0.5
    %v2045 = vmul.f32 %v2041, 0.5
    %v2046 = vmul.f32 %v2042, 0.5
    %v2047 = vmul.f32 %v2043, 0.5
    %v2048 = vmul.f32 %v2040, 0.70710677
    %v2049 = vmul.f32 %v2041, 0.70710677
    %v2050 = vmul.f32 %v2042, 0.70710677
    %v2051 = vmul.f32 %v2043, 0.70710677
    %v2052 = vmul.f32 %v2048, %v2048
    %v2053 = vmin.f32 16.0, %v2052
    %v2054 = vmul.f32 %v2053, 2.1237322e-06
    %v2055 = vadd.f32 %v2054, 0.00028619796
    %v2056 = vmul.f32 %v2053, %v2055
    %v2057 = vadd.f32 %v2056, 0.0036580483
    %v2058 = vmul.f32 %v2053, %v2057
    %v2059 = vadd.f32 %v2058, 0.05243302
    %v2060 = vmul.f32 %v2053, %v2059
    %v2061 = vadd.f32 %v2060, 0.18741608
    %v2062 = vmul.f32 %v2053, %v2061
    %v2063 = vadd.f32 %v2062, 1.1283791
    %v2064 = vmul.f32 %v2048, %v2063
    %v2065 = vmul.f32 %v2053, 3.8918573e-05
    %v2066 = vadd.f32 %v2065, 0.001143296
    %v2067 = vmul.f32 %v2053, %v2066
    %v2068 = vadd.f32 %v2067, 0.014752088
    %v2069 = vmul.f32 %v2053, %v2068
    %v2070 = vadd.f32 %v2069, 0.112945676
    %v2071 = vmul.f32 %v2053, %v2070
    %v2072 = vadd.f32 %v2071, 0.4994258
    %v2073 = vmul.f32 %v2053, %v2072
    %v2074 = vadd.f32 %v2073, 1.0
    %v2075 = vrcp.pop %v2074
    %v2076 = vmul.f32 %v2074, %v2075
    %v2077 = vsub.f32 1.0, %v2076
    %v2078 = vmul.f32 %v2075, %v2077
    %v2079 = vadd.f32 %v2075, %v2078
    %vm2080 = vweird.f32 %v2074
    %vm2081 = vweird.f32 %v2075
    %vm2082 = vmor %vm2080, %vm2081
    %v2083 = vsel %vm2082, %v2075, %v2079
    %v2084 = vand.u32 2147483647, %v2074
    %vm2085 = vcmp.eq.f32.partialorder %v2084, 8.507059e+37
    %v2086 = vand.u32 %v2074, 2147483648
    %v2087 = vor.u32 1.1754944e-38, %v2086
    %v2088 = vsel %vm2085, %v2087, %v2083
    %v2089 = vmul.f32 %v2064, %v2088
    %v2090 = vmin.f32 %v2089, 1.0
    %v2091 = vmax.f32 %v2090, -1.0
    %v2092 = vmul.f32 %v2049, %v2049
    %v2093 = vmin.f32 16.0, %v2092
    %v2094 = vmul.f32 %v2093, 2.1237322e-06
    %v2095 = vadd.f32 %v2094, 0.00028619796
    %v2096 = vmul.f32 %v2093, %v2095
    %v2097 = vadd.f32 %v2096, 0.0036580483
    %v2098 = vmul.f32 %v2093, %v2097
    %v2099 = vadd.f32 %v2098, 0.05243302
    %v2100 = vmul.f32 %v2093, %v2099
    %v2101 = vadd.f32 %v2100, 0.18741608
    %v2102 = vmul.f32 %v2093, %v2101
    %v2103 = vadd.f32 %v2102, 1.1283791
    %v2104 = vmul.f32 %v2049, %v2103
    %v2105 = vmul.f32 %v2093, 3.8918573e-05
    %v2106 = vadd.f32 %v2105, 0.001143296
    %v2107 = vmul.f32 %v2093, %v2106
    %v2108 = vadd.f32 %v2107, 0.014752088
    %v2109 = vmul.f32 %v2093, %v2108
    %v2110 = vadd.f32 %v2109, 0.112945676
    %v2111 = vmul.f32 %v2093, %v2110
    %v2112 = vadd.f32 %v2111, 0.4994258
    %v2113 = vmul.f32 %v2093, %v2112
    %v2114 = vadd.f32 %v2113, 1.0
    %v2115 = vrcp.pop %v2114
    %v2116 = vmul.f32 %v2114, %v2115
    %v2117 = vsub.f32 1.0, %v2116
    %v2118 = vmul.f32 %v2115, %v2117
    %v2119 = vadd.f32 %v2115, %v2118
    %vm2120 = vweird.f32 %v2114
    %vm2121 = vweird.f32 %v2115
    %vm2122 = vmor %vm2120, %vm2121
    %v2123 = vsel %vm2122, %v2115, %v2119
    %v2124 = vand.u32 2147483647, %v2114
    %vm2125 = vcmp.eq.f32.partialorder %v2124, 8.507059e+37
    %v2126 = vand.u32 %v2114, 2147483648
    %v2127 = vor.u32 1.1754944e-38, %v2126
    %v2128 = vsel %vm2125, %v2127, %v2123
    %v2129 = vmul.f32 %v2104, %v2128
    %v2130 = vmin.f32 %v2129, 1.0
    %v2131 = vmax.f32 %v2130, -1.0
    %v2132 = vmul.f32 %v2050, %v2050
    %v2133 = vmin.f32 16.0, %v2132
    %v2134 = vmul.f32 %v2133, 2.1237322e-06
    %v2135 = vadd.f32 %v2134, 0.00028619796
    %v2136 = vmul.f32 %v2133, %v2135
    %v2137 = vadd.f32 %v2136, 0.0036580483
    %v2138 = vmul.f32 %v2133, %v2137
    %v2139 = vadd.f32 %v2138, 0.05243302
    %v2140 = vmul.f32 %v2133, %v2139
    %v2141 = vadd.f32 %v2140, 0.18741608
    %v2142 = vmul.f32 %v2133, %v2141
    %v2143 = vadd.f32 %v2142, 1.1283791
    %v2144 = vmul.f32 %v2050, %v2143
    %v2145 = vmul.f32 %v2133, 3.8918573e-05
    %v2146 = vadd.f32 %v2145, 0.001143296
    %v2147 = vmul.f32 %v2133, %v2146
    %v2148 = vadd.f32 %v2147, 0.014752088
    %v2149 = vmul.f32 %v2133, %v2148
    %v2150 = vadd.f32 %v2149, 0.112945676
    %v2151 = vmul.f32 %v2133, %v2150
    %v2152 = vadd.f32 %v2151, 0.4994258
    %v2153 = vmul.f32 %v2133, %v2152
    %v2154 = vadd.f32 %v2153, 1.0
    %v2155 = vrcp.pop %v2154
    %v2156 = vmul.f32 %v2154, %v2155
    %v2157 = vsub.f32 1.0, %v2156
    %v2158 = vmul.f32 %v2155, %v2157
    %v2159 = vadd.f32 %v2155, %v2158
    %vm2160 = vweird.f32 %v2154
    %vm2161 = vweird.f32 %v2155
    %vm2162 = vmor %vm2160, %vm2161
    %v2163 = vsel %vm2162, %v2155, %v2159
    %v2164 = vand.u32 2147483647, %v2154
    %vm2165 = vcmp.eq.f32.partialorder %v2164, 8.507059e+37
    %v2166 = vand.u32 %v2154, 2147483648
    %v2167 = vor.u32 1.1754944e-38, %v2166
    %v2168 = vsel %vm2165, %v2167, %v2163
    %v2169 = vmul.f32 %v2144, %v2168
    %v2170 = vmin.f32 %v2169, 1.0
    %v2171 = vmax.f32 %v2170, -1.0
    %v2172 = vmul.f32 %v2051, %v2051
    %v2173 = vmin.f32 16.0, %v2172
    %v2174 = vmul.f32 %v2173, 2.1237322e-06
    %v2175 = vadd.f32 %v2174, 0.00028619796
    %v2176 = vmul.f32 %v2173, %v2175
    %v2177 = vadd.f32 %v2176, 0.0036580483
    %v2178 = vmul.f32 %v2173, %v2177
    %v2179 = vadd.f32 %v2178, 0.05243302
    %v2180 = vmul.f32 %v2173, %v2179
    %v2181 = vadd.f32 %v2180, 0.18741608
    %v2182 = vmul.f32 %v2173, %v2181
    %v2183 = vadd.f32 %v2182, 1.1283791
    %v2184 = vmul.f32 %v2051, %v2183
    %v2185 = vmul.f32 %v2173, 3.8918573e-05
    %v2186 = vadd.f32 %v2185, 0.001143296
    %v2187 = vmul.f32 %v2173, %v2186
    %v2188 = vadd.f32 %v2187, 0.014752088
    %v2189 = vmul.f32 %v2173, %v2188
    %v2190 = vadd.f32 %v2189, 0.112945676
    %v2191 = vmul.f32 %v2173, %v2190
    %v2192 = vadd.f32 %v2191, 0.4994258
    %v2193 = vmul.f32 %v2173, %v2192
    %v2194 = vadd.f32 %v2193, 1.0
    %v2195 = vrcp.pop %v2194
    %v2196 = vmul.f32 %v2194, %v2195
    %v2197 = vsub.f32 1.0, %v2196
    %v2198 = vmul.f32 %v2195, %v2197
    %v2199 = vadd.f32 %v2195, %v2198
    %vm2200 = vweird.f32 %v2194
    %vm2201 = vweird.f32 %v2195
    %vm2202 = vmor %vm2200, %vm2201
    %v2203 = vsel %vm2202, %v2195, %v2199
    %v2204 = vand.u32 2147483647, %v2194
    %vm2205 = vcmp.eq.f32.partialorder %v2204, 8.507059e+37
    %v2206 = vand.u32 %v2194, 2147483648
    %v2207 = vor.u32 1.1754944e-38, %v2206
    %v2208 = vsel %vm2205, %v2207, %v2203
    %v2209 = vmul.f32 %v2184, %v2208
    %v2210 = vmin.f32 %v2209, 1.0
    %v2211 = vmax.f32 %v2210, -1.0
    %v2212 = vadd.f32 %v2091, 1.0
    %v2213 = vadd.f32 %v2131, 1.0
    %v2214 = vadd.f32 %v2171, 1.0
    %v2215 = vadd.f32 %v2211, 1.0
    %v2216 = vmul.f32 %v2044, %v2212
    %v2217 = vmul.f32 %v2045, %v2213
    %v2218 = vmul.f32 %v2046, %v2214
    %v2219 = vmul.f32 %v2047, %v2215
    %v2220 = vld [vmem:[#allocation2 + $0x310] sm:$0xf]
    %v2221 = vld [vmem:[#allocation2 + $0x318] sm:$0xf]
    %v2222 = vld [vmem:[#allocation2 + $0x320] sm:$0xf]
    %v2223 = vld [vmem:[#allocation2 + $0x328] sm:$0xf]
    %v2224 = vld [vmem:[#allocation2 + $0x330] sm:$0xf]
    %v2225 = vld [vmem:[#allocation2 + $0x338] sm:$0xf]
    %v2226 = vld [vmem:[#allocation2 + $0x340] sm:$0xf]
    %v2227 = vld [vmem:[#allocation2 + $0x348] sm:$0xf]
    %v2228 = vld [vmem:[#allocation4 + $0x12] ss:$0 sm:$0xff]
    %v2237 = vunpack.c.l.b16 %v2220
    %v2238 = vunpack.c.l.b16 %v2221
    %v2239 = vunpack.c.l.b16 %v2222
    %v2240 = vunpack.c.l.b16 %v2223
    %v2241 = vunpack.c.l.b16 %v2224
    %v2242 = vunpack.c.l.b16 %v2225
    %v2243 = vunpack.c.l.b16 %v2226
    %v2244 = vunpack.c.l.b16 %v2227
    %v2245 = vpack.c.b16 %v2238, %v2237
    %v2246 = vpack.c.b16 %v2240, %v2239
    %v2247 = vpack.c.b16 %v2242, %v2241
    %v2248 = vpack.c.b16 %v2244, %v2243
    %2253 = vmatpush.bf16.msra.mxu0 0
    %2254 = vmatpush.bf16.msra.mxu0 0
    %2255 = vmatpush.bf16.msra.mxu0 0
    %2256 = vmatpush.bf16.msra.mxu0 0
    %2257 = vmatpush.bf16.msra.mxu0 %v2248
    %2258 = vmatpush.bf16.msra.mxu0 %v2247
    %2259 = vmatpush.bf16.msra.mxu0 %v2246
    %2260 = vmatpush.bf16.msra.mxu0 %v2245
    %2261 = vmatmul.bf16.gmra.mxu0 %v1274
    %v2262 = vpop.f32.mrf.mxu0
    %v2263 = vadd.f32 %v2228, %v2262
    %v2264 = vpop.f32.mrf.mxu0
    %v2265 = vadd.f32 %v2228, %v2264
    %2266 = vmatmul.bf16.gmra.mxu0 %v1277
    %v2267 = vpop.f32.mrf.mxu0
    %v2268 = vadd.f32 %v2228, %v2267
    %v2269 = vpop.f32.mrf.mxu0
    %v2270 = vadd.f32 %v2228, %v2269
    %2271 = vdwg.mxu0
    %v2272 = vadd.f32 %v2216, %v2263
    %v2273 = vadd.f32 %v2217, %v2265
    %v2274 = vadd.f32 %v2218, %v2268
    %v2275 = vadd.f32 %v2219, %v2270
    %v2276 = vrot.slane %v2272, 7
    %v2277 = vrot.slane %v2273, 7
    %v2278 = vrot.slane %v2274, 7
    %v2279 = vrot.slane %v2275, 7
    %v2280 = vsel %vm1058, %v2278, %v2279
    %v2281 = vsel %vm1058, %v2277, %v2278
    %v2282 = vsel %vm1058, %v2276, %v2277
    %v2283 = vsel %vm1058, %v2279, %v2276
    %v2284 = vsel %vm1067, 0.0, %v2283
    %v2285 = vsel %vm1068, 0.0, %v2282
    %v2286 = vsel %vm1069, 0.0, %v2281
    %v2287 = vsel %vm1070, 0.0, %v2280
    %v2288 = vrot.slane %v2272, 1
    %v2289 = vrot.slane %v2273, 1
    %v2290 = vrot.slane %v2274, 1
    %v2291 = vrot.slane %v2275, 1
    %v2292 = vsel %vm1083, %v2290, %v2291
    %v2293 = vsel %vm1083, %v2289, %v2290
    %v2294 = vsel %vm1083, %v2288, %v2289
    %v2295 = vsel %vm1083, %v2291, %v2288
    %v2296 = vsel %vm1092, 0.0, %v2294
    %v2297 = vsel %vm1093, 0.0, %v2293
    %v2298 = vsel %vm1094, 0.0, %v2292
    %v2299 = vsel %vm1095, 0.0, %v2295
    %v2300 = vpack.c.bf16 %v2285, %v2284
    %v2301 = vpack.c.bf16 %v2287, %v2286
    %v2302 = vld [vmem:[#allocation2 + $0x350] sm:$0xff]
    %v2303 = vld [vmem:[#allocation2 + $0x358] sm:$0xff]
    %v2304 = vld [vmem:[#allocation2 + $0x360] sm:$0xff]
    %v2305 = vld [vmem:[#allocation2 + $0x368] sm:$0xff]
    %v2306 = vld [vmem:[#allocation2 + $0x370] sm:$0xff]
    %v2307 = vld [vmem:[#allocation2 + $0x378] sm:$0xff]
    %v2308 = vld [vmem:[#allocation2 + $0x380] sm:$0xff]
    %v2309 = vld [vmem:[#allocation2 + $0x388] sm:$0xff]
    %v2310 = vld [vmem:[#allocation2 + $0x390] sm:$0xff]
    %v2311 = vld [vmem:[#allocation2 + $0x398] sm:$0xff]
    %v2312 = vld [vmem:[#allocation2 + $0x3a0] sm:$0xff]
    %v2313 = vld [vmem:[#allocation2 + $0x3a8] sm:$0xff]
    %v2314 = vld [vmem:[#allocation2 + $0x3b0] sm:$0xff]
    %v2315 = vld [vmem:[#allocation2 + $0x3b8] sm:$0xff]
    %v2316 = vld [vmem:[#allocation2 + $0x3c0] sm:$0xff]
    %v2317 = vld [vmem:[#allocation2 + $0x3c8] sm:$0xff]
    %v2318 = vpack.c.bf16 %v2273, %v2272
    %v2319 = vpack.c.bf16 %v2275, %v2274
    %v2320 = vld [vmem:[#allocation2 + $0x3d0] sm:$0xff]
    %v2321 = vld [vmem:[#allocation2 + $0x3d8] sm:$0xff]
    %v2322 = vld [vmem:[#allocation2 + $0x3e0] sm:$0xff]
    %v2323 = vld [vmem:[#allocation2 + $0x3e8] sm:$0xff]
    %v2324 = vld [vmem:[#allocation2 + $0x3f0] sm:$0xff]
    %v2325 = vld [vmem:[#allocation2 + $0x3f8] sm:$0xff]
    %v2326 = vld [vmem:[#allocation2 + $0x400] sm:$0xff]
    %v2327 = vld [vmem:[#allocation2 + $0x408] sm:$0xff]
    %v2328 = vld [vmem:[#allocation2 + $0x410] sm:$0xff]
    %v2329 = vld [vmem:[#allocation2 + $0x418] sm:$0xff]
    %v2330 = vld [vmem:[#allocation2 + $0x420] sm:$0xff]
    %v2331 = vld [vmem:[#allocation2 + $0x428] sm:$0xff]
    %v2332 = vld [vmem:[#allocation2 + $0x430] sm:$0xff]
    %v2333 = vld [vmem:[#allocation2 + $0x438] sm:$0xff]
    %v2334 = vld [vmem:[#allocation2 + $0x440] sm:$0xff]
    %v2335 = vld [vmem:[#allocation2 + $0x448] sm:$0xff]
    %v2352 = vunpack.c.l.b16 %v2320
    %v2353 = vunpack.c.h.b16 %v2320
    %v2354 = vunpack.c.l.b16 %v2321
    %v2355 = vunpack.c.h.b16 %v2321
    %v2356 = vunpack.c.l.b16 %v2322
    %v2357 = vunpack.c.h.b16 %v2322
    %v2358 = vunpack.c.l.b16 %v2323
    %v2359 = vunpack.c.h.b16 %v2323
    %v2360 = vunpack.c.l.b16 %v2324
    %v2361 = vunpack.c.h.b16 %v2324
    %v2362 = vunpack.c.l.b16 %v2325
    %v2363 = vunpack.c.h.b16 %v2325
    %v2364 = vunpack.c.l.b16 %v2326
    %v2365 = vunpack.c.h.b16 %v2326
    %v2366 = vunpack.c.l.b16 %v2327
    %v2367 = vunpack.c.h.b16 %v2327
    %v2368 = vunpack.c.l.b16 %v2328
    %v2369 = vunpack.c.h.b16 %v2328
    %v2370 = vunpack.c.l.b16 %v2329
    %v2371 = vunpack.c.h.b16 %v2329
    %v2372 = vunpack.c.l.b16 %v2330
    %v2373 = vunpack.c.h.b16 %v2330
    %v2374 = vunpack.c.l.b16 %v2331
    %v2375 = vunpack.c.h.b16 %v2331
    %v2376 = vunpack.c.l.b16 %v2332
    %v2377 = vunpack.c.h.b16 %v2332
    %v2378 = vunpack.c.l.b16 %v2333
    %v2379 = vunpack.c.h.b16 %v2333
    %v2380 = vunpack.c.l.b16 %v2334
    %v2381 = vunpack.c.h.b16 %v2334
    %v2382 = vunpack.c.l.b16 %v2335
    %v2383 = vunpack.c.h.b16 %v2335
    %v2384 = vpack.c.b16 %v2354, %v2352
    %v2385 = vpack.c.b16 %v2355, %v2353
    %v2386 = vpack.c.b16 %v2358, %v2356
    %v2387 = vpack.c.b16 %v2359, %v2357
    %v2388 = vpack.c.b16 %v2362, %v2360
    %v2389 = vpack.c.b16 %v2363, %v2361
    %v2390 = vpack.c.b16 %v2366, %v2364
    %v2391 = vpack.c.b16 %v2367, %v2365
    %v2392 = vpack.c.b16 %v2370, %v2368
    %v2393 = vpack.c.b16 %v2371, %v2369
    %v2394 = vpack.c.b16 %v2374, %v2372
    %v2395 = vpack.c.b16 %v2375, %v2373
    %v2396 = vpack.c.b16 %v2378, %v2376
    %v2397 = vpack.c.b16 %v2379, %v2377
    %v2398 = vpack.c.b16 %v2382, %v2380
    %v2399 = vpack.c.b16 %v2383, %v2381
    %2416 = vmatpush.bf16.msra.mxu0 %v2398
    %2417 = vmatpush.bf16.msra.mxu0 %v2396
    %2418 = vmatpush.bf16.msra.mxu0 %v2394
    %2419 = vmatpush.bf16.msra.mxu0 %v2392
    %2420 = vmatpush.bf16.msra.mxu0 %v2390
    %2421 = vmatpush.bf16.msra.mxu0 %v2388
    %2422 = vmatpush.bf16.msra.mxu0 %v2386
    %2423 = vmatpush.bf16.msra.mxu0 %v2384
    %2424 = vmatmul.bf16.gmra.mxu0 %v2318
    %v2425 = vpop.f32.mrf.mxu0
    %v2426 = vadd.f32 0.0, %v2425
    %v2427 = vpop.f32.mrf.mxu0
    %v2428 = vadd.f32 0.0, %v2427
    %2429 = vmatmul.bf16.gmra.mxu0 %v2319
    %v2430 = vpop.f32.mrf.mxu0
    %v2431 = vadd.f32 0.0, %v2430
    %v2432 = vpop.f32.mrf.mxu0
    %v2433 = vadd.f32 0.0, %v2432
    %2434 = vdwg.mxu0
    %2435 = vmatpush.bf16.msra.mxu0 %v2399
    %2436 = vmatpush.bf16.msra.mxu0 %v2397
    %2437 = vmatpush.bf16.msra.mxu0 %v2395
    %2438 = vmatpush.bf16.msra.mxu0 %v2393
    %2439 = vmatpush.bf16.msra.mxu0 %v2391
    %2440 = vmatpush.bf16.msra.mxu0 %v2389
    %2441 = vmatpush.bf16.msra.mxu0 %v2387
    %2442 = vmatpush.bf16.msra.mxu0 %v2385
    %2443 = vmatmul.bf16.gmra.mxu0 %v2318
    %v2444 = vpop.f32.mrf.mxu0
    %v2445 = vadd.f32 0.0, %v2444
    %v2446 = vpop.f32.mrf.mxu0
    %v2447 = vadd.f32 0.0, %v2446
    %2448 = vmatmul.bf16.gmra.mxu0 %v2319
    %v2449 = vpop.f32.mrf.mxu0
    %v2450 = vadd.f32 0.0, %v2449
    %v2451 = vpop.f32.mrf.mxu0
    %v2452 = vadd.f32 0.0, %v2451
    %2453 = vdwg.mxu0
    %v2470 = vunpack.c.l.b16 %v2302
    %v2471 = vunpack.c.h.b16 %v2302
    %v2472 = vunpack.c.l.b16 %v2303
    %v2473 = vunpack.c.h.b16 %v2303
    %v2474 = vunpack.c.l.b16 %v2304
    %v2475 = vunpack.c.h.b16 %v2304
    %v2476 = vunpack.c.l.b16 %v2305
    %v2477 = vunpack.c.h.b16 %v2305
    %v2478 = vunpack.c.l.b16 %v2306
    %v2479 = vunpack.c.h.b16 %v2306
    %v2480 = vunpack.c.l.b16 %v2307
    %v2481 = vunpack.c.h.b16 %v2307
    %v2482 = vunpack.c.l.b16 %v2308
    %v2483 = vunpack.c.h.b16 %v2308
    %v2484 = vunpack.c.l.b16 %v2309
    %v2485 = vunpack.c.h.b16 %v2309
    %v2486 = vunpack.c.l.b16 %v2310
    %v2487 = vunpack.c.h.b16 %v2310
    %v2488 = vunpack.c.l.b16 %v2311
    %v2489 = vunpack.c.h.b16 %v2311
    %v2490 = vunpack.c.l.b16 %v2312
    %v2491 = vunpack.c.h.b16 %v2312
    %v2492 = vunpack.c.l.b16 %v2313
    %v2493 = vunpack.c.h.b16 %v2313
    %v2494 = vunpack.c.l.b16 %v2314
    %v2495 = vunpack.c.h.b16 %v2314
    %v2496 = vunpack.c.l.b16 %v2315
    %v2497 = vunpack.c.h.b16 %v2315
    %v2498 = vunpack.c.l.b16 %v2316
    %v2499 = vunpack.c.h.b16 %v2316
    %v2500 = vunpack.c.l.b16 %v2317
    %v2501 = vunpack.c.h.b16 %v2317
    %v2502 = vpack.c.b16 %v2472, %v2470
    %v2503 = vpack.c.b16 %v2473, %v2471
    %v2504 = vpack.c.b16 %v2476, %v2474
    %v2505 = vpack.c.b16 %v2477, %v2475
    %v2506 = vpack.c.b16 %v2480, %v2478
    %v2507 = vpack.c.b16 %v2481, %v2479
    %v2508 = vpack.c.b16 %v2484, %v2482
    %v2509 = vpack.c.b16 %v2485, %v2483
    %v2510 = vpack.c.b16 %v2488, %v2486
    %v2511 = vpack.c.b16 %v2489, %v2487
    %v2512 = vpack.c.b16 %v2492, %v2490
    %v2513 = vpack.c.b16 %v2493, %v2491
    %v2514 = vpack.c.b16 %v2496, %v2494
    %v2515 = vpack.c.b16 %v2497, %v2495
    %v2516 = vpack.c.b16 %v2500, %v2498
    %v2517 = vpack.c.b16 %v2501, %v2499
    %2534 = vmatpush.bf16.msra.mxu0 %v2516
    %2535 = vmatpush.bf16.msra.mxu0 %v2514
    %2536 = vmatpush.bf16.msra.mxu0 %v2512
    %2537 = vmatpush.bf16.msra.mxu0 %v2510
    %2538 = vmatpush.bf16.msra.mxu0 %v2508
    %2539 = vmatpush.bf16.msra.mxu0 %v2506
    %2540 = vmatpush.bf16.msra.mxu0 %v2504
    %2541 = vmatpush.bf16.msra.mxu0 %v2502
    %2542 = vmatmul.bf16.gmra.mxu0 %v2300
    %v2543 = vpop.f32.mrf.mxu0
    %v2544 = vadd.f32 %v2426, %v2543
    %v2545 = vpop.f32.mrf.mxu0
    %v2546 = vadd.f32 %v2428, %v2545
    %2547 = vmatmul.bf16.gmra.mxu0 %v2301
    %v2548 = vpop.f32.mrf.mxu0
    %v2549 = vadd.f32 %v2431, %v2548
    %v2550 = vpop.f32.mrf.mxu0
    %v2551 = vadd.f32 %v2433, %v2550
    %2552 = vdwg.mxu0
    %2553 = vmatpush.bf16.msra.mxu0 %v2517
    %2554 = vmatpush.bf16.msra.mxu0 %v2515
    %2555 = vmatpush.bf16.msra.mxu0 %v2513
    %2556 = vmatpush.bf16.msra.mxu0 %v2511
    %2557 = vmatpush.bf16.msra.mxu0 %v2509
    %2558 = vmatpush.bf16.msra.mxu0 %v2507
    %2559 = vmatpush.bf16.msra.mxu0 %v2505
    %2560 = vmatpush.bf16.msra.mxu0 %v2503
    %2561 = vmatmul.bf16.gmra.mxu0 %v2300
    %v2562 = vpop.f32.mrf.mxu0
    %v2563 = vadd.f32 %v2445, %v2562
    %v2564 = vpop.f32.mrf.mxu0
    %v2565 = vadd.f32 %v2447, %v2564
    %2566 = vmatmul.bf16.gmra.mxu0 %v2301
    %v2567 = vpop.f32.mrf.mxu0
    %v2568 = vadd.f32 %v2450, %v2567
    %v2569 = vpop.f32.mrf.mxu0
    %v2570 = vadd.f32 %v2452, %v2569
    %2571 = vdwg.mxu0
    %v2572 = vpack.c.bf16 %v2297, %v2296
    %v2573 = vpack.c.bf16 %v2299, %v2298
    %v2574 = vld [vmem:[#allocation2 + $0x450] sm:$0xff]
    %v2575 = vld [vmem:[#allocation2 + $0x458] sm:$0xff]
    %v2576 = vld [vmem:[#allocation2 + $0x460] sm:$0xff]
    %v2577 = vld [vmem:[#allocation2 + $0x468] sm:$0xff]
    %v2578 = vld [vmem:[#allocation2 + $0x470] sm:$0xff]
    %v2579 = vld [vmem:[#allocation2 + $0x478] sm:$0xff]
    %v2580 = vld [vmem:[#allocation2 + $0x480] sm:$0xff]
    %v2581 = vld [vmem:[#allocation2 + $0x488] sm:$0xff]
    %v2582 = vld [vmem:[#allocation2 + $0x490] sm:$0xff]
    %v2583 = vld [vmem:[#allocation2 + $0x498] sm:$0xff]
    %v2584 = vld [vmem:[#allocation2 + $0x4a0] sm:$0xff]
    %v2585 = vld [vmem:[#allocation2 + $0x4a8] sm:$0xff]
    %v2586 = vld [vmem:[#allocation2 + $0x4b0] sm:$0xff]
    %v2587 = vld [vmem:[#allocation2 + $0x4b8] sm:$0xff]
    %v2588 = vld [vmem:[#allocation2 + $0x4c0] sm:$0xff]
    %v2589 = vld [vmem:[#allocation2 + $0x4c8] sm:$0xff]
    %v2606 = vunpack.c.l.b16 %v2574
    %v2607 = vunpack.c.h.b16 %v2574
    %v2608 = vunpack.c.l.b16 %v2575
    %v2609 = vunpack.c.h.b16 %v2575
    %v2610 = vunpack.c.l.b16 %v2576
    %v2611 = vunpack.c.h.b16 %v2576
    %v2612 = vunpack.c.l.b16 %v2577
    %v2613 = vunpack.c.h.b16 %v2577
    %v2614 = vunpack.c.l.b16 %v2578
    %v2615 = vunpack.c.h.b16 %v2578
    %v2616 = vunpack.c.l.b16 %v2579
    %v2617 = vunpack.c.h.b16 %v2579
    %v2618 = vunpack.c.l.b16 %v2580
    %v2619 = vunpack.c.h.b16 %v2580
    %v2620 = vunpack.c.l.b16 %v2581
    %v2621 = vunpack.c.h.b16 %v2581
    %v2622 = vunpack.c.l.b16 %v2582
    %v2623 = vunpack.c.h.b16 %v2582
    %v2624 = vunpack.c.l.b16 %v2583
    %v2625 = vunpack.c.h.b16 %v2583
    %v2626 = vunpack.c.l.b16 %v2584
    %v2627 = vunpack.c.h.b16 %v2584
    %v2628 = vunpack.c.l.b16 %v2585
    %v2629 = vunpack.c.h.b16 %v2585
    %v2630 = vunpack.c.l.b16 %v2586
    %v2631 = vunpack.c.h.b16 %v2586
    %v2632 = vunpack.c.l.b16 %v2587
    %v2633 = vunpack.c.h.b16 %v2587
    %v2634 = vunpack.c.l.b16 %v2588
    %v2635 = vunpack.c.h.b16 %v2588
    %v2636 = vunpack.c.l.b16 %v2589
    %v2637 = vunpack.c.h.b16 %v2589
    %v2638 = vpack.c.b16 %v2608, %v2606
    %v2639 = vpack.c.b16 %v2609, %v2607
    %v2640 = vpack.c.b16 %v2612, %v2610
    %v2641 = vpack.c.b16 %v2613, %v2611
    %v2642 = vpack.c.b16 %v2616, %v2614
    %v2643 = vpack.c.b16 %v2617, %v2615
    %v2644 = vpack.c.b16 %v2620, %v2618
    %v2645 = vpack.c.b16 %v2621, %v2619
    %v2646 = vpack.c.b16 %v2624, %v2622
    %v2647 = vpack.c.b16 %v2625, %v2623
    %v2648 = vpack.c.b16 %v2628, %v2626
    %v2649 = vpack.c.b16 %v2629, %v2627
    %v2650 = vpack.c.b16 %v2632, %v2630
    %v2651 = vpack.c.b16 %v2633, %v2631
    %v2652 = vpack.c.b16 %v2636, %v2634
    %v2653 = vpack.c.b16 %v2637, %v2635
    %2670 = vmatpush.bf16.msra.mxu0 %v2652
    %2671 = vmatpush.bf16.msra.mxu0 %v2650
    %2672 = vmatpush.bf16.msra.mxu0 %v2648
    %2673 = vmatpush.bf16.msra.mxu0 %v2646
    %2674 = vmatpush.bf16.msra.mxu0 %v2644
    %2675 = vmatpush.bf16.msra.mxu0 %v2642
    %2676 = vmatpush.bf16.msra.mxu0 %v2640
    %2677 = vmatpush.bf16.msra.mxu0 %v2638
    %2678 = vmatmul.bf16.gmra.mxu0 %v2572
    %v2679 = vpop.f32.mrf.mxu0
    %v2680 = vadd.f32 0.0, %v2679
    %v2681 = vpop.f32.mrf.mxu0
    %v2682 = vadd.f32 0.0, %v2681
    %2683 = vmatmul.bf16.gmra.mxu0 %v2573
    %v2684 = vpop.f32.mrf.mxu0
    %v2685 = vadd.f32 0.0, %v2684
    %v2686 = vpop.f32.mrf.mxu0
    %v2687 = vadd.f32 0.0, %v2686
    %2688 = vdwg.mxu0
    %2689 = vmatpush.bf16.msra.mxu0 %v2653
    %2690 = vmatpush.bf16.msra.mxu0 %v2651
    %2691 = vmatpush.bf16.msra.mxu0 %v2649
    %2692 = vmatpush.bf16.msra.mxu0 %v2647
    %2693 = vmatpush.bf16.msra.mxu0 %v2645
    %2694 = vmatpush.bf16.msra.mxu0 %v2643
    %2695 = vmatpush.bf16.msra.mxu0 %v2641
    %2696 = vmatpush.bf16.msra.mxu0 %v2639
    %2697 = vmatmul.bf16.gmra.mxu0 %v2572
    %v2698 = vpop.f32.mrf.mxu0
    %v2699 = vadd.f32 0.0, %v2698
    %v2700 = vpop.f32.mrf.mxu0
    %v2701 = vadd.f32 0.0, %v2700
    %2702 = vmatmul.bf16.gmra.mxu0 %v2573
    %v2703 = vpop.f32.mrf.mxu0
    %v2704 = vadd.f32 0.0, %v2703
    %v2705 = vpop.f32.mrf.mxu0
    %v2706 = vadd.f32 0.0, %v2705
    %2707 = vdwg.mxu0
    %v2708 = vadd.f32 %v2544, %v2680
    %v2709 = vadd.f32 %v2563, %v2699
    %v2710 = vadd.f32 %v2546, %v2682
    %v2711 = vadd.f32 %v2565, %v2701
    %v2712 = vadd.f32 %v2549, %v2685
    %v2713 = vadd.f32 %v2568, %v2704
    %v2714 = vadd.f32 %v2551, %v2687
    %v2715 = vadd.f32 %v2570, %v2706
    %s2716 = scalar_lea.vmem [#allocation4], 19
    %v2717 = vld [vmem:[%s2716] ss:$8 sm:$0x3]
    %v2719 = vperm.slane %v2717, 0
    %v2720 = vperm.slane %v2717, 1
    %v2723 = vadd.f32 %v2708, %v2719
    %v2724 = vadd.f32 %v2709, %v2720
    %v2725 = vadd.f32 %v2710, %v2719
    %v2726 = vadd.f32 %v2711, %v2720
    %v2727 = vadd.f32 %v2712, %v2719
    %v2728 = vadd.f32 %v2713, %v2720
    %v2729 = vadd.f32 %v2714, %v2719
    %v2730 = vadd.f32 %v2715, %v2720
    %v2731 = vadd.f32 %v2723, %v2725
    %v2732 = vadd.f32 %v2731, %v2727
    %v2733 = vadd.f32 %v2732, %v2729
    %v2734 = vrot.slane %v2733, 4
    %v2735 = vadd.f32 %v2733, %v2734
    %v2736 = vrot.slane %v2735, 2
    %v2737 = vadd.f32 %v2735, %v2736
    %v2738 = vrot.slane %v2737, 1
    %v2739 = vadd.f32 %v2737, %v2738
    %v2740 = vadd.f32 %v2724, %v2726
    %v2741 = vadd.f32 %v2740, %v2728
    %v2742 = vadd.f32 %v2741, %v2730
    %v2743 = vrot.slane %v2742, 4
    %v2744 = vadd.f32 %v2742, %v2743
    %v2745 = vrot.slane %v2744, 2
    %v2746 = vadd.f32 %v2744, %v2745
    %v2747 = vrot.slane %v2746, 1
    %v2748 = vadd.f32 %v2746, %v2747
    %v2749 = vmul.f32 %v2739, %v1430
    %v2750 = vmul.f32 %v2748, %v1430
    %v2751 = vmul.f32 %v2723, %v2723
    %v2752 = vmul.f32 %v2724, %v2724
    %v2753 = vmul.f32 %v2725, %v2725
    %v2754 = vmul.f32 %v2726, %v2726
    %v2755 = vmul.f32 %v2727, %v2727
    %v2756 = vmul.f32 %v2728, %v2728
    %v2757 = vmul.f32 %v2729, %v2729
    %v2758 = vmul.f32 %v2730, %v2730
    %v2759 = vadd.f32 %v2751, %v2753
    %v2760 = vadd.f32 %v2759, %v2755
    %v2761 = vadd.f32 %v2760, %v2757
    %v2762 = vrot.slane %v2761, 4
    %v2763 = vadd.f32 %v2761, %v2762
    %v2764 = vrot.slane %v2763, 2
    %v2765 = vadd.f32 %v2763, %v2764
    %v2766 = vrot.slane %v2765, 1
    %v2767 = vadd.f32 %v2765, %v2766
    %v2768 = vadd.f32 %v2752, %v2754
    %v2769 = vadd.f32 %v2768, %v2756
    %v2770 = vadd.f32 %v2769, %v2758
    %v2771 = vrot.slane %v2770, 4
    %v2772 = vadd.f32 %v2770, %v2771
    %v2773 = vrot.slane %v2772, 2
    %v2774 = vadd.f32 %v2772, %v2773
    %v2775 = vrot.slane %v2774, 1
    %v2776 = vadd.f32 %v2774, %v2775
    %v2777 = vmul.f32 %v2767, %v1430
    %v2778 = vmul.f32 %v2776, %v1430
    %v2779 = vmul.f32 %v2749, %v2749
    %v2780 = vmul.f32 %v2750, %v2750
    %v2781 = vsub.f32 %v2777, %v2779
    %v2782 = vsub.f32 %v2778, %v2780
    %v2783 = vmax.f32 %v2781, 0.0
    %v2784 = vmax.f32 %v2782, 0.0
    %s2785 = scalar_lea.vmem [#allocation4], 20
    %v2786 = vld [vmem:[%s2785] ss:$8 sm:$0x3]
    %v2787 = vadd.f32 %v2783, 1e-05
    %v2788 = vadd.f32 %v2784, 1e-05
    %v2789 = vrsqrt.pop %v2787
    %v2790 = vmul.f32 %v2789, %v2787
    %v2791 = vmul.f32 %v2790, %v2789
    %v2792 = vmul.f32 0.5, %v2791
    %v2793 = vsub.f32 1.5, %v2792
    %v2794 = vmul.f32 %v2789, %v2793
    %vm2795 = vweird.f32 %v2787
    %vm2796 = vweird.f32 %v2789
    %vm2797 = vmor %vm2795, %vm2796
    %v2798 = vsel %vm2797, %v2789, %v2794
    %v2799 = vrsqrt.pop %v2788
    %v2800 = vmul.f32 %v2799, %v2788
    %v2801 = vmul.f32 %v2800, %v2799
    %v2802 = vmul.f32 0.5, %v2801
    %v2803 = vsub.f32 1.5, %v2802
    %v2804 = vmul.f32 %v2799, %v2803
    %vm2805 = vweird.f32 %v2788
    %vm2806 = vweird.f32 %v2799
    %vm2807 = vmor %vm2805, %vm2806
    %v2808 = vsel %vm2807, %v2799, %v2804
    %v2811 = vrot.slane %v2808, 7
    %vm2812 = vcmask 1040384
    %v2813 = vsel %vm2812, %v2798, %v2811
    %v2815 = vmul.f32 %v2786, %v2813
    %s2816 = scalar_lea.vmem [#allocation4], 21
    %v2817 = vld [vmem:[%s2816] ss:$8 sm:$0x3]
    %v2819 = vperm.slane %v2815, 0
    %v2820 = vperm.slane %v2815, 1
    %v2823 = vmul.f32 %v2749, %v2819
    %v2824 = vmul.f32 %v2750, %v2820
    %v2827 = vrot.slane %v2824, 7
    %v2828 = vsel %vm2812, %v2823, %v2827
    %v2830 = vsub.f32 %v2817, %v2828
    %v2831 = vmul.f32 %v2723, %v2819
    %v2832 = vmul.f32 %v2724, %v2820
    %v2833 = vmul.f32 %v2725, %v2819
    %v2834 = vmul.f32 %v2726, %v2820
    %v2835 = vmul.f32 %v2727, %v2819
    %v2836 = vmul.f32 %v2728, %v2820
    %v2837 = vmul.f32 %v2729, %v2819
    %v2838 = vmul.f32 %v2730, %v2820
    %v2840 = vperm.slane %v2830, 0
    %v2841 = vperm.slane %v2830, 1
    %v2844 = vadd.f32 %v2831, %v2840
    %v2845 = vadd.f32 %v2832, %v2841
    %v2846 = vadd.f32 %v2833, %v2840
    %v2847 = vadd.f32 %v2834, %v2841
    %v2848 = vadd.f32 %v2835, %v2840
    %v2849 = vadd.f32 %v2836, %v2841
    %v2850 = vadd.f32 %v2837, %v2840
    %v2851 = vadd.f32 %v2838, %v2841
    %v2852 = vmul.f32 %v2844, 0.5
    %v2853 = vmul.f32 %v2845, 0.5
    %v2854 = vmul.f32 %v2846, 0.5
    %v2855 = vmul.f32 %v2847, 0.5
    %v2856 = vmul.f32 %v2848, 0.5
    %v2857 = vmul.f32 %v2849, 0.5
    %v2858 = vmul.f32 %v2850, 0.5
    %v2859 = vmul.f32 %v2851, 0.5
    %v2860 = vmul.f32 %v2844, 0.70710677
    %v2861 = vmul.f32 %v2845, 0.70710677
    %v2862 = vmul.f32 %v2846, 0.70710677
    %v2863 = vmul.f32 %v2847, 0.70710677
    %v2864 = vmul.f32 %v2848, 0.70710677
    %v2865 = vmul.f32 %v2849, 0.70710677
    %v2866 = vmul.f32 %v2850, 0.70710677
    %v2867 = vmul.f32 %v2851, 0.70710677
    %v2868 = vmul.f32 %v2860, %v2860
    %v2869 = vmin.f32 16.0, %v2868
    %v2870 = vmul.f32 %v2869, 2.1237322e-06
    %v2871 = vadd.f32 %v2870, 0.00028619796
    %v2872 = vmul.f32 %v2869, %v2871
    %v2873 = vadd.f32 %v2872, 0.0036580483
    %v2874 = vmul.f32 %v2869, %v2873
    %v2875 = vadd.f32 %v2874, 0.05243302
    %v2876 = vmul.f32 %v2869, %v2875
    %v2877 = vadd.f32 %v2876, 0.18741608
    %v2878 = vmul.f32 %v2869, %v2877
    %v2879 = vadd.f32 %v2878, 1.1283791
    %v2880 = vmul.f32 %v2860, %v2879
    %v2881 = vmul.f32 %v2869, 3.8918573e-05
    %v2882 = vadd.f32 %v2881, 0.001143296
    %v2883 = vmul.f32 %v2869, %v2882
    %v2884 = vadd.f32 %v2883, 0.014752088
    %v2885 = vmul.f32 %v2869, %v2884
    %v2886 = vadd.f32 %v2885, 0.112945676
    %v2887 = vmul.f32 %v2869, %v2886
    %v2888 = vadd.f32 %v2887, 0.4994258
    %v2889 = vmul.f32 %v2869, %v2888
    %v2890 = vadd.f32 %v2889, 1.0
    %v2891 = vrcp.pop %v2890
    %v2892 = vmul.f32 %v2890, %v2891
    %v2893 = vsub.f32 1.0, %v2892
    %v2894 = vmul.f32 %v2891, %v2893
    %v2895 = vadd.f32 %v2891, %v2894
    %vm2896 = vweird.f32 %v2890
    %vm2897 = vweird.f32 %v2891
    %vm2898 = vmor %vm2896, %vm2897
    %v2899 = vsel %vm2898, %v2891, %v2895
    %v2900 = vand.u32 2147483647, %v2890
    %vm2901 = vcmp.eq.f32.partialorder %v2900, 8.507059e+37
    %v2902 = vand.u32 %v2890, 2147483648
    %v2903 = vor.u32 1.1754944e-38, %v2902
    %v2904 = vsel %vm2901, %v2903, %v2899
    %v2905 = vmul.f32 %v2880, %v2904
    %v2906 = vmin.f32 %v2905, 1.0
    %v2907 = vmax.f32 %v2906, -1.0
    %v2908 = vmul.f32 %v2861, %v2861
    %v2909 = vmin.f32 16.0, %v2908
    %v2910 = vmul.f32 %v2909, 2.1237322e-06
    %v2911 = vadd.f32 %v2910, 0.00028619796
    %v2912 = vmul.f32 %v2909, %v2911
    %v2913 = vadd.f32 %v2912, 0.0036580483
    %v2914 = vmul.f32 %v2909, %v2913
    %v2915 = vadd.f32 %v2914, 0.05243302
    %v2916 = vmul.f32 %v2909, %v2915
    %v2917 = vadd.f32 %v2916, 0.18741608
    %v2918 = vmul.f32 %v2909, %v2917
    %v2919 = vadd.f32 %v2918, 1.1283791
    %v2920 = vmul.f32 %v2861, %v2919
    %v2921 = vmul.f32 %v2909, 3.8918573e-05
    %v2922 = vadd.f32 %v2921, 0.001143296
    %v2923 = vmul.f32 %v2909, %v2922
    %v2924 = vadd.f32 %v2923, 0.014752088
    %v2925 = vmul.f32 %v2909, %v2924
    %v2926 = vadd.f32 %v2925, 0.112945676
    %v2927 = vmul.f32 %v2909, %v2926
    %v2928 = vadd.f32 %v2927, 0.4994258
    %v2929 = vmul.f32 %v2909, %v2928
    %v2930 = vadd.f32 %v2929, 1.0
    %v2931 = vrcp.pop %v2930
    %v2932 = vmul.f32 %v2930, %v2931
    %v2933 = vsub.f32 1.0, %v2932
    %v2934 = vmul.f32 %v2931, %v2933
    %v2935 = vadd.f32 %v2931, %v2934
    %vm2936 = vweird.f32 %v2930
    %vm2937 = vweird.f32 %v2931
    %vm2938 = vmor %vm2936, %vm2937
    %v2939 = vsel %vm2938, %v2931, %v2935
    %v2940 = vand.u32 2147483647, %v2930
    %vm2941 = vcmp.eq.f32.partialorder %v2940, 8.507059e+37
    %v2942 = vand.u32 %v2930, 2147483648
    %v2943 = vor.u32 1.1754944e-38, %v2942
    %v2944 = vsel %vm2941, %v2943, %v2939
    %v2945 = vmul.f32 %v2920, %v2944
    %v2946 = vmin.f32 %v2945, 1.0
    %v2947 = vmax.f32 %v2946, -1.0
    %v2948 = vmul.f32 %v2862, %v2862
    %v2949 = vmin.f32 16.0, %v2948
    %v2950 = vmul.f32 %v2949, 2.1237322e-06
    %v2951 = vadd.f32 %v2950, 0.00028619796
    %v2952 = vmul.f32 %v2949, %v2951
    %v2953 = vadd.f32 %v2952, 0.0036580483
    %v2954 = vmul.f32 %v2949, %v2953
    %v2955 = vadd.f32 %v2954, 0.05243302
    %v2956 = vmul.f32 %v2949, %v2955
    %v2957 = vadd.f32 %v2956, 0.18741608
    %v2958 = vmul.f32 %v2949, %v2957
    %v2959 = vadd.f32 %v2958, 1.1283791
    %v2960 = vmul.f32 %v2862, %v2959
    %v2961 = vmul.f32 %v2949, 3.8918573e-05
    %v2962 = vadd.f32 %v2961, 0.001143296
    %v2963 = vmul.f32 %v2949, %v2962
    %v2964 = vadd.f32 %v2963, 0.014752088
    %v2965 = vmul.f32 %v2949, %v2964
    %v2966 = vadd.f32 %v2965, 0.112945676
    %v2967 = vmul.f32 %v2949, %v2966
    %v2968 = vadd.f32 %v2967, 0.4994258
    %v2969 = vmul.f32 %v2949, %v2968
    %v2970 = vadd.f32 %v2969, 1.0
    %v2971 = vrcp.pop %v2970
    %v2972 = vmul.f32 %v2970, %v2971
    %v2973 = vsub.f32 1.0, %v2972
    %v2974 = vmul.f32 %v2971, %v2973
    %v2975 = vadd.f32 %v2971, %v2974
    %vm2976 = vweird.f32 %v2970
    %vm2977 = vweird.f32 %v2971
    %vm2978 = vmor %vm2976, %vm2977
    %v2979 = vsel %vm2978, %v2971, %v2975
    %v2980 = vand.u32 2147483647, %v2970
    %vm2981 = vcmp.eq.f32.partialorder %v2980, 8.507059e+37
    %v2982 = vand.u32 %v2970, 2147483648
    %v2983 = vor.u32 1.1754944e-38, %v2982
    %v2984 = vsel %vm2981, %v2983, %v2979
    %v2985 = vmul.f32 %v2960, %v2984
    %v2986 = vmin.f32 %v2985, 1.0
    %v2987 = vmax.f32 %v2986, -1.0
    %v2988 = vmul.f32 %v2863, %v2863
    %v2989 = vmin.f32 16.0, %v2988
    %v2990 = vmul.f32 %v2989, 2.1237322e-06
    %v2991 = vadd.f32 %v2990, 0.00028619796
    %v2992 = vmul.f32 %v2989, %v2991
    %v2993 = vadd.f32 %v2992, 0.0036580483
    %v2994 = vmul.f32 %v2989, %v2993
    %v2995 = vadd.f32 %v2994, 0.05243302
    %v2996 = vmul.f32 %v2989, %v2995
    %v2997 = vadd.f32 %v2996, 0.18741608
    %v2998 = vmul.f32 %v2989, %v2997
    %v2999 = vadd.f32 %v2998, 1.1283791
    %v3000 = vmul.f32 %v2863, %v2999
    %v3001 = vmul.f32 %v2989, 3.8918573e-05
    %v3002 = vadd.f32 %v3001, 0.001143296
    %v3003 = vmul.f32 %v2989, %v3002
    %v3004 = vadd.f32 %v3003, 0.014752088
    %v3005 = vmul.f32 %v2989, %v3004
    %v3006 = vadd.f32 %v3005, 0.112945676
    %v3007 = vmul.f32 %v2989, %v3006
    %v3008 = vadd.f32 %v3007, 0.4994258
    %v3009 = vmul.f32 %v2989, %v3008
    %v3010 = vadd.f32 %v3009, 1.0
    %v3011 = vrcp.pop %v3010
    %v3012 = vmul.f32 %v3010, %v3011
    %v3013 = vsub.f32 1.0, %v3012
    %v3014 = vmul.f32 %v3011, %v3013
    %v3015 = vadd.f32 %v3011, %v3014
    %vm3016 = vweird.f32 %v3010
    %vm3017 = vweird.f32 %v3011
    %vm3018 = vmor %vm3016, %vm3017
    %v3019 = vsel %vm3018, %v3011, %v3015
    %v3020 = vand.u32 2147483647, %v3010
    %vm3021 = vcmp.eq.f32.partialorder %v3020, 8.507059e+37
    %v3022 = vand.u32 %v3010, 2147483648
    %v3023 = vor.u32 1.1754944e-38, %v3022
    %v3024 = vsel %vm3021, %v3023, %v3019
    %v3025 = vmul.f32 %v3000, %v3024
    %v3026 = vmin.f32 %v3025, 1.0
    %v3027 = vmax.f32 %v3026, -1.0
    %v3028 = vmul.f32 %v2864, %v2864
    %v3029 = vmin.f32 16.0, %v3028
    %v3030 = vmul.f32 %v3029, 2.1237322e-06
    %v3031 = vadd.f32 %v3030, 0.00028619796
    %v3032 = vmul.f32 %v3029, %v3031
    %v3033 = vadd.f32 %v3032, 0.0036580483
    %v3034 = vmul.f32 %v3029, %v3033
    %v3035 = vadd.f32 %v3034, 0.05243302
    %v3036 = vmul.f32 %v3029, %v3035
    %v3037 = vadd.f32 %v3036, 0.18741608
    %v3038 = vmul.f32 %v3029, %v3037
    %v3039 = vadd.f32 %v3038, 1.1283791
    %v3040 = vmul.f32 %v2864, %v3039
    %v3041 = vmul.f32 %v3029, 3.8918573e-05
    %v3042 = vadd.f32 %v3041, 0.001143296
    %v3043 = vmul.f32 %v3029, %v3042
    %v3044 = vadd.f32 %v3043, 0.014752088
    %v3045 = vmul.f32 %v3029, %v3044
    %v3046 = vadd.f32 %v3045, 0.112945676
    %v3047 = vmul.f32 %v3029, %v3046
    %v3048 = vadd.f32 %v3047, 0.4994258
    %v3049 = vmul.f32 %v3029, %v3048
    %v3050 = vadd.f32 %v3049, 1.0
    %v3051 = vrcp.pop %v3050
    %v3052 = vmul.f32 %v3050, %v3051
    %v3053 = vsub.f32 1.0, %v3052
    %v3054 = vmul.f32 %v3051, %v3053
    %v3055 = vadd.f32 %v3051, %v3054
    %vm3056 = vweird.f32 %v3050
    %vm3057 = vweird.f32 %v3051
    %vm3058 = vmor %vm3056, %vm3057
    %v3059 = vsel %vm3058, %v3051, %v3055
    %v3060 = vand.u32 2147483647, %v3050
    %vm3061 = vcmp.eq.f32.partialorder %v3060, 8.507059e+37
    %v3062 = vand.u32 %v3050, 2147483648
    %v3063 = vor.u32 1.1754944e-38, %v3062
    %v3064 = vsel %vm3061, %v3063, %v3059
    %v3065 = vmul.f32 %v3040, %v3064
    %v3066 = vmin.f32 %v3065, 1.0
    %v3067 = vmax.f32 %v3066, -1.0
    %v3068 = vmul.f32 %v2865, %v2865
    %v3069 = vmin.f32 16.0, %v3068
    %v3070 = vmul.f32 %v3069, 2.1237322e-06
    %v3071 = vadd.f32 %v3070, 0.00028619796
    %v3072 = vmul.f32 %v3069, %v3071
    %v3073 = vadd.f32 %v3072, 0.0036580483
    %v3074 = vmul.f32 %v3069, %v3073
    %v3075 = vadd.f32 %v3074, 0.05243302
    %v3076 = vmul.f32 %v3069, %v3075
    %v3077 = vadd.f32 %v3076, 0.18741608
    %v3078 = vmul.f32 %v3069, %v3077
    %v3079 = vadd.f32 %v3078, 1.1283791
    %v3080 = vmul.f32 %v2865, %v3079
    %v3081 = vmul.f32 %v3069, 3.8918573e-05
    %v3082 = vadd.f32 %v3081, 0.001143296
    %v3083 = vmul.f32 %v3069, %v3082
    %v3084 = vadd.f32 %v3083, 0.014752088
    %v3085 = vmul.f32 %v3069, %v3084
    %v3086 = vadd.f32 %v3085, 0.112945676
    %v3087 = vmul.f32 %v3069, %v3086
    %v3088 = vadd.f32 %v3087, 0.4994258
    %v3089 = vmul.f32 %v3069, %v3088
    %v3090 = vadd.f32 %v3089, 1.0
    %v3091 = vrcp.pop %v3090
    %v3092 = vmul.f32 %v3090, %v3091
    %v3093 = vsub.f32 1.0, %v3092
    %v3094 = vmul.f32 %v3091, %v3093
    %v3095 = vadd.f32 %v3091, %v3094
    %vm3096 = vweird.f32 %v3090
    %vm3097 = vweird.f32 %v3091
    %vm3098 = vmor %vm3096, %vm3097
    %v3099 = vsel %vm3098, %v3091, %v3095
    %v3100 = vand.u32 2147483647, %v3090
    %vm3101 = vcmp.eq.f32.partialorder %v3100, 8.507059e+37
    %v3102 = vand.u32 %v3090, 2147483648
    %v3103 = vor.u32 1.1754944e-38, %v3102
    %v3104 = vsel %vm3101, %v3103, %v3099
    %v3105 = vmul.f32 %v3080, %v3104
    %v3106 = vmin.f32 %v3105, 1.0
    %v3107 = vmax.f32 %v3106, -1.0
    %v3108 = vmul.f32 %v2866, %v2866
    %v3109 = vmin.f32 16.0, %v3108
    %v3110 = vmul.f32 %v3109, 2.1237322e-06
    %v3111 = vadd.f32 %v3110, 0.00028619796
    %v3112 = vmul.f32 %v3109, %v3111
    %v3113 = vadd.f32 %v3112, 0.0036580483
    %v3114 = vmul.f32 %v3109, %v3113
    %v3115 = vadd.f32 %v3114, 0.05243302
    %v3116 = vmul.f32 %v3109, %v3115
    %v3117 = vadd.f32 %v3116, 0.18741608
    %v3118 = vmul.f32 %v3109, %v3117
    %v3119 = vadd.f32 %v3118, 1.1283791
    %v3120 = vmul.f32 %v2866, %v3119
    %v3121 = vmul.f32 %v3109, 3.8918573e-05
    %v3122 = vadd.f32 %v3121, 0.001143296
    %v3123 = vmul.f32 %v3109, %v3122
    %v3124 = vadd.f32 %v3123, 0.014752088
    %v3125 = vmul.f32 %v3109, %v3124
    %v3126 = vadd.f32 %v3125, 0.112945676
    %v3127 = vmul.f32 %v3109, %v3126
    %v3128 = vadd.f32 %v3127, 0.4994258
    %v3129 = vmul.f32 %v3109, %v3128
    %v3130 = vadd.f32 %v3129, 1.0
    %v3131 = vrcp.pop %v3130
    %v3132 = vmul.f32 %v3130, %v3131
    %v3133 = vsub.f32 1.0, %v3132
    %v3134 = vmul.f32 %v3131, %v3133
    %v3135 = vadd.f32 %v3131, %v3134
    %vm3136 = vweird.f32 %v3130
    %vm3137 = vweird.f32 %v3131
    %vm3138 = vmor %vm3136, %vm3137
    %v3139 = vsel %vm3138, %v3131, %v3135
    %v3140 = vand.u32 2147483647, %v3130
    %vm3141 = vcmp.eq.f32.partialorder %v3140, 8.507059e+37
    %v3142 = vand.u32 %v3130, 2147483648
    %v3143 = vor.u32 1.1754944e-38, %v3142
    %v3144 = vsel %vm3141, %v3143, %v3139
    %v3145 = vmul.f32 %v3120, %v3144
    %v3146 = vmin.f32 %v3145, 1.0
    %v3147 = vmax.f32 %v3146, -1.0
    %v3148 = vmul.f32 %v2867, %v2867
    %v3149 = vmin.f32 16.0, %v3148
    %v3150 = vmul.f32 %v3149, 2.1237322e-06
    %v3151 = vadd.f32 %v3150, 0.00028619796
    %v3152 = vmul.f32 %v3149, %v3151
    %v3153 = vadd.f32 %v3152, 0.0036580483
    %v3154 = vmul.f32 %v3149, %v3153
    %v3155 = vadd.f32 %v3154, 0.05243302
    %v3156 = vmul.f32 %v3149, %v3155
    %v3157 = vadd.f32 %v3156, 0.18741608
    %v3158 = vmul.f32 %v3149, %v3157
    %v3159 = vadd.f32 %v3158, 1.1283791
    %v3160 = vmul.f32 %v2867, %v3159
    %v3161 = vmul.f32 %v3149, 3.8918573e-05
    %v3162 = vadd.f32 %v3161, 0.001143296
    %v3163 = vmul.f32 %v3149, %v3162
    %v3164 = vadd.f32 %v3163, 0.014752088
    %v3165 = vmul.f32 %v3149, %v3164
    %v3166 = vadd.f32 %v3165, 0.112945676
    %v3167 = vmul.f32 %v3149, %v3166
    %v3168 = vadd.f32 %v3167, 0.4994258
    %v3169 = vmul.f32 %v3149, %v3168
    %v3170 = vadd.f32 %v3169, 1.0
    %v3171 = vrcp.pop %v3170
    %v3172 = vmul.f32 %v3170, %v3171
    %v3173 = vsub.f32 1.0, %v3172
    %v3174 = vmul.f32 %v3171, %v3173
    %v3175 = vadd.f32 %v3171, %v3174
    %vm3176 = vweird.f32 %v3170
    %vm3177 = vweird.f32 %v3171
    %vm3178 = vmor %vm3176, %vm3177
    %v3179 = vsel %vm3178, %v3171, %v3175
    %v3180 = vand.u32 2147483647, %v3170
    %vm3181 = vcmp.eq.f32.partialorder %v3180, 8.507059e+37
    %v3182 = vand.u32 %v3170, 2147483648
    %v3183 = vor.u32 1.1754944e-38, %v3182
    %v3184 = vsel %vm3181, %v3183, %v3179
    %v3185 = vmul.f32 %v3160, %v3184
    %v3186 = vmin.f32 %v3185, 1.0
    %v3187 = vmax.f32 %v3186, -1.0
    %v3188 = vadd.f32 %v2907, 1.0
    %v3189 = vadd.f32 %v2947, 1.0
    %v3190 = vadd.f32 %v2987, 1.0
    %v3191 = vadd.f32 %v3027, 1.0
    %v3192 = vadd.f32 %v3067, 1.0
    %v3193 = vadd.f32 %v3107, 1.0
    %v3194 = vadd.f32 %v3147, 1.0
    %v3195 = vadd.f32 %v3187, 1.0
    %v3196 = vmul.f32 %v2852, %v3188
    %v3197 = vmul.f32 %v2853, %v3189
    %v3198 = vmul.f32 %v2854, %v3190
    %v3199 = vmul.f32 %v2855, %v3191
    %v3200 = vmul.f32 %v2856, %v3192
    %v3201 = vmul.f32 %v2857, %v3193
    %v3202 = vmul.f32 %v2858, %v3194
    %v3203 = vmul.f32 %v2859, %v3195
    %s3204 = scalar_lea.vmem [#allocation4], 22
    %v3205 = vld [vmem:[%s3204] ss:$8 sm:$0x3]
    %v3207 = vperm.slane %v3205, 0
    %v3208 = vperm.slane %v3205, 1
    %v3211 = vadd.f32 %v978, %v3207
    %v3212 = vadd.f32 %v991, %v3208
    %v3213 = vmul.f32 %v3211, 0.5
    %v3214 = vmul.f32 %v3212, 0.5
    %v3215 = vmul.f32 %v3211, 0.70710677
    %v3216 = vmul.f32 %v3212, 0.70710677
    %v3217 = vmul.f32 %v3215, %v3215
    %v3218 = vmin.f32 16.0, %v3217
    %v3219 = vmul.f32 %v3218, 2.1237322e-06
    %v3220 = vadd.f32 %v3219, 0.00028619796
    %v3221 = vmul.f32 %v3218, %v3220
    %v3222 = vadd.f32 %v3221, 0.0036580483
    %v3223 = vmul.f32 %v3218, %v3222
    %v3224 = vadd.f32 %v3223, 0.05243302
    %v3225 = vmul.f32 %v3218, %v3224
    %v3226 = vadd.f32 %v3225, 0.18741608
    %v3227 = vmul.f32 %v3218, %v3226
    %v3228 = vadd.f32 %v3227, 1.1283791
    %v3229 = vmul.f32 %v3215, %v3228
    %v3230 = vmul.f32 %v3218, 3.8918573e-05
    %v3231 = vadd.f32 %v3230, 0.001143296
    %v3232 = vmul.f32 %v3218, %v3231
    %v3233 = vadd.f32 %v3232, 0.014752088
    %v3234 = vmul.f32 %v3218, %v3233
    %v3235 = vadd.f32 %v3234, 0.112945676
    %v3236 = vmul.f32 %v3218, %v3235
    %v3237 = vadd.f32 %v3236, 0.4994258
    %v3238 = vmul.f32 %v3218, %v3237
    %v3239 = vadd.f32 %v3238, 1.0
    %v3240 = vrcp.pop %v3239
    %v3241 = vmul.f32 %v3239, %v3240
    %v3242 = vsub.f32 1.0, %v3241
    %v3243 = vmul.f32 %v3240, %v3242
    %v3244 = vadd.f32 %v3240, %v3243
    %vm3245 = vweird.f32 %v3239
    %vm3246 = vweird.f32 %v3240
    %vm3247 = vmor %vm3245, %vm3246
    %v3248 = vsel %vm3247, %v3240, %v3244
    %v3249 = vand.u32 2147483647, %v3239
    %vm3250 = vcmp.eq.f32.partialorder %v3249, 8.507059e+37
    %v3251 = vand.u32 %v3239, 2147483648
    %v3252 = vor.u32 1.1754944e-38, %v3251
    %v3253 = vsel %vm3250, %v3252, %v3248
    %v3254 = vmul.f32 %v3229, %v3253
    %v3255 = vmin.f32 %v3254, 1.0
    %v3256 = vmax.f32 %v3255, -1.0
    %v3257 = vmul.f32 %v3216, %v3216
    %v3258 = vmin.f32 16.0, %v3257
    %v3259 = vmul.f32 %v3258, 2.1237322e-06
    %v3260 = vadd.f32 %v3259, 0.00028619796
    %v3261 = vmul.f32 %v3258, %v3260
    %v3262 = vadd.f32 %v3261, 0.0036580483
    %v3263 = vmul.f32 %v3258, %v3262
    %v3264 = vadd.f32 %v3263, 0.05243302
    %v3265 = vmul.f32 %v3258, %v3264
    %v3266 = vadd.f32 %v3265, 0.18741608
    %v3267 = vmul.f32 %v3258, %v3266
    %v3268 = vadd.f32 %v3267, 1.1283791
    %v3269 = vmul.f32 %v3216, %v3268
    %v3270 = vmul.f32 %v3258, 3.8918573e-05
    %v3271 = vadd.f32 %v3270, 0.001143296
    %v3272 = vmul.f32 %v3258, %v3271
    %v3273 = vadd.f32 %v3272, 0.014752088
    %v3274 = vmul.f32 %v3258, %v3273
    %v3275 = vadd.f32 %v3274, 0.112945676
    %v3276 = vmul.f32 %v3258, %v3275
    %v3277 = vadd.f32 %v3276, 0.4994258
    %v3278 = vmul.f32 %v3258, %v3277
    %v3279 = vadd.f32 %v3278, 1.0
    %v3280 = vrcp.pop %v3279
    %v3281 = vmul.f32 %v3279, %v3280
    %v3282 = vsub.f32 1.0, %v3281
    %v3283 = vmul.f32 %v3280, %v3282
    %v3284 = vadd.f32 %v3280, %v3283
    %vm3285 = vweird.f32 %v3279
    %vm3286 = vweird.f32 %v3280
    %vm3287 = vmor %vm3285, %vm3286
    %v3288 = vsel %vm3287, %v3280, %v3284
    %v3289 = vand.u32 2147483647, %v3279
    %vm3290 = vcmp.eq.f32.partialorder %v3289, 8.507059e+37
    %v3291 = vand.u32 %v3279, 2147483648
    %v3292 = vor.u32 1.1754944e-38, %v3291
    %v3293 = vsel %vm3290, %v3292, %v3288
    %v3294 = vmul.f32 %v3269, %v3293
    %v3295 = vmin.f32 %v3294, 1.0
    %v3296 = vmax.f32 %v3295, -1.0
    %v3297 = vadd.f32 %v3256, 1.0
    %v3298 = vadd.f32 %v3296, 1.0
    %v3299 = vmul.f32 %v3213, %v3297
    %v3300 = vmul.f32 %v3214, %v3298
    %v3303 = vrot.slane %v3300, 7
    %v3304 = vsel %vm2812, %v3299, %v3303
    %vm3305 = vcmask 1041409
    %v3306 = vsel %vm3305, %v3299, %v3303
    %v3307 = vrot.slane %v3306, 1
    %v3308 = vperm.slane %v3304, 0
    %v3309 = vperm.slane %v3304, 1
    %v3310 = vperm.slane %v3307, 0
    %v3311 = vperm.slane %v3307, 1
    %v3316 = vadd.f32 %v3196, %v3308
    %v3317 = vadd.f32 %v3197, %v3309
    %v3318 = vadd.f32 %v3198, %v3308
    %v3319 = vadd.f32 %v3199, %v3309
    %v3320 = vadd.f32 %v3200, %v3310
    %v3321 = vadd.f32 %v3201, %v3311
    %v3322 = vadd.f32 %v3202, %v3310
    %v3323 = vadd.f32 %v3203, %v3311
    %v3324 = vrot.slane %v3316, 7
    %v3325 = vrot.slane %v3317, 7
    %v3326 = vrot.slane %v3318, 7
    %v3327 = vrot.slane %v3319, 7
    %v3328 = vrot.slane %v3320, 7
    %v3329 = vrot.slane %v3321, 7
    %v3330 = vrot.slane %v3322, 7
    %v3331 = vrot.slane %v3323, 7
    %v3332 = vsel %vm1058, %v3328, %v3330
    %v3333 = vsel %vm1058, %v3329, %v3331
    %v3334 = vsel %vm1058, %v3326, %v3328
    %v3335 = vsel %vm1058, %v3327, %v3329
    %v3336 = vsel %vm1058, %v3324, %v3326
    %v3337 = vsel %vm1058, %v3325, %v3327
    %v3338 = vsel %vm1058, %v3330, %v3324
    %v3339 = vsel %vm1058, %v3331, %v3325
    %v3340 = vsel %vm1067, 0.0, %v3338
    %v3341 = vsel %vm1067, 0.0, %v3339
    %v3342 = vsel %vm1068, 0.0, %v3336
    %v3343 = vsel %vm1068, 0.0, %v3337
    %v3344 = vsel %vm1069, 0.0, %v3334
    %v3345 = vsel %vm1069, 0.0, %v3335
    %v3346 = vsel %vm1070, 0.0, %v3332
    %v3347 = vsel %vm1070, 0.0, %v3333
    %v3348 = vrot.slane %v3316, 1
    %v3349 = vrot.slane %v3317, 1
    %v3350 = vrot.slane %v3318, 1
    %v3351 = vrot.slane %v3319, 1
    %v3352 = vrot.slane %v3320, 1
    %v3353 = vrot.slane %v3321, 1
    %v3354 = vrot.slane %v3322, 1
    %v3355 = vrot.slane %v3323, 1
    %v3356 = vsel %vm1083, %v3352, %v3354
    %v3357 = vsel %vm1083, %v3353, %v3355
    %v3358 = vsel %vm1083, %v3350, %v3352
    %v3359 = vsel %vm1083, %v3351, %v3353
    %v3360 = vsel %vm1083, %v3348, %v3350
    %v3361 = vsel %vm1083, %v3349, %v3351
    %v3362 = vsel %vm1083, %v3354, %v3348
    %v3363 = vsel %vm1083, %v3355, %v3349
    %v3364 = vsel %vm1092, 0.0, %v3360
    %v3365 = vsel %vm1092, 0.0, %v3361
    %v3366 = vsel %vm1093, 0.0, %v3358
    %v3367 = vsel %vm1093, 0.0, %v3359
    %v3368 = vsel %vm1094, 0.0, %v3356
    %v3369 = vsel %vm1094, 0.0, %v3357
    %v3370 = vsel %vm1095, 0.0, %v3362
    %v3371 = vsel %vm1095, 0.0, %v3363
    %v3372 = vpack.c.bf16 %v3342, %v3340
    %v3373 = vpack.c.bf16 %v3343, %v3341
    %v3374 = vpack.c.bf16 %v3346, %v3344
    %v3375 = vpack.c.bf16 %v3347, %v3345
    %v3376 = vld [vmem:[#allocation2 + $0x4d0] sm:$0xff]
    %v3377 = vld [vmem:[#allocation2 + $0x4d8] sm:$0xff]
    %v3378 = vld [vmem:[#allocation2 + $0x4e0] sm:$0xff]
    %v3379 = vld [vmem:[#allocation2 + $0x4e8] sm:$0xff]
    %v3380 = vld [vmem:[#allocation2 + $0x4f0] sm:$0xff]
    %v3381 = vld [vmem:[#allocation2 + $0x4f8] sm:$0xff]
    %v3382 = vld [vmem:[#allocation2 + $0x500] sm:$0xff]
    %v3383 = vld [vmem:[#allocation2 + $0x508] sm:$0xff]
    %v3384 = vld [vmem:[#allocation2 + $0x510] sm:$0xff]
    %v3385 = vld [vmem:[#allocation2 + $0x518] sm:$0xff]
    %v3386 = vld [vmem:[#allocation2 + $0x520] sm:$0xff]
    %v3387 = vld [vmem:[#allocation2 + $0x528] sm:$0xff]
    %v3388 = vld [vmem:[#allocation2 + $0x530] sm:$0xff]
    %v3389 = vld [vmem:[#allocation2 + $0x538] sm:$0xff]
    %v3390 = vld [vmem:[#allocation2 + $0x540] sm:$0xff]
    %v3391 = vld [vmem:[#allocation2 + $0x548] sm:$0xff]
    %v3392 = vld [vmem:[#allocation2 + $0x550] sm:$0xff]
    %v3393 = vld [vmem:[#allocation2 + $0x558] sm:$0xff]
    %v3394 = vld [vmem:[#allocation2 + $0x560] sm:$0xff]
    %v3395 = vld [vmem:[#allocation2 + $0x568] sm:$0xff]
    %v3396 = vld [vmem:[#allocation2 + $0x570] sm:$0xff]
    %v3397 = vld [vmem:[#allocation2 + $0x578] sm:$0xff]
    %v3398 = vld [vmem:[#allocation2 + $0x580] sm:$0xff]
    %v3399 = vld [vmem:[#allocation2 + $0x588] sm:$0xff]
    %v3400 = vld [vmem:[#allocation2 + $0x590] sm:$0xff]
    %v3401 = vld [vmem:[#allocation2 + $0x598] sm:$0xff]
    %v3402 = vld [vmem:[#allocation2 + $0x5a0] sm:$0xff]
    %v3403 = vld [vmem:[#allocation2 + $0x5a8] sm:$0xff]
    %v3404 = vld [vmem:[#allocation2 + $0x5b0] sm:$0xff]
    %v3405 = vld [vmem:[#allocation2 + $0x5b8] sm:$0xff]
    %v3406 = vld [vmem:[#allocation2 + $0x5c0] sm:$0xff]
    %v3407 = vld [vmem:[#allocation2 + $0x5c8] sm:$0xff]
    %v3408 = vpack.c.bf16 %v3318, %v3316
    %v3409 = vpack.c.bf16 %v3319, %v3317
    %v3410 = vpack.c.bf16 %v3322, %v3320
    %v3411 = vpack.c.bf16 %v3323, %v3321
    %v3412 = vld [vmem:[#allocation2 + $0x5d0] sm:$0xff]
    %v3413 = vld [vmem:[#allocation2 + $0x5d8] sm:$0xff]
    %v3414 = vld [vmem:[#allocation2 + $0x5e0] sm:$0xff]
    %v3415 = vld [vmem:[#allocation2 + $0x5e8] sm:$0xff]
    %v3416 = vld [vmem:[#allocation2 + $0x5f0] sm:$0xff]
    %v3417 = vld [vmem:[#allocation2 + $0x5f8] sm:$0xff]
    %v3418 = vld [vmem:[#allocation2 + $0x600] sm:$0xff]
    %v3419 = vld [vmem:[#allocation2 + $0x608] sm:$0xff]
    %v3420 = vld [vmem:[#allocation2 + $0x610] sm:$0xff]
    %v3421 = vld [vmem:[#allocation2 + $0x618] sm:$0xff]
    %v3422 = vld [vmem:[#allocation2 + $0x620] sm:$0xff]
    %v3423 = vld [vmem:[#allocation2 + $0x628] sm:$0xff]
    %v3424 = vld [vmem:[#allocation2 + $0x630] sm:$0xff]
    %v3425 = vld [vmem:[#allocation2 + $0x638] sm:$0xff]
    %v3426 = vld [vmem:[#allocation2 + $0x640] sm:$0xff]
    %v3427 = vld [vmem:[#allocation2 + $0x648] sm:$0xff]
    %v3428 = vld [vmem:[#allocation2 + $0x650] sm:$0xff]
    %v3429 = vld [vmem:[#allocation2 + $0x658] sm:$0xff]
    %v3430 = vld [vmem:[#allocation2 + $0x660] sm:$0xff]
    %v3431 = vld [vmem:[#allocation2 + $0x668] sm:$0xff]
    %v3432 = vld [vmem:[#allocation2 + $0x670] sm:$0xff]
    %v3433 = vld [vmem:[#allocation2 + $0x678] sm:$0xff]
    %v3434 = vld [vmem:[#allocation2 + $0x680] sm:$0xff]
    %v3435 = vld [vmem:[#allocation2 + $0x688] sm:$0xff]
    %v3436 = vld [vmem:[#allocation2 + $0x690] sm:$0xff]
    %v3437 = vld [vmem:[#allocation2 + $0x698] sm:$0xff]
    %v3438 = vld [vmem:[#allocation2 + $0x6a0] sm:$0xff]
    %v3439 = vld [vmem:[#allocation2 + $0x6a8] sm:$0xff]
    %v3440 = vld [vmem:[#allocation2 + $0x6b0] sm:$0xff]
    %v3441 = vld [vmem:[#allocation2 + $0x6b8] sm:$0xff]
    %v3442 = vld [vmem:[#allocation2 + $0x6c0] sm:$0xff]
    %v3443 = vld [vmem:[#allocation2 + $0x6c8] sm:$0xff]
    %v3476 = vunpack.c.l.b16 %v3412
    %v3477 = vunpack.c.h.b16 %v3412
    %v3478 = vunpack.c.l.b16 %v3413
    %v3479 = vunpack.c.h.b16 %v3413
    %v3480 = vunpack.c.l.b16 %v3414
    %v3481 = vunpack.c.h.b16 %v3414
    %v3482 = vunpack.c.l.b16 %v3415
    %v3483 = vunpack.c.h.b16 %v3415
    %v3484 = vunpack.c.l.b16 %v3416
    %v3485 = vunpack.c.h.b16 %v3416
    %v3486 = vunpack.c.l.b16 %v3417
    %v3487 = vunpack.c.h.b16 %v3417
    %v3488 = vunpack.c.l.b16 %v3418
    %v3489 = vunpack.c.h.b16 %v3418
    %v3490 = vunpack.c.l.b16 %v3419
    %v3491 = vunpack.c.h.b16 %v3419
    %v3492 = vunpack.c.l.b16 %v3420
    %v3493 = vunpack.c.h.b16 %v3420
    %v3494 = vunpack.c.l.b16 %v3421
    %v3495 = vunpack.c.h.b16 %v3421
    %v3496 = vunpack.c.l.b16 %v3422
    %v3497 = vunpack.c.h.b16 %v3422
    %v3498 = vunpack.c.l.b16 %v3423
    %v3499 = vunpack.c.h.b16 %v3423
    %v3500 = vunpack.c.l.b16 %v3424
    %v3501 = vunpack.c.h.b16 %v3424
    %v3502 = vunpack.c.l.b16 %v3425
    %v3503 = vunpack.c.h.b16 %v3425
    %v3504 = vunpack.c.l.b16 %v3426
    %v3505 = vunpack.c.h.b16 %v3426
    %v3506 = vunpack.c.l.b16 %v3427
    %v3507 = vunpack.c.h.b16 %v3427
    %v3508 = vunpack.c.l.b16 %v3428
    %v3509 = vunpack.c.h.b16 %v3428
    %v3510 = vunpack.c.l.b16 %v3429
    %v3511 = vunpack.c.h.b16 %v3429
    %v3512 = vunpack.c.l.b16 %v3430
    %v3513 = vunpack.c.h.b16 %v3430
    %v3514 = vunpack.c.l.b16 %v3431
    %v3515 = vunpack.c.h.b16 %v3431
    %v3516 = vunpack.c.l.b16 %v3432
    %v3517 = vunpack.c.h.b16 %v3432
    %v3518 = vunpack.c.l.b16 %v3433
    %v3519 = vunpack.c.h.b16 %v3433
    %v3520 = vunpack.c.l.b16 %v3434
    %v3521 = vunpack.c.h.b16 %v3434
    %v3522 = vunpack.c.l.b16 %v3435
    %v3523 = vunpack.c.h.b16 %v3435
    %v3524 = vunpack.c.l.b16 %v3436
    %v3525 = vunpack.c.h.b16 %v3436
    %v3526 = vunpack.c.l.b16 %v3437
    %v3527 = vunpack.c.h.b16 %v3437
    %v3528 = vunpack.c.l.b16 %v3438
    %v3529 = vunpack.c.h.b16 %v3438
    %v3530 = vunpack.c.l.b16 %v3439
    %v3531 = vunpack.c.h.b16 %v3439
    %v3532 = vunpack.c.l.b16 %v3440
    %v3533 = vunpack.c.h.b16 %v3440
    %v3534 = vunpack.c.l.b16 %v3441
    %v3535 = vunpack.c.h.b16 %v3441
    %v3536 = vunpack.c.l.b16 %v3442
    %v3537 = vunpack.c.h.b16 %v3442
    %v3538 = vunpack.c.l.b16 %v3443
    %v3539 = vunpack.c.h.b16 %v3443
    %v3540 = vpack.c.b16 %v3478, %v3476
    %v3541 = vpack.c.b16 %v3479, %v3477
    %v3542 = vpack.c.b16 %v3482, %v3480
    %v3543 = vpack.c.b16 %v3483, %v3481
    %v3544 = vpack.c.b16 %v3486, %v3484
    %v3545 = vpack.c.b16 %v3487, %v3485
    %v3546 = vpack.c.b16 %v3490, %v3488
    %v3547 = vpack.c.b16 %v3491, %v3489
    %v3548 = vpack.c.b16 %v3494, %v3492
    %v3549 = vpack.c.b16 %v3495, %v3493
    %v3550 = vpack.c.b16 %v3498, %v3496
    %v3551 = vpack.c.b16 %v3499, %v3497
    %v3552 = vpack.c.b16 %v3502, %v3500
    %v3553 = vpack.c.b16 %v3503, %v3501
    %v3554 = vpack.c.b16 %v3506, %v3504
    %v3555 = vpack.c.b16 %v3507, %v3505
    %v3556 = vpack.c.b16 %v3510, %v3508
    %v3557 = vpack.c.b16 %v3511, %v3509
    %v3558 = vpack.c.b16 %v3514, %v3512
    %v3559 = vpack.c.b16 %v3515, %v3513
    %v3560 = vpack.c.b16 %v3518, %v3516
    %v3561 = vpack.c.b16 %v3519, %v3517
    %v3562 = vpack.c.b16 %v3522, %v3520
    %v3563 = vpack.c.b16 %v3523, %v3521
    %v3564 = vpack.c.b16 %v3526, %v3524
    %v3565 = vpack.c.b16 %v3527, %v3525
    %v3566 = vpack.c.b16 %v3530, %v3528
    %v3567 = vpack.c.b16 %v3531, %v3529
    %v3568 = vpack.c.b16 %v3534, %v3532
    %v3569 = vpack.c.b16 %v3535, %v3533
    %v3570 = vpack.c.b16 %v3538, %v3536
    %v3571 = vpack.c.b16 %v3539, %v3537
    %3604 = vmatpush.bf16.msra.mxu0 %v3554
    %3605 = vmatpush.bf16.msra.mxu0 %v3552
    %3606 = vmatpush.bf16.msra.mxu0 %v3550
    %3607 = vmatpush.bf16.msra.mxu0 %v3548
    %3608 = vmatpush.bf16.msra.mxu0 %v3546
    %3609 = vmatpush.bf16.msra.mxu0 %v3544
    %3610 = vmatpush.bf16.msra.mxu0 %v3542
    %3611 = vmatpush.bf16.msra.mxu0 %v3540
    %3612 = vmatmul.bf16.gmra.mxu0 %v3408
    %v3613 = vpop.f32.mrf.mxu0
    %v3614 = vadd.f32 0.0, %v3613
    %v3615 = vpop.f32.mrf.mxu0
    %v3616 = vadd.f32 0.0, %v3615
    %3617 = vmatmul.bf16.gmra.mxu0 %v3410
    %v3618 = vpop.f32.mrf.mxu0
    %v3619 = vadd.f32 0.0, %v3618
    %v3620 = vpop.f32.mrf.mxu0
    %v3621 = vadd.f32 0.0, %v3620
    %3622 = vdwg.mxu0
    %3623 = vmatpush.bf16.msra.mxu0 %v3570
    %3624 = vmatpush.bf16.msra.mxu0 %v3568
    %3625 = vmatpush.bf16.msra.mxu0 %v3566
    %3626 = vmatpush.bf16.msra.mxu0 %v3564
    %3627 = vmatpush.bf16.msra.mxu0 %v3562
    %3628 = vmatpush.bf16.msra.mxu0 %v3560
    %3629 = vmatpush.bf16.msra.mxu0 %v3558
    %3630 = vmatpush.bf16.msra.mxu0 %v3556
    %3631 = vmatmul.bf16.gmra.mxu0 %v3409
    %v3632 = vpop.f32.mrf.mxu0
    %v3633 = vadd.f32 %v3614, %v3632
    %v3634 = vpop.f32.mrf.mxu0
    %v3635 = vadd.f32 %v3616, %v3634
    %3636 = vmatmul.bf16.gmra.mxu0 %v3411
    %v3637 = vpop.f32.mrf.mxu0
    %v3638 = vadd.f32 %v3619, %v3637
    %v3639 = vpop.f32.mrf.mxu0
    %v3640 = vadd.f32 %v3621, %v3639
    %3641 = vdwg.mxu0
    %3642 = vmatpush.bf16.msra.mxu0 %v3555
    %3643 = vmatpush.bf16.msra.mxu0 %v3553
    %3644 = vmatpush.bf16.msra.mxu0 %v3551
    %3645 = vmatpush.bf16.msra.mxu0 %v3549
    %3646 = vmatpush.bf16.msra.mxu0 %v3547
    %3647 = vmatpush.bf16.msra.mxu0 %v3545
    %3648 = vmatpush.bf16.msra.mxu0 %v3543
    %3649 = vmatpush.bf16.msra.mxu0 %v3541
    %3650 = vmatmul.bf16.gmra.mxu0 %v3408
    %v3651 = vpop.f32.mrf.mxu0
    %v3652 = vadd.f32 0.0, %v3651
    %v3653 = vpop.f32.mrf.mxu0
    %v3654 = vadd.f32 0.0, %v3653
    %3655 = vmatmul.bf16.gmra.mxu0 %v3410
    %v3656 = vpop.f32.mrf.mxu0
    %v3657 = vadd.f32 0.0, %v3656
    %v3658 = vpop.f32.mrf.mxu0
    %v3659 = vadd.f32 0.0, %v3658
    %3660 = vdwg.mxu0
    %3661 = vmatpush.bf16.msra.mxu0 %v3571
    %3662 = vmatpush.bf16.msra.mxu0 %v3569
    %3663 = vmatpush.bf16.msra.mxu0 %v3567
    %3664 = vmatpush.bf16.msra.mxu0 %v3565
    %3665 = vmatpush.bf16.msra.mxu0 %v3563
    %3666 = vmatpush.bf16.msra.mxu0 %v3561
    %3667 = vmatpush.bf16.msra.mxu0 %v3559
    %3668 = vmatpush.bf16.msra.mxu0 %v3557
    %3669 = vmatmul.bf16.gmra.mxu0 %v3409
    %v3670 = vpop.f32.mrf.mxu0
    %v3671 = vadd.f32 %v3652, %v3670
    %v3672 = vpop.f32.mrf.mxu0
    %v3673 = vadd.f32 %v3654, %v3672
    %3674 = vmatmul.bf16.gmra.mxu0 %v3411
    %v3675 = vpop.f32.mrf.mxu0
    %v3676 = vadd.f32 %v3657, %v3675
    %v3677 = vpop.f32.mrf.mxu0
    %v3678 = vadd.f32 %v3659, %v3677
    %3679 = vdwg.mxu0
    %v3712 = vunpack.c.l.b16 %v3376
    %v3713 = vunpack.c.h.b16 %v3376
    %v3714 = vunpack.c.l.b16 %v3377
    %v3715 = vunpack.c.h.b16 %v3377
    %v3716 = vunpack.c.l.b16 %v3378
    %v3717 = vunpack.c.h.b16 %v3378
    %v3718 = vunpack.c.l.b16 %v3379
    %v3719 = vunpack.c.h.b16 %v3379
    %v3720 = vunpack.c.l.b16 %v3380
    %v3721 = vunpack.c.h.b16 %v3380
    %v3722 = vunpack.c.l.b16 %v3381
    %v3723 = vunpack.c.h.b16 %v3381
    %v3724 = vunpack.c.l.b16 %v3382
    %v3725 = vunpack.c.h.b16 %v3382
    %v3726 = vunpack.c.l.b16 %v3383
    %v3727 = vunpack.c.h.b16 %v3383
    %v3728 = vunpack.c.l.b16 %v3384
    %v3729 = vunpack.c.h.b16 %v3384
    %v3730 = vunpack.c.l.b16 %v3385
    %v3731 = vunpack.c.h.b16 %v3385
    %v3732 = vunpack.c.l.b16 %v3386
    %v3733 = vunpack.c.h.b16 %v3386
    %v3734 = vunpack.c.l.b16 %v3387
    %v3735 = vunpack.c.h.b16 %v3387
    %v3736 = vunpack.c.l.b16 %v3388
    %v3737 = vunpack.c.h.b16 %v3388
    %v3738 = vunpack.c.l.b16 %v3389
    %v3739 = vunpack.c.h.b16 %v3389
    %v3740 = vunpack.c.l.b16 %v3390
    %v3741 = vunpack.c.h.b16 %v3390
    %v3742 = vunpack.c.l.b16 %v3391
    %v3743 = vunpack.c.h.b16 %v3391
    %v3744 = vunpack.c.l.b16 %v3392
    %v3745 = vunpack.c.h.b16 %v3392
    %v3746 = vunpack.c.l.b16 %v3393
    %v3747 = vunpack.c.h.b16 %v3393
    %v3748 = vunpack.c.l.b16 %v3394
    %v3749 = vunpack.c.h.b16 %v3394
    %v3750 = vunpack.c.l.b16 %v3395
    %v3751 = vunpack.c.h.b16 %v3395
    %v3752 = vunpack.c.l.b16 %v3396
    %v3753 = vunpack.c.h.b16 %v3396
    %v3754 = vunpack.c.l.b16 %v3397
    %v3755 = vunpack.c.h.b16 %v3397
    %v3756 = vunpack.c.l.b16 %v3398
    %v3757 = vunpack.c.h.b16 %v3398
    %v3758 = vunpack.c.l.b16 %v3399
    %v3759 = vunpack.c.h.b16 %v3399
    %v3760 = vunpack.c.l.b16 %v3400
    %v3761 = vunpack.c.h.b16 %v3400
    %v3762 = vunpack.c.l.b16 %v3401
    %v3763 = vunpack.c.h.b16 %v3401
    %v3764 = vunpack.c.l.b16 %v3402
    %v3765 = vunpack.c.h.b16 %v3402
    %v3766 = vunpack.c.l.b16 %v3403
    %v3767 = vunpack.c.h.b16 %v3403
    %v3768 = vunpack.c.l.b16 %v3404
    %v3769 = vunpack.c.h.b16 %v3404
    %v3770 = vunpack.c.l.b16 %v3405
    %v3771 = vunpack.c.h.b16 %v3405
    %v3772 = vunpack.c.l.b16 %v3406
    %v3773 = vunpack.c.h.b16 %v3406
    %v3774 = vunpack.c.l.b16 %v3407
    %v3775 = vunpack.c.h.b16 %v3407
    %v3776 = vpack.c.b16 %v3714, %v3712
    %v3777 = vpack.c.b16 %v3715, %v3713
    %v3778 = vpack.c.b16 %v3718, %v3716
    %v3779 = vpack.c.b16 %v3719, %v3717
    %v3780 = vpack.c.b16 %v3722, %v3720
    %v3781 = vpack.c.b16 %v3723, %v3721
    %v3782 = vpack.c.b16 %v3726, %v3724
    %v3783 = vpack.c.b16 %v3727, %v3725
    %v3784 = vpack.c.b16 %v3730, %v3728
    %v3785 = vpack.c.b16 %v3731, %v3729
    %v3786 = vpack.c.b16 %v3734, %v3732
    %v3787 = vpack.c.b16 %v3735, %v3733
    %v3788 = vpack.c.b16 %v3738, %v3736
    %v3789 = vpack.c.b16 %v3739, %v3737
    %v3790 = vpack.c.b16 %v3742, %v3740
    %v3791 = vpack.c.b16 %v3743, %v3741
    %v3792 = vpack.c.b16 %v3746, %v3744
    %v3793 = vpack.c.b16 %v3747, %v3745
    %v3794 = vpack.c.b16 %v3750, %v3748
    %v3795 = vpack.c.b16 %v3751, %v3749
    %v3796 = vpack.c.b16 %v3754, %v3752
    %v3797 = vpack.c.b16 %v3755, %v3753
    %v3798 = vpack.c.b16 %v3758, %v3756
    %v3799 = vpack.c.b16 %v3759, %v3757
    %v3800 = vpack.c.b16 %v3762, %v3760
    %v3801 = vpack.c.b16 %v3763, %v3761
    %v3802 = vpack.c.b16 %v3766, %v3764
    %v3803 = vpack.c.b16 %v3767, %v3765
    %v3804 = vpack.c.b16 %v3770, %v3768
    %v3805 = vpack.c.b16 %v3771, %v3769
    %v3806 = vpack.c.b16 %v3774, %v3772
    %v3807 = vpack.c.b16 %v3775, %v3773
    %3840 = vmatpush.bf16.msra.mxu0 %v3790
    %3841 = vmatpush.bf16.msra.mxu0 %v3788
    %3842 = vmatpush.bf16.msra.mxu0 %v3786
    %3843 = vmatpush.bf16.msra.mxu0 %v3784
    %3844 = vmatpush.bf16.msra.mxu0 %v3782
    %3845 = vmatpush.bf16.msra.mxu0 %v3780
    %3846 = vmatpush.bf16.msra.mxu0 %v3778
    %3847 = vmatpush.bf16.msra.mxu0 %v3776
    %3848 = vmatmul.bf16.gmra.mxu0 %v3372
    %v3849 = vpop.f32.mrf.mxu0
    %v3850 = vadd.f32 %v3633, %v3849
    %v3851 = vpop.f32.mrf.mxu0
    %v3852 = vadd.f32 %v3635, %v3851
    %3853 = vmatmul.bf16.gmra.mxu0 %v3374
    %v3854 = vpop.f32.mrf.mxu0
    %v3855 = vadd.f32 %v3638, %v3854
    %v3856 = vpop.f32.mrf.mxu0
    %v3857 = vadd.f32 %v3640, %v3856
    %3858 = vdwg.mxu0
    %3859 = vmatpush.bf16.msra.mxu0 %v3806
    %3860 = vmatpush.bf16.msra.mxu0 %v3804
    %3861 = vmatpush.bf16.msra.mxu0 %v3802
    %3862 = vmatpush.bf16.msra.mxu0 %v3800
    %3863 = vmatpush.bf16.msra.mxu0 %v3798
    %3864 = vmatpush.bf16.msra.mxu0 %v3796
    %3865 = vmatpush.bf16.msra.mxu0 %v3794
    %3866 = vmatpush.bf16.msra.mxu0 %v3792
    %3867 = vmatmul.bf16.gmra.mxu0 %v3373
    %v3868 = vpop.f32.mrf.mxu0
    %v3869 = vadd.f32 %v3850, %v3868
    %v3870 = vpop.f32.mrf.mxu0
    %v3871 = vadd.f32 %v3852, %v3870
    %3872 = vmatmul.bf16.gmra.mxu0 %v3375
    %v3873 = vpop.f32.mrf.mxu0
    %v3874 = vadd.f32 %v3855, %v3873
    %v3875 = vpop.f32.mrf.mxu0
    %v3876 = vadd.f32 %v3857, %v3875
    %3877 = vdwg.mxu0
    %3878 = vmatpush.bf16.msra.mxu0 %v3791
    %3879 = vmatpush.bf16.msra.mxu0 %v3789
    %3880 = vmatpush.bf16.msra.mxu0 %v3787
    %3881 = vmatpush.bf16.msra.mxu0 %v3785
    %3882 = vmatpush.bf16.msra.mxu0 %v3783
    %3883 = vmatpush.bf16.msra.mxu0 %v3781
    %3884 = vmatpush.bf16.msra.mxu0 %v3779
    %3885 = vmatpush.bf16.msra.mxu0 %v3777
    %3886 = vmatmul.bf16.gmra.mxu0 %v3372
    %v3887 = vpop.f32.mrf.mxu0
    %v3888 = vadd.f32 %v3671, %v3887
    %v3889 = vpop.f32.mrf.mxu0
    %v3890 = vadd.f32 %v3673, %v3889
    %3891 = vmatmul.bf16.gmra.mxu0 %v3374
    %v3892 = vpop.f32.mrf.mxu0
    %v3893 = vadd.f32 %v3676, %v3892
    %v3894 = vpop.f32.mrf.mxu0
    %v3895 = vadd.f32 %v3678, %v3894
    %3896 = vdwg.mxu0
    %3897 = vmatpush.bf16.msra.mxu0 %v3807
    %3898 = vmatpush.bf16.msra.mxu0 %v3805
    %3899 = vmatpush.bf16.msra.mxu0 %v3803
    %3900 = vmatpush.bf16.msra.mxu0 %v3801
    %3901 = vmatpush.bf16.msra.mxu0 %v3799
    %3902 = vmatpush.bf16.msra.mxu0 %v3797
    %3903 = vmatpush.bf16.msra.mxu0 %v3795
    %3904 = vmatpush.bf16.msra.mxu0 %v3793
    %3905 = vmatmul.bf16.gmra.mxu0 %v3373
    %v3906 = vpop.f32.mrf.mxu0
    %v3907 = vadd.f32 %v3888, %v3906
    %v3908 = vpop.f32.mrf.mxu0
    %v3909 = vadd.f32 %v3890, %v3908
    %3910 = vmatmul.bf16.gmra.mxu0 %v3375
    %v3911 = vpop.f32.mrf.mxu0
    %v3912 = vadd.f32 %v3893, %v3911
    %v3913 = vpop.f32.mrf.mxu0
    %v3914 = vadd.f32 %v3895, %v3913
    %3915 = vdwg.mxu0
    %v3916 = vpack.c.bf16 %v3366, %v3364
    %v3917 = vpack.c.bf16 %v3367, %v3365
    %v3918 = vpack.c.bf16 %v3370, %v3368
    %v3919 = vpack.c.bf16 %v3371, %v3369
    %v3920 = vld [vmem:[#allocation2 + $0x6d0] sm:$0xff]
    %v3921 = vld [vmem:[#allocation2 + $0x6d8] sm:$0xff]
    %v3922 = vld [vmem:[#allocation2 + $0x6e0] sm:$0xff]
    %v3923 = vld [vmem:[#allocation2 + $0x6e8] sm:$0xff]
    %v3924 = vld [vmem:[#allocation2 + $0x6f0] sm:$0xff]
    %v3925 = vld [vmem:[#allocation2 + $0x6f8] sm:$0xff]
    %v3926 = vld [vmem:[#allocation2 + $0x700] sm:$0xff]
    %v3927 = vld [vmem:[#allocation2 + $0x708] sm:$0xff]
    %v3928 = vld [vmem:[#allocation2 + $0x710] sm:$0xff]
    %v3929 = vld [vmem:[#allocation2 + $0x718] sm:$0xff]
    %v3930 = vld [vmem:[#allocation2 + $0x720] sm:$0xff]
    %v3931 = vld [vmem:[#allocation2 + $0x728] sm:$0xff]
    %v3932 = vld [vmem:[#allocation2 + $0x730] sm:$0xff]
    %v3933 = vld [vmem:[#allocation2 + $0x738] sm:$0xff]
    %v3934 = vld [vmem:[#allocation2 + $0x740] sm:$0xff]
    %v3935 = vld [vmem:[#allocation2 + $0x748] sm:$0xff]
    %v3936 = vld [vmem:[#allocation2 + $0x750] sm:$0xff]
    %v3937 = vld [vmem:[#allocation2 + $0x758] sm:$0xff]
    %v3938 = vld [vmem:[#allocation2 + $0x760] sm:$0xff]
    %v3939 = vld [vmem:[#allocation2 + $0x768] sm:$0xff]
    %v3940 = vld [vmem:[#allocation2 + $0x770] sm:$0xff]
    %v3941 = vld [vmem:[#allocation2 + $0x778] sm:$0xff]
    %v3942 = vld [vmem:[#allocation2 + $0x780] sm:$0xff]
    %v3943 = vld [vmem:[#allocation2 + $0x788] sm:$0xff]
    %v3944 = vld [vmem:[#allocation2 + $0x790] sm:$0xff]
    %v3945 = vld [vmem:[#allocation2 + $0x798] sm:$0xff]
    %v3946 = vld [vmem:[#allocation2 + $0x7a0] sm:$0xff]
    %v3947 = vld [vmem:[#allocation2 + $0x7a8] sm:$0xff]
    %v3948 = vld [vmem:[#allocation2 + $0x7b0] sm:$0xff]
    %v3949 = vld [vmem:[#allocation2 + $0x7b8] sm:$0xff]
    %v3950 = vld [vmem:[#allocation2 + $0x7c0] sm:$0xff]
    %v3951 = vld [vmem:[#allocation2 + $0x7c8] sm:$0xff]
    %v3984 = vunpack.c.l.b16 %v3920
    %v3985 = vunpack.c.h.b16 %v3920
    %v3986 = vunpack.c.l.b16 %v3921
    %v3987 = vunpack.c.h.b16 %v3921
    %v3988 = vunpack.c.l.b16 %v3922
    %v3989 = vunpack.c.h.b16 %v3922
    %v3990 = vunpack.c.l.b16 %v3923
    %v3991 = vunpack.c.h.b16 %v3923
    %v3992 = vunpack.c.l.b16 %v3924
    %v3993 = vunpack.c.h.b16 %v3924
    %v3994 = vunpack.c.l.b16 %v3925
    %v3995 = vunpack.c.h.b16 %v3925
    %v3996 = vunpack.c.l.b16 %v3926
    %v3997 = vunpack.c.h.b16 %v3926
    %v3998 = vunpack.c.l.b16 %v3927
    %v3999 = vunpack.c.h.b16 %v3927
    %v4000 = vunpack.c.l.b16 %v3928
    %v4001 = vunpack.c.h.b16 %v3928
    %v4002 = vunpack.c.l.b16 %v3929
    %v4003 = vunpack.c.h.b16 %v3929
    %v4004 = vunpack.c.l.b16 %v3930
    %v4005 = vunpack.c.h.b16 %v3930
    %v4006 = vunpack.c.l.b16 %v3931
    %v4007 = vunpack.c.h.b16 %v3931
    %v4008 = vunpack.c.l.b16 %v3932
    %v4009 = vunpack.c.h.b16 %v3932
    %v4010 = vunpack.c.l.b16 %v3933
    %v4011 = vunpack.c.h.b16 %v3933
    %v4012 = vunpack.c.l.b16 %v3934
    %v4013 = vunpack.c.h.b16 %v3934
    %v4014 = vunpack.c.l.b16 %v3935
    %v4015 = vunpack.c.h.b16 %v3935
    %v4016 = vunpack.c.l.b16 %v3936
    %v4017 = vunpack.c.h.b16 %v3936
    %v4018 = vunpack.c.l.b16 %v3937
    %v4019 = vunpack.c.h.b16 %v3937
    %v4020 = vunpack.c.l.b16 %v3938
    %v4021 = vunpack.c.h.b16 %v3938
    %v4022 = vunpack.c.l.b16 %v3939
    %v4023 = vunpack.c.h.b16 %v3939
    %v4024 = vunpack.c.l.b16 %v3940
    %v4025 = vunpack.c.h.b16 %v3940
    %v4026 = vunpack.c.l.b16 %v3941
    %v4027 = vunpack.c.h.b16 %v3941
    %v4028 = vunpack.c.l.b16 %v3942
    %v4029 = vunpack.c.h.b16 %v3942
    %v4030 = vunpack.c.l.b16 %v3943
    %v4031 = vunpack.c.h.b16 %v3943
    %v4032 = vunpack.c.l.b16 %v3944
    %v4033 = vunpack.c.h.b16 %v3944
    %v4034 = vunpack.c.l.b16 %v3945
    %v4035 = vunpack.c.h.b16 %v3945
    %v4036 = vunpack.c.l.b16 %v3946
    %v4037 = vunpack.c.h.b16 %v3946
    %v4038 = vunpack.c.l.b16 %v3947
    %v4039 = vunpack.c.h.b16 %v3947
    %v4040 = vunpack.c.l.b16 %v3948
    %v4041 = vunpack.c.h.b16 %v3948
    %v4042 = vunpack.c.l.b16 %v3949
    %v4043 = vunpack.c.h.b16 %v3949
    %v4044 = vunpack.c.l.b16 %v3950
    %v4045 = vunpack.c.h.b16 %v3950
    %v4046 = vunpack.c.l.b16 %v3951
    %v4047 = vunpack.c.h.b16 %v3951
    %v4048 = vpack.c.b16 %v3986, %v3984
    %v4049 = vpack.c.b16 %v3987, %v3985
    %v4050 = vpack.c.b16 %v3990, %v3988
    %v4051 = vpack.c.b16 %v3991, %v3989
    %v4052 = vpack.c.b16 %v3994, %v3992
    %v4053 = vpack.c.b16 %v3995, %v3993
    %v4054 = vpack.c.b16 %v3998, %v3996
    %v4055 = vpack.c.b16 %v3999, %v3997
    %v4056 = vpack.c.b16 %v4002, %v4000
    %v4057 = vpack.c.b16 %v4003, %v4001
    %v4058 = vpack.c.b16 %v4006, %v4004
    %v4059 = vpack.c.b16 %v4007, %v4005
    %v4060 = vpack.c.b16 %v4010, %v4008
    %v4061 = vpack.c.b16 %v4011, %v4009
    %v4062 = vpack.c.b16 %v4014, %v4012
    %v4063 = vpack.c.b16 %v4015, %v4013
    %v4064 = vpack.c.b16 %v4018, %v4016
    %v4065 = vpack.c.b16 %v4019, %v4017
    %v4066 = vpack.c.b16 %v4022, %v4020
    %v4067 = vpack.c.b16 %v4023, %v4021
    %v4068 = vpack.c.b16 %v4026, %v4024
    %v4069 = vpack.c.b16 %v4027, %v4025
    %v4070 = vpack.c.b16 %v4030, %v4028
    %v4071 = vpack.c.b16 %v4031, %v4029
    %v4072 = vpack.c.b16 %v4034, %v4032
    %v4073 = vpack.c.b16 %v4035, %v4033
    %v4074 = vpack.c.b16 %v4038, %v4036
    %v4075 = vpack.c.b16 %v4039, %v4037
    %v4076 = vpack.c.b16 %v4042, %v4040
    %v4077 = vpack.c.b16 %v4043, %v4041
    %v4078 = vpack.c.b16 %v4046, %v4044
    %v4079 = vpack.c.b16 %v4047, %v4045
    %4112 = vmatpush.bf16.msra.mxu0 %v4062
    %4113 = vmatpush.bf16.msra.mxu0 %v4060
    %4114 = vmatpush.bf16.msra.mxu0 %v4058
    %4115 = vmatpush.bf16.msra.mxu0 %v4056
    %4116 = vmatpush.bf16.msra.mxu0 %v4054
    %4117 = vmatpush.bf16.msra.mxu0 %v4052
    %4118 = vmatpush.bf16.msra.mxu0 %v4050
    %4119 = vmatpush.bf16.msra.mxu0 %v4048
    %4120 = vmatmul.bf16.gmra.mxu0 %v3916
    %v4121 = vpop.f32.mrf.mxu0
    %v4122 = vadd.f32 0.0, %v4121
    %v4123 = vpop.f32.mrf.mxu0
    %v4124 = vadd.f32 0.0, %v4123
    %4125 = vmatmul.bf16.gmra.mxu0 %v3918
    %v4126 = vpop.f32.mrf.mxu0
    %v4127 = vadd.f32 0.0, %v4126
    %v4128 = vpop.f32.mrf.mxu0
    %v4129 = vadd.f32 0.0, %v4128
    %4130 = vdwg.mxu0
    %4131 = vmatpush.bf16.msra.mxu0 %v4078
    %4132 = vmatpush.bf16.msra.mxu0 %v4076
    %4133 = vmatpush.bf16.msra.mxu0 %v4074
    %4134 = vmatpush.bf16.msra.mxu0 %v4072
    %4135 = vmatpush.bf16.msra.mxu0 %v4070
    %4136 = vmatpush.bf16.msra.mxu0 %v4068
    %4137 = vmatpush.bf16.msra.mxu0 %v4066
    %4138 = vmatpush.bf16.msra.mxu0 %v4064
    %4139 = vmatmul.bf16.gmra.mxu0 %v3917
    %v4140 = vpop.f32.mrf.mxu0
    %v4141 = vadd.f32 %v4122, %v4140
    %v4142 = vpop.f32.mrf.mxu0
    %v4143 = vadd.f32 %v4124, %v4142
    %4144 = vmatmul.bf16.gmra.mxu0 %v3919
    %v4145 = vpop.f32.mrf.mxu0
    %v4146 = vadd.f32 %v4127, %v4145
    %v4147 = vpop.f32.mrf.mxu0
    %v4148 = vadd.f32 %v4129, %v4147
    %4149 = vdwg.mxu0
    %4150 = vmatpush.bf16.msra.mxu0 %v4063
    %4151 = vmatpush.bf16.msra.mxu0 %v4061
    %4152 = vmatpush.bf16.msra.mxu0 %v4059
    %4153 = vmatpush.bf16.msra.mxu0 %v4057
    %4154 = vmatpush.bf16.msra.mxu0 %v4055
    %4155 = vmatpush.bf16.msra.mxu0 %v4053
    %4156 = vmatpush.bf16.msra.mxu0 %v4051
    %4157 = vmatpush.bf16.msra.mxu0 %v4049
    %4158 = vmatmul.bf16.gmra.mxu0 %v3916
    %v4159 = vpop.f32.mrf.mxu0
    %v4160 = vadd.f32 0.0, %v4159
    %v4161 = vpop.f32.mrf.mxu0
    %v4162 = vadd.f32 0.0, %v4161
    %4163 = vmatmul.bf16.gmra.mxu0 %v3918
    %v4164 = vpop.f32.mrf.mxu0
    %v4165 = vadd.f32 0.0, %v4164
    %v4166 = vpop.f32.mrf.mxu0
    %v4167 = vadd.f32 0.0, %v4166
    %4168 = vdwg.mxu0
    %4169 = vmatpush.bf16.msra.mxu0 %v4079
    %4170 = vmatpush.bf16.msra.mxu0 %v4077
    %4171 = vmatpush.bf16.msra.mxu0 %v4075
    %4172 = vmatpush.bf16.msra.mxu0 %v4073
    %4173 = vmatpush.bf16.msra.mxu0 %v4071
    %4174 = vmatpush.bf16.msra.mxu0 %v4069
    %4175 = vmatpush.bf16.msra.mxu0 %v4067
    %4176 = vmatpush.bf16.msra.mxu0 %v4065
    %4177 = vmatmul.bf16.gmra.mxu0 %v3917
    %v4178 = vpop.f32.mrf.mxu0
    %v4179 = vadd.f32 %v4160, %v4178
    %v4180 = vpop.f32.mrf.mxu0
    %v4181 = vadd.f32 %v4162, %v4180
    %4182 = vmatmul.bf16.gmra.mxu0 %v3919
    %v4183 = vpop.f32.mrf.mxu0
    %v4184 = vadd.f32 %v4165, %v4183
    %v4185 = vpop.f32.mrf.mxu0
    %v4186 = vadd.f32 %v4167, %v4185
    %4187 = vdwg.mxu0
    %v4188 = vadd.f32 %v3869, %v4141
    %v4189 = vadd.f32 %v3907, %v4179
    %v4190 = vadd.f32 %v3871, %v4143
    %v4191 = vadd.f32 %v3909, %v4181
    %v4192 = vadd.f32 %v3874, %v4146
    %v4193 = vadd.f32 %v3912, %v4184
    %v4194 = vadd.f32 %v3876, %v4148
    %v4195 = vadd.f32 %v3914, %v4186
    %s4196 = scalar_lea.vmem [#allocation4], 23
    %v4197 = vld [vmem:[%s4196] ss:$8 sm:$0x3]
    %v4199 = vperm.slane %v4197, 0
    %v4200 = vperm.slane %v4197, 1
    %v4203 = vadd.f32 %v4188, %v4199
    %v4204 = vadd.f32 %v4189, %v4200
    %v4205 = vadd.f32 %v4190, %v4199
    %v4206 = vadd.f32 %v4191, %v4200
    %v4207 = vadd.f32 %v4192, %v4199
    %v4208 = vadd.f32 %v4193, %v4200
    %v4209 = vadd.f32 %v4194, %v4199
    %v4210 = vadd.f32 %v4195, %v4200
    %v4211 = vadd.f32 %v4203, %v4205
    %v4212 = vadd.f32 %v4211, %v4207
    %v4213 = vadd.f32 %v4212, %v4209
    %v4214 = vrot.slane %v4213, 4
    %v4215 = vadd.f32 %v4213, %v4214
    %v4216 = vrot.slane %v4215, 2
    %v4217 = vadd.f32 %v4215, %v4216
    %v4218 = vrot.slane %v4217, 1
    %v4219 = vadd.f32 %v4217, %v4218
    %v4220 = vadd.f32 %v4204, %v4206
    %v4221 = vadd.f32 %v4220, %v4208
    %v4222 = vadd.f32 %v4221, %v4210
    %v4223 = vrot.slane %v4222, 4
    %v4224 = vadd.f32 %v4222, %v4223
    %v4225 = vrot.slane %v4224, 2
    %v4226 = vadd.f32 %v4224, %v4225
    %v4227 = vrot.slane %v4226, 1
    %v4228 = vadd.f32 %v4226, %v4227
    %v4229 = vmul.f32 %v4219, %v1430
    %v4230 = vmul.f32 %v4228, %v1430
    %v4231 = vmul.f32 %v4203, %v4203
    %v4232 = vmul.f32 %v4204, %v4204
    %v4233 = vmul.f32 %v4205, %v4205
    %v4234 = vmul.f32 %v4206, %v4206
    %v4235 = vmul.f32 %v4207, %v4207
    %v4236 = vmul.f32 %v4208, %v4208
    %v4237 = vmul.f32 %v4209, %v4209
    %v4238 = vmul.f32 %v4210, %v4210
    %v4239 = vadd.f32 %v4231, %v4233
    %v4240 = vadd.f32 %v4239, %v4235
    %v4241 = vadd.f32 %v4240, %v4237
    %v4242 = vrot.slane %v4241, 4
    %v4243 = vadd.f32 %v4241, %v4242
    %v4244 = vrot.slane %v4243, 2
    %v4245 = vadd.f32 %v4243, %v4244
    %v4246 = vrot.slane %v4245, 1
    %v4247 = vadd.f32 %v4245, %v4246
    %v4248 = vadd.f32 %v4232, %v4234
    %v4249 = vadd.f32 %v4248, %v4236
    %v4250 = vadd.f32 %v4249, %v4238
    %v4251 = vrot.slane %v4250, 4
    %v4252 = vadd.f32 %v4250, %v4251
    %v4253 = vrot.slane %v4252, 2
    %v4254 = vadd.f32 %v4252, %v4253
    %v4255 = vrot.slane %v4254, 1
    %v4256 = vadd.f32 %v4254, %v4255
    %v4257 = vmul.f32 %v4247, %v1430
    %v4258 = vmul.f32 %v4256, %v1430
    %v4259 = vmul.f32 %v4229, %v4229
    %v4260 = vmul.f32 %v4230, %v4230
    %v4261 = vsub.f32 %v4257, %v4259
    %v4262 = vsub.f32 %v4258, %v4260
    %v4263 = vmax.f32 %v4261, 0.0
    %v4264 = vmax.f32 %v4262, 0.0
    %s4265 = scalar_lea.vmem [#allocation4], 32
    %v4266 = vld [vmem:[%s4265] ss:$8 sm:$0x3]
    %v4267 = vadd.f32 %v4263, 1e-05
    %v4268 = vadd.f32 %v4264, 1e-05
    %v4269 = vrsqrt.pop %v4267
    %v4270 = vmul.f32 %v4269, %v4267
    %v4271 = vmul.f32 %v4270, %v4269
    %v4272 = vmul.f32 0.5, %v4271
    %v4273 = vsub.f32 1.5, %v4272
    %v4274 = vmul.f32 %v4269, %v4273
    %vm4275 = vweird.f32 %v4267
    %vm4276 = vweird.f32 %v4269
    %vm4277 = vmor %vm4275, %vm4276
    %v4278 = vsel %vm4277, %v4269, %v4274
    %v4279 = vrsqrt.pop %v4268
    %v4280 = vmul.f32 %v4279, %v4268
    %v4281 = vmul.f32 %v4280, %v4279
    %v4282 = vmul.f32 0.5, %v4281
    %v4283 = vsub.f32 1.5, %v4282
    %v4284 = vmul.f32 %v4279, %v4283
    %vm4285 = vweird.f32 %v4268
    %vm4286 = vweird.f32 %v4279
    %vm4287 = vmor %vm4285, %vm4286
    %v4288 = vsel %vm4287, %v4279, %v4284
    %v4291 = vrot.slane %v4288, 7
    %v4292 = vsel %vm2812, %v4278, %v4291
    %v4294 = vmul.f32 %v4266, %v4292
    %s4295 = scalar_lea.vmem [#allocation4], 33
    %v4296 = vld [vmem:[%s4295] ss:$8 sm:$0x3]
    %v4298 = vperm.slane %v4294, 0
    %v4299 = vperm.slane %v4294, 1
    %v4302 = vmul.f32 %v4229, %v4298
    %v4303 = vmul.f32 %v4230, %v4299
    %v4306 = vrot.slane %v4303, 7
    %v4307 = vsel %vm2812, %v4302, %v4306
    %v4309 = vsub.f32 %v4296, %v4307
    %v4310 = vmul.f32 %v4203, %v4298
    %v4311 = vmul.f32 %v4204, %v4299
    %v4312 = vmul.f32 %v4205, %v4298
    %v4313 = vmul.f32 %v4206, %v4299
    %v4314 = vmul.f32 %v4207, %v4298
    %v4315 = vmul.f32 %v4208, %v4299
    %v4316 = vmul.f32 %v4209, %v4298
    %v4317 = vmul.f32 %v4210, %v4299
    %v4319 = vperm.slane %v4309, 0
    %v4320 = vperm.slane %v4309, 1
    %v4323 = vadd.f32 %v4310, %v4319
    %v4324 = vadd.f32 %v4311, %v4320
    %v4325 = vadd.f32 %v4312, %v4319
    %v4326 = vadd.f32 %v4313, %v4320
    %v4327 = vadd.f32 %v4314, %v4319
    %v4328 = vadd.f32 %v4315, %v4320
    %v4329 = vadd.f32 %v4316, %v4319
    %v4330 = vadd.f32 %v4317, %v4320
    %v4331 = vmul.f32 %v4323, 0.5
    %v4332 = vmul.f32 %v4324, 0.5
    %v4333 = vmul.f32 %v4325, 0.5
    %v4334 = vmul.f32 %v4326, 0.5
    %v4335 = vmul.f32 %v4327, 0.5
    %v4336 = vmul.f32 %v4328, 0.5
    %v4337 = vmul.f32 %v4329, 0.5
    %v4338 = vmul.f32 %v4330, 0.5
    %v4339 = vmul.f32 %v4323, 0.70710677
    %v4340 = vmul.f32 %v4324, 0.70710677
    %v4341 = vmul.f32 %v4325, 0.70710677
    %v4342 = vmul.f32 %v4326, 0.70710677
    %v4343 = vmul.f32 %v4327, 0.70710677
    %v4344 = vmul.f32 %v4328, 0.70710677
    %v4345 = vmul.f32 %v4329, 0.70710677
    %v4346 = vmul.f32 %v4330, 0.70710677
    %v4347 = vmul.f32 %v4339, %v4339
    %v4348 = vmin.f32 16.0, %v4347
    %v4349 = vmul.f32 %v4348, 2.1237322e-06
    %v4350 = vadd.f32 %v4349, 0.00028619796
    %v4351 = vmul.f32 %v4348, %v4350
    %v4352 = vadd.f32 %v4351, 0.0036580483
    %v4353 = vmul.f32 %v4348, %v4352
    %v4354 = vadd.f32 %v4353, 0.05243302
    %v4355 = vmul.f32 %v4348, %v4354
    %v4356 = vadd.f32 %v4355, 0.18741608
    %v4357 = vmul.f32 %v4348, %v4356
    %v4358 = vadd.f32 %v4357, 1.1283791
    %v4359 = vmul.f32 %v4339, %v4358
    %v4360 = vmul.f32 %v4348, 3.8918573e-05
    %v4361 = vadd.f32 %v4360, 0.001143296
    %v4362 = vmul.f32 %v4348, %v4361
    %v4363 = vadd.f32 %v4362, 0.014752088
    %v4364 = vmul.f32 %v4348, %v4363
    %v4365 = vadd.f32 %v4364, 0.112945676
    %v4366 = vmul.f32 %v4348, %v4365
    %v4367 = vadd.f32 %v4366, 0.4994258
    %v4368 = vmul.f32 %v4348, %v4367
    %v4369 = vadd.f32 %v4368, 1.0
    %v4370 = vrcp.pop %v4369
    %v4371 = vmul.f32 %v4369, %v4370
    %v4372 = vsub.f32 1.0, %v4371
    %v4373 = vmul.f32 %v4370, %v4372
    %v4374 = vadd.f32 %v4370, %v4373
    %vm4375 = vweird.f32 %v4369
    %vm4376 = vweird.f32 %v4370
    %vm4377 = vmor %vm4375, %vm4376
    %v4378 = vsel %vm4377, %v4370, %v4374
    %v4379 = vand.u32 2147483647, %v4369
    %vm4380 = vcmp.eq.f32.partialorder %v4379, 8.507059e+37
    %v4381 = vand.u32 %v4369, 2147483648
    %v4382 = vor.u32 1.1754944e-38, %v4381
    %v4383 = vsel %vm4380, %v4382, %v4378
    %v4384 = vmul.f32 %v4359, %v4383
    %v4385 = vmin.f32 %v4384, 1.0
    %v4386 = vmax.f32 %v4385, -1.0
    %v4387 = vmul.f32 %v4340, %v4340
    %v4388 = vmin.f32 16.0, %v4387
    %v4389 = vmul.f32 %v4388, 2.1237322e-06
    %v4390 = vadd.f32 %v4389, 0.00028619796
    %v4391 = vmul.f32 %v4388, %v4390
    %v4392 = vadd.f32 %v4391, 0.0036580483
    %v4393 = vmul.f32 %v4388, %v4392
    %v4394 = vadd.f32 %v4393, 0.05243302
    %v4395 = vmul.f32 %v4388, %v4394
    %v4396 = vadd.f32 %v4395, 0.18741608
    %v4397 = vmul.f32 %v4388, %v4396
    %v4398 = vadd.f32 %v4397, 1.1283791
    %v4399 = vmul.f32 %v4340, %v4398
    %v4400 = vmul.f32 %v4388, 3.8918573e-05
    %v4401 = vadd.f32 %v4400, 0.001143296
    %v4402 = vmul.f32 %v4388, %v4401
    %v4403 = vadd.f32 %v4402, 0.014752088
    %v4404 = vmul.f32 %v4388, %v4403
    %v4405 = vadd.f32 %v4404, 0.112945676
    %v4406 = vmul.f32 %v4388, %v4405
    %v4407 = vadd.f32 %v4406, 0.4994258
    %v4408 = vmul.f32 %v4388, %v4407
    %v4409 = vadd.f32 %v4408, 1.0
    %v4410 = vrcp.pop %v4409
    %v4411 = vmul.f32 %v4409, %v4410
    %v4412 = vsub.f32 1.0, %v4411
    %v4413 = vmul.f32 %v4410, %v4412
    %v4414 = vadd.f32 %v4410, %v4413
    %vm4415 = vweird.f32 %v4409
    %vm4416 = vweird.f32 %v4410
    %vm4417 = vmor %vm4415, %vm4416
    %v4418 = vsel %vm4417, %v4410, %v4414
    %v4419 = vand.u32 2147483647, %v4409
    %vm4420 = vcmp.eq.f32.partialorder %v4419, 8.507059e+37
    %v4421 = vand.u32 %v4409, 2147483648
    %v4422 = vor.u32 1.1754944e-38, %v4421
    %v4423 = vsel %vm4420, %v4422, %v4418
    %v4424 = vmul.f32 %v4399, %v4423
    %v4425 = vmin.f32 %v4424, 1.0
    %v4426 = vmax.f32 %v4425, -1.0
    %v4427 = vmul.f32 %v4341, %v4341
    %v4428 = vmin.f32 16.0, %v4427
    %v4429 = vmul.f32 %v4428, 2.1237322e-06
    %v4430 = vadd.f32 %v4429, 0.00028619796
    %v4431 = vmul.f32 %v4428, %v4430
    %v4432 = vadd.f32 %v4431, 0.0036580483
    %v4433 = vmul.f32 %v4428, %v4432
    %v4434 = vadd.f32 %v4433, 0.05243302
    %v4435 = vmul.f32 %v4428, %v4434
    %v4436 = vadd.f32 %v4435, 0.18741608
    %v4437 = vmul.f32 %v4428, %v4436
    %v4438 = vadd.f32 %v4437, 1.1283791
    %v4439 = vmul.f32 %v4341, %v4438
    %v4440 = vmul.f32 %v4428, 3.8918573e-05
    %v4441 = vadd.f32 %v4440, 0.001143296
    %v4442 = vmul.f32 %v4428, %v4441
    %v4443 = vadd.f32 %v4442, 0.014752088
    %v4444 = vmul.f32 %v4428, %v4443
    %v4445 = vadd.f32 %v4444, 0.112945676
    %v4446 = vmul.f32 %v4428, %v4445
    %v4447 = vadd.f32 %v4446, 0.4994258
    %v4448 = vmul.f32 %v4428, %v4447
    %v4449 = vadd.f32 %v4448, 1.0
    %v4450 = vrcp.pop %v4449
    %v4451 = vmul.f32 %v4449, %v4450
    %v4452 = vsub.f32 1.0, %v4451
    %v4453 = vmul.f32 %v4450, %v4452
    %v4454 = vadd.f32 %v4450, %v4453
    %vm4455 = vweird.f32 %v4449
    %vm4456 = vweird.f32 %v4450
    %vm4457 = vmor %vm4455, %vm4456
    %v4458 = vsel %vm4457, %v4450, %v4454
    %v4459 = vand.u32 2147483647, %v4449
    %vm4460 = vcmp.eq.f32.partialorder %v4459, 8.507059e+37
    %v4461 = vand.u32 %v4449, 2147483648
    %v4462 = vor.u32 1.1754944e-38, %v4461
    %v4463 = vsel %vm4460, %v4462, %v4458
    %v4464 = vmul.f32 %v4439, %v4463
    %v4465 = vmin.f32 %v4464, 1.0
    %v4466 = vmax.f32 %v4465, -1.0
    %v4467 = vmul.f32 %v4342, %v4342
    %v4468 = vmin.f32 16.0, %v4467
    %v4469 = vmul.f32 %v4468, 2.1237322e-06
    %v4470 = vadd.f32 %v4469, 0.00028619796
    %v4471 = vmul.f32 %v4468, %v4470
    %v4472 = vadd.f32 %v4471, 0.0036580483
    %v4473 = vmul.f32 %v4468, %v4472
    %v4474 = vadd.f32 %v4473, 0.05243302
    %v4475 = vmul.f32 %v4468, %v4474
    %v4476 = vadd.f32 %v4475, 0.18741608
    %v4477 = vmul.f32 %v4468, %v4476
    %v4478 = vadd.f32 %v4477, 1.1283791
    %v4479 = vmul.f32 %v4342, %v4478
    %v4480 = vmul.f32 %v4468, 3.8918573e-05
    %v4481 = vadd.f32 %v4480, 0.001143296
    %v4482 = vmul.f32 %v4468, %v4481
    %v4483 = vadd.f32 %v4482, 0.014752088
    %v4484 = vmul.f32 %v4468, %v4483
    %v4485 = vadd.f32 %v4484, 0.112945676
    %v4486 = vmul.f32 %v4468, %v4485
    %v4487 = vadd.f32 %v4486, 0.4994258
    %v4488 = vmul.f32 %v4468, %v4487
    %v4489 = vadd.f32 %v4488, 1.0
    %v4490 = vrcp.pop %v4489
    %v4491 = vmul.f32 %v4489, %v4490
    %v4492 = vsub.f32 1.0, %v4491
    %v4493 = vmul.f32 %v4490, %v4492
    %v4494 = vadd.f32 %v4490, %v4493
    %vm4495 = vweird.f32 %v4489
    %vm4496 = vweird.f32 %v4490
    %vm4497 = vmor %vm4495, %vm4496
    %v4498 = vsel %vm4497, %v4490, %v4494
    %v4499 = vand.u32 2147483647, %v4489
    %vm4500 = vcmp.eq.f32.partialorder %v4499, 8.507059e+37
    %v4501 = vand.u32 %v4489, 2147483648
    %v4502 = vor.u32 1.1754944e-38, %v4501
    %v4503 = vsel %vm4500, %v4502, %v4498
    %v4504 = vmul.f32 %v4479, %v4503
    %v4505 = vmin.f32 %v4504, 1.0
    %v4506 = vmax.f32 %v4505, -1.0
    %v4507 = vmul.f32 %v4343, %v4343
    %v4508 = vmin.f32 16.0, %v4507
    %v4509 = vmul.f32 %v4508, 2.1237322e-06
    %v4510 = vadd.f32 %v4509, 0.00028619796
    %v4511 = vmul.f32 %v4508, %v4510
    %v4512 = vadd.f32 %v4511, 0.0036580483
    %v4513 = vmul.f32 %v4508, %v4512
    %v4514 = vadd.f32 %v4513, 0.05243302
    %v4515 = vmul.f32 %v4508, %v4514
    %v4516 = vadd.f32 %v4515, 0.18741608
    %v4517 = vmul.f32 %v4508, %v4516
    %v4518 = vadd.f32 %v4517, 1.1283791
    %v4519 = vmul.f32 %v4343, %v4518
    %v4520 = vmul.f32 %v4508, 3.8918573e-05
    %v4521 = vadd.f32 %v4520, 0.001143296
    %v4522 = vmul.f32 %v4508, %v4521
    %v4523 = vadd.f32 %v4522, 0.014752088
    %v4524 = vmul.f32 %v4508, %v4523
    %v4525 = vadd.f32 %v4524, 0.112945676
    %v4526 = vmul.f32 %v4508, %v4525
    %v4527 = vadd.f32 %v4526, 0.4994258
    %v4528 = vmul.f32 %v4508, %v4527
    %v4529 = vadd.f32 %v4528, 1.0
    %v4530 = vrcp.pop %v4529
    %v4531 = vmul.f32 %v4529, %v4530
    %v4532 = vsub.f32 1.0, %v4531
    %v4533 = vmul.f32 %v4530, %v4532
    %v4534 = vadd.f32 %v4530, %v4533
    %vm4535 = vweird.f32 %v4529
    %vm4536 = vweird.f32 %v4530
    %vm4537 = vmor %vm4535, %vm4536
    %v4538 = vsel %vm4537, %v4530, %v4534
    %v4539 = vand.u32 2147483647, %v4529
    %vm4540 = vcmp.eq.f32.partialorder %v4539, 8.507059e+37
    %v4541 = vand.u32 %v4529, 2147483648
    %v4542 = vor.u32 1.1754944e-38, %v4541
    %v4543 = vsel %vm4540, %v4542, %v4538
    %v4544 = vmul.f32 %v4519, %v4543
    %v4545 = vmin.f32 %v4544, 1.0
    %v4546 = vmax.f32 %v4545, -1.0
    %v4547 = vmul.f32 %v4344, %v4344
    %v4548 = vmin.f32 16.0, %v4547
    %v4549 = vmul.f32 %v4548, 2.1237322e-06
    %v4550 = vadd.f32 %v4549, 0.00028619796
    %v4551 = vmul.f32 %v4548, %v4550
    %v4552 = vadd.f32 %v4551, 0.0036580483
    %v4553 = vmul.f32 %v4548, %v4552
    %v4554 = vadd.f32 %v4553, 0.05243302
    %v4555 = vmul.f32 %v4548, %v4554
    %v4556 = vadd.f32 %v4555, 0.18741608
    %v4557 = vmul.f32 %v4548, %v4556
    %v4558 = vadd.f32 %v4557, 1.1283791
    %v4559 = vmul.f32 %v4344, %v4558
    %v4560 = vmul.f32 %v4548, 3.8918573e-05
    %v4561 = vadd.f32 %v4560, 0.001143296
    %v4562 = vmul.f32 %v4548, %v4561
    %v4563 = vadd.f32 %v4562, 0.014752088
    %v4564 = vmul.f32 %v4548, %v4563
    %v4565 = vadd.f32 %v4564, 0.112945676
    %v4566 = vmul.f32 %v4548, %v4565
    %v4567 = vadd.f32 %v4566, 0.4994258
    %v4568 = vmul.f32 %v4548, %v4567
    %v4569 = vadd.f32 %v4568, 1.0
    %v4570 = vrcp.pop %v4569
    %v4571 = vmul.f32 %v4569, %v4570
    %v4572 = vsub.f32 1.0, %v4571
    %v4573 = vmul.f32 %v4570, %v4572
    %v4574 = vadd.f32 %v4570, %v4573
    %vm4575 = vweird.f32 %v4569
    %vm4576 = vweird.f32 %v4570
    %vm4577 = vmor %vm4575, %vm4576
    %v4578 = vsel %vm4577, %v4570, %v4574
    %v4579 = vand.u32 2147483647, %v4569
    %vm4580 = vcmp.eq.f32.partialorder %v4579, 8.507059e+37
    %v4581 = vand.u32 %v4569, 2147483648
    %v4582 = vor.u32 1.1754944e-38, %v4581
    %v4583 = vsel %vm4580, %v4582, %v4578
    %v4584 = vmul.f32 %v4559, %v4583
    %v4585 = vmin.f32 %v4584, 1.0
    %v4586 = vmax.f32 %v4585, -1.0
    %v4587 = vmul.f32 %v4345, %v4345
    %v4588 = vmin.f32 16.0, %v4587
    %v4589 = vmul.f32 %v4588, 2.1237322e-06
    %v4590 = vadd.f32 %v4589, 0.00028619796
    %v4591 = vmul.f32 %v4588, %v4590
    %v4592 = vadd.f32 %v4591, 0.0036580483
    %v4593 = vmul.f32 %v4588, %v4592
    %v4594 = vadd.f32 %v4593, 0.05243302
    %v4595 = vmul.f32 %v4588, %v4594
    %v4596 = vadd.f32 %v4595, 0.18741608
    %v4597 = vmul.f32 %v4588, %v4596
    %v4598 = vadd.f32 %v4597, 1.1283791
    %v4599 = vmul.f32 %v4345, %v4598
    %v4600 = vmul.f32 %v4588, 3.8918573e-05
    %v4601 = vadd.f32 %v4600, 0.001143296
    %v4602 = vmul.f32 %v4588, %v4601
    %v4603 = vadd.f32 %v4602, 0.014752088
    %v4604 = vmul.f32 %v4588, %v4603
    %v4605 = vadd.f32 %v4604, 0.112945676
    %v4606 = vmul.f32 %v4588, %v4605
    %v4607 = vadd.f32 %v4606, 0.4994258
    %v4608 = vmul.f32 %v4588, %v4607
    %v4609 = vadd.f32 %v4608, 1.0
    %v4610 = vrcp.pop %v4609
    %v4611 = vmul.f32 %v4609, %v4610
    %v4612 = vsub.f32 1.0, %v4611
    %v4613 = vmul.f32 %v4610, %v4612
    %v4614 = vadd.f32 %v4610, %v4613
    %vm4615 = vweird.f32 %v4609
    %vm4616 = vweird.f32 %v4610
    %vm4617 = vmor %vm4615, %vm4616
    %v4618 = vsel %vm4617, %v4610, %v4614
    %v4619 = vand.u32 2147483647, %v4609
    %vm4620 = vcmp.eq.f32.partialorder %v4619, 8.507059e+37
    %v4621 = vand.u32 %v4609, 2147483648
    %v4622 = vor.u32 1.1754944e-38, %v4621
    %v4623 = vsel %vm4620, %v4622, %v4618
    %v4624 = vmul.f32 %v4599, %v4623
    %v4625 = vmin.f32 %v4624, 1.0
    %v4626 = vmax.f32 %v4625, -1.0
    %v4627 = vmul.f32 %v4346, %v4346
    %v4628 = vmin.f32 16.0, %v4627
    %v4629 = vmul.f32 %v4628, 2.1237322e-06
    %v4630 = vadd.f32 %v4629, 0.00028619796
    %v4631 = vmul.f32 %v4628, %v4630
    %v4632 = vadd.f32 %v4631, 0.0036580483
    %v4633 = vmul.f32 %v4628, %v4632
    %v4634 = vadd.f32 %v4633, 0.05243302
    %v4635 = vmul.f32 %v4628, %v4634
    %v4636 = vadd.f32 %v4635, 0.18741608
    %v4637 = vmul.f32 %v4628, %v4636
    %v4638 = vadd.f32 %v4637, 1.1283791
    %v4639 = vmul.f32 %v4346, %v4638
    %v4640 = vmul.f32 %v4628, 3.8918573e-05
    %v4641 = vadd.f32 %v4640, 0.001143296
    %v4642 = vmul.f32 %v4628, %v4641
    %v4643 = vadd.f32 %v4642, 0.014752088
    %v4644 = vmul.f32 %v4628, %v4643
    %v4645 = vadd.f32 %v4644, 0.112945676
    %v4646 = vmul.f32 %v4628, %v4645
    %v4647 = vadd.f32 %v4646, 0.4994258
    %v4648 = vmul.f32 %v4628, %v4647
    %v4649 = vadd.f32 %v4648, 1.0
    %v4650 = vrcp.pop %v4649
    %v4651 = vmul.f32 %v4649, %v4650
    %v4652 = vsub.f32 1.0, %v4651
    %v4653 = vmul.f32 %v4650, %v4652
    %v4654 = vadd.f32 %v4650, %v4653
    %vm4655 = vweird.f32 %v4649
    %vm4656 = vweird.f32 %v4650
    %vm4657 = vmor %vm4655, %vm4656
    %v4658 = vsel %vm4657, %v4650, %v4654
    %v4659 = vand.u32 2147483647, %v4649
    %vm4660 = vcmp.eq.f32.partialorder %v4659, 8.507059e+37
    %v4661 = vand.u32 %v4649, 2147483648
    %v4662 = vor.u32 1.1754944e-38, %v4661
    %v4663 = vsel %vm4660, %v4662, %v4658
    %v4664 = vmul.f32 %v4639, %v4663
    %v4665 = vmin.f32 %v4664, 1.0
    %v4666 = vmax.f32 %v4665, -1.0
    %v4667 = vadd.f32 %v4386, 1.0
    %v4668 = vadd.f32 %v4426, 1.0
    %v4669 = vadd.f32 %v4466, 1.0
    %v4670 = vadd.f32 %v4506, 1.0
    %v4671 = vadd.f32 %v4546, 1.0
    %v4672 = vadd.f32 %v4586, 1.0
    %v4673 = vadd.f32 %v4626, 1.0
    %v4674 = vadd.f32 %v4666, 1.0
    %v4675 = vmul.f32 %v4331, %v4667
    %v4676 = vmul.f32 %v4332, %v4668
    %v4677 = vmul.f32 %v4333, %v4669
    %v4678 = vmul.f32 %v4334, %v4670
    %v4679 = vmul.f32 %v4335, %v4671
    %v4680 = vmul.f32 %v4336, %v4672
    %v4681 = vmul.f32 %v4337, %v4673
    %v4682 = vmul.f32 %v4338, %v4674
    %v4683 = vld [vmem:[#allocation2 + $0x7d0] sm:$0xff]
    %v4684 = vld [vmem:[#allocation2 + $0x7d8] sm:$0xff]
    %v4685 = vld [vmem:[#allocation2 + $0x7e0] sm:$0xff]
    %v4686 = vld [vmem:[#allocation2 + $0x7e8] sm:$0xff]
    %v4687 = vld [vmem:[#allocation2 + $0x7f0] sm:$0xff]
    %v4688 = vld [vmem:[#allocation2 + $0x7f8] sm:$0xff]
    %v4689 = vld [vmem:[#allocation2 + $0x800] sm:$0xff]
    %v4690 = vld [vmem:[#allocation2 + $0x808] sm:$0xff]
    %v4691 = vld [vmem:[#allocation2 + $0x810] sm:$0xff]
    %v4692 = vld [vmem:[#allocation2 + $0x818] sm:$0xff]
    %v4693 = vld [vmem:[#allocation2 + $0x820] sm:$0xff]
    %v4694 = vld [vmem:[#allocation2 + $0x828] sm:$0xff]
    %v4695 = vld [vmem:[#allocation2 + $0x830] sm:$0xff]
    %v4696 = vld [vmem:[#allocation2 + $0x838] sm:$0xff]
    %v4697 = vld [vmem:[#allocation2 + $0x840] sm:$0xff]
    %v4698 = vld [vmem:[#allocation2 + $0x848] sm:$0xff]
    %s4699 = scalar_lea.vmem [#allocation4], 34
    %v4700 = vld [vmem:[%s4699] ss:$8 sm:$0x3]
    %v4702 = vperm.slane %v4700, 0
    %v4703 = vperm.slane %v4700, 1
    %v4722 = vunpack.c.l.b16 %v4683
    %v4723 = vunpack.c.h.b16 %v4683
    %v4724 = vunpack.c.l.b16 %v4684
    %v4725 = vunpack.c.h.b16 %v4684
    %v4726 = vunpack.c.l.b16 %v4685
    %v4727 = vunpack.c.h.b16 %v4685
    %v4728 = vunpack.c.l.b16 %v4686
    %v4729 = vunpack.c.h.b16 %v4686
    %v4730 = vunpack.c.l.b16 %v4687
    %v4731 = vunpack.c.h.b16 %v4687
    %v4732 = vunpack.c.l.b16 %v4688
    %v4733 = vunpack.c.h.b16 %v4688
    %v4734 = vunpack.c.l.b16 %v4689
    %v4735 = vunpack.c.h.b16 %v4689
    %v4736 = vunpack.c.l.b16 %v4690
    %v4737 = vunpack.c.h.b16 %v4690
    %v4738 = vunpack.c.l.b16 %v4691
    %v4739 = vunpack.c.h.b16 %v4691
    %v4740 = vunpack.c.l.b16 %v4692
    %v4741 = vunpack.c.h.b16 %v4692
    %v4742 = vunpack.c.l.b16 %v4693
    %v4743 = vunpack.c.h.b16 %v4693
    %v4744 = vunpack.c.l.b16 %v4694
    %v4745 = vunpack.c.h.b16 %v4694
    %v4746 = vunpack.c.l.b16 %v4695
    %v4747 = vunpack.c.h.b16 %v4695
    %v4748 = vunpack.c.l.b16 %v4696
    %v4749 = vunpack.c.h.b16 %v4696
    %v4750 = vunpack.c.l.b16 %v4697
    %v4751 = vunpack.c.h.b16 %v4697
    %v4752 = vunpack.c.l.b16 %v4698
    %v4753 = vunpack.c.h.b16 %v4698
    %v4754 = vpack.c.b16 %v4724, %v4722
    %v4755 = vpack.c.b16 %v4725, %v4723
    %v4756 = vpack.c.b16 %v4728, %v4726
    %v4757 = vpack.c.b16 %v4729, %v4727
    %v4758 = vpack.c.b16 %v4732, %v4730
    %v4759 = vpack.c.b16 %v4733, %v4731
    %v4760 = vpack.c.b16 %v4736, %v4734
    %v4761 = vpack.c.b16 %v4737, %v4735
    %v4762 = vpack.c.b16 %v4740, %v4738
    %v4763 = vpack.c.b16 %v4741, %v4739
    %v4764 = vpack.c.b16 %v4744, %v4742
    %v4765 = vpack.c.b16 %v4745, %v4743
    %v4766 = vpack.c.b16 %v4748, %v4746
    %v4767 = vpack.c.b16 %v4749, %v4747
    %v4768 = vpack.c.b16 %v4752, %v4750
    %v4769 = vpack.c.b16 %v4753, %v4751
    %4786 = vmatpush.bf16.msra.mxu0 %v4768
    %4787 = vmatpush.bf16.msra.mxu0 %v4766
    %4788 = vmatpush.bf16.msra.mxu0 %v4764
    %4789 = vmatpush.bf16.msra.mxu0 %v4762
    %4790 = vmatpush.bf16.msra.mxu0 %v4760
    %4791 = vmatpush.bf16.msra.mxu0 %v4758
    %4792 = vmatpush.bf16.msra.mxu0 %v4756
    %4793 = vmatpush.bf16.msra.mxu0 %v4754
    %4794 = vmatmul.bf16.gmra.mxu0 %v2318
    %v4795 = vpop.f32.mrf.mxu0
    %v4796 = vadd.f32 %v4702, %v4795
    %v4797 = vpop.f32.mrf.mxu0
    %v4798 = vadd.f32 %v4702, %v4797
    %4799 = vmatmul.bf16.gmra.mxu0 %v2319
    %v4800 = vpop.f32.mrf.mxu0
    %v4801 = vadd.f32 %v4702, %v4800
    %v4802 = vpop.f32.mrf.mxu0
    %v4803 = vadd.f32 %v4702, %v4802
    %4804 = vdwg.mxu0
    %4805 = vmatpush.bf16.msra.mxu0 %v4769
    %4806 = vmatpush.bf16.msra.mxu0 %v4767
    %4807 = vmatpush.bf16.msra.mxu0 %v4765
    %4808 = vmatpush.bf16.msra.mxu0 %v4763
    %4809 = vmatpush.bf16.msra.mxu0 %v4761
    %4810 = vmatpush.bf16.msra.mxu0 %v4759
    %4811 = vmatpush.bf16.msra.mxu0 %v4757
    %4812 = vmatpush.bf16.msra.mxu0 %v4755
    %4813 = vmatmul.bf16.gmra.mxu0 %v2318
    %v4814 = vpop.f32.mrf.mxu0
    %v4815 = vadd.f32 %v4703, %v4814
    %v4816 = vpop.f32.mrf.mxu0
    %v4817 = vadd.f32 %v4703, %v4816
    %4818 = vmatmul.bf16.gmra.mxu0 %v2319
    %v4819 = vpop.f32.mrf.mxu0
    %v4820 = vadd.f32 %v4703, %v4819
    %v4821 = vpop.f32.mrf.mxu0
    %v4822 = vadd.f32 %v4703, %v4821
    %4823 = vdwg.mxu0
    %v4824 = vadd.f32 %v4675, %v4796
    %v4825 = vadd.f32 %v4676, %v4815
    %v4826 = vadd.f32 %v4677, %v4798
    %v4827 = vadd.f32 %v4678, %v4817
    %v4828 = vadd.f32 %v4679, %v4801
    %v4829 = vadd.f32 %v4680, %v4820
    %v4830 = vadd.f32 %v4681, %v4803
    %v4831 = vadd.f32 %v4682, %v4822
    %v4832 = vrot.slane %v4824, 7
    %v4833 = vrot.slane %v4825, 7
    %v4834 = vrot.slane %v4826, 7
    %v4835 = vrot.slane %v4827, 7
    %v4836 = vrot.slane %v4828, 7
    %v4837 = vrot.slane %v4829, 7
    %v4838 = vrot.slane %v4830, 7
    %v4839 = vrot.slane %v4831, 7
    %v4840 = vsel %vm1058, %v4836, %v4838
    %v4841 = vsel %vm1058, %v4837, %v4839
    %v4842 = vsel %vm1058, %v4834, %v4836
    %v4843 = vsel %vm1058, %v4835, %v4837
    %v4844 = vsel %vm1058, %v4832, %v4834
    %v4845 = vsel %vm1058, %v4833, %v4835
    %v4846 = vsel %vm1058, %v4838, %v4832
    %v4847 = vsel %vm1058, %v4839, %v4833
    %v4848 = vsel %vm1067, 0.0, %v4846
    %v4849 = vsel %vm1067, 0.0, %v4847
    %v4850 = vsel %vm1068, 0.0, %v4844
    %v4851 = vsel %vm1068, 0.0, %v4845
    %v4852 = vsel %vm1069, 0.0, %v4842
    %v4853 = vsel %vm1069, 0.0, %v4843
    %v4854 = vsel %vm1070, 0.0, %v4840
    %v4855 = vsel %vm1070, 0.0, %v4841
    %v4856 = vrot.slane %v4824, 1
    %v4857 = vrot.slane %v4825, 1
    %v4858 = vrot.slane %v4826, 1
    %v4859 = vrot.slane %v4827, 1
    %v4860 = vrot.slane %v4828, 1
    %v4861 = vrot.slane %v4829, 1
    %v4862 = vrot.slane %v4830, 1
    %v4863 = vrot.slane %v4831, 1
    %v4864 = vsel %vm1083, %v4860, %v4862
    %v4865 = vsel %vm1083, %v4861, %v4863
    %v4866 = vsel %vm1083, %v4858, %v4860
    %v4867 = vsel %vm1083, %v4859, %v4861
    %v4868 = vsel %vm1083, %v4856, %v4858
    %v4869 = vsel %vm1083, %v4857, %v4859
    %v4870 = vsel %vm1083, %v4862, %v4856
    %v4871 = vsel %vm1083, %v4863, %v4857
    %v4872 = vsel %vm1092, 0.0, %v4868
    %v4873 = vsel %vm1092, 0.0, %v4869
    %v4874 = vsel %vm1093, 0.0, %v4866
    %v4875 = vsel %vm1093, 0.0, %v4867
    %v4876 = vsel %vm1094, 0.0, %v4864
    %v4877 = vsel %vm1094, 0.0, %v4865
    %v4878 = vsel %vm1095, 0.0, %v4870
    %v4879 = vsel %vm1095, 0.0, %v4871
    %v4880 = vpack.c.bf16 %v4850, %v4848
    %v4881 = vpack.c.bf16 %v4851, %v4849
    %v4882 = vpack.c.bf16 %v4854, %v4852
    %v4883 = vpack.c.bf16 %v4855, %v4853
    %v4884 = vld [vmem:[#allocation2 + $0x850] sm:$0xff]
    %v4885 = vld [vmem:[#allocation2 + $0x858] sm:$0xff]
    %v4886 = vld [vmem:[#allocation2 + $0x860] sm:$0xff]
    %v4887 = vld [vmem:[#allocation2 + $0x868] sm:$0xff]
    %v4888 = vld [vmem:[#allocation2 + $0x870] sm:$0xff]
    %v4889 = vld [vmem:[#allocation2 + $0x878] sm:$0xff]
    %v4890 = vld [vmem:[#allocation2 + $0x880] sm:$0xff]
    %v4891 = vld [vmem:[#allocation2 + $0x888] sm:$0xff]
    %v4892 = vld [vmem:[#allocation2 + $0x890] sm:$0xff]
    %v4893 = vld [vmem:[#allocation2 + $0x898] sm:$0xff]
    %v4894 = vld [vmem:[#allocation2 + $0x8a0] sm:$0xff]
    %v4895 = vld [vmem:[#allocation2 + $0x8a8] sm:$0xff]
    %v4896 = vld [vmem:[#allocation2 + $0x8b0] sm:$0xff]
    %v4897 = vld [vmem:[#allocation2 + $0x8b8] sm:$0xff]
    %v4898 = vld [vmem:[#allocation2 + $0x8c0] sm:$0xff]
    %v4899 = vld [vmem:[#allocation2 + $0x8c8] sm:$0xff]
    %v4900 = vld [vmem:[#allocation2 + $0x8d0] sm:$0xff]
    %v4901 = vld [vmem:[#allocation2 + $0x8d8] sm:$0xff]
    %v4902 = vld [vmem:[#allocation2 + $0x8e0] sm:$0xff]
    %v4903 = vld [vmem:[#allocation2 + $0x8e8] sm:$0xff]
    %v4904 = vld [vmem:[#allocation2 + $0x8f0] sm:$0xff]
    %v4905 = vld [vmem:[#allocation2 + $0x8f8] sm:$0xff]
    %v4906 = vld [vmem:[#allocation2 + $0x900] sm:$0xff]
    %v4907 = vld [vmem:[#allocation2 + $0x908] sm:$0xff]
    %v4908 = vld [vmem:[#allocation2 + $0x910] sm:$0xff]
    %v4909 = vld [vmem:[#allocation2 + $0x918] sm:$0xff]
    %v4910 = vld [vmem:[#allocation2 + $0x920] sm:$0xff]
    %v4911 = vld [vmem:[#allocation2 + $0x928] sm:$0xff]
    %v4912 = vld [vmem:[#allocation2 + $0x930] sm:$0xff]
    %v4913 = vld [vmem:[#allocation2 + $0x938] sm:$0xff]
    %v4914 = vld [vmem:[#allocation2 + $0x940] sm:$0xff]
    %v4915 = vld [vmem:[#allocation2 + $0x948] sm:$0xff]
    %v4916 = vpack.c.bf16 %v4826, %v4824
    %v4917 = vpack.c.bf16 %v4827, %v4825
    %v4918 = vpack.c.bf16 %v4830, %v4828
    %v4919 = vpack.c.bf16 %v4831, %v4829
    %v4920 = vld [vmem:[#allocation2 + $0x950] sm:$0xff]
    %v4921 = vld [vmem:[#allocation2 + $0x958] sm:$0xff]
    %v4922 = vld [vmem:[#allocation2 + $0x960] sm:$0xff]
    %v4923 = vld [vmem:[#allocation2 + $0x968] sm:$0xff]
    %v4924 = vld [vmem:[#allocation2 + $0x970] sm:$0xff]
    %v4925 = vld [vmem:[#allocation2 + $0x978] sm:$0xff]
    %v4926 = vld [vmem:[#allocation2 + $0x980] sm:$0xff]
    %v4927 = vld [vmem:[#allocation2 + $0x988] sm:$0xff]
    %v4928 = vld [vmem:[#allocation2 + $0x990] sm:$0xff]
    %v4929 = vld [vmem:[#allocation2 + $0x998] sm:$0xff]
    %v4930 = vld [vmem:[#allocation2 + $0x9a0] sm:$0xff]
    %v4931 = vld [vmem:[#allocation2 + $0x9a8] sm:$0xff]
    %v4932 = vld [vmem:[#allocation2 + $0x9b0] sm:$0xff]
    %v4933 = vld [vmem:[#allocation2 + $0x9b8] sm:$0xff]
    %v4934 = vld [vmem:[#allocation2 + $0x9c0] sm:$0xff]
    %v4935 = vld [vmem:[#allocation2 + $0x9c8] sm:$0xff]
    %v4936 = vld [vmem:[#allocation2 + $0x9d0] sm:$0xff]
    %v4937 = vld [vmem:[#allocation2 + $0x9d8] sm:$0xff]
    %v4938 = vld [vmem:[#allocation2 + $0x9e0] sm:$0xff]
    %v4939 = vld [vmem:[#allocation2 + $0x9e8] sm:$0xff]
    %v4940 = vld [vmem:[#allocation2 + $0x9f0] sm:$0xff]
    %v4941 = vld [vmem:[#allocation2 + $0x9f8] sm:$0xff]
    %v4942 = vld [vmem:[#allocation2 + $0xa00] sm:$0xff]
    %v4943 = vld [vmem:[#allocation2 + $0xa08] sm:$0xff]
    %v4944 = vld [vmem:[#allocation2 + $0xa10] sm:$0xff]
    %v4945 = vld [vmem:[#allocation2 + $0xa18] sm:$0xff]
    %v4946 = vld [vmem:[#allocation2 + $0xa20] sm:$0xff]
    %v4947 = vld [vmem:[#allocation2 + $0xa28] sm:$0xff]
    %v4948 = vld [vmem:[#allocation2 + $0xa30] sm:$0xff]
    %v4949 = vld [vmem:[#allocation2 + $0xa38] sm:$0xff]
    %v4950 = vld [vmem:[#allocation2 + $0xa40] sm:$0xff]
    %v4951 = vld [vmem:[#allocation2 + $0xa48] sm:$0xff]
    %v4984 = vunpack.c.l.b16 %v4920
    %v4985 = vunpack.c.h.b16 %v4920
    %v4986 = vunpack.c.l.b16 %v4921
    %v4987 = vunpack.c.h.b16 %v4921
    %v4988 = vunpack.c.l.b16 %v4922
    %v4989 = vunpack.c.h.b16 %v4922
    %v4990 = vunpack.c.l.b16 %v4923
    %v4991 = vunpack.c.h.b16 %v4923
    %v4992 = vunpack.c.l.b16 %v4924
    %v4993 = vunpack.c.h.b16 %v4924
    %v4994 = vunpack.c.l.b16 %v4925
    %v4995 = vunpack.c.h.b16 %v4925
    %v4996 = vunpack.c.l.b16 %v4926
    %v4997 = vunpack.c.h.b16 %v4926
    %v4998 = vunpack.c.l.b16 %v4927
    %v4999 = vunpack.c.h.b16 %v4927
    %v5000 = vunpack.c.l.b16 %v4928
    %v5001 = vunpack.c.h.b16 %v4928
    %v5002 = vunpack.c.l.b16 %v4929
    %v5003 = vunpack.c.h.b16 %v4929
    %v5004 = vunpack.c.l.b16 %v4930
    %v5005 = vunpack.c.h.b16 %v4930
    %v5006 = vunpack.c.l.b16 %v4931
    %v5007 = vunpack.c.h.b16 %v4931
    %v5008 = vunpack.c.l.b16 %v4932
    %v5009 = vunpack.c.h.b16 %v4932
    %v5010 = vunpack.c.l.b16 %v4933
    %v5011 = vunpack.c.h.b16 %v4933
    %v5012 = vunpack.c.l.b16 %v4934
    %v5013 = vunpack.c.h.b16 %v4934
    %v5014 = vunpack.c.l.b16 %v4935
    %v5015 = vunpack.c.h.b16 %v4935
    %v5016 = vunpack.c.l.b16 %v4936
    %v5017 = vunpack.c.h.b16 %v4936
    %v5018 = vunpack.c.l.b16 %v4937
    %v5019 = vunpack.c.h.b16 %v4937
    %v5020 = vunpack.c.l.b16 %v4938
    %v5021 = vunpack.c.h.b16 %v4938
    %v5022 = vunpack.c.l.b16 %v4939
    %v5023 = vunpack.c.h.b16 %v4939
    %v5024 = vunpack.c.l.b16 %v4940
    %v5025 = vunpack.c.h.b16 %v4940
    %v5026 = vunpack.c.l.b16 %v4941
    %v5027 = vunpack.c.h.b16 %v4941
    %v5028 = vunpack.c.l.b16 %v4942
    %v5029 = vunpack.c.h.b16 %v4942
    %v5030 = vunpack.c.l.b16 %v4943
    %v5031 = vunpack.c.h.b16 %v4943
    %v5032 = vunpack.c.l.b16 %v4944
    %v5033 = vunpack.c.h.b16 %v4944
    %v5034 = vunpack.c.l.b16 %v4945
    %v5035 = vunpack.c.h.b16 %v4945
    %v5036 = vunpack.c.l.b16 %v4946
    %v5037 = vunpack.c.h.b16 %v4946
    %v5038 = vunpack.c.l.b16 %v4947
    %v5039 = vunpack.c.h.b16 %v4947
    %v5040 = vunpack.c.l.b16 %v4948
    %v5041 = vunpack.c.h.b16 %v4948
    %v5042 = vunpack.c.l.b16 %v4949
    %v5043 = vunpack.c.h.b16 %v4949
    %v5044 = vunpack.c.l.b16 %v4950
    %v5045 = vunpack.c.h.b16 %v4950
    %v5046 = vunpack.c.l.b16 %v4951
    %v5047 = vunpack.c.h.b16 %v4951
    %v5048 = vpack.c.b16 %v4986, %v4984
    %v5049 = vpack.c.b16 %v4987, %v4985
    %v5050 = vpack.c.b16 %v4990, %v4988
    %v5051 = vpack.c.b16 %v4991, %v4989
    %v5052 = vpack.c.b16 %v4994, %v4992
    %v5053 = vpack.c.b16 %v4995, %v4993
    %v5054 = vpack.c.b16 %v4998, %v4996
    %v5055 = vpack.c.b16 %v4999, %v4997
    %v5056 = vpack.c.b16 %v5002, %v5000
    %v5057 = vpack.c.b16 %v5003, %v5001
    %v5058 = vpack.c.b16 %v5006, %v5004
    %v5059 = vpack.c.b16 %v5007, %v5005
    %v5060 = vpack.c.b16 %v5010, %v5008
    %v5061 = vpack.c.b16 %v5011, %v5009
    %v5062 = vpack.c.b16 %v5014, %v5012
    %v5063 = vpack.c.b16 %v5015, %v5013
    %v5064 = vpack.c.b16 %v5018, %v5016
    %v5065 = vpack.c.b16 %v5019, %v5017
    %v5066 = vpack.c.b16 %v5022, %v5020
    %v5067 = vpack.c.b16 %v5023, %v5021
    %v5068 = vpack.c.b16 %v5026, %v5024
    %v5069 = vpack.c.b16 %v5027, %v5025
    %v5070 = vpack.c.b16 %v5030, %v5028
    %v5071 = vpack.c.b16 %v5031, %v5029
    %v5072 = vpack.c.b16 %v5034, %v5032
    %v5073 = vpack.c.b16 %v5035, %v5033
    %v5074 = vpack.c.b16 %v5038, %v5036
    %v5075 = vpack.c.b16 %v5039, %v5037
    %v5076 = vpack.c.b16 %v5042, %v5040
    %v5077 = vpack.c.b16 %v5043, %v5041
    %v5078 = vpack.c.b16 %v5046, %v5044
    %v5079 = vpack.c.b16 %v5047, %v5045
    %5112 = vmatpush.bf16.msra.mxu0 %v5062
    %5113 = vmatpush.bf16.msra.mxu0 %v5060
    %5114 = vmatpush.bf16.msra.mxu0 %v5058
    %5115 = vmatpush.bf16.msra.mxu0 %v5056
    %5116 = vmatpush.bf16.msra.mxu0 %v5054
    %5117 = vmatpush.bf16.msra.mxu0 %v5052
    %5118 = vmatpush.bf16.msra.mxu0 %v5050
    %5119 = vmatpush.bf16.msra.mxu0 %v5048
    %5120 = vmatmul.bf16.gmra.mxu0 %v4916
    %v5121 = vpop.f32.mrf.mxu0
    %v5122 = vadd.f32 0.0, %v5121
    %v5123 = vpop.f32.mrf.mxu0
    %v5124 = vadd.f32 0.0, %v5123
    %5125 = vmatmul.bf16.gmra.mxu0 %v4918
    %v5126 = vpop.f32.mrf.mxu0
    %v5127 = vadd.f32 0.0, %v5126
    %v5128 = vpop.f32.mrf.mxu0
    %v5129 = vadd.f32 0.0, %v5128
    %5130 = vdwg.mxu0
    %5131 = vmatpush.bf16.msra.mxu0 %v5078
    %5132 = vmatpush.bf16.msra.mxu0 %v5076
    %5133 = vmatpush.bf16.msra.mxu0 %v5074
    %5134 = vmatpush.bf16.msra.mxu0 %v5072
    %5135 = vmatpush.bf16.msra.mxu0 %v5070
    %5136 = vmatpush.bf16.msra.mxu0 %v5068
    %5137 = vmatpush.bf16.msra.mxu0 %v5066
    %5138 = vmatpush.bf16.msra.mxu0 %v5064
    %5139 = vmatmul.bf16.gmra.mxu0 %v4917
    %v5140 = vpop.f32.mrf.mxu0
    %v5141 = vadd.f32 %v5122, %v5140
    %v5142 = vpop.f32.mrf.mxu0
    %v5143 = vadd.f32 %v5124, %v5142
    %5144 = vmatmul.bf16.gmra.mxu0 %v4919
    %v5145 = vpop.f32.mrf.mxu0
    %v5146 = vadd.f32 %v5127, %v5145
    %v5147 = vpop.f32.mrf.mxu0
    %v5148 = vadd.f32 %v5129, %v5147
    %5149 = vdwg.mxu0
    %5150 = vmatpush.bf16.msra.mxu0 %v5063
    %5151 = vmatpush.bf16.msra.mxu0 %v5061
    %5152 = vmatpush.bf16.msra.mxu0 %v5059
    %5153 = vmatpush.bf16.msra.mxu0 %v5057
    %5154 = vmatpush.bf16.msra.mxu0 %v5055
    %5155 = vmatpush.bf16.msra.mxu0 %v5053
    %5156 = vmatpush.bf16.msra.mxu0 %v5051
    %5157 = vmatpush.bf16.msra.mxu0 %v5049
    %5158 = vmatmul.bf16.gmra.mxu0 %v4916
    %v5159 = vpop.f32.mrf.mxu0
    %v5160 = vadd.f32 0.0, %v5159
    %v5161 = vpop.f32.mrf.mxu0
    %v5162 = vadd.f32 0.0, %v5161
    %5163 = vmatmul.bf16.gmra.mxu0 %v4918
    %v5164 = vpop.f32.mrf.mxu0
    %v5165 = vadd.f32 0.0, %v5164
    %v5166 = vpop.f32.mrf.mxu0
    %v5167 = vadd.f32 0.0, %v5166
    %5168 = vdwg.mxu0
    %5169 = vmatpush.bf16.msra.mxu0 %v5079
    %5170 = vmatpush.bf16.msra.mxu0 %v5077
    %5171 = vmatpush.bf16.msra.mxu0 %v5075
    %5172 = vmatpush.bf16.msra.mxu0 %v5073
    %5173 = vmatpush.bf16.msra.mxu0 %v5071
    %5174 = vmatpush.bf16.msra.mxu0 %v5069
    %5175 = vmatpush.bf16.msra.mxu0 %v5067
    %5176 = vmatpush.bf16.msra.mxu0 %v5065
    %5177 = vmatmul.bf16.gmra.mxu0 %v4917
    %v5178 = vpop.f32.mrf.mxu0
    %v5179 = vadd.f32 %v5160, %v5178
    %v5180 = vpop.f32.mrf.mxu0
    %v5181 = vadd.f32 %v5162, %v5180
    %5182 = vmatmul.bf16.gmra.mxu0 %v4919
    %v5183 = vpop.f32.mrf.mxu0
    %v5184 = vadd.f32 %v5165, %v5183
    %v5185 = vpop.f32.mrf.mxu0
    %v5186 = vadd.f32 %v5167, %v5185
    %5187 = vdwg.mxu0
    %v5220 = vunpack.c.l.b16 %v4884
    %v5221 = vunpack.c.h.b16 %v4884
    %v5222 = vunpack.c.l.b16 %v4885
    %v5223 = vunpack.c.h.b16 %v4885
    %v5224 = vunpack.c.l.b16 %v4886
    %v5225 = vunpack.c.h.b16 %v4886
    %v5226 = vunpack.c.l.b16 %v4887
    %v5227 = vunpack.c.h.b16 %v4887
    %v5228 = vunpack.c.l.b16 %v4888
    %v5229 = vunpack.c.h.b16 %v4888
    %v5230 = vunpack.c.l.b16 %v4889
    %v5231 = vunpack.c.h.b16 %v4889
    %v5232 = vunpack.c.l.b16 %v4890
    %v5233 = vunpack.c.h.b16 %v4890
    %v5234 = vunpack.c.l.b16 %v4891
    %v5235 = vunpack.c.h.b16 %v4891
    %v5236 = vunpack.c.l.b16 %v4892
    %v5237 = vunpack.c.h.b16 %v4892
    %v5238 = vunpack.c.l.b16 %v4893
    %v5239 = vunpack.c.h.b16 %v4893
    %v5240 = vunpack.c.l.b16 %v4894
    %v5241 = vunpack.c.h.b16 %v4894
    %v5242 = vunpack.c.l.b16 %v4895
    %v5243 = vunpack.c.h.b16 %v4895
    %v5244 = vunpack.c.l.b16 %v4896
    %v5245 = vunpack.c.h.b16 %v4896
    %v5246 = vunpack.c.l.b16 %v4897
    %v5247 = vunpack.c.h.b16 %v4897
    %v5248 = vunpack.c.l.b16 %v4898
    %v5249 = vunpack.c.h.b16 %v4898
    %v5250 = vunpack.c.l.b16 %v4899
    %v5251 = vunpack.c.h.b16 %v4899
    %v5252 = vunpack.c.l.b16 %v4900
    %v5253 = vunpack.c.h.b16 %v4900
    %v5254 = vunpack.c.l.b16 %v4901
    %v5255 = vunpack.c.h.b16 %v4901
    %v5256 = vunpack.c.l.b16 %v4902
    %v5257 = vunpack.c.h.b16 %v4902
    %v5258 = vunpack.c.l.b16 %v4903
    %v5259 = vunpack.c.h.b16 %v4903
    %v5260 = vunpack.c.l.b16 %v4904
    %v5261 = vunpack.c.h.b16 %v4904
    %v5262 = vunpack.c.l.b16 %v4905
    %v5263 = vunpack.c.h.b16 %v4905
    %v5264 = vunpack.c.l.b16 %v4906
    %v5265 = vunpack.c.h.b16 %v4906
    %v5266 = vunpack.c.l.b16 %v4907
    %v5267 = vunpack.c.h.b16 %v4907
    %v5268 = vunpack.c.l.b16 %v4908
    %v5269 = vunpack.c.h.b16 %v4908
    %v5270 = vunpack.c.l.b16 %v4909
    %v5271 = vunpack.c.h.b16 %v4909
    %v5272 = vunpack.c.l.b16 %v4910
    %v5273 = vunpack.c.h.b16 %v4910
    %v5274 = vunpack.c.l.b16 %v4911
    %v5275 = vunpack.c.h.b16 %v4911
    %v5276 = vunpack.c.l.b16 %v4912
    %v5277 = vunpack.c.h.b16 %v4912
    %v5278 = vunpack.c.l.b16 %v4913
    %v5279 = vunpack.c.h.b16 %v4913
    %v5280 = vunpack.c.l.b16 %v4914
    %v5281 = vunpack.c.h.b16 %v4914
    %v5282 = vunpack.c.l.b16 %v4915
    %v5283 = vunpack.c.h.b16 %v4915
    %v5284 = vpack.c.b16 %v5222, %v5220
    %v5285 = vpack.c.b16 %v5223, %v5221
    %v5286 = vpack.c.b16 %v5226, %v5224
    %v5287 = vpack.c.b16 %v5227, %v5225
    %v5288 = vpack.c.b16 %v5230, %v5228
    %v5289 = vpack.c.b16 %v5231, %v5229
    %v5290 = vpack.c.b16 %v5234, %v5232
    %v5291 = vpack.c.b16 %v5235, %v5233
    %v5292 = vpack.c.b16 %v5238, %v5236
    %v5293 = vpack.c.b16 %v5239, %v5237
    %v5294 = vpack.c.b16 %v5242, %v5240
    %v5295 = vpack.c.b16 %v5243, %v5241
    %v5296 = vpack.c.b16 %v5246, %v5244
    %v5297 = vpack.c.b16 %v5247, %v5245
    %v5298 = vpack.c.b16 %v5250, %v5248
    %v5299 = vpack.c.b16 %v5251, %v5249
    %v5300 = vpack.c.b16 %v5254, %v5252
    %v5301 = vpack.c.b16 %v5255, %v5253
    %v5302 = vpack.c.b16 %v5258, %v5256
    %v5303 = vpack.c.b16 %v5259, %v5257
    %v5304 = vpack.c.b16 %v5262, %v5260
    %v5305 = vpack.c.b16 %v5263, %v5261
    %v5306 = vpack.c.b16 %v5266, %v5264
    %v5307 = vpack.c.b16 %v5267, %v5265
    %v5308 = vpack.c.b16 %v5270, %v5268
    %v5309 = vpack.c.b16 %v5271, %v5269
    %v5310 = vpack.c.b16 %v5274, %v5272
    %v5311 = vpack.c.b16 %v5275, %v5273
    %v5312 = vpack.c.b16 %v5278, %v5276
    %v5313 = vpack.c.b16 %v5279, %v5277
    %v5314 = vpack.c.b16 %v5282, %v5280
    %v5315 = vpack.c.b16 %v5283, %v5281
    %5348 = vmatpush.bf16.msra.mxu0 %v5298
    %5349 = vmatpush.bf16.msra.mxu0 %v5296
    %5350 = vmatpush.bf16.msra.mxu0 %v5294
    %5351 = vmatpush.bf16.msra.mxu0 %v5292
    %5352 = vmatpush.bf16.msra.mxu0 %v5290
    %5353 = vmatpush.bf16.msra.mxu0 %v5288
    %5354 = vmatpush.bf16.msra.mxu0 %v5286
    %5355 = vmatpush.bf16.msra.mxu0 %v5284
    %5356 = vmatmul.bf16.gmra.mxu0 %v4880
    %v5357 = vpop.f32.mrf.mxu0
    %v5358 = vadd.f32 %v5141, %v5357
    %v5359 = vpop.f32.mrf.mxu0
    %v5360 = vadd.f32 %v5143, %v5359
    %5361 = vmatmul.bf16.gmra.mxu0 %v4882
    %v5362 = vpop.f32.mrf.mxu0
    %v5363 = vadd.f32 %v5146, %v5362
    %v5364 = vpop.f32.mrf.mxu0
    %v5365 = vadd.f32 %v5148, %v5364
    %5366 = vdwg.mxu0
    %5367 = vmatpush.bf16.msra.mxu0 %v5314
    %5368 = vmatpush.bf16.msra.mxu0 %v5312
    %5369 = vmatpush.bf16.msra.mxu0 %v5310
    %5370 = vmatpush.bf16.msra.mxu0 %v5308
    %5371 = vmatpush.bf16.msra.mxu0 %v5306
    %5372 = vmatpush.bf16.msra.mxu0 %v5304
    %5373 = vmatpush.bf16.msra.mxu0 %v5302
    %5374 = vmatpush.bf16.msra.mxu0 %v5300
    %5375 = vmatmul.bf16.gmra.mxu0 %v4881
    %v5376 = vpop.f32.mrf.mxu0
    %v5377 = vadd.f32 %v5358, %v5376
    %v5378 = vpop.f32.mrf.mxu0
    %v5379 = vadd.f32 %v5360, %v5378
    %5380 = vmatmul.bf16.gmra.mxu0 %v4883
    %v5381 = vpop.f32.mrf.mxu0
    %v5382 = vadd.f32 %v5363, %v5381
    %v5383 = vpop.f32.mrf.mxu0
    %v5384 = vadd.f32 %v5365, %v5383
    %5385 = vdwg.mxu0
    %5386 = vmatpush.bf16.msra.mxu0 %v5299
    %5387 = vmatpush.bf16.msra.mxu0 %v5297
    %5388 = vmatpush.bf16.msra.mxu0 %v5295
    %5389 = vmatpush.bf16.msra.mxu0 %v5293
    %5390 = vmatpush.bf16.msra.mxu0 %v5291
    %5391 = vmatpush.bf16.msra.mxu0 %v5289
    %5392 = vmatpush.bf16.msra.mxu0 %v5287
    %5393 = vmatpush.bf16.msra.mxu0 %v5285
    %5394 = vmatmul.bf16.gmra.mxu0 %v4880
    %v5395 = vpop.f32.mrf.mxu0
    %v5396 = vadd.f32 %v5179, %v5395
    %v5397 = vpop.f32.mrf.mxu0
    %v5398 = vadd.f32 %v5181, %v5397
    %5399 = vmatmul.bf16.gmra.mxu0 %v4882
    %v5400 = vpop.f32.mrf.mxu0
    %v5401 = vadd.f32 %v5184, %v5400
    %v5402 = vpop.f32.mrf.mxu0
    %v5403 = vadd.f32 %v5186, %v5402
    %5404 = vdwg.mxu0
    %5405 = vmatpush.bf16.msra.mxu0 %v5315
    %5406 = vmatpush.bf16.msra.mxu0 %v5313
    %5407 = vmatpush.bf16.msra.mxu0 %v5311
    %5408 = vmatpush.bf16.msra.mxu0 %v5309
    %5409 = vmatpush.bf16.msra.mxu0 %v5307
    %5410 = vmatpush.bf16.msra.mxu0 %v5305
    %5411 = vmatpush.bf16.msra.mxu0 %v5303
    %5412 = vmatpush.bf16.msra.mxu0 %v5301
    %5413 = vmatmul.bf16.gmra.mxu0 %v4881
    %v5414 = vpop.f32.mrf.mxu0
    %v5415 = vadd.f32 %v5396, %v5414
    %v5416 = vpop.f32.mrf.mxu0
    %v5417 = vadd.f32 %v5398, %v5416
    %5418 = vmatmul.bf16.gmra.mxu0 %v4883
    %v5419 = vpop.f32.mrf.mxu0
    %v5420 = vadd.f32 %v5401, %v5419
    %v5421 = vpop.f32.mrf.mxu0
    %v5422 = vadd.f32 %v5403, %v5421
    %5423 = vdwg.mxu0
    %v5424 = vpack.c.bf16 %v4874, %v4872
    %v5425 = vpack.c.bf16 %v4875, %v4873
    %v5426 = vpack.c.bf16 %v4878, %v4876
    %v5427 = vpack.c.bf16 %v4879, %v4877
    %v5428 = vld [vmem:[#allocation2 + $0xa50] sm:$0xff]
    %v5429 = vld [vmem:[#allocation2 + $0xa58] sm:$0xff]
    %v5430 = vld [vmem:[#allocation2 + $0xa60] sm:$0xff]
    %v5431 = vld [vmem:[#allocation2 + $0xa68] sm:$0xff]
    %v5432 = vld [vmem:[#allocation2 + $0xa70] sm:$0xff]
    %v5433 = vld [vmem:[#allocation2 + $0xa78] sm:$0xff]
    %v5434 = vld [vmem:[#allocation2 + $0xa80] sm:$0xff]
    %v5435 = vld [vmem:[#allocation2 + $0xa88] sm:$0xff]
    %v5436 = vld [vmem:[#allocation2 + $0xa90] sm:$0xff]
    %v5437 = vld [vmem:[#allocation2 + $0xa98] sm:$0xff]
    %v5438 = vld [vmem:[#allocation2 + $0xaa0] sm:$0xff]
    %v5439 = vld [vmem:[#allocation2 + $0xaa8] sm:$0xff]
    %v5440 = vld [vmem:[#allocation2 + $0xab0] sm:$0xff]
    %v5441 = vld [vmem:[#allocation2 + $0xab8] sm:$0xff]
    %v5442 = vld [vmem:[#allocation2 + $0xac0] sm:$0xff]
    %v5443 = vld [vmem:[#allocation2 + $0xac8] sm:$0xff]
    %v5444 = vld [vmem:[#allocation2 + $0xad0] sm:$0xff]
    %v5445 = vld [vmem:[#allocation2 + $0xad8] sm:$0xff]
    %v5446 = vld [vmem:[#allocation2 + $0xae0] sm:$0xff]
    %v5447 = vld [vmem:[#allocation2 + $0xae8] sm:$0xff]
    %v5448 = vld [vmem:[#allocation2 + $0xaf0] sm:$0xff]
    %v5449 = vld [vmem:[#allocation2 + $0xaf8] sm:$0xff]
    %v5450 = vld [vmem:[#allocation2 + $0xb00] sm:$0xff]
    %v5451 = vld [vmem:[#allocation2 + $0xb08] sm:$0xff]
    %v5452 = vld [vmem:[#allocation2 + $0xb10] sm:$0xff]
    %v5453 = vld [vmem:[#allocation2 + $0xb18] sm:$0xff]
    %v5454 = vld [vmem:[#allocation2 + $0xb20] sm:$0xff]
    %v5455 = vld [vmem:[#allocation2 + $0xb28] sm:$0xff]
    %v5456 = vld [vmem:[#allocation2 + $0xb30] sm:$0xff]
    %v5457 = vld [vmem:[#allocation2 + $0xb38] sm:$0xff]
    %v5458 = vld [vmem:[#allocation2 + $0xb40] sm:$0xff]
    %v5459 = vld [vmem:[#allocation2 + $0xb48] sm:$0xff]
    %v5492 = vunpack.c.l.b16 %v5428
    %v5493 = vunpack.c.h.b16 %v5428
    %v5494 = vunpack.c.l.b16 %v5429
    %v5495 = vunpack.c.h.b16 %v5429
    %v5496 = vunpack.c.l.b16 %v5430
    %v5497 = vunpack.c.h.b16 %v5430
    %v5498 = vunpack.c.l.b16 %v5431
    %v5499 = vunpack.c.h.b16 %v5431
    %v5500 = vunpack.c.l.b16 %v5432
    %v5501 = vunpack.c.h.b16 %v5432
    %v5502 = vunpack.c.l.b16 %v5433
    %v5503 = vunpack.c.h.b16 %v5433
    %v5504 = vunpack.c.l.b16 %v5434
    %v5505 = vunpack.c.h.b16 %v5434
    %v5506 = vunpack.c.l.b16 %v5435
    %v5507 = vunpack.c.h.b16 %v5435
    %v5508 = vunpack.c.l.b16 %v5436
    %v5509 = vunpack.c.h.b16 %v5436
    %v5510 = vunpack.c.l.b16 %v5437
    %v5511 = vunpack.c.h.b16 %v5437
    %v5512 = vunpack.c.l.b16 %v5438
    %v5513 = vunpack.c.h.b16 %v5438
    %v5514 = vunpack.c.l.b16 %v5439
    %v5515 = vunpack.c.h.b16 %v5439
    %v5516 = vunpack.c.l.b16 %v5440
    %v5517 = vunpack.c.h.b16 %v5440
    %v5518 = vunpack.c.l.b16 %v5441
    %v5519 = vunpack.c.h.b16 %v5441
    %v5520 = vunpack.c.l.b16 %v5442
    %v5521 = vunpack.c.h.b16 %v5442
    %v5522 = vunpack.c.l.b16 %v5443
    %v5523 = vunpack.c.h.b16 %v5443
    %v5524 = vunpack.c.l.b16 %v5444
    %v5525 = vunpack.c.h.b16 %v5444
    %v5526 = vunpack.c.l.b16 %v5445
    %v5527 = vunpack.c.h.b16 %v5445
    %v5528 = vunpack.c.l.b16 %v5446
    %v5529 = vunpack.c.h.b16 %v5446
    %v5530 = vunpack.c.l.b16 %v5447
    %v5531 = vunpack.c.h.b16 %v5447
    %v5532 = vunpack.c.l.b16 %v5448
    %v5533 = vunpack.c.h.b16 %v5448
    %v5534 = vunpack.c.l.b16 %v5449
    %v5535 = vunpack.c.h.b16 %v5449
    %v5536 = vunpack.c.l.b16 %v5450
    %v5537 = vunpack.c.h.b16 %v5450
    %v5538 = vunpack.c.l.b16 %v5451
    %v5539 = vunpack.c.h.b16 %v5451
    %v5540 = vunpack.c.l.b16 %v5452
    %v5541 = vunpack.c.h.b16 %v5452
    %v5542 = vunpack.c.l.b16 %v5453
    %v5543 = vunpack.c.h.b16 %v5453
    %v5544 = vunpack.c.l.b16 %v5454
    %v5545 = vunpack.c.h.b16 %v5454
    %v5546 = vunpack.c.l.b16 %v5455
    %v5547 = vunpack.c.h.b16 %v5455
    %v5548 = vunpack.c.l.b16 %v5456
    %v5549 = vunpack.c.h.b16 %v5456
    %v5550 = vunpack.c.l.b16 %v5457
    %v5551 = vunpack.c.h.b16 %v5457
    %v5552 = vunpack.c.l.b16 %v5458
    %v5553 = vunpack.c.h.b16 %v5458
    %v5554 = vunpack.c.l.b16 %v5459
    %v5555 = vunpack.c.h.b16 %v5459
    %v5556 = vpack.c.b16 %v5494, %v5492
    %v5557 = vpack.c.b16 %v5495, %v5493
    %v5558 = vpack.c.b16 %v5498, %v5496
    %v5559 = vpack.c.b16 %v5499, %v5497
    %v5560 = vpack.c.b16 %v5502, %v5500
    %v5561 = vpack.c.b16 %v5503, %v5501
    %v5562 = vpack.c.b16 %v5506, %v5504
    %v5563 = vpack.c.b16 %v5507, %v5505
    %v5564 = vpack.c.b16 %v5510, %v5508
    %v5565 = vpack.c.b16 %v5511, %v5509
    %v5566 = vpack.c.b16 %v5514, %v5512
    %v5567 = vpack.c.b16 %v5515, %v5513
    %v5568 = vpack.c.b16 %v5518, %v5516
    %v5569 = vpack.c.b16 %v5519, %v5517
    %v5570 = vpack.c.b16 %v5522, %v5520
    %v5571 = vpack.c.b16 %v5523, %v5521
    %v5572 = vpack.c.b16 %v5526, %v5524
    %v5573 = vpack.c.b16 %v5527, %v5525
    %v5574 = vpack.c.b16 %v5530, %v5528
    %v5575 = vpack.c.b16 %v5531, %v5529
    %v5576 = vpack.c.b16 %v5534, %v5532
    %v5577 = vpack.c.b16 %v5535, %v5533
    %v5578 = vpack.c.b16 %v5538, %v5536
    %v5579 = vpack.c.b16 %v5539, %v5537
    %v5580 = vpack.c.b16 %v5542, %v5540
    %v5581 = vpack.c.b16 %v5543, %v5541
    %v5582 = vpack.c.b16 %v5546, %v5544
    %v5583 = vpack.c.b16 %v5547, %v5545
    %v5584 = vpack.c.b16 %v5550, %v5548
    %v5585 = vpack.c.b16 %v5551, %v5549
    %v5586 = vpack.c.b16 %v5554, %v5552
    %v5587 = vpack.c.b16 %v5555, %v5553
    %5620 = vmatpush.bf16.msra.mxu0 %v5570
    %5621 = vmatpush.bf16.msra.mxu0 %v5568
    %5622 = vmatpush.bf16.msra.mxu0 %v5566
    %5623 = vmatpush.bf16.msra.mxu0 %v5564
    %5624 = vmatpush.bf16.msra.mxu0 %v5562
    %5625 = vmatpush.bf16.msra.mxu0 %v5560
    %5626 = vmatpush.bf16.msra.mxu0 %v5558
    %5627 = vmatpush.bf16.msra.mxu0 %v5556
    %5628 = vmatmul.bf16.gmra.mxu0 %v5424
    %v5629 = vpop.f32.mrf.mxu0
    %v5630 = vadd.f32 0.0, %v5629
    %v5631 = vpop.f32.mrf.mxu0
    %v5632 = vadd.f32 0.0, %v5631
    %5633 = vmatmul.bf16.gmra.mxu0 %v5426
    %v5634 = vpop.f32.mrf.mxu0
    %v5635 = vadd.f32 0.0, %v5634
    %v5636 = vpop.f32.mrf.mxu0
    %v5637 = vadd.f32 0.0, %v5636
    %5638 = vdwg.mxu0
    %5639 = vmatpush.bf16.msra.mxu0 %v5586
    %5640 = vmatpush.bf16.msra.mxu0 %v5584
    %5641 = vmatpush.bf16.msra.mxu0 %v5582
    %5642 = vmatpush.bf16.msra.mxu0 %v5580
    %5643 = vmatpush.bf16.msra.mxu0 %v5578
    %5644 = vmatpush.bf16.msra.mxu0 %v5576
    %5645 = vmatpush.bf16.msra.mxu0 %v5574
    %5646 = vmatpush.bf16.msra.mxu0 %v5572
    %5647 = vmatmul.bf16.gmra.mxu0 %v5425
    %v5648 = vpop.f32.mrf.mxu0
    %v5649 = vadd.f32 %v5630, %v5648
    %v5650 = vpop.f32.mrf.mxu0
    %v5651 = vadd.f32 %v5632, %v5650
    %5652 = vmatmul.bf16.gmra.mxu0 %v5427
    %v5653 = vpop.f32.mrf.mxu0
    %v5654 = vadd.f32 %v5635, %v5653
    %v5655 = vpop.f32.mrf.mxu0
    %v5656 = vadd.f32 %v5637, %v5655
    %5657 = vdwg.mxu0
    %5658 = vmatpush.bf16.msra.mxu0 %v5571
    %5659 = vmatpush.bf16.msra.mxu0 %v5569
    %5660 = vmatpush.bf16.msra.mxu0 %v5567
    %5661 = vmatpush.bf16.msra.mxu0 %v5565
    %5662 = vmatpush.bf16.msra.mxu0 %v5563
    %5663 = vmatpush.bf16.msra.mxu0 %v5561
    %5664 = vmatpush.bf16.msra.mxu0 %v5559
    %5665 = vmatpush.bf16.msra.mxu0 %v5557
    %5666 = vmatmul.bf16.gmra.mxu0 %v5424
    %v5667 = vpop.f32.mrf.mxu0
    %v5668 = vadd.f32 0.0, %v5667
    %v5669 = vpop.f32.mrf.mxu0
    %v5670 = vadd.f32 0.0, %v5669
    %5671 = vmatmul.bf16.gmra.mxu0 %v5426
    %v5672 = vpop.f32.mrf.mxu0
    %v5673 = vadd.f32 0.0, %v5672
    %v5674 = vpop.f32.mrf.mxu0
    %v5675 = vadd.f32 0.0, %v5674
    %5676 = vdwg.mxu0
    %5677 = vmatpush.bf16.msra.mxu0 %v5587
    %5678 = vmatpush.bf16.msra.mxu0 %v5585
    %5679 = vmatpush.bf16.msra.mxu0 %v5583
    %5680 = vmatpush.bf16.msra.mxu0 %v5581
    %5681 = vmatpush.bf16.msra.mxu0 %v5579
    %5682 = vmatpush.bf16.msra.mxu0 %v5577
    %5683 = vmatpush.bf16.msra.mxu0 %v5575
    %5684 = vmatpush.bf16.msra.mxu0 %v5573
    %5685 = vmatmul.bf16.gmra.mxu0 %v5425
    %v5686 = vpop.f32.mrf.mxu0
    %v5687 = vadd.f32 %v5668, %v5686
    %v5688 = vpop.f32.mrf.mxu0
    %v5689 = vadd.f32 %v5670, %v5688
    %5690 = vmatmul.bf16.gmra.mxu0 %v5427
    %v5691 = vpop.f32.mrf.mxu0
    %v5692 = vadd.f32 %v5673, %v5691
    %v5693 = vpop.f32.mrf.mxu0
    %v5694 = vadd.f32 %v5675, %v5693
    %5695 = vdwg.mxu0
    %v5696 = vadd.f32 %v5377, %v5649
    %v5697 = vadd.f32 %v5415, %v5687
    %v5698 = vadd.f32 %v5379, %v5651
    %v5699 = vadd.f32 %v5417, %v5689
    %v5700 = vadd.f32 %v5382, %v5654
    %v5701 = vadd.f32 %v5420, %v5692
    %v5702 = vadd.f32 %v5384, %v5656
    %v5703 = vadd.f32 %v5422, %v5694
    %s5704 = scalar_lea.vmem [#allocation4], 35
    %v5705 = vld [vmem:[%s5704] ss:$8 sm:$0x3]
    %v5707 = vperm.slane %v5705, 0
    %v5708 = vperm.slane %v5705, 1
    %v5711 = vadd.f32 %v5696, %v5707
    %v5712 = vadd.f32 %v5697, %v5708
    %v5713 = vadd.f32 %v5698, %v5707
    %v5714 = vadd.f32 %v5699, %v5708
    %v5715 = vadd.f32 %v5700, %v5707
    %v5716 = vadd.f32 %v5701, %v5708
    %v5717 = vadd.f32 %v5702, %v5707
    %v5718 = vadd.f32 %v5703, %v5708
    %v5719 = vadd.f32 %v5711, %v5713
    %v5720 = vadd.f32 %v5719, %v5715
    %v5721 = vadd.f32 %v5720, %v5717
    %v5722 = vrot.slane %v5721, 4
    %v5723 = vadd.f32 %v5721, %v5722
    %v5724 = vrot.slane %v5723, 2
    %v5725 = vadd.f32 %v5723, %v5724
    %v5726 = vrot.slane %v5725, 1
    %v5727 = vadd.f32 %v5725, %v5726
    %v5728 = vadd.f32 %v5712, %v5714
    %v5729 = vadd.f32 %v5728, %v5716
    %v5730 = vadd.f32 %v5729, %v5718
    %v5731 = vrot.slane %v5730, 4
    %v5732 = vadd.f32 %v5730, %v5731
    %v5733 = vrot.slane %v5732, 2
    %v5734 = vadd.f32 %v5732, %v5733
    %v5735 = vrot.slane %v5734, 1
    %v5736 = vadd.f32 %v5734, %v5735
    %v5737 = vmul.f32 %v5727, %v1430
    %v5738 = vmul.f32 %v5736, %v1430
    %v5739 = vmul.f32 %v5711, %v5711
    %v5740 = vmul.f32 %v5712, %v5712
    %v5741 = vmul.f32 %v5713, %v5713
    %v5742 = vmul.f32 %v5714, %v5714
    %v5743 = vmul.f32 %v5715, %v5715
    %v5744 = vmul.f32 %v5716, %v5716
    %v5745 = vmul.f32 %v5717, %v5717
    %v5746 = vmul.f32 %v5718, %v5718
    %v5747 = vadd.f32 %v5739, %v5741
    %v5748 = vadd.f32 %v5747, %v5743
    %v5749 = vadd.f32 %v5748, %v5745
    %v5750 = vrot.slane %v5749, 4
    %v5751 = vadd.f32 %v5749, %v5750
    %v5752 = vrot.slane %v5751, 2
    %v5753 = vadd.f32 %v5751, %v5752
    %v5754 = vrot.slane %v5753, 1
    %v5755 = vadd.f32 %v5753, %v5754
    %v5756 = vadd.f32 %v5740, %v5742
    %v5757 = vadd.f32 %v5756, %v5744
    %v5758 = vadd.f32 %v5757, %v5746
    %v5759 = vrot.slane %v5758, 4
    %v5760 = vadd.f32 %v5758, %v5759
    %v5761 = vrot.slane %v5760, 2
    %v5762 = vadd.f32 %v5760, %v5761
    %v5763 = vrot.slane %v5762, 1
    %v5764 = vadd.f32 %v5762, %v5763
    %v5765 = vmul.f32 %v5755, %v1430
    %v5766 = vmul.f32 %v5764, %v1430
    %v5767 = vmul.f32 %v5737, %v5737
    %v5768 = vmul.f32 %v5738, %v5738
    %v5769 = vsub.f32 %v5765, %v5767
    %v5770 = vsub.f32 %v5766, %v5768
    %v5771 = vmax.f32 %v5769, 0.0
    %v5772 = vmax.f32 %v5770, 0.0
    %s5773 = scalar_lea.vmem [#allocation4], 36
    %v5774 = vld [vmem:[%s5773] ss:$8 sm:$0x3]
    %v5775 = vadd.f32 %v5771, 1e-05
    %v5776 = vadd.f32 %v5772, 1e-05
    %v5777 = vrsqrt.pop %v5775
    %v5778 = vmul.f32 %v5777, %v5775
    %v5779 = vmul.f32 %v5778, %v5777
    %v5780 = vmul.f32 0.5, %v5779
    %v5781 = vsub.f32 1.5, %v5780
    %v5782 = vmul.f32 %v5777, %v5781
    %vm5783 = vweird.f32 %v5775
    %vm5784 = vweird.f32 %v5777
    %vm5785 = vmor %vm5783, %vm5784
    %v5786 = vsel %vm5785, %v5777, %v5782
    %v5787 = vrsqrt.pop %v5776
    %v5788 = vmul.f32 %v5787, %v5776
    %v5789 = vmul.f32 %v5788, %v5787
    %v5790 = vmul.f32 0.5, %v5789
    %v5791 = vsub.f32 1.5, %v5790
    %v5792 = vmul.f32 %v5787, %v5791
    %vm5793 = vweird.f32 %v5776
    %vm5794 = vweird.f32 %v5787
    %vm5795 = vmor %vm5793, %vm5794
    %v5796 = vsel %vm5795, %v5787, %v5792
    %v5799 = vrot.slane %v5796, 7
    %v5800 = vsel %vm2812, %v5786, %v5799
    %v5802 = vmul.f32 %v5774, %v5800
    %s5803 = scalar_lea.vmem [#allocation4], 37
    %v5804 = vld [vmem:[%s5803] ss:$8 sm:$0x3]
    %v5806 = vperm.slane %v5802, 0
    %v5807 = vperm.slane %v5802, 1
    %v5810 = vmul.f32 %v5737, %v5806
    %v5811 = vmul.f32 %v5738, %v5807
    %v5814 = vrot.slane %v5811, 7
    %v5815 = vsel %vm2812, %v5810, %v5814
    %v5817 = vsub.f32 %v5804, %v5815
    %v5818 = vmul.f32 %v5711, %v5806
    %v5819 = vmul.f32 %v5712, %v5807
    %v5820 = vmul.f32 %v5713, %v5806
    %v5821 = vmul.f32 %v5714, %v5807
    %v5822 = vmul.f32 %v5715, %v5806
    %v5823 = vmul.f32 %v5716, %v5807
    %v5824 = vmul.f32 %v5717, %v5806
    %v5825 = vmul.f32 %v5718, %v5807
    %v5827 = vperm.slane %v5817, 0
    %v5828 = vperm.slane %v5817, 1
    %v5831 = vadd.f32 %v5818, %v5827
    %v5832 = vadd.f32 %v5819, %v5828
    %v5833 = vadd.f32 %v5820, %v5827
    %v5834 = vadd.f32 %v5821, %v5828
    %v5835 = vadd.f32 %v5822, %v5827
    %v5836 = vadd.f32 %v5823, %v5828
    %v5837 = vadd.f32 %v5824, %v5827
    %v5838 = vadd.f32 %v5825, %v5828
    %v5839 = vmul.f32 %v5831, 0.5
    %v5840 = vmul.f32 %v5832, 0.5
    %v5841 = vmul.f32 %v5833, 0.5
    %v5842 = vmul.f32 %v5834, 0.5
    %v5843 = vmul.f32 %v5835, 0.5
    %v5844 = vmul.f32 %v5836, 0.5
    %v5845 = vmul.f32 %v5837, 0.5
    %v5846 = vmul.f32 %v5838, 0.5
    %v5847 = vmul.f32 %v5831, 0.70710677
    %v5848 = vmul.f32 %v5832, 0.70710677
    %v5849 = vmul.f32 %v5833, 0.70710677
    %v5850 = vmul.f32 %v5834, 0.70710677
    %v5851 = vmul.f32 %v5835, 0.70710677
    %v5852 = vmul.f32 %v5836, 0.70710677
    %v5853 = vmul.f32 %v5837, 0.70710677
    %v5854 = vmul.f32 %v5838, 0.70710677
    %v5855 = vmul.f32 %v5847, %v5847
    %v5856 = vmin.f32 16.0, %v5855
    %v5857 = vmul.f32 %v5856, 2.1237322e-06
    %v5858 = vadd.f32 %v5857, 0.00028619796
    %v5859 = vmul.f32 %v5856, %v5858
    %v5860 = vadd.f32 %v5859, 0.0036580483
    %v5861 = vmul.f32 %v5856, %v5860
    %v5862 = vadd.f32 %v5861, 0.05243302
    %v5863 = vmul.f32 %v5856, %v5862
    %v5864 = vadd.f32 %v5863, 0.18741608
    %v5865 = vmul.f32 %v5856, %v5864
    %v5866 = vadd.f32 %v5865, 1.1283791
    %v5867 = vmul.f32 %v5847, %v5866
    %v5868 = vmul.f32 %v5856, 3.8918573e-05
    %v5869 = vadd.f32 %v5868, 0.001143296
    %v5870 = vmul.f32 %v5856, %v5869
    %v5871 = vadd.f32 %v5870, 0.014752088
    %v5872 = vmul.f32 %v5856, %v5871
    %v5873 = vadd.f32 %v5872, 0.112945676
    %v5874 = vmul.f32 %v5856, %v5873
    %v5875 = vadd.f32 %v5874, 0.4994258
    %v5876 = vmul.f32 %v5856, %v5875
    %v5877 = vadd.f32 %v5876, 1.0
    %v5878 = vrcp.pop %v5877
    %v5879 = vmul.f32 %v5877, %v5878
    %v5880 = vsub.f32 1.0, %v5879
    %v5881 = vmul.f32 %v5878, %v5880
    %v5882 = vadd.f32 %v5878, %v5881
    %vm5883 = vweird.f32 %v5877
    %vm5884 = vweird.f32 %v5878
    %vm5885 = vmor %vm5883, %vm5884
    %v5886 = vsel %vm5885, %v5878, %v5882
    %v5887 = vand.u32 2147483647, %v5877
    %vm5888 = vcmp.eq.f32.partialorder %v5887, 8.507059e+37
    %v5889 = vand.u32 %v5877, 2147483648
    %v5890 = vor.u32 1.1754944e-38, %v5889
    %v5891 = vsel %vm5888, %v5890, %v5886
    %v5892 = vmul.f32 %v5867, %v5891
    %v5893 = vmin.f32 %v5892, 1.0
    %v5894 = vmax.f32 %v5893, -1.0
    %v5895 = vmul.f32 %v5848, %v5848
    %v5896 = vmin.f32 16.0, %v5895
    %v5897 = vmul.f32 %v5896, 2.1237322e-06
    %v5898 = vadd.f32 %v5897, 0.00028619796
    %v5899 = vmul.f32 %v5896, %v5898
    %v5900 = vadd.f32 %v5899, 0.0036580483
    %v5901 = vmul.f32 %v5896, %v5900
    %v5902 = vadd.f32 %v5901, 0.05243302
    %v5903 = vmul.f32 %v5896, %v5902
    %v5904 = vadd.f32 %v5903, 0.18741608
    %v5905 = vmul.f32 %v5896, %v5904
    %v5906 = vadd.f32 %v5905, 1.1283791
    %v5907 = vmul.f32 %v5848, %v5906
    %v5908 = vmul.f32 %v5896, 3.8918573e-05
    %v5909 = vadd.f32 %v5908, 0.001143296
    %v5910 = vmul.f32 %v5896, %v5909
    %v5911 = vadd.f32 %v5910, 0.014752088
    %v5912 = vmul.f32 %v5896, %v5911
    %v5913 = vadd.f32 %v5912, 0.112945676
    %v5914 = vmul.f32 %v5896, %v5913
    %v5915 = vadd.f32 %v5914, 0.4994258
    %v5916 = vmul.f32 %v5896, %v5915
    %v5917 = vadd.f32 %v5916, 1.0
    %v5918 = vrcp.pop %v5917
    %v5919 = vmul.f32 %v5917, %v5918
    %v5920 = vsub.f32 1.0, %v5919
    %v5921 = vmul.f32 %v5918, %v5920
    %v5922 = vadd.f32 %v5918, %v5921
    %vm5923 = vweird.f32 %v5917
    %vm5924 = vweird.f32 %v5918
    %vm5925 = vmor %vm5923, %vm5924
    %v5926 = vsel %vm5925, %v5918, %v5922
    %v5927 = vand.u32 2147483647, %v5917
    %vm5928 = vcmp.eq.f32.partialorder %v5927, 8.507059e+37
    %v5929 = vand.u32 %v5917, 2147483648
    %v5930 = vor.u32 1.1754944e-38, %v5929
    %v5931 = vsel %vm5928, %v5930, %v5926
    %v5932 = vmul.f32 %v5907, %v5931
    %v5933 = vmin.f32 %v5932, 1.0
    %v5934 = vmax.f32 %v5933, -1.0
    %v5935 = vmul.f32 %v5849, %v5849
    %v5936 = vmin.f32 16.0, %v5935
    %v5937 = vmul.f32 %v5936, 2.1237322e-06
    %v5938 = vadd.f32 %v5937, 0.00028619796
    %v5939 = vmul.f32 %v5936, %v5938
    %v5940 = vadd.f32 %v5939, 0.0036580483
    %v5941 = vmul.f32 %v5936, %v5940
    %v5942 = vadd.f32 %v5941, 0.05243302
    %v5943 = vmul.f32 %v5936, %v5942
    %v5944 = vadd.f32 %v5943, 0.18741608
    %v5945 = vmul.f32 %v5936, %v5944
    %v5946 = vadd.f32 %v5945, 1.1283791
    %v5947 = vmul.f32 %v5849, %v5946
    %v5948 = vmul.f32 %v5936, 3.8918573e-05
    %v5949 = vadd.f32 %v5948, 0.001143296
    %v5950 = vmul.f32 %v5936, %v5949
    %v5951 = vadd.f32 %v5950, 0.014752088
    %v5952 = vmul.f32 %v5936, %v5951
    %v5953 = vadd.f32 %v5952, 0.112945676
    %v5954 = vmul.f32 %v5936, %v5953
    %v5955 = vadd.f32 %v5954, 0.4994258
    %v5956 = vmul.f32 %v5936, %v5955
    %v5957 = vadd.f32 %v5956, 1.0
    %v5958 = vrcp.pop %v5957
    %v5959 = vmul.f32 %v5957, %v5958
    %v5960 = vsub.f32 1.0, %v5959
    %v5961 = vmul.f32 %v5958, %v5960
    %v5962 = vadd.f32 %v5958, %v5961
    %vm5963 = vweird.f32 %v5957
    %vm5964 = vweird.f32 %v5958
    %vm5965 = vmor %vm5963, %vm5964
    %v5966 = vsel %vm5965, %v5958, %v5962
    %v5967 = vand.u32 2147483647, %v5957
    %vm5968 = vcmp.eq.f32.partialorder %v5967, 8.507059e+37
    %v5969 = vand.u32 %v5957, 2147483648
    %v5970 = vor.u32 1.1754944e-38, %v5969
    %v5971 = vsel %vm5968, %v5970, %v5966
    %v5972 = vmul.f32 %v5947, %v5971
    %v5973 = vmin.f32 %v5972, 1.0
    %v5974 = vmax.f32 %v5973, -1.0
    %v5975 = vmul.f32 %v5850, %v5850
    %v5976 = vmin.f32 16.0, %v5975
    %v5977 = vmul.f32 %v5976, 2.1237322e-06
    %v5978 = vadd.f32 %v5977, 0.00028619796
    %v5979 = vmul.f32 %v5976, %v5978
    %v5980 = vadd.f32 %v5979, 0.0036580483
    %v5981 = vmul.f32 %v5976, %v5980
    %v5982 = vadd.f32 %v5981, 0.05243302
    %v5983 = vmul.f32 %v5976, %v5982
    %v5984 = vadd.f32 %v5983, 0.18741608
    %v5985 = vmul.f32 %v5976, %v5984
    %v5986 = vadd.f32 %v5985, 1.1283791
    %v5987 = vmul.f32 %v5850, %v5986
    %v5988 = vmul.f32 %v5976, 3.8918573e-05
    %v5989 = vadd.f32 %v5988, 0.001143296
    %v5990 = vmul.f32 %v5976, %v5989
    %v5991 = vadd.f32 %v5990, 0.014752088
    %v5992 = vmul.f32 %v5976, %v5991
    %v5993 = vadd.f32 %v5992, 0.112945676
    %v5994 = vmul.f32 %v5976, %v5993
    %v5995 = vadd.f32 %v5994, 0.4994258
    %v5996 = vmul.f32 %v5976, %v5995
    %v5997 = vadd.f32 %v5996, 1.0
    %v5998 = vrcp.pop %v5997
    %v5999 = vmul.f32 %v5997, %v5998
    %v6000 = vsub.f32 1.0, %v5999
    %v6001 = vmul.f32 %v5998, %v6000
    %v6002 = vadd.f32 %v5998, %v6001
    %vm6003 = vweird.f32 %v5997
    %vm6004 = vweird.f32 %v5998
    %vm6005 = vmor %vm6003, %vm6004
    %v6006 = vsel %vm6005, %v5998, %v6002
    %v6007 = vand.u32 2147483647, %v5997
    %vm6008 = vcmp.eq.f32.partialorder %v6007, 8.507059e+37
    %v6009 = vand.u32 %v5997, 2147483648
    %v6010 = vor.u32 1.1754944e-38, %v6009
    %v6011 = vsel %vm6008, %v6010, %v6006
    %v6012 = vmul.f32 %v5987, %v6011
    %v6013 = vmin.f32 %v6012, 1.0
    %v6014 = vmax.f32 %v6013, -1.0
    %v6015 = vmul.f32 %v5851, %v5851
    %v6016 = vmin.f32 16.0, %v6015
    %v6017 = vmul.f32 %v6016, 2.1237322e-06
    %v6018 = vadd.f32 %v6017, 0.00028619796
    %v6019 = vmul.f32 %v6016, %v6018
    %v6020 = vadd.f32 %v6019, 0.0036580483
    %v6021 = vmul.f32 %v6016, %v6020
    %v6022 = vadd.f32 %v6021, 0.05243302
    %v6023 = vmul.f32 %v6016, %v6022
    %v6024 = vadd.f32 %v6023, 0.18741608
    %v6025 = vmul.f32 %v6016, %v6024
    %v6026 = vadd.f32 %v6025, 1.1283791
    %v6027 = vmul.f32 %v5851, %v6026
    %v6028 = vmul.f32 %v6016, 3.8918573e-05
    %v6029 = vadd.f32 %v6028, 0.001143296
    %v6030 = vmul.f32 %v6016, %v6029
    %v6031 = vadd.f32 %v6030, 0.014752088
    %v6032 = vmul.f32 %v6016, %v6031
    %v6033 = vadd.f32 %v6032, 0.112945676
    %v6034 = vmul.f32 %v6016, %v6033
    %v6035 = vadd.f32 %v6034, 0.4994258
    %v6036 = vmul.f32 %v6016, %v6035
    %v6037 = vadd.f32 %v6036, 1.0
    %v6038 = vrcp.pop %v6037
    %v6039 = vmul.f32 %v6037, %v6038
    %v6040 = vsub.f32 1.0, %v6039
    %v6041 = vmul.f32 %v6038, %v6040
    %v6042 = vadd.f32 %v6038, %v6041
    %vm6043 = vweird.f32 %v6037
    %vm6044 = vweird.f32 %v6038
    %vm6045 = vmor %vm6043, %vm6044
    %v6046 = vsel %vm6045, %v6038, %v6042
    %v6047 = vand.u32 2147483647, %v6037
    %vm6048 = vcmp.eq.f32.partialorder %v6047, 8.507059e+37
    %v6049 = vand.u32 %v6037, 2147483648
    %v6050 = vor.u32 1.1754944e-38, %v6049
    %v6051 = vsel %vm6048, %v6050, %v6046
    %v6052 = vmul.f32 %v6027, %v6051
    %v6053 = vmin.f32 %v6052, 1.0
    %v6054 = vmax.f32 %v6053, -1.0
    %v6055 = vmul.f32 %v5852, %v5852
    %v6056 = vmin.f32 16.0, %v6055
    %v6057 = vmul.f32 %v6056, 2.1237322e-06
    %v6058 = vadd.f32 %v6057, 0.00028619796
    %v6059 = vmul.f32 %v6056, %v6058
    %v6060 = vadd.f32 %v6059, 0.0036580483
    %v6061 = vmul.f32 %v6056, %v6060
    %v6062 = vadd.f32 %v6061, 0.05243302
    %v6063 = vmul.f32 %v6056, %v6062
    %v6064 = vadd.f32 %v6063, 0.18741608
    %v6065 = vmul.f32 %v6056, %v6064
    %v6066 = vadd.f32 %v6065, 1.1283791
    %v6067 = vmul.f32 %v5852, %v6066
    %v6068 = vmul.f32 %v6056, 3.8918573e-05
    %v6069 = vadd.f32 %v6068, 0.001143296
    %v6070 = vmul.f32 %v6056, %v6069
    %v6071 = vadd.f32 %v6070, 0.014752088
    %v6072 = vmul.f32 %v6056, %v6071
    %v6073 = vadd.f32 %v6072, 0.112945676
    %v6074 = vmul.f32 %v6056, %v6073
    %v6075 = vadd.f32 %v6074, 0.4994258
    %v6076 = vmul.f32 %v6056, %v6075
    %v6077 = vadd.f32 %v6076, 1.0
    %v6078 = vrcp.pop %v6077
    %v6079 = vmul.f32 %v6077, %v6078
    %v6080 = vsub.f32 1.0, %v6079
    %v6081 = vmul.f32 %v6078, %v6080
    %v6082 = vadd.f32 %v6078, %v6081
    %vm6083 = vweird.f32 %v6077
    %vm6084 = vweird.f32 %v6078
    %vm6085 = vmor %vm6083, %vm6084
    %v6086 = vsel %vm6085, %v6078, %v6082
    %v6087 = vand.u32 2147483647, %v6077
    %vm6088 = vcmp.eq.f32.partialorder %v6087, 8.507059e+37
    %v6089 = vand.u32 %v6077, 2147483648
    %v6090 = vor.u32 1.1754944e-38, %v6089
    %v6091 = vsel %vm6088, %v6090, %v6086
    %v6092 = vmul.f32 %v6067, %v6091
    %v6093 = vmin.f32 %v6092, 1.0
    %v6094 = vmax.f32 %v6093, -1.0
    %v6095 = vmul.f32 %v5853, %v5853
    %v6096 = vmin.f32 16.0, %v6095
    %v6097 = vmul.f32 %v6096, 2.1237322e-06
    %v6098 = vadd.f32 %v6097, 0.00028619796
    %v6099 = vmul.f32 %v6096, %v6098
    %v6100 = vadd.f32 %v6099, 0.0036580483
    %v6101 = vmul.f32 %v6096, %v6100
    %v6102 = vadd.f32 %v6101, 0.05243302
    %v6103 = vmul.f32 %v6096, %v6102
    %v6104 = vadd.f32 %v6103, 0.18741608
    %v6105 = vmul.f32 %v6096, %v6104
    %v6106 = vadd.f32 %v6105, 1.1283791
    %v6107 = vmul.f32 %v5853, %v6106
    %v6108 = vmul.f32 %v6096, 3.8918573e-05
    %v6109 = vadd.f32 %v6108, 0.001143296
    %v6110 = vmul.f32 %v6096, %v6109
    %v6111 = vadd.f32 %v6110, 0.014752088
    %v6112 = vmul.f32 %v6096, %v6111
    %v6113 = vadd.f32 %v6112, 0.112945676
    %v6114 = vmul.f32 %v6096, %v6113
    %v6115 = vadd.f32 %v6114, 0.4994258
    %v6116 = vmul.f32 %v6096, %v6115
    %v6117 = vadd.f32 %v6116, 1.0
    %v6118 = vrcp.pop %v6117
    %v6119 = vmul.f32 %v6117, %v6118
    %v6120 = vsub.f32 1.0, %v6119
    %v6121 = vmul.f32 %v6118, %v6120
    %v6122 = vadd.f32 %v6118, %v6121
    %vm6123 = vweird.f32 %v6117
    %vm6124 = vweird.f32 %v6118
    %vm6125 = vmor %vm6123, %vm6124
    %v6126 = vsel %vm6125, %v6118, %v6122
    %v6127 = vand.u32 2147483647, %v6117
    %vm6128 = vcmp.eq.f32.partialorder %v6127, 8.507059e+37
    %v6129 = vand.u32 %v6117, 2147483648
    %v6130 = vor.u32 1.1754944e-38, %v6129
    %v6131 = vsel %vm6128, %v6130, %v6126
    %v6132 = vmul.f32 %v6107, %v6131
    %v6133 = vmin.f32 %v6132, 1.0
    %v6134 = vmax.f32 %v6133, -1.0
    %v6135 = vmul.f32 %v5854, %v5854
    %v6136 = vmin.f32 16.0, %v6135
    %v6137 = vmul.f32 %v6136, 2.1237322e-06
    %v6138 = vadd.f32 %v6137, 0.00028619796
    %v6139 = vmul.f32 %v6136, %v6138
    %v6140 = vadd.f32 %v6139, 0.0036580483
    %v6141 = vmul.f32 %v6136, %v6140
    %v6142 = vadd.f32 %v6141, 0.05243302
    %v6143 = vmul.f32 %v6136, %v6142
    %v6144 = vadd.f32 %v6143, 0.18741608
    %v6145 = vmul.f32 %v6136, %v6144
    %v6146 = vadd.f32 %v6145, 1.1283791
    %v6147 = vmul.f32 %v5854, %v6146
    %v6148 = vmul.f32 %v6136, 3.8918573e-05
    %v6149 = vadd.f32 %v6148, 0.001143296
    %v6150 = vmul.f32 %v6136, %v6149
    %v6151 = vadd.f32 %v6150, 0.014752088
    %v6152 = vmul.f32 %v6136, %v6151
    %v6153 = vadd.f32 %v6152, 0.112945676
    %v6154 = vmul.f32 %v6136, %v6153
    %v6155 = vadd.f32 %v6154, 0.4994258
    %v6156 = vmul.f32 %v6136, %v6155
    %v6157 = vadd.f32 %v6156, 1.0
    %v6158 = vrcp.pop %v6157
    %v6159 = vmul.f32 %v6157, %v6158
    %v6160 = vsub.f32 1.0, %v6159
    %v6161 = vmul.f32 %v6158, %v6160
    %v6162 = vadd.f32 %v6158, %v6161
    %vm6163 = vweird.f32 %v6157
    %vm6164 = vweird.f32 %v6158
    %vm6165 = vmor %vm6163, %vm6164
    %v6166 = vsel %vm6165, %v6158, %v6162
    %v6167 = vand.u32 2147483647, %v6157
    %vm6168 = vcmp.eq.f32.partialorder %v6167, 8.507059e+37
    %v6169 = vand.u32 %v6157, 2147483648
    %v6170 = vor.u32 1.1754944e-38, %v6169
    %v6171 = vsel %vm6168, %v6170, %v6166
    %v6172 = vmul.f32 %v6147, %v6171
    %v6173 = vmin.f32 %v6172, 1.0
    %v6174 = vmax.f32 %v6173, -1.0
    %v6175 = vadd.f32 %v5894, 1.0
    %v6176 = vadd.f32 %v5934, 1.0
    %v6177 = vadd.f32 %v5974, 1.0
    %v6178 = vadd.f32 %v6014, 1.0
    %v6179 = vadd.f32 %v6054, 1.0
    %v6180 = vadd.f32 %v6094, 1.0
    %v6181 = vadd.f32 %v6134, 1.0
    %v6182 = vadd.f32 %v6174, 1.0
    %v6183 = vmul.f32 %v5839, %v6175
    %v6184 = vmul.f32 %v5840, %v6176
    %v6185 = vmul.f32 %v5841, %v6177
    %v6186 = vmul.f32 %v5842, %v6178
    %v6187 = vmul.f32 %v5843, %v6179
    %v6188 = vmul.f32 %v5844, %v6180
    %v6189 = vmul.f32 %v5845, %v6181
    %v6190 = vmul.f32 %v5846, %v6182
    %s6191 = scalar_lea.vmem [#allocation4], 38
    %v6192 = vld [vmem:[%s6191] ss:$8 sm:$0x3]
    %v6194 = vperm.slane %v6192, 0
    %v6195 = vperm.slane %v6192, 1
    %v6198 = vadd.f32 %v1004, %v6194
    %v6199 = vadd.f32 %v1017, %v6195
    %v6200 = vmul.f32 %v6198, 0.5
    %v6201 = vmul.f32 %v6199, 0.5
    %v6202 = vmul.f32 %v6198, 0.70710677
    %v6203 = vmul.f32 %v6199, 0.70710677
    %v6204 = vmul.f32 %v6202, %v6202
    %v6205 = vmin.f32 16.0, %v6204
    %v6206 = vmul.f32 %v6205, 2.1237322e-06
    %v6207 = vadd.f32 %v6206, 0.00028619796
    %v6208 = vmul.f32 %v6205, %v6207
    %v6209 = vadd.f32 %v6208, 0.0036580483
    %v6210 = vmul.f32 %v6205, %v6209
    %v6211 = vadd.f32 %v6210, 0.05243302
    %v6212 = vmul.f32 %v6205, %v6211
    %v6213 = vadd.f32 %v6212, 0.18741608
    %v6214 = vmul.f32 %v6205, %v6213
    %v6215 = vadd.f32 %v6214, 1.1283791
    %v6216 = vmul.f32 %v6202, %v6215
    %v6217 = vmul.f32 %v6205, 3.8918573e-05
    %v6218 = vadd.f32 %v6217, 0.001143296
    %v6219 = vmul.f32 %v6205, %v6218
    %v6220 = vadd.f32 %v6219, 0.014752088
    %v6221 = vmul.f32 %v6205, %v6220
    %v6222 = vadd.f32 %v6221, 0.112945676
    %v6223 = vmul.f32 %v6205, %v6222
    %v6224 = vadd.f32 %v6223, 0.4994258
    %v6225 = vmul.f32 %v6205, %v6224
    %v6226 = vadd.f32 %v6225, 1.0
    %v6227 = vrcp.pop %v6226
    %v6228 = vmul.f32 %v6226, %v6227
    %v6229 = vsub.f32 1.0, %v6228
    %v6230 = vmul.f32 %v6227, %v6229
    %v6231 = vadd.f32 %v6227, %v6230
    %vm6232 = vweird.f32 %v6226
    %vm6233 = vweird.f32 %v6227
    %vm6234 = vmor %vm6232, %vm6233
    %v6235 = vsel %vm6234, %v6227, %v6231
    %v6236 = vand.u32 2147483647, %v6226
    %vm6237 = vcmp.eq.f32.partialorder %v6236, 8.507059e+37
    %v6238 = vand.u32 %v6226, 2147483648
    %v6239 = vor.u32 1.1754944e-38, %v6238
    %v6240 = vsel %vm6237, %v6239, %v6235
    %v6241 = vmul.f32 %v6216, %v6240
    %v6242 = vmin.f32 %v6241, 1.0
    %v6243 = vmax.f32 %v6242, -1.0
    %v6244 = vmul.f32 %v6203, %v6203
    %v6245 = vmin.f32 16.0, %v6244
    %v6246 = vmul.f32 %v6245, 2.1237322e-06
    %v6247 = vadd.f32 %v6246, 0.00028619796
    %v6248 = vmul.f32 %v6245, %v6247
    %v6249 = vadd.f32 %v6248, 0.0036580483
    %v6250 = vmul.f32 %v6245, %v6249
    %v6251 = vadd.f32 %v6250, 0.05243302
    %v6252 = vmul.f32 %v6245, %v6251
    %v6253 = vadd.f32 %v6252, 0.18741608
    %v6254 = vmul.f32 %v6245, %v6253
    %v6255 = vadd.f32 %v6254, 1.1283791
    %v6256 = vmul.f32 %v6203, %v6255
    %v6257 = vmul.f32 %v6245, 3.8918573e-05
    %v6258 = vadd.f32 %v6257, 0.001143296
    %v6259 = vmul.f32 %v6245, %v6258
    %v6260 = vadd.f32 %v6259, 0.014752088
    %v6261 = vmul.f32 %v6245, %v6260
    %v6262 = vadd.f32 %v6261, 0.112945676
    %v6263 = vmul.f32 %v6245, %v6262
    %v6264 = vadd.f32 %v6263, 0.4994258
    %v6265 = vmul.f32 %v6245, %v6264
    %v6266 = vadd.f32 %v6265, 1.0
    %v6267 = vrcp.pop %v6266
    %v6268 = vmul.f32 %v6266, %v6267
    %v6269 = vsub.f32 1.0, %v6268
    %v6270 = vmul.f32 %v6267, %v6269
    %v6271 = vadd.f32 %v6267, %v6270
    %vm6272 = vweird.f32 %v6266
    %vm6273 = vweird.f32 %v6267
    %vm6274 = vmor %vm6272, %vm6273
    %v6275 = vsel %vm6274, %v6267, %v6271
    %v6276 = vand.u32 2147483647, %v6266
    %vm6277 = vcmp.eq.f32.partialorder %v6276, 8.507059e+37
    %v6278 = vand.u32 %v6266, 2147483648
    %v6279 = vor.u32 1.1754944e-38, %v6278
    %v6280 = vsel %vm6277, %v6279, %v6275
    %v6281 = vmul.f32 %v6256, %v6280
    %v6282 = vmin.f32 %v6281, 1.0
    %v6283 = vmax.f32 %v6282, -1.0
    %v6284 = vadd.f32 %v6243, 1.0
    %v6285 = vadd.f32 %v6283, 1.0
    %v6286 = vmul.f32 %v6200, %v6284
    %v6287 = vmul.f32 %v6201, %v6285
    %v6290 = vrot.slane %v6287, 7
    %v6291 = vsel %vm2812, %v6286, %v6290
    %v6292 = vsel %vm3305, %v6286, %v6290
    %v6293 = vrot.slane %v6292, 1
    %v6294 = vperm.slane %v6291, 0
    %v6295 = vperm.slane %v6291, 1
    %v6296 = vperm.slane %v6293, 0
    %v6297 = vperm.slane %v6293, 1
    %v6302 = vadd.f32 %v6183, %v6294
    %v6303 = vadd.f32 %v6184, %v6295
    %v6304 = vadd.f32 %v6185, %v6294
    %v6305 = vadd.f32 %v6186, %v6295
    %v6306 = vadd.f32 %v6187, %v6296
    %v6307 = vadd.f32 %v6188, %v6297
    %v6308 = vadd.f32 %v6189, %v6296
    %v6309 = vadd.f32 %v6190, %v6297
    %v6310 = vrot.slane %v6302, 7
    %v6311 = vrot.slane %v6303, 7
    %v6312 = vrot.slane %v6304, 7
    %v6313 = vrot.slane %v6305, 7
    %v6314 = vrot.slane %v6306, 7
    %v6315 = vrot.slane %v6307, 7
    %v6316 = vrot.slane %v6308, 7
    %v6317 = vrot.slane %v6309, 7
    %v6318 = vsel %vm1058, %v6314, %v6316
    %v6319 = vsel %vm1058, %v6315, %v6317
    %v6320 = vsel %vm1058, %v6312, %v6314
    %v6321 = vsel %vm1058, %v6313, %v6315
    %v6322 = vsel %vm1058, %v6310, %v6312
    %v6323 = vsel %vm1058, %v6311, %v6313
    %v6324 = vsel %vm1058, %v6316, %v6310
    %v6325 = vsel %vm1058, %v6317, %v6311
    %v6326 = vsel %vm1067, 0.0, %v6324
    %v6327 = vsel %vm1067, 0.0, %v6325
    %v6328 = vsel %vm1068, 0.0, %v6322
    %v6329 = vsel %vm1068, 0.0, %v6323
    %v6330 = vsel %vm1069, 0.0, %v6320
    %v6331 = vsel %vm1069, 0.0, %v6321
    %v6332 = vsel %vm1070, 0.0, %v6318
    %v6333 = vsel %vm1070, 0.0, %v6319
    %v6334 = vrot.slane %v6302, 1
    %v6335 = vrot.slane %v6303, 1
    %v6336 = vrot.slane %v6304, 1
    %v6337 = vrot.slane %v6305, 1
    %v6338 = vrot.slane %v6306, 1
    %v6339 = vrot.slane %v6307, 1
    %v6340 = vrot.slane %v6308, 1
    %v6341 = vrot.slane %v6309, 1
    %v6342 = vsel %vm1083, %v6338, %v6340
    %v6343 = vsel %vm1083, %v6339, %v6341
    %v6344 = vsel %vm1083, %v6336, %v6338
    %v6345 = vsel %vm1083, %v6337, %v6339
    %v6346 = vsel %vm1083, %v6334, %v6336
    %v6347 = vsel %vm1083, %v6335, %v6337
    %v6348 = vsel %vm1083, %v6340, %v6334
    %v6349 = vsel %vm1083, %v6341, %v6335
    %v6350 = vsel %vm1092, 0.0, %v6346
    %v6351 = vsel %vm1092, 0.0, %v6347
    %v6352 = vsel %vm1093, 0.0, %v6344
    %v6353 = vsel %vm1093, 0.0, %v6345
    %v6354 = vsel %vm1094, 0.0, %v6342
    %v6355 = vsel %vm1094, 0.0, %v6343
    %v6356 = vsel %vm1095, 0.0, %v6348
    %v6357 = vsel %vm1095, 0.0, %v6349
    %v6358 = vpack.c.bf16 %v6328, %v6326
    %v6359 = vpack.c.bf16 %v6329, %v6327
    %v6360 = vpack.c.bf16 %v6332, %v6330
    %v6361 = vpack.c.bf16 %v6333, %v6331
    %v6362 = vld [vmem:[#allocation2 + $0xb50] sm:$0xff]
    %v6363 = vld [vmem:[#allocation2 + $0xb58] sm:$0xff]
    %v6364 = vld [vmem:[#allocation2 + $0xb60] sm:$0xff]
    %v6365 = vld [vmem:[#allocation2 + $0xb68] sm:$0xff]
    %v6366 = vld [vmem:[#allocation2 + $0xb70] sm:$0xff]
    %v6367 = vld [vmem:[#allocation2 + $0xb78] sm:$0xff]
    %v6368 = vld [vmem:[#allocation2 + $0xb80] sm:$0xff]
    %v6369 = vld [vmem:[#allocation2 + $0xb88] sm:$0xff]
    %v6370 = vld [vmem:[#allocation2 + $0xb90] sm:$0xff]
    %v6371 = vld [vmem:[#allocation2 + $0xb98] sm:$0xff]
    %v6372 = vld [vmem:[#allocation2 + $0xba0] sm:$0xff]
    %v6373 = vld [vmem:[#allocation2 + $0xba8] sm:$0xff]
    %v6374 = vld [vmem:[#allocation2 + $0xbb0] sm:$0xff]
    %v6375 = vld [vmem:[#allocation2 + $0xbb8] sm:$0xff]
    %v6376 = vld [vmem:[#allocation2 + $0xbc0] sm:$0xff]
    %v6377 = vld [vmem:[#allocation2 + $0xbc8] sm:$0xff]
    %v6378 = vld [vmem:[#allocation2 + $0xbd0] sm:$0xff]
    %v6379 = vld [vmem:[#allocation2 + $0xbd8] sm:$0xff]
    %v6380 = vld [vmem:[#allocation2 + $0xbe0] sm:$0xff]
    %v6381 = vld [vmem:[#allocation2 + $0xbe8] sm:$0xff]
    %v6382 = vld [vmem:[#allocation2 + $0xbf0] sm:$0xff]
    %v6383 = vld [vmem:[#allocation2 + $0xbf8] sm:$0xff]
    %v6384 = vld [vmem:[#allocation2 + $0xc00] sm:$0xff]
    %v6385 = vld [vmem:[#allocation2 + $0xc08] sm:$0xff]
    %v6386 = vld [vmem:[#allocation2 + $0xc10] sm:$0xff]
    %v6387 = vld [vmem:[#allocation2 + $0xc18] sm:$0xff]
    %v6388 = vld [vmem:[#allocation2 + $0xc20] sm:$0xff]
    %v6389 = vld [vmem:[#allocation2 + $0xc28] sm:$0xff]
    %v6390 = vld [vmem:[#allocation2 + $0xc30] sm:$0xff]
    %v6391 = vld [vmem:[#allocation2 + $0xc38] sm:$0xff]
    %v6392 = vld [vmem:[#allocation2 + $0xc40] sm:$0xff]
    %v6393 = vld [vmem:[#allocation2 + $0xc48] sm:$0xff]
    %v6394 = vpack.c.bf16 %v6304, %v6302
    %v6395 = vpack.c.bf16 %v6305, %v6303
    %v6396 = vpack.c.bf16 %v6308, %v6306
    %v6397 = vpack.c.bf16 %v6309, %v6307
    %v6398 = vld [vmem:[#allocation2 + $0xc50] sm:$0xff]
    %v6399 = vld [vmem:[#allocation2 + $0xc58] sm:$0xff]
    %v6400 = vld [vmem:[#allocation2 + $0xc60] sm:$0xff]
    %v6401 = vld [vmem:[#allocation2 + $0xc68] sm:$0xff]
    %v6402 = vld [vmem:[#allocation2 + $0xc70] sm:$0xff]
    %v6403 = vld [vmem:[#allocation2 + $0xc78] sm:$0xff]
    %v6404 = vld [vmem:[#allocation2 + $0xc80] sm:$0xff]
    %v6405 = vld [vmem:[#allocation2 + $0xc88] sm:$0xff]
    %v6406 = vld [vmem:[#allocation2 + $0xc90] sm:$0xff]
    %v6407 = vld [vmem:[#allocation2 + $0xc98] sm:$0xff]
    %v6408 = vld [vmem:[#allocation2 + $0xca0] sm:$0xff]
    %v6409 = vld [vmem:[#allocation2 + $0xca8] sm:$0xff]
    %v6410 = vld [vmem:[#allocation2 + $0xcb0] sm:$0xff]
    %v6411 = vld [vmem:[#allocation2 + $0xcb8] sm:$0xff]
    %v6412 = vld [vmem:[#allocation2 + $0xcc0] sm:$0xff]
    %v6413 = vld [vmem:[#allocation2 + $0xcc8] sm:$0xff]
    %v6414 = vld [vmem:[#allocation2 + $0xcd0] sm:$0xff]
    %v6415 = vld [vmem:[#allocation2 + $0xcd8] sm:$0xff]
    %v6416 = vld [vmem:[#allocation2 + $0xce0] sm:$0xff]
    %v6417 = vld [vmem:[#allocation2 + $0xce8] sm:$0xff]
    %v6418 = vld [vmem:[#allocation2 + $0xcf0] sm:$0xff]
    %v6419 = vld [vmem:[#allocation2 + $0xcf8] sm:$0xff]
    %v6420 = vld [vmem:[#allocation2 + $0xd00] sm:$0xff]
    %v6421 = vld [vmem:[#allocation2 + $0xd08] sm:$0xff]
    %v6422 = vld [vmem:[#allocation2 + $0xd10] sm:$0xff]
    %v6423 = vld [vmem:[#allocation2 + $0xd18] sm:$0xff]
    %v6424 = vld [vmem:[#allocation2 + $0xd20] sm:$0xff]
    %v6425 = vld [vmem:[#allocation2 + $0xd28] sm:$0xff]
    %v6426 = vld [vmem:[#allocation2 + $0xd30] sm:$0xff]
    %v6427 = vld [vmem:[#allocation2 + $0xd38] sm:$0xff]
    %v6428 = vld [vmem:[#allocation2 + $0xd40] sm:$0xff]
    %v6429 = vld [vmem:[#allocation2 + $0xd48] sm:$0xff]
    %v6462 = vunpack.c.l.b16 %v6398
    %v6463 = vunpack.c.h.b16 %v6398
    %v6464 = vunpack.c.l.b16 %v6399
    %v6465 = vunpack.c.h.b16 %v6399
    %v6466 = vunpack.c.l.b16 %v6400
    %v6467 = vunpack.c.h.b16 %v6400
    %v6468 = vunpack.c.l.b16 %v6401
    %v6469 = vunpack.c.h.b16 %v6401
    %v6470 = vunpack.c.l.b16 %v6402
    %v6471 = vunpack.c.h.b16 %v6402
    %v6472 = vunpack.c.l.b16 %v6403
    %v6473 = vunpack.c.h.b16 %v6403
    %v6474 = vunpack.c.l.b16 %v6404
    %v6475 = vunpack.c.h.b16 %v6404
    %v6476 = vunpack.c.l.b16 %v6405
    %v6477 = vunpack.c.h.b16 %v6405
    %v6478 = vunpack.c.l.b16 %v6406
    %v6479 = vunpack.c.h.b16 %v6406
    %v6480 = vunpack.c.l.b16 %v6407
    %v6481 = vunpack.c.h.b16 %v6407
    %v6482 = vunpack.c.l.b16 %v6408
    %v6483 = vunpack.c.h.b16 %v6408
    %v6484 = vunpack.c.l.b16 %v6409
    %v6485 = vunpack.c.h.b16 %v6409
    %v6486 = vunpack.c.l.b16 %v6410
    %v6487 = vunpack.c.h.b16 %v6410
    %v6488 = vunpack.c.l.b16 %v6411
    %v6489 = vunpack.c.h.b16 %v6411
    %v6490 = vunpack.c.l.b16 %v6412
    %v6491 = vunpack.c.h.b16 %v6412
    %v6492 = vunpack.c.l.b16 %v6413
    %v6493 = vunpack.c.h.b16 %v6413
    %v6494 = vunpack.c.l.b16 %v6414
    %v6495 = vunpack.c.h.b16 %v6414
    %v6496 = vunpack.c.l.b16 %v6415
    %v6497 = vunpack.c.h.b16 %v6415
    %v6498 = vunpack.c.l.b16 %v6416
    %v6499 = vunpack.c.h.b16 %v6416
    %v6500 = vunpack.c.l.b16 %v6417
    %v6501 = vunpack.c.h.b16 %v6417
    %v6502 = vunpack.c.l.b16 %v6418
    %v6503 = vunpack.c.h.b16 %v6418
    %v6504 = vunpack.c.l.b16 %v6419
    %v6505 = vunpack.c.h.b16 %v6419
    %v6506 = vunpack.c.l.b16 %v6420
    %v6507 = vunpack.c.h.b16 %v6420
    %v6508 = vunpack.c.l.b16 %v6421
    %v6509 = vunpack.c.h.b16 %v6421
    %v6510 = vunpack.c.l.b16 %v6422
    %v6511 = vunpack.c.h.b16 %v6422
    %v6512 = vunpack.c.l.b16 %v6423
    %v6513 = vunpack.c.h.b16 %v6423
    %v6514 = vunpack.c.l.b16 %v6424
    %v6515 = vunpack.c.h.b16 %v6424
    %v6516 = vunpack.c.l.b16 %v6425
    %v6517 = vunpack.c.h.b16 %v6425
    %v6518 = vunpack.c.l.b16 %v6426
    %v6519 = vunpack.c.h.b16 %v6426
    %v6520 = vunpack.c.l.b16 %v6427
    %v6521 = vunpack.c.h.b16 %v6427
    %v6522 = vunpack.c.l.b16 %v6428
    %v6523 = vunpack.c.h.b16 %v6428
    %v6524 = vunpack.c.l.b16 %v6429
    %v6525 = vunpack.c.h.b16 %v6429
    %v6526 = vpack.c.b16 %v6464, %v6462
    %v6527 = vpack.c.b16 %v6465, %v6463
    %v6528 = vpack.c.b16 %v6468, %v6466
    %v6529 = vpack.c.b16 %v6469, %v6467
    %v6530 = vpack.c.b16 %v6472, %v6470
    %v6531 = vpack.c.b16 %v6473, %v6471
    %v6532 = vpack.c.b16 %v6476, %v6474
    %v6533 = vpack.c.b16 %v6477, %v6475
    %v6534 = vpack.c.b16 %v6480, %v6478
    %v6535 = vpack.c.b16 %v6481, %v6479
    %v6536 = vpack.c.b16 %v6484, %v6482
    %v6537 = vpack.c.b16 %v6485, %v6483
    %v6538 = vpack.c.b16 %v6488, %v6486
    %v6539 = vpack.c.b16 %v6489, %v6487
    %v6540 = vpack.c.b16 %v6492, %v6490
    %v6541 = vpack.c.b16 %v6493, %v6491
    %v6542 = vpack.c.b16 %v6496, %v6494
    %v6543 = vpack.c.b16 %v6497, %v6495
    %v6544 = vpack.c.b16 %v6500, %v6498
    %v6545 = vpack.c.b16 %v6501, %v6499
    %v6546 = vpack.c.b16 %v6504, %v6502
    %v6547 = vpack.c.b16 %v6505, %v6503
    %v6548 = vpack.c.b16 %v6508, %v6506
    %v6549 = vpack.c.b16 %v6509, %v6507
    %v6550 = vpack.c.b16 %v6512, %v6510
    %v6551 = vpack.c.b16 %v6513, %v6511
    %v6552 = vpack.c.b16 %v6516, %v6514
    %v6553 = vpack.c.b16 %v6517, %v6515
    %v6554 = vpack.c.b16 %v6520, %v6518
    %v6555 = vpack.c.b16 %v6521, %v6519
    %v6556 = vpack.c.b16 %v6524, %v6522
    %v6557 = vpack.c.b16 %v6525, %v6523
    %6590 = vmatpush.bf16.msra.mxu0 %v6540
    %6591 = vmatpush.bf16.msra.mxu0 %v6538
    %6592 = vmatpush.bf16.msra.mxu0 %v6536
    %6593 = vmatpush.bf16.msra.mxu0 %v6534
    %6594 = vmatpush.bf16.msra.mxu0 %v6532
    %6595 = vmatpush.bf16.msra.mxu0 %v6530
    %6596 = vmatpush.bf16.msra.mxu0 %v6528
    %6597 = vmatpush.bf16.msra.mxu0 %v6526
    %6598 = vmatmul.bf16.gmra.mxu0 %v6394
    %v6599 = vpop.f32.mrf.mxu0
    %v6600 = vadd.f32 0.0, %v6599
    %v6601 = vpop.f32.mrf.mxu0
    %v6602 = vadd.f32 0.0, %v6601
    %6603 = vmatmul.bf16.gmra.mxu0 %v6396
    %v6604 = vpop.f32.mrf.mxu0
    %v6605 = vadd.f32 0.0, %v6604
    %v6606 = vpop.f32.mrf.mxu0
    %v6607 = vadd.f32 0.0, %v6606
    %6608 = vdwg.mxu0
    %6609 = vmatpush.bf16.msra.mxu0 %v6556
    %6610 = vmatpush.bf16.msra.mxu0 %v6554
    %6611 = vmatpush.bf16.msra.mxu0 %v6552
    %6612 = vmatpush.bf16.msra.mxu0 %v6550
    %6613 = vmatpush.bf16.msra.mxu0 %v6548
    %6614 = vmatpush.bf16.msra.mxu0 %v6546
    %6615 = vmatpush.bf16.msra.mxu0 %v6544
    %6616 = vmatpush.bf16.msra.mxu0 %v6542
    %6617 = vmatmul.bf16.gmra.mxu0 %v6395
    %v6618 = vpop.f32.mrf.mxu0
    %v6619 = vadd.f32 %v6600, %v6618
    %v6620 = vpop.f32.mrf.mxu0
    %v6621 = vadd.f32 %v6602, %v6620
    %6622 = vmatmul.bf16.gmra.mxu0 %v6397
    %v6623 = vpop.f32.mrf.mxu0
    %v6624 = vadd.f32 %v6605, %v6623
    %v6625 = vpop.f32.mrf.mxu0
    %v6626 = vadd.f32 %v6607, %v6625
    %6627 = vdwg.mxu0
    %6628 = vmatpush.bf16.msra.mxu0 %v6541
    %6629 = vmatpush.bf16.msra.mxu0 %v6539
    %6630 = vmatpush.bf16.msra.mxu0 %v6537
    %6631 = vmatpush.bf16.msra.mxu0 %v6535
    %6632 = vmatpush.bf16.msra.mxu0 %v6533
    %6633 = vmatpush.bf16.msra.mxu0 %v6531
    %6634 = vmatpush.bf16.msra.mxu0 %v6529
    %6635 = vmatpush.bf16.msra.mxu0 %v6527
    %6636 = vmatmul.bf16.gmra.mxu0 %v6394
    %v6637 = vpop.f32.mrf.mxu0
    %v6638 = vadd.f32 0.0, %v6637
    %v6639 = vpop.f32.mrf.mxu0
    %v6640 = vadd.f32 0.0, %v6639
    %6641 = vmatmul.bf16.gmra.mxu0 %v6396
    %v6642 = vpop.f32.mrf.mxu0
    %v6643 = vadd.f32 0.0, %v6642
    %v6644 = vpop.f32.mrf.mxu0
    %v6645 = vadd.f32 0.0, %v6644
    %6646 = vdwg.mxu0
    %6647 = vmatpush.bf16.msra.mxu0 %v6557
    %6648 = vmatpush.bf16.msra.mxu0 %v6555
    %6649 = vmatpush.bf16.msra.mxu0 %v6553
    %6650 = vmatpush.bf16.msra.mxu0 %v6551
    %6651 = vmatpush.bf16.msra.mxu0 %v6549
    %6652 = vmatpush.bf16.msra.mxu0 %v6547
    %6653 = vmatpush.bf16.msra.mxu0 %v6545
    %6654 = vmatpush.bf16.msra.mxu0 %v6543
    %6655 = vmatmul.bf16.gmra.mxu0 %v6395
    %v6656 = vpop.f32.mrf.mxu0
    %v6657 = vadd.f32 %v6638, %v6656
    %v6658 = vpop.f32.mrf.mxu0
    %v6659 = vadd.f32 %v6640, %v6658
    %6660 = vmatmul.bf16.gmra.mxu0 %v6397
    %v6661 = vpop.f32.mrf.mxu0
    %v6662 = vadd.f32 %v6643, %v6661
    %v6663 = vpop.f32.mrf.mxu0
    %v6664 = vadd.f32 %v6645, %v6663
    %6665 = vdwg.mxu0
    %v6698 = vunpack.c.l.b16 %v6362
    %v6699 = vunpack.c.h.b16 %v6362
    %v6700 = vunpack.c.l.b16 %v6363
    %v6701 = vunpack.c.h.b16 %v6363
    %v6702 = vunpack.c.l.b16 %v6364
    %v6703 = vunpack.c.h.b16 %v6364
    %v6704 = vunpack.c.l.b16 %v6365
    %v6705 = vunpack.c.h.b16 %v6365
    %v6706 = vunpack.c.l.b16 %v6366
    %v6707 = vunpack.c.h.b16 %v6366
    %v6708 = vunpack.c.l.b16 %v6367
    %v6709 = vunpack.c.h.b16 %v6367
    %v6710 = vunpack.c.l.b16 %v6368
    %v6711 = vunpack.c.h.b16 %v6368
    %v6712 = vunpack.c.l.b16 %v6369
    %v6713 = vunpack.c.h.b16 %v6369
    %v6714 = vunpack.c.l.b16 %v6370
    %v6715 = vunpack.c.h.b16 %v6370
    %v6716 = vunpack.c.l.b16 %v6371
    %v6717 = vunpack.c.h.b16 %v6371
    %v6718 = vunpack.c.l.b16 %v6372
    %v6719 = vunpack.c.h.b16 %v6372
    %v6720 = vunpack.c.l.b16 %v6373
    %v6721 = vunpack.c.h.b16 %v6373
    %v6722 = vunpack.c.l.b16 %v6374
    %v6723 = vunpack.c.h.b16 %v6374
    %v6724 = vunpack.c.l.b16 %v6375
    %v6725 = vunpack.c.h.b16 %v6375
    %v6726 = vunpack.c.l.b16 %v6376
    %v6727 = vunpack.c.h.b16 %v6376
    %v6728 = vunpack.c.l.b16 %v6377
    %v6729 = vunpack.c.h.b16 %v6377
    %v6730 = vunpack.c.l.b16 %v6378
    %v6731 = vunpack.c.h.b16 %v6378
    %v6732 = vunpack.c.l.b16 %v6379
    %v6733 = vunpack.c.h.b16 %v6379
    %v6734 = vunpack.c.l.b16 %v6380
    %v6735 = vunpack.c.h.b16 %v6380
    %v6736 = vunpack.c.l.b16 %v6381
    %v6737 = vunpack.c.h.b16 %v6381
    %v6738 = vunpack.c.l.b16 %v6382
    %v6739 = vunpack.c.h.b16 %v6382
    %v6740 = vunpack.c.l.b16 %v6383
    %v6741 = vunpack.c.h.b16 %v6383
    %v6742 = vunpack.c.l.b16 %v6384
    %v6743 = vunpack.c.h.b16 %v6384
    %v6744 = vunpack.c.l.b16 %v6385
    %v6745 = vunpack.c.h.b16 %v6385
    %v6746 = vunpack.c.l.b16 %v6386
    %v6747 = vunpack.c.h.b16 %v6386
    %v6748 = vunpack.c.l.b16 %v6387
    %v6749 = vunpack.c.h.b16 %v6387
    %v6750 = vunpack.c.l.b16 %v6388
    %v6751 = vunpack.c.h.b16 %v6388
    %v6752 = vunpack.c.l.b16 %v6389
    %v6753 = vunpack.c.h.b16 %v6389
    %v6754 = vunpack.c.l.b16 %v6390
    %v6755 = vunpack.c.h.b16 %v6390
    %v6756 = vunpack.c.l.b16 %v6391
    %v6757 = vunpack.c.h.b16 %v6391
    %v6758 = vunpack.c.l.b16 %v6392
    %v6759 = vunpack.c.h.b16 %v6392
    %v6760 = vunpack.c.l.b16 %v6393
    %v6761 = vunpack.c.h.b16 %v6393
    %v6762 = vpack.c.b16 %v6700, %v6698
    %v6763 = vpack.c.b16 %v6701, %v6699
    %v6764 = vpack.c.b16 %v6704, %v6702
    %v6765 = vpack.c.b16 %v6705, %v6703
    %v6766 = vpack.c.b16 %v6708, %v6706
    %v6767 = vpack.c.b16 %v6709, %v6707
    %v6768 = vpack.c.b16 %v6712, %v6710
    %v6769 = vpack.c.b16 %v6713, %v6711
    %v6770 = vpack.c.b16 %v6716, %v6714
    %v6771 = vpack.c.b16 %v6717, %v6715
    %v6772 = vpack.c.b16 %v6720, %v6718
    %v6773 = vpack.c.b16 %v6721, %v6719
    %v6774 = vpack.c.b16 %v6724, %v6722
    %v6775 = vpack.c.b16 %v6725, %v6723
    %v6776 = vpack.c.b16 %v6728, %v6726
    %v6777 = vpack.c.b16 %v6729, %v6727
    %v6778 = vpack.c.b16 %v6732, %v6730
    %v6779 = vpack.c.b16 %v6733, %v6731
    %v6780 = vpack.c.b16 %v6736, %v6734
    %v6781 = vpack.c.b16 %v6737, %v6735
    %v6782 = vpack.c.b16 %v6740, %v6738
    %v6783 = vpack.c.b16 %v6741, %v6739
    %v6784 = vpack.c.b16 %v6744, %v6742
    %v6785 = vpack.c.b16 %v6745, %v6743
    %v6786 = vpack.c.b16 %v6748, %v6746
    %v6787 = vpack.c.b16 %v6749, %v6747
    %v6788 = vpack.c.b16 %v6752, %v6750
    %v6789 = vpack.c.b16 %v6753, %v6751
    %v6790 = vpack.c.b16 %v6756, %v6754
    %v6791 = vpack.c.b16 %v6757, %v6755
    %v6792 = vpack.c.b16 %v6760, %v6758
    %v6793 = vpack.c.b16 %v6761, %v6759
    %6826 = vmatpush.bf16.msra.mxu0 %v6776
    %6827 = vmatpush.bf16.msra.mxu0 %v6774
    %6828 = vmatpush.bf16.msra.mxu0 %v6772
    %6829 = vmatpush.bf16.msra.mxu0 %v6770
    %6830 = vmatpush.bf16.msra.mxu0 %v6768
    %6831 = vmatpush.bf16.msra.mxu0 %v6766
    %6832 = vmatpush.bf16.msra.mxu0 %v6764
    %6833 = vmatpush.bf16.msra.mxu0 %v6762
    %6834 = vmatmul.bf16.gmra.mxu0 %v6358
    %v6835 = vpop.f32.mrf.mxu0
    %v6836 = vadd.f32 %v6619, %v6835
    %v6837 = vpop.f32.mrf.mxu0
    %v6838 = vadd.f32 %v6621, %v6837
    %6839 = vmatmul.bf16.gmra.mxu0 %v6360
    %v6840 = vpop.f32.mrf.mxu0
    %v6841 = vadd.f32 %v6624, %v6840
    %v6842 = vpop.f32.mrf.mxu0
    %v6843 = vadd.f32 %v6626, %v6842
    %6844 = vdwg.mxu0
    %6845 = vmatpush.bf16.msra.mxu0 %v6792
    %6846 = vmatpush.bf16.msra.mxu0 %v6790
    %6847 = vmatpush.bf16.msra.mxu0 %v6788
    %6848 = vmatpush.bf16.msra.mxu0 %v6786
    %6849 = vmatpush.bf16.msra.mxu0 %v6784
    %6850 = vmatpush.bf16.msra.mxu0 %v6782
    %6851 = vmatpush.bf16.msra.mxu0 %v6780
    %6852 = vmatpush.bf16.msra.mxu0 %v6778
    %6853 = vmatmul.bf16.gmra.mxu0 %v6359
    %v6854 = vpop.f32.mrf.mxu0
    %v6855 = vadd.f32 %v6836, %v6854
    %v6856 = vpop.f32.mrf.mxu0
    %v6857 = vadd.f32 %v6838, %v6856
    %6858 = vmatmul.bf16.gmra.mxu0 %v6361
    %v6859 = vpop.f32.mrf.mxu0
    %v6860 = vadd.f32 %v6841, %v6859
    %v6861 = vpop.f32.mrf.mxu0
    %v6862 = vadd.f32 %v6843, %v6861
    %6863 = vdwg.mxu0
    %6864 = vmatpush.bf16.msra.mxu0 %v6777
    %6865 = vmatpush.bf16.msra.mxu0 %v6775
    %6866 = vmatpush.bf16.msra.mxu0 %v6773
    %6867 = vmatpush.bf16.msra.mxu0 %v6771
    %6868 = vmatpush.bf16.msra.mxu0 %v6769
    %6869 = vmatpush.bf16.msra.mxu0 %v6767
    %6870 = vmatpush.bf16.msra.mxu0 %v6765
    %6871 = vmatpush.bf16.msra.mxu0 %v6763
    %6872 = vmatmul.bf16.gmra.mxu0 %v6358
    %v6873 = vpop.f32.mrf.mxu0
    %v6874 = vadd.f32 %v6657, %v6873
    %v6875 = vpop.f32.mrf.mxu0
    %v6876 = vadd.f32 %v6659, %v6875
    %6877 = vmatmul.bf16.gmra.mxu0 %v6360
    %v6878 = vpop.f32.mrf.mxu0
    %v6879 = vadd.f32 %v6662, %v6878
    %v6880 = vpop.f32.mrf.mxu0
    %v6881 = vadd.f32 %v6664, %v6880
    %6882 = vdwg.mxu0
    %6883 = vmatpush.bf16.msra.mxu0 %v6793
    %6884 = vmatpush.bf16.msra.mxu0 %v6791
    %6885 = vmatpush.bf16.msra.mxu0 %v6789
    %6886 = vmatpush.bf16.msra.mxu0 %v6787
    %6887 = vmatpush.bf16.msra.mxu0 %v6785
    %6888 = vmatpush.bf16.msra.mxu0 %v6783
    %6889 = vmatpush.bf16.msra.mxu0 %v6781
    %6890 = vmatpush.bf16.msra.mxu0 %v6779
    %6891 = vmatmul.bf16.gmra.mxu0 %v6359
    %v6892 = vpop.f32.mrf.mxu0
    %v6893 = vadd.f32 %v6874, %v6892
    %v6894 = vpop.f32.mrf.mxu0
    %v6895 = vadd.f32 %v6876, %v6894
    %6896 = vmatmul.bf16.gmra.mxu0 %v6361
    %v6897 = vpop.f32.mrf.mxu0
    %v6898 = vadd.f32 %v6879, %v6897
    %v6899 = vpop.f32.mrf.mxu0
    %v6900 = vadd.f32 %v6881, %v6899
    %6901 = vdwg.mxu0
    %v6902 = vpack.c.bf16 %v6352, %v6350
    %v6903 = vpack.c.bf16 %v6353, %v6351
    %v6904 = vpack.c.bf16 %v6356, %v6354
    %v6905 = vpack.c.bf16 %v6357, %v6355
    %v6906 = vld [vmem:[#allocation2 + $0xd50] sm:$0xff]
    %v6907 = vld [vmem:[#allocation2 + $0xd58] sm:$0xff]
    %v6908 = vld [vmem:[#allocation2 + $0xd60] sm:$0xff]
    %v6909 = vld [vmem:[#allocation2 + $0xd68] sm:$0xff]
    %v6910 = vld [vmem:[#allocation2 + $0xd70] sm:$0xff]
    %v6911 = vld [vmem:[#allocation2 + $0xd78] sm:$0xff]
    %v6912 = vld [vmem:[#allocation2 + $0xd80] sm:$0xff]
    %v6913 = vld [vmem:[#allocation2 + $0xd88] sm:$0xff]
    %v6914 = vld [vmem:[#allocation2 + $0xd90] sm:$0xff]
    %v6915 = vld [vmem:[#allocation2 + $0xd98] sm:$0xff]
    %v6916 = vld [vmem:[#allocation2 + $0xda0] sm:$0xff]
    %v6917 = vld [vmem:[#allocation2 + $0xda8] sm:$0xff]
    %v6918 = vld [vmem:[#allocation2 + $0xdb0] sm:$0xff]
    %v6919 = vld [vmem:[#allocation2 + $0xdb8] sm:$0xff]
    %v6920 = vld [vmem:[#allocation2 + $0xdc0] sm:$0xff]
    %v6921 = vld [vmem:[#allocation2 + $0xdc8] sm:$0xff]
    %v6922 = vld [vmem:[#allocation2 + $0xdd0] sm:$0xff]
    %v6923 = vld [vmem:[#allocation2 + $0xdd8] sm:$0xff]
    %v6924 = vld [vmem:[#allocation2 + $0xde0] sm:$0xff]
    %v6925 = vld [vmem:[#allocation2 + $0xde8] sm:$0xff]
    %v6926 = vld [vmem:[#allocation2 + $0xdf0] sm:$0xff]
    %v6927 = vld [vmem:[#allocation2 + $0xdf8] sm:$0xff]
    %v6928 = vld [vmem:[#allocation2 + $0xe00] sm:$0xff]
    %v6929 = vld [vmem:[#allocation2 + $0xe08] sm:$0xff]
    %v6930 = vld [vmem:[#allocation2 + $0xe10] sm:$0xff]
    %v6931 = vld [vmem:[#allocation2 + $0xe18] sm:$0xff]
    %v6932 = vld [vmem:[#allocation2 + $0xe20] sm:$0xff]
    %v6933 = vld [vmem:[#allocation2 + $0xe28] sm:$0xff]
    %v6934 = vld [vmem:[#allocation2 + $0xe30] sm:$0xff]
    %v6935 = vld [vmem:[#allocation2 + $0xe38] sm:$0xff]
    %v6936 = vld [vmem:[#allocation2 + $0xe40] sm:$0xff]
    %v6937 = vld [vmem:[#allocation2 + $0xe48] sm:$0xff]
    %v6970 = vunpack.c.l.b16 %v6906
    %v6971 = vunpack.c.h.b16 %v6906
    %v6972 = vunpack.c.l.b16 %v6907
    %v6973 = vunpack.c.h.b16 %v6907
    %v6974 = vunpack.c.l.b16 %v6908
    %v6975 = vunpack.c.h.b16 %v6908
    %v6976 = vunpack.c.l.b16 %v6909
    %v6977 = vunpack.c.h.b16 %v6909
    %v6978 = vunpack.c.l.b16 %v6910
    %v6979 = vunpack.c.h.b16 %v6910
    %v6980 = vunpack.c.l.b16 %v6911
    %v6981 = vunpack.c.h.b16 %v6911
    %v6982 = vunpack.c.l.b16 %v6912
    %v6983 = vunpack.c.h.b16 %v6912
    %v6984 = vunpack.c.l.b16 %v6913
    %v6985 = vunpack.c.h.b16 %v6913
    %v6986 = vunpack.c.l.b16 %v6914
    %v6987 = vunpack.c.h.b16 %v6914
    %v6988 = vunpack.c.l.b16 %v6915
    %v6989 = vunpack.c.h.b16 %v6915
    %v6990 = vunpack.c.l.b16 %v6916
    %v6991 = vunpack.c.h.b16 %v6916
    %v6992 = vunpack.c.l.b16 %v6917
    %v6993 = vunpack.c.h.b16 %v6917
    %v6994 = vunpack.c.l.b16 %v6918
    %v6995 = vunpack.c.h.b16 %v6918
    %v6996 = vunpack.c.l.b16 %v6919
    %v6997 = vunpack.c.h.b16 %v6919
    %v6998 = vunpack.c.l.b16 %v6920
    %v6999 = vunpack.c.h.b16 %v6920
    %v7000 = vunpack.c.l.b16 %v6921
    %v7001 = vunpack.c.h.b16 %v6921
    %v7002 = vunpack.c.l.b16 %v6922
    %v7003 = vunpack.c.h.b16 %v6922
    %v7004 = vunpack.c.l.b16 %v6923
    %v7005 = vunpack.c.h.b16 %v6923
    %v7006 = vunpack.c.l.b16 %v6924
    %v7007 = vunpack.c.h.b16 %v6924
    %v7008 = vunpack.c.l.b16 %v6925
    %v7009 = vunpack.c.h.b16 %v6925
    %v7010 = vunpack.c.l.b16 %v6926
    %v7011 = vunpack.c.h.b16 %v6926
    %v7012 = vunpack.c.l.b16 %v6927
    %v7013 = vunpack.c.h.b16 %v6927
    %v7014 = vunpack.c.l.b16 %v6928
    %v7015 = vunpack.c.h.b16 %v6928
    %v7016 = vunpack.c.l.b16 %v6929
    %v7017 = vunpack.c.h.b16 %v6929
    %v7018 = vunpack.c.l.b16 %v6930
    %v7019 = vunpack.c.h.b16 %v6930
    %v7020 = vunpack.c.l.b16 %v6931
    %v7021 = vunpack.c.h.b16 %v6931
    %v7022 = vunpack.c.l.b16 %v6932
    %v7023 = vunpack.c.h.b16 %v6932
    %v7024 = vunpack.c.l.b16 %v6933
    %v7025 = vunpack.c.h.b16 %v6933
    %v7026 = vunpack.c.l.b16 %v6934
    %v7027 = vunpack.c.h.b16 %v6934
    %v7028 = vunpack.c.l.b16 %v6935
    %v7029 = vunpack.c.h.b16 %v6935
    %v7030 = vunpack.c.l.b16 %v6936
    %v7031 = vunpack.c.h.b16 %v6936
    %v7032 = vunpack.c.l.b16 %v6937
    %v7033 = vunpack.c.h.b16 %v6937
    %v7034 = vpack.c.b16 %v6972, %v6970
    %v7035 = vpack.c.b16 %v6973, %v6971
    %v7036 = vpack.c.b16 %v6976, %v6974
    %v7037 = vpack.c.b16 %v6977, %v6975
    %v7038 = vpack.c.b16 %v6980, %v6978
    %v7039 = vpack.c.b16 %v6981, %v6979
    %v7040 = vpack.c.b16 %v6984, %v6982
    %v7041 = vpack.c.b16 %v6985, %v6983
    %v7042 = vpack.c.b16 %v6988, %v6986
    %v7043 = vpack.c.b16 %v6989, %v6987
    %v7044 = vpack.c.b16 %v6992, %v6990
    %v7045 = vpack.c.b16 %v6993, %v6991
    %v7046 = vpack.c.b16 %v6996, %v6994
    %v7047 = vpack.c.b16 %v6997, %v6995
    %v7048 = vpack.c.b16 %v7000, %v6998
    %v7049 = vpack.c.b16 %v7001, %v6999
    %v7050 = vpack.c.b16 %v7004, %v7002
    %v7051 = vpack.c.b16 %v7005, %v7003
    %v7052 = vpack.c.b16 %v7008, %v7006
    %v7053 = vpack.c.b16 %v7009, %v7007
    %v7054 = vpack.c.b16 %v7012, %v7010
    %v7055 = vpack.c.b16 %v7013, %v7011
    %v7056 = vpack.c.b16 %v7016, %v7014
    %v7057 = vpack.c.b16 %v7017, %v7015
    %v7058 = vpack.c.b16 %v7020, %v7018
    %v7059 = vpack.c.b16 %v7021, %v7019
    %v7060 = vpack.c.b16 %v7024, %v7022
    %v7061 = vpack.c.b16 %v7025, %v7023
    %v7062 = vpack.c.b16 %v7028, %v7026
    %v7063 = vpack.c.b16 %v7029, %v7027
    %v7064 = vpack.c.b16 %v7032, %v7030
    %v7065 = vpack.c.b16 %v7033, %v7031
    %7098 = vmatpush.bf16.msra.mxu0 %v7048
    %7099 = vmatpush.bf16.msra.mxu0 %v7046
    %7100 = vmatpush.bf16.msra.mxu0 %v7044
    %7101 = vmatpush.bf16.msra.mxu0 %v7042
    %7102 = vmatpush.bf16.msra.mxu0 %v7040
    %7103 = vmatpush.bf16.msra.mxu0 %v7038
    %7104 = vmatpush.bf16.msra.mxu0 %v7036
    %7105 = vmatpush.bf16.msra.mxu0 %v7034
    %7106 = vmatmul.bf16.gmra.mxu0 %v6902
    %v7107 = vpop.f32.mrf.mxu0
    %v7108 = vadd.f32 0.0, %v7107
    %v7109 = vpop.f32.mrf.mxu0
    %v7110 = vadd.f32 0.0, %v7109
    %7111 = vmatmul.bf16.gmra.mxu0 %v6904
    %v7112 = vpop.f32.mrf.mxu0
    %v7113 = vadd.f32 0.0, %v7112
    %v7114 = vpop.f32.mrf.mxu0
    %v7115 = vadd.f32 0.0, %v7114
    %7116 = vdwg.mxu0
    %7117 = vmatpush.bf16.msra.mxu0 %v7064
    %7118 = vmatpush.bf16.msra.mxu0 %v7062
    %7119 = vmatpush.bf16.msra.mxu0 %v7060
    %7120 = vmatpush.bf16.msra.mxu0 %v7058
    %7121 = vmatpush.bf16.msra.mxu0 %v7056
    %7122 = vmatpush.bf16.msra.mxu0 %v7054
    %7123 = vmatpush.bf16.msra.mxu0 %v7052
    %7124 = vmatpush.bf16.msra.mxu0 %v7050
    %7125 = vmatmul.bf16.gmra.mxu0 %v6903
    %v7126 = vpop.f32.mrf.mxu0
    %v7127 = vadd.f32 %v7108, %v7126
    %v7128 = vpop.f32.mrf.mxu0
    %v7129 = vadd.f32 %v7110, %v7128
    %7130 = vmatmul.bf16.gmra.mxu0 %v6905
    %v7131 = vpop.f32.mrf.mxu0
    %v7132 = vadd.f32 %v7113, %v7131
    %v7133 = vpop.f32.mrf.mxu0
    %v7134 = vadd.f32 %v7115, %v7133
    %7135 = vdwg.mxu0
    %7136 = vmatpush.bf16.msra.mxu0 %v7049
    %7137 = vmatpush.bf16.msra.mxu0 %v7047
    %7138 = vmatpush.bf16.msra.mxu0 %v7045
    %7139 = vmatpush.bf16.msra.mxu0 %v7043
    %7140 = vmatpush.bf16.msra.mxu0 %v7041
    %7141 = vmatpush.bf16.msra.mxu0 %v7039
    %7142 = vmatpush.bf16.msra.mxu0 %v7037
    %7143 = vmatpush.bf16.msra.mxu0 %v7035
    %7144 = vmatmul.bf16.gmra.mxu0 %v6902
    %v7145 = vpop.f32.mrf.mxu0
    %v7146 = vadd.f32 0.0, %v7145
    %v7147 = vpop.f32.mrf.mxu0
    %v7148 = vadd.f32 0.0, %v7147
    %7149 = vmatmul.bf16.gmra.mxu0 %v6904
    %v7150 = vpop.f32.mrf.mxu0
    %v7151 = vadd.f32 0.0, %v7150
    %v7152 = vpop.f32.mrf.mxu0
    %v7153 = vadd.f32 0.0, %v7152
    %7154 = vdwg.mxu0
    %7155 = vmatpush.bf16.msra.mxu0 %v7065
    %7156 = vmatpush.bf16.msra.mxu0 %v7063
    %7157 = vmatpush.bf16.msra.mxu0 %v7061
    %7158 = vmatpush.bf16.msra.mxu0 %v7059
    %7159 = vmatpush.bf16.msra.mxu0 %v7057
    %7160 = vmatpush.bf16.msra.mxu0 %v7055
    %7161 = vmatpush.bf16.msra.mxu0 %v7053
    %7162 = vmatpush.bf16.msra.mxu0 %v7051
    %7163 = vmatmul.bf16.gmra.mxu0 %v6903
    %v7164 = vpop.f32.mrf.mxu0
    %v7165 = vadd.f32 %v7146, %v7164
    %v7166 = vpop.f32.mrf.mxu0
    %v7167 = vadd.f32 %v7148, %v7166
    %7168 = vmatmul.bf16.gmra.mxu0 %v6905
    %v7169 = vpop.f32.mrf.mxu0
    %v7170 = vadd.f32 %v7151, %v7169
    %v7171 = vpop.f32.mrf.mxu0
    %v7172 = vadd.f32 %v7153, %v7171
    %7173 = vdwg.mxu0
    %v7174 = vadd.f32 %v6855, %v7127
    %v7175 = vadd.f32 %v6893, %v7165
    %v7176 = vadd.f32 %v6857, %v7129
    %v7177 = vadd.f32 %v6895, %v7167
    %v7178 = vadd.f32 %v6860, %v7132
    %v7179 = vadd.f32 %v6898, %v7170
    %v7180 = vadd.f32 %v6862, %v7134
    %v7181 = vadd.f32 %v6900, %v7172
    %s7182 = scalar_lea.vmem [#allocation4], 39
    %v7183 = vld [vmem:[%s7182] ss:$8 sm:$0x3]
    %v7185 = vperm.slane %v7183, 0
    %v7186 = vperm.slane %v7183, 1
    %v7189 = vadd.f32 %v7174, %v7185
    %v7190 = vadd.f32 %v7175, %v7186
    %v7191 = vadd.f32 %v7176, %v7185
    %v7192 = vadd.f32 %v7177, %v7186
    %v7193 = vadd.f32 %v7178, %v7185
    %v7194 = vadd.f32 %v7179, %v7186
    %v7195 = vadd.f32 %v7180, %v7185
    %v7196 = vadd.f32 %v7181, %v7186
    %v7197 = vadd.f32 %v7189, %v7191
    %v7198 = vadd.f32 %v7197, %v7193
    %v7199 = vadd.f32 %v7198, %v7195
    %v7200 = vrot.slane %v7199, 4
    %v7201 = vadd.f32 %v7199, %v7200
    %v7202 = vrot.slane %v7201, 2
    %v7203 = vadd.f32 %v7201, %v7202
    %v7204 = vrot.slane %v7203, 1
    %v7205 = vadd.f32 %v7203, %v7204
    %v7206 = vadd.f32 %v7190, %v7192
    %v7207 = vadd.f32 %v7206, %v7194
    %v7208 = vadd.f32 %v7207, %v7196
    %v7209 = vrot.slane %v7208, 4
    %v7210 = vadd.f32 %v7208, %v7209
    %v7211 = vrot.slane %v7210, 2
    %v7212 = vadd.f32 %v7210, %v7211
    %v7213 = vrot.slane %v7212, 1
    %v7214 = vadd.f32 %v7212, %v7213
    %v7215 = vmul.f32 %v7205, %v1430
    %v7216 = vmul.f32 %v7214, %v1430
    %v7217 = vmul.f32 %v7189, %v7189
    %v7218 = vmul.f32 %v7190, %v7190
    %v7219 = vmul.f32 %v7191, %v7191
    %v7220 = vmul.f32 %v7192, %v7192
    %v7221 = vmul.f32 %v7193, %v7193
    %v7222 = vmul.f32 %v7194, %v7194
    %v7223 = vmul.f32 %v7195, %v7195
    %v7224 = vmul.f32 %v7196, %v7196
    %v7225 = vadd.f32 %v7217, %v7219
    %v7226 = vadd.f32 %v7225, %v7221
    %v7227 = vadd.f32 %v7226, %v7223
    %v7228 = vrot.slane %v7227, 4
    %v7229 = vadd.f32 %v7227, %v7228
    %v7230 = vrot.slane %v7229, 2
    %v7231 = vadd.f32 %v7229, %v7230
    %v7232 = vrot.slane %v7231, 1
    %v7233 = vadd.f32 %v7231, %v7232
    %v7234 = vadd.f32 %v7218, %v7220
    %v7235 = vadd.f32 %v7234, %v7222
    %v7236 = vadd.f32 %v7235, %v7224
    %v7237 = vrot.slane %v7236, 4
    %v7238 = vadd.f32 %v7236, %v7237
    %v7239 = vrot.slane %v7238, 2
    %v7240 = vadd.f32 %v7238, %v7239
    %v7241 = vrot.slane %v7240, 1
    %v7242 = vadd.f32 %v7240, %v7241
    %v7243 = vmul.f32 %v7233, %v1430
    %v7244 = vmul.f32 %v7242, %v1430
    %v7245 = vmul.f32 %v7215, %v7215
    %v7246 = vmul.f32 %v7216, %v7216
    %v7247 = vsub.f32 %v7243, %v7245
    %v7248 = vsub.f32 %v7244, %v7246
    %v7249 = vmax.f32 %v7247, 0.0
    %v7250 = vmax.f32 %v7248, 0.0
    %s7251 = scalar_lea.vmem [#allocation4], 48
    %v7252 = vld [vmem:[%s7251] ss:$8 sm:$0x3]
    %v7253 = vadd.f32 %v7249, 1e-05
    %v7254 = vadd.f32 %v7250, 1e-05
    %v7255 = vrsqrt.pop %v7253
    %v7256 = vmul.f32 %v7255, %v7253
    %v7257 = vmul.f32 %v7256, %v7255
    %v7258 = vmul.f32 0.5, %v7257
    %v7259 = vsub.f32 1.5, %v7258
    %v7260 = vmul.f32 %v7255, %v7259
    %vm7261 = vweird.f32 %v7253
    %vm7262 = vweird.f32 %v7255
    %vm7263 = vmor %vm7261, %vm7262
    %v7264 = vsel %vm7263, %v7255, %v7260
    %v7265 = vrsqrt.pop %v7254
    %v7266 = vmul.f32 %v7265, %v7254
    %v7267 = vmul.f32 %v7266, %v7265
    %v7268 = vmul.f32 0.5, %v7267
    %v7269 = vsub.f32 1.5, %v7268
    %v7270 = vmul.f32 %v7265, %v7269
    %vm7271 = vweird.f32 %v7254
    %vm7272 = vweird.f32 %v7265
    %vm7273 = vmor %vm7271, %vm7272
    %v7274 = vsel %vm7273, %v7265, %v7270
    %v7277 = vrot.slane %v7274, 7
    %v7278 = vsel %vm2812, %v7264, %v7277
    %v7280 = vmul.f32 %v7252, %v7278
    %s7281 = scalar_lea.vmem [#allocation4], 49
    %v7282 = vld [vmem:[%s7281] ss:$8 sm:$0x3]
    %v7284 = vperm.slane %v7280, 0
    %v7285 = vperm.slane %v7280, 1
    %v7288 = vmul.f32 %v7215, %v7284
    %v7289 = vmul.f32 %v7216, %v7285
    %v7292 = vrot.slane %v7289, 7
    %v7293 = vsel %vm2812, %v7288, %v7292
    %v7295 = vsub.f32 %v7282, %v7293
    %v7296 = vmul.f32 %v7189, %v7284
    %v7297 = vmul.f32 %v7190, %v7285
    %v7298 = vmul.f32 %v7191, %v7284
    %v7299 = vmul.f32 %v7192, %v7285
    %v7300 = vmul.f32 %v7193, %v7284
    %v7301 = vmul.f32 %v7194, %v7285
    %v7302 = vmul.f32 %v7195, %v7284
    %v7303 = vmul.f32 %v7196, %v7285
    %v7305 = vperm.slane %v7295, 0
    %v7306 = vperm.slane %v7295, 1
    %v7309 = vadd.f32 %v7296, %v7305
    %v7310 = vadd.f32 %v7297, %v7306
    %v7311 = vadd.f32 %v7298, %v7305
    %v7312 = vadd.f32 %v7299, %v7306
    %v7313 = vadd.f32 %v7300, %v7305
    %v7314 = vadd.f32 %v7301, %v7306
    %v7315 = vadd.f32 %v7302, %v7305
    %v7316 = vadd.f32 %v7303, %v7306
    %v7317 = vmul.f32 %v7309, 0.5
    %v7318 = vmul.f32 %v7310, 0.5
    %v7319 = vmul.f32 %v7311, 0.5
    %v7320 = vmul.f32 %v7312, 0.5
    %v7321 = vmul.f32 %v7313, 0.5
    %v7322 = vmul.f32 %v7314, 0.5
    %v7323 = vmul.f32 %v7315, 0.5
    %v7324 = vmul.f32 %v7316, 0.5
    %v7325 = vmul.f32 %v7309, 0.70710677
    %v7326 = vmul.f32 %v7310, 0.70710677
    %v7327 = vmul.f32 %v7311, 0.70710677
    %v7328 = vmul.f32 %v7312, 0.70710677
    %v7329 = vmul.f32 %v7313, 0.70710677
    %v7330 = vmul.f32 %v7314, 0.70710677
    %v7331 = vmul.f32 %v7315, 0.70710677
    %v7332 = vmul.f32 %v7316, 0.70710677
    %v7333 = vmul.f32 %v7325, %v7325
    %v7334 = vmin.f32 16.0, %v7333
    %v7335 = vmul.f32 %v7334, 2.1237322e-06
    %v7336 = vadd.f32 %v7335, 0.00028619796
    %v7337 = vmul.f32 %v7334, %v7336
    %v7338 = vadd.f32 %v7337, 0.0036580483
    %v7339 = vmul.f32 %v7334, %v7338
    %v7340 = vadd.f32 %v7339, 0.05243302
    %v7341 = vmul.f32 %v7334, %v7340
    %v7342 = vadd.f32 %v7341, 0.18741608
    %v7343 = vmul.f32 %v7334, %v7342
    %v7344 = vadd.f32 %v7343, 1.1283791
    %v7345 = vmul.f32 %v7325, %v7344
    %v7346 = vmul.f32 %v7334, 3.8918573e-05
    %v7347 = vadd.f32 %v7346, 0.001143296
    %v7348 = vmul.f32 %v7334, %v7347
    %v7349 = vadd.f32 %v7348, 0.014752088
    %v7350 = vmul.f32 %v7334, %v7349
    %v7351 = vadd.f32 %v7350, 0.112945676
    %v7352 = vmul.f32 %v7334, %v7351
    %v7353 = vadd.f32 %v7352, 0.4994258
    %v7354 = vmul.f32 %v7334, %v7353
    %v7355 = vadd.f32 %v7354, 1.0
    %v7356 = vrcp.pop %v7355
    %v7357 = vmul.f32 %v7355, %v7356
    %v7358 = vsub.f32 1.0, %v7357
    %v7359 = vmul.f32 %v7356, %v7358
    %v7360 = vadd.f32 %v7356, %v7359
    %vm7361 = vweird.f32 %v7355
    %vm7362 = vweird.f32 %v7356
    %vm7363 = vmor %vm7361, %vm7362
    %v7364 = vsel %vm7363, %v7356, %v7360
    %v7365 = vand.u32 2147483647, %v7355
    %vm7366 = vcmp.eq.f32.partialorder %v7365, 8.507059e+37
    %v7367 = vand.u32 %v7355, 2147483648
    %v7368 = vor.u32 1.1754944e-38, %v7367
    %v7369 = vsel %vm7366, %v7368, %v7364
    %v7370 = vmul.f32 %v7345, %v7369
    %v7371 = vmin.f32 %v7370, 1.0
    %v7372 = vmax.f32 %v7371, -1.0
    %v7373 = vmul.f32 %v7326, %v7326
    %v7374 = vmin.f32 16.0, %v7373
    %v7375 = vmul.f32 %v7374, 2.1237322e-06
    %v7376 = vadd.f32 %v7375, 0.00028619796
    %v7377 = vmul.f32 %v7374, %v7376
    %v7378 = vadd.f32 %v7377, 0.0036580483
    %v7379 = vmul.f32 %v7374, %v7378
    %v7380 = vadd.f32 %v7379, 0.05243302
    %v7381 = vmul.f32 %v7374, %v7380
    %v7382 = vadd.f32 %v7381, 0.18741608
    %v7383 = vmul.f32 %v7374, %v7382
    %v7384 = vadd.f32 %v7383, 1.1283791
    %v7385 = vmul.f32 %v7326, %v7384
    %v7386 = vmul.f32 %v7374, 3.8918573e-05
    %v7387 = vadd.f32 %v7386, 0.001143296
    %v7388 = vmul.f32 %v7374, %v7387
    %v7389 = vadd.f32 %v7388, 0.014752088
    %v7390 = vmul.f32 %v7374, %v7389
    %v7391 = vadd.f32 %v7390, 0.112945676
    %v7392 = vmul.f32 %v7374, %v7391
    %v7393 = vadd.f32 %v7392, 0.4994258
    %v7394 = vmul.f32 %v7374, %v7393
    %v7395 = vadd.f32 %v7394, 1.0
    %v7396 = vrcp.pop %v7395
    %v7397 = vmul.f32 %v7395, %v7396
    %v7398 = vsub.f32 1.0, %v7397
    %v7399 = vmul.f32 %v7396, %v7398
    %v7400 = vadd.f32 %v7396, %v7399
    %vm7401 = vweird.f32 %v7395
    %vm7402 = vweird.f32 %v7396
    %vm7403 = vmor %vm7401, %vm7402
    %v7404 = vsel %vm7403, %v7396, %v7400
    %v7405 = vand.u32 2147483647, %v7395
    %vm7406 = vcmp.eq.f32.partialorder %v7405, 8.507059e+37
    %v7407 = vand.u32 %v7395, 2147483648
    %v7408 = vor.u32 1.1754944e-38, %v7407
    %v7409 = vsel %vm7406, %v7408, %v7404
    %v7410 = vmul.f32 %v7385, %v7409
    %v7411 = vmin.f32 %v7410, 1.0
    %v7412 = vmax.f32 %v7411, -1.0
    %v7413 = vmul.f32 %v7327, %v7327
    %v7414 = vmin.f32 16.0, %v7413
    %v7415 = vmul.f32 %v7414, 2.1237322e-06
    %v7416 = vadd.f32 %v7415, 0.00028619796
    %v7417 = vmul.f32 %v7414, %v7416
    %v7418 = vadd.f32 %v7417, 0.0036580483
    %v7419 = vmul.f32 %v7414, %v7418
    %v7420 = vadd.f32 %v7419, 0.05243302
    %v7421 = vmul.f32 %v7414, %v7420
    %v7422 = vadd.f32 %v7421, 0.18741608
    %v7423 = vmul.f32 %v7414, %v7422
    %v7424 = vadd.f32 %v7423, 1.1283791
    %v7425 = vmul.f32 %v7327, %v7424
    %v7426 = vmul.f32 %v7414, 3.8918573e-05
    %v7427 = vadd.f32 %v7426, 0.001143296
    %v7428 = vmul.f32 %v7414, %v7427
    %v7429 = vadd.f32 %v7428, 0.014752088
    %v7430 = vmul.f32 %v7414, %v7429
    %v7431 = vadd.f32 %v7430, 0.112945676
    %v7432 = vmul.f32 %v7414, %v7431
    %v7433 = vadd.f32 %v7432, 0.4994258
    %v7434 = vmul.f32 %v7414, %v7433
    %v7435 = vadd.f32 %v7434, 1.0
    %v7436 = vrcp.pop %v7435
    %v7437 = vmul.f32 %v7435, %v7436
    %v7438 = vsub.f32 1.0, %v7437
    %v7439 = vmul.f32 %v7436, %v7438
    %v7440 = vadd.f32 %v7436, %v7439
    %vm7441 = vweird.f32 %v7435
    %vm7442 = vweird.f32 %v7436
    %vm7443 = vmor %vm7441, %vm7442
    %v7444 = vsel %vm7443, %v7436, %v7440
    %v7445 = vand.u32 2147483647, %v7435
    %vm7446 = vcmp.eq.f32.partialorder %v7445, 8.507059e+37
    %v7447 = vand.u32 %v7435, 2147483648
    %v7448 = vor.u32 1.1754944e-38, %v7447
    %v7449 = vsel %vm7446, %v7448, %v7444
    %v7450 = vmul.f32 %v7425, %v7449
    %v7451 = vmin.f32 %v7450, 1.0
    %v7452 = vmax.f32 %v7451, -1.0
    %v7453 = vmul.f32 %v7328, %v7328
    %v7454 = vmin.f32 16.0, %v7453
    %v7455 = vmul.f32 %v7454, 2.1237322e-06
    %v7456 = vadd.f32 %v7455, 0.00028619796
    %v7457 = vmul.f32 %v7454, %v7456
    %v7458 = vadd.f32 %v7457, 0.0036580483
    %v7459 = vmul.f32 %v7454, %v7458
    %v7460 = vadd.f32 %v7459, 0.05243302
    %v7461 = vmul.f32 %v7454, %v7460
    %v7462 = vadd.f32 %v7461, 0.18741608
    %v7463 = vmul.f32 %v7454, %v7462
    %v7464 = vadd.f32 %v7463, 1.1283791
    %v7465 = vmul.f32 %v7328, %v7464
    %v7466 = vmul.f32 %v7454, 3.8918573e-05
    %v7467 = vadd.f32 %v7466, 0.001143296
    %v7468 = vmul.f32 %v7454, %v7467
    %v7469 = vadd.f32 %v7468, 0.014752088
    %v7470 = vmul.f32 %v7454, %v7469
    %v7471 = vadd.f32 %v7470, 0.112945676
    %v7472 = vmul.f32 %v7454, %v7471
    %v7473 = vadd.f32 %v7472, 0.4994258
    %v7474 = vmul.f32 %v7454, %v7473
    %v7475 = vadd.f32 %v7474, 1.0
    %v7476 = vrcp.pop %v7475
    %v7477 = vmul.f32 %v7475, %v7476
    %v7478 = vsub.f32 1.0, %v7477
    %v7479 = vmul.f32 %v7476, %v7478
    %v7480 = vadd.f32 %v7476, %v7479
    %vm7481 = vweird.f32 %v7475
    %vm7482 = vweird.f32 %v7476
    %vm7483 = vmor %vm7481, %vm7482
    %v7484 = vsel %vm7483, %v7476, %v7480
    %v7485 = vand.u32 2147483647, %v7475
    %vm7486 = vcmp.eq.f32.partialorder %v7485, 8.507059e+37
    %v7487 = vand.u32 %v7475, 2147483648
    %v7488 = vor.u32 1.1754944e-38, %v7487
    %v7489 = vsel %vm7486, %v7488, %v7484
    %v7490 = vmul.f32 %v7465, %v7489
    %v7491 = vmin.f32 %v7490, 1.0
    %v7492 = vmax.f32 %v7491, -1.0
    %v7493 = vmul.f32 %v7329, %v7329
    %v7494 = vmin.f32 16.0, %v7493
    %v7495 = vmul.f32 %v7494, 2.1237322e-06
    %v7496 = vadd.f32 %v7495, 0.00028619796
    %v7497 = vmul.f32 %v7494, %v7496
    %v7498 = vadd.f32 %v7497, 0.0036580483
    %v7499 = vmul.f32 %v7494, %v7498
    %v7500 = vadd.f32 %v7499, 0.05243302
    %v7501 = vmul.f32 %v7494, %v7500
    %v7502 = vadd.f32 %v7501, 0.18741608
    %v7503 = vmul.f32 %v7494, %v7502
    %v7504 = vadd.f32 %v7503, 1.1283791
    %v7505 = vmul.f32 %v7329, %v7504
    %v7506 = vmul.f32 %v7494, 3.8918573e-05
    %v7507 = vadd.f32 %v7506, 0.001143296
    %v7508 = vmul.f32 %v7494, %v7507
    %v7509 = vadd.f32 %v7508, 0.014752088
    %v7510 = vmul.f32 %v7494, %v7509
    %v7511 = vadd.f32 %v7510, 0.112945676
    %v7512 = vmul.f32 %v7494, %v7511
    %v7513 = vadd.f32 %v7512, 0.4994258
    %v7514 = vmul.f32 %v7494, %v7513
    %v7515 = vadd.f32 %v7514, 1.0
    %v7516 = vrcp.pop %v7515
    %v7517 = vmul.f32 %v7515, %v7516
    %v7518 = vsub.f32 1.0, %v7517
    %v7519 = vmul.f32 %v7516, %v7518
    %v7520 = vadd.f32 %v7516, %v7519
    %vm7521 = vweird.f32 %v7515
    %vm7522 = vweird.f32 %v7516
    %vm7523 = vmor %vm7521, %vm7522
    %v7524 = vsel %vm7523, %v7516, %v7520
    %v7525 = vand.u32 2147483647, %v7515
    %vm7526 = vcmp.eq.f32.partialorder %v7525, 8.507059e+37
    %v7527 = vand.u32 %v7515, 2147483648
    %v7528 = vor.u32 1.1754944e-38, %v7527
    %v7529 = vsel %vm7526, %v7528, %v7524
    %v7530 = vmul.f32 %v7505, %v7529
    %v7531 = vmin.f32 %v7530, 1.0
    %v7532 = vmax.f32 %v7531, -1.0
    %v7533 = vmul.f32 %v7330, %v7330
    %v7534 = vmin.f32 16.0, %v7533
    %v7535 = vmul.f32 %v7534, 2.1237322e-06
    %v7536 = vadd.f32 %v7535, 0.00028619796
    %v7537 = vmul.f32 %v7534, %v7536
    %v7538 = vadd.f32 %v7537, 0.0036580483
    %v7539 = vmul.f32 %v7534, %v7538
    %v7540 = vadd.f32 %v7539, 0.05243302
    %v7541 = vmul.f32 %v7534, %v7540
    %v7542 = vadd.f32 %v7541, 0.18741608
    %v7543 = vmul.f32 %v7534, %v7542
    %v7544 = vadd.f32 %v7543, 1.1283791
    %v7545 = vmul.f32 %v7330, %v7544
    %v7546 = vmul.f32 %v7534, 3.8918573e-05
    %v7547 = vadd.f32 %v7546, 0.001143296
    %v7548 = vmul.f32 %v7534, %v7547
    %v7549 = vadd.f32 %v7548, 0.014752088
    %v7550 = vmul.f32 %v7534, %v7549
    %v7551 = vadd.f32 %v7550, 0.112945676
    %v7552 = vmul.f32 %v7534, %v7551
    %v7553 = vadd.f32 %v7552, 0.4994258
    %v7554 = vmul.f32 %v7534, %v7553
    %v7555 = vadd.f32 %v7554, 1.0
    %v7556 = vrcp.pop %v7555
    %v7557 = vmul.f32 %v7555, %v7556
    %v7558 = vsub.f32 1.0, %v7557
    %v7559 = vmul.f32 %v7556, %v7558
    %v7560 = vadd.f32 %v7556, %v7559
    %vm7561 = vweird.f32 %v7555
    %vm7562 = vweird.f32 %v7556
    %vm7563 = vmor %vm7561, %vm7562
    %v7564 = vsel %vm7563, %v7556, %v7560
    %v7565 = vand.u32 2147483647, %v7555
    %vm7566 = vcmp.eq.f32.partialorder %v7565, 8.507059e+37
    %v7567 = vand.u32 %v7555, 2147483648
    %v7568 = vor.u32 1.1754944e-38, %v7567
    %v7569 = vsel %vm7566, %v7568, %v7564
    %v7570 = vmul.f32 %v7545, %v7569
    %v7571 = vmin.f32 %v7570, 1.0
    %v7572 = vmax.f32 %v7571, -1.0
    %v7573 = vmul.f32 %v7331, %v7331
    %v7574 = vmin.f32 16.0, %v7573
    %v7575 = vmul.f32 %v7574, 2.1237322e-06
    %v7576 = vadd.f32 %v7575, 0.00028619796
    %v7577 = vmul.f32 %v7574, %v7576
    %v7578 = vadd.f32 %v7577, 0.0036580483
    %v7579 = vmul.f32 %v7574, %v7578
    %v7580 = vadd.f32 %v7579, 0.05243302
    %v7581 = vmul.f32 %v7574, %v7580
    %v7582 = vadd.f32 %v7581, 0.18741608
    %v7583 = vmul.f32 %v7574, %v7582
    %v7584 = vadd.f32 %v7583, 1.1283791
    %v7585 = vmul.f32 %v7331, %v7584
    %v7586 = vmul.f32 %v7574, 3.8918573e-05
    %v7587 = vadd.f32 %v7586, 0.001143296
    %v7588 = vmul.f32 %v7574, %v7587
    %v7589 = vadd.f32 %v7588, 0.014752088
    %v7590 = vmul.f32 %v7574, %v7589
    %v7591 = vadd.f32 %v7590, 0.112945676
    %v7592 = vmul.f32 %v7574, %v7591
    %v7593 = vadd.f32 %v7592, 0.4994258
    %v7594 = vmul.f32 %v7574, %v7593
    %v7595 = vadd.f32 %v7594, 1.0
    %v7596 = vrcp.pop %v7595
    %v7597 = vmul.f32 %v7595, %v7596
    %v7598 = vsub.f32 1.0, %v7597
    %v7599 = vmul.f32 %v7596, %v7598
    %v7600 = vadd.f32 %v7596, %v7599
    %vm7601 = vweird.f32 %v7595
    %vm7602 = vweird.f32 %v7596
    %vm7603 = vmor %vm7601, %vm7602
    %v7604 = vsel %vm7603, %v7596, %v7600
    %v7605 = vand.u32 2147483647, %v7595
    %vm7606 = vcmp.eq.f32.partialorder %v7605, 8.507059e+37
    %v7607 = vand.u32 %v7595, 2147483648
    %v7608 = vor.u32 1.1754944e-38, %v7607
    %v7609 = vsel %vm7606, %v7608, %v7604
    %v7610 = vmul.f32 %v7585, %v7609
    %v7611 = vmin.f32 %v7610, 1.0
    %v7612 = vmax.f32 %v7611, -1.0
    %v7613 = vmul.f32 %v7332, %v7332
    %v7614 = vmin.f32 16.0, %v7613
    %v7615 = vmul.f32 %v7614, 2.1237322e-06
    %v7616 = vadd.f32 %v7615, 0.00028619796
    %v7617 = vmul.f32 %v7614, %v7616
    %v7618 = vadd.f32 %v7617, 0.0036580483
    %v7619 = vmul.f32 %v7614, %v7618
    %v7620 = vadd.f32 %v7619, 0.05243302
    %v7621 = vmul.f32 %v7614, %v7620
    %v7622 = vadd.f32 %v7621, 0.18741608
    %v7623 = vmul.f32 %v7614, %v7622
    %v7624 = vadd.f32 %v7623, 1.1283791
    %v7625 = vmul.f32 %v7332, %v7624
    %v7626 = vmul.f32 %v7614, 3.8918573e-05
    %v7627 = vadd.f32 %v7626, 0.001143296
    %v7628 = vmul.f32 %v7614, %v7627
    %v7629 = vadd.f32 %v7628, 0.014752088
    %v7630 = vmul.f32 %v7614, %v7629
    %v7631 = vadd.f32 %v7630, 0.112945676
    %v7632 = vmul.f32 %v7614, %v7631
    %v7633 = vadd.f32 %v7632, 0.4994258
    %v7634 = vmul.f32 %v7614, %v7633
    %v7635 = vadd.f32 %v7634, 1.0
    %v7636 = vrcp.pop %v7635
    %v7637 = vmul.f32 %v7635, %v7636
    %v7638 = vsub.f32 1.0, %v7637
    %v7639 = vmul.f32 %v7636, %v7638
    %v7640 = vadd.f32 %v7636, %v7639
    %vm7641 = vweird.f32 %v7635
    %vm7642 = vweird.f32 %v7636
    %vm7643 = vmor %vm7641, %vm7642
    %v7644 = vsel %vm7643, %v7636, %v7640
    %v7645 = vand.u32 2147483647, %v7635
    %vm7646 = vcmp.eq.f32.partialorder %v7645, 8.507059e+37
    %v7647 = vand.u32 %v7635, 2147483648
    %v7648 = vor.u32 1.1754944e-38, %v7647
    %v7649 = vsel %vm7646, %v7648, %v7644
    %v7650 = vmul.f32 %v7625, %v7649
    %v7651 = vmin.f32 %v7650, 1.0
    %v7652 = vmax.f32 %v7651, -1.0
    %v7653 = vadd.f32 %v7372, 1.0
    %v7654 = vadd.f32 %v7412, 1.0
    %v7655 = vadd.f32 %v7452, 1.0
    %v7656 = vadd.f32 %v7492, 1.0
    %v7657 = vadd.f32 %v7532, 1.0
    %v7658 = vadd.f32 %v7572, 1.0
    %v7659 = vadd.f32 %v7612, 1.0
    %v7660 = vadd.f32 %v7652, 1.0
    %v7661 = vmul.f32 %v7317, %v7653
    %v7662 = vmul.f32 %v7318, %v7654
    %v7663 = vmul.f32 %v7319, %v7655
    %v7664 = vmul.f32 %v7320, %v7656
    %v7665 = vmul.f32 %v7321, %v7657
    %v7666 = vmul.f32 %v7322, %v7658
    %v7667 = vmul.f32 %v7323, %v7659
    %v7668 = vmul.f32 %v7324, %v7660
    %v7669 = vadd.f32 %v7661, %v4824
    %v7670 = vadd.f32 %v7662, %v4825
    %v7671 = vadd.f32 %v7663, %v4826
    %v7672 = vadd.f32 %v7664, %v4827
    %v7673 = vadd.f32 %v7665, %v4828
    %v7674 = vadd.f32 %v7666, %v4829
    %v7675 = vadd.f32 %v7667, %v4830
    %v7676 = vadd.f32 %v7668, %v4831
    %v7677 = vrot.slane %v7669, 7
    %v7678 = vrot.slane %v7670, 7
    %v7679 = vrot.slane %v7671, 7
    %v7680 = vrot.slane %v7672, 7
    %v7681 = vrot.slane %v7673, 7
    %v7682 = vrot.slane %v7674, 7
    %v7683 = vrot.slane %v7675, 7
    %v7684 = vrot.slane %v7676, 7
    %v7685 = vsel %vm1058, %v7681, %v7683
    %v7686 = vsel %vm1058, %v7682, %v7684
    %v7687 = vsel %vm1058, %v7679, %v7681
    %v7688 = vsel %vm1058, %v7680, %v7682
    %v7689 = vsel %vm1058, %v7677, %v7679
    %v7690 = vsel %vm1058, %v7678, %v7680
    %v7691 = vsel %vm1058, %v7683, %v7677
    %v7692 = vsel %vm1058, %v7684, %v7678
    %v7693 = vsel %vm1067, 0.0, %v7691
    %v7694 = vsel %vm1067, 0.0, %v7692
    %v7695 = vsel %vm1068, 0.0, %v7689
    %v7696 = vsel %vm1068, 0.0, %v7690
    %v7697 = vsel %vm1069, 0.0, %v7687
    %v7698 = vsel %vm1069, 0.0, %v7688
    %v7699 = vsel %vm1070, 0.0, %v7685
    %v7700 = vsel %vm1070, 0.0, %v7686
    %v7701 = vrot.slane %v7669, 1
    %v7702 = vrot.slane %v7670, 1
    %v7703 = vrot.slane %v7671, 1
    %v7704 = vrot.slane %v7672, 1
    %v7705 = vrot.slane %v7673, 1
    %v7706 = vrot.slane %v7674, 1
    %v7707 = vrot.slane %v7675, 1
    %v7708 = vrot.slane %v7676, 1
    %v7709 = vsel %vm1083, %v7705, %v7707
    %v7710 = vsel %vm1083, %v7706, %v7708
    %v7711 = vsel %vm1083, %v7703, %v7705
    %v7712 = vsel %vm1083, %v7704, %v7706
    %v7713 = vsel %vm1083, %v7701, %v7703
    %v7714 = vsel %vm1083, %v7702, %v7704
    %v7715 = vsel %vm1083, %v7707, %v7701
    %v7716 = vsel %vm1083, %v7708, %v7702
    %v7717 = vsel %vm1092, 0.0, %v7713
    %v7718 = vsel %vm1092, 0.0, %v7714
    %v7719 = vsel %vm1093, 0.0, %v7711
    %v7720 = vsel %vm1093, 0.0, %v7712
    %v7721 = vsel %vm1094, 0.0, %v7709
    %v7722 = vsel %vm1094, 0.0, %v7710
    %v7723 = vsel %vm1095, 0.0, %v7715
    %v7724 = vsel %vm1095, 0.0, %v7716
    %v7725 = vpack.c.bf16 %v7695, %v7693
    %v7726 = vpack.c.bf16 %v7696, %v7694
    %v7727 = vpack.c.bf16 %v7699, %v7697
    %v7728 = vpack.c.bf16 %v7700, %v7698
    %v7729 = vld [vmem:[#allocation2 + $0xe50] sm:$0xf]
    %v7730 = vld [vmem:[#allocation2 + $0xe58] sm:$0xf]
    %v7731 = vld [vmem:[#allocation2 + $0xe60] sm:$0xf]
    %v7732 = vld [vmem:[#allocation2 + $0xe68] sm:$0xf]
    %v7733 = vld [vmem:[#allocation2 + $0xe70] sm:$0xf]
    %v7734 = vld [vmem:[#allocation2 + $0xe78] sm:$0xf]
    %v7735 = vld [vmem:[#allocation2 + $0xe80] sm:$0xf]
    %v7736 = vld [vmem:[#allocation2 + $0xe88] sm:$0xf]
    %v7737 = vld [vmem:[#allocation2 + $0xe90] sm:$0xf]
    %v7738 = vld [vmem:[#allocation2 + $0xe98] sm:$0xf]
    %v7739 = vld [vmem:[#allocation2 + $0xea0] sm:$0xf]
    %v7740 = vld [vmem:[#allocation2 + $0xea8] sm:$0xf]
    %v7741 = vld [vmem:[#allocation2 + $0xeb0] sm:$0xf]
    %v7742 = vld [vmem:[#allocation2 + $0xeb8] sm:$0xf]
    %v7743 = vld [vmem:[#allocation2 + $0xec0] sm:$0xf]
    %v7744 = vld [vmem:[#allocation2 + $0xec8] sm:$0xf]
    %v7745 = vld [vmem:[#allocation2 + $0xed0] sm:$0xf]
    %v7746 = vld [vmem:[#allocation2 + $0xed8] sm:$0xf]
    %v7747 = vld [vmem:[#allocation2 + $0xee0] sm:$0xf]
    %v7748 = vld [vmem:[#allocation2 + $0xee8] sm:$0xf]
    %v7749 = vld [vmem:[#allocation2 + $0xef0] sm:$0xf]
    %v7750 = vld [vmem:[#allocation2 + $0xef8] sm:$0xf]
    %v7751 = vld [vmem:[#allocation2 + $0xf00] sm:$0xf]
    %v7752 = vld [vmem:[#allocation2 + $0xf08] sm:$0xf]
    %v7753 = vld [vmem:[#allocation2 + $0xf10] sm:$0xf]
    %v7754 = vld [vmem:[#allocation2 + $0xf18] sm:$0xf]
    %v7755 = vld [vmem:[#allocation2 + $0xf20] sm:$0xf]
    %v7756 = vld [vmem:[#allocation2 + $0xf28] sm:$0xf]
    %v7757 = vld [vmem:[#allocation2 + $0xf30] sm:$0xf]
    %v7758 = vld [vmem:[#allocation2 + $0xf38] sm:$0xf]
    %v7759 = vld [vmem:[#allocation2 + $0xf40] sm:$0xf]
    %v7760 = vld [vmem:[#allocation2 + $0xf48] sm:$0xf]
    %v7761 = vpack.c.bf16 %v7671, %v7669
    %v7762 = vpack.c.bf16 %v7672, %v7670
    %v7763 = vpack.c.bf16 %v7675, %v7673
    %v7764 = vpack.c.bf16 %v7676, %v7674
    %v7765 = vld [vmem:[#allocation2 + $0xf50] sm:$0xf]
    %v7766 = vld [vmem:[#allocation2 + $0xf58] sm:$0xf]
    %v7767 = vld [vmem:[#allocation2 + $0xf60] sm:$0xf]
    %v7768 = vld [vmem:[#allocation2 + $0xf68] sm:$0xf]
    %v7769 = vld [vmem:[#allocation2 + $0xf70] sm:$0xf]
    %v7770 = vld [vmem:[#allocation2 + $0xf78] sm:$0xf]
    %v7771 = vld [vmem:[#allocation2 + $0xf80] sm:$0xf]
    %v7772 = vld [vmem:[#allocation2 + $0xf88] sm:$0xf]
    %v7773 = vld [vmem:[#allocation2 + $0xf90] sm:$0xf]
    %v7774 = vld [vmem:[#allocation2 + $0xf98] sm:$0xf]
    %v7775 = vld [vmem:[#allocation2 + $0xfa0] sm:$0xf]
    %v7776 = vld [vmem:[#allocation2 + $0xfa8] sm:$0xf]
    %v7777 = vld [vmem:[#allocation2 + $0xfb0] sm:$0xf]
    %v7778 = vld [vmem:[#allocation2 + $0xfb8] sm:$0xf]
    %v7779 = vld [vmem:[#allocation2 + $0xfc0] sm:$0xf]
    %v7780 = vld [vmem:[#allocation2 + $0xfc8] sm:$0xf]
    %v7781 = vld [vmem:[#allocation2 + $0xfd0] sm:$0xf]
    %v7782 = vld [vmem:[#allocation2 + $0xfd8] sm:$0xf]
    %v7783 = vld [vmem:[#allocation2 + $0xfe0] sm:$0xf]
    %v7784 = vld [vmem:[#allocation2 + $0xfe8] sm:$0xf]
    %v7785 = vld [vmem:[#allocation2 + $0xff0] sm:$0xf]
    %v7786 = vld [vmem:[#allocation2 + $0xff8] sm:$0xf]
    %v7787 = vld [vmem:[#allocation2 + $0x1000] sm:$0xf]
    %v7788 = vld [vmem:[#allocation2 + $0x1008] sm:$0xf]
    %v7789 = vld [vmem:[#allocation2 + $0x1010] sm:$0xf]
    %v7790 = vld [vmem:[#allocation2 + $0x1018] sm:$0xf]
    %v7791 = vld [vmem:[#allocation2 + $0x1020] sm:$0xf]
    %v7792 = vld [vmem:[#allocation2 + $0x1028] sm:$0xf]
    %v7793 = vld [vmem:[#allocation2 + $0x1030] sm:$0xf]
    %v7794 = vld [vmem:[#allocation2 + $0x1038] sm:$0xf]
    %v7795 = vld [vmem:[#allocation2 + $0x1040] sm:$0xf]
    %v7796 = vld [vmem:[#allocation2 + $0x1048] sm:$0xf]
    %v7829 = vunpack.c.l.b16 %v7765
    %v7830 = vunpack.c.l.b16 %v7766
    %v7831 = vunpack.c.l.b16 %v7767
    %v7832 = vunpack.c.l.b16 %v7768
    %v7833 = vunpack.c.l.b16 %v7769
    %v7834 = vunpack.c.l.b16 %v7770
    %v7835 = vunpack.c.l.b16 %v7771
    %v7836 = vunpack.c.l.b16 %v7772
    %v7837 = vunpack.c.l.b16 %v7773
    %v7838 = vunpack.c.l.b16 %v7774
    %v7839 = vunpack.c.l.b16 %v7775
    %v7840 = vunpack.c.l.b16 %v7776
    %v7841 = vunpack.c.l.b16 %v7777
    %v7842 = vunpack.c.l.b16 %v7778
    %v7843 = vunpack.c.l.b16 %v7779
    %v7844 = vunpack.c.l.b16 %v7780
    %v7845 = vunpack.c.l.b16 %v7781
    %v7846 = vunpack.c.l.b16 %v7782
    %v7847 = vunpack.c.l.b16 %v7783
    %v7848 = vunpack.c.l.b16 %v7784
    %v7849 = vunpack.c.l.b16 %v7785
    %v7850 = vunpack.c.l.b16 %v7786
    %v7851 = vunpack.c.l.b16 %v7787
    %v7852 = vunpack.c.l.b16 %v7788
    %v7853 = vunpack.c.l.b16 %v7789
    %v7854 = vunpack.c.l.b16 %v7790
    %v7855 = vunpack.c.l.b16 %v7791
    %v7856 = vunpack.c.l.b16 %v7792
    %v7857 = vunpack.c.l.b16 %v7793
    %v7858 = vunpack.c.l.b16 %v7794
    %v7859 = vunpack.c.l.b16 %v7795
    %v7860 = vunpack.c.l.b16 %v7796
    %v7861 = vpack.c.b16 %v7830, %v7829
    %v7862 = vpack.c.b16 %v7832, %v7831
    %v7863 = vpack.c.b16 %v7834, %v7833
    %v7864 = vpack.c.b16 %v7836, %v7835
    %v7865 = vpack.c.b16 %v7838, %v7837
    %v7866 = vpack.c.b16 %v7840, %v7839
    %v7867 = vpack.c.b16 %v7842, %v7841
    %v7868 = vpack.c.b16 %v7844, %v7843
    %v7869 = vpack.c.b16 %v7846, %v7845
    %v7870 = vpack.c.b16 %v7848, %v7847
    %v7871 = vpack.c.b16 %v7850, %v7849
    %v7872 = vpack.c.b16 %v7852, %v7851
    %v7873 = vpack.c.b16 %v7854, %v7853
    %v7874 = vpack.c.b16 %v7856, %v7855
    %v7875 = vpack.c.b16 %v7858, %v7857
    %v7876 = vpack.c.b16 %v7860, %v7859
    %7893 = vmatpush.bf16.msra.mxu0 %v7868
    %7894 = vmatpush.bf16.msra.mxu0 %v7867
    %7895 = vmatpush.bf16.msra.mxu0 %v7866
    %7896 = vmatpush.bf16.msra.mxu0 %v7865
    %7897 = vmatpush.bf16.msra.mxu0 %v7864
    %7898 = vmatpush.bf16.msra.mxu0 %v7863
    %7899 = vmatpush.bf16.msra.mxu0 %v7862
    %7900 = vmatpush.bf16.msra.mxu0 %v7861
    %7901 = vmatmul.bf16.gmra.mxu0 %v7761
    %v7902 = vpop.f32.mrf.mxu0
    %v7903 = vadd.f32 0.0, %v7902
    %v7904 = vpop.f32.mrf.mxu0
    %v7905 = vadd.f32 0.0, %v7904
    %7906 = vmatmul.bf16.gmra.mxu0 %v7763
    %v7907 = vpop.f32.mrf.mxu0
    %v7908 = vadd.f32 0.0, %v7907
    %v7909 = vpop.f32.mrf.mxu0
    %v7910 = vadd.f32 0.0, %v7909
    %7911 = vdwg.mxu0
    %7912 = vmatpush.bf16.msra.mxu0 %v7876
    %7913 = vmatpush.bf16.msra.mxu0 %v7875
    %7914 = vmatpush.bf16.msra.mxu0 %v7874
    %7915 = vmatpush.bf16.msra.mxu0 %v7873
    %7916 = vmatpush.bf16.msra.mxu0 %v7872
    %7917 = vmatpush.bf16.msra.mxu0 %v7871
    %7918 = vmatpush.bf16.msra.mxu0 %v7870
    %7919 = vmatpush.bf16.msra.mxu0 %v7869
    %7920 = vmatmul.bf16.gmra.mxu0 %v7762
    %v7921 = vpop.f32.mrf.mxu0
    %v7922 = vadd.f32 %v7903, %v7921
    %v7923 = vpop.f32.mrf.mxu0
    %v7924 = vadd.f32 %v7905, %v7923
    %7925 = vmatmul.bf16.gmra.mxu0 %v7764
    %v7926 = vpop.f32.mrf.mxu0
    %v7927 = vadd.f32 %v7908, %v7926
    %v7928 = vpop.f32.mrf.mxu0
    %v7929 = vadd.f32 %v7910, %v7928
    %7930 = vdwg.mxu0
    %v7963 = vunpack.c.l.b16 %v7729
    %v7964 = vunpack.c.l.b16 %v7730
    %v7965 = vunpack.c.l.b16 %v7731
    %v7966 = vunpack.c.l.b16 %v7732
    %v7967 = vunpack.c.l.b16 %v7733
    %v7968 = vunpack.c.l.b16 %v7734
    %v7969 = vunpack.c.l.b16 %v7735
    %v7970 = vunpack.c.l.b16 %v7736
    %v7971 = vunpack.c.l.b16 %v7737
    %v7972 = vunpack.c.l.b16 %v7738
    %v7973 = vunpack.c.l.b16 %v7739
    %v7974 = vunpack.c.l.b16 %v7740
    %v7975 = vunpack.c.l.b16 %v7741
    %v7976 = vunpack.c.l.b16 %v7742
    %v7977 = vunpack.c.l.b16 %v7743
    %v7978 = vunpack.c.l.b16 %v7744
    %v7979 = vunpack.c.l.b16 %v7745
    %v7980 = vunpack.c.l.b16 %v7746
    %v7981 = vunpack.c.l.b16 %v7747
    %v7982 = vunpack.c.l.b16 %v7748
    %v7983 = vunpack.c.l.b16 %v7749
    %v7984 = vunpack.c.l.b16 %v7750
    %v7985 = vunpack.c.l.b16 %v7751
    %v7986 = vunpack.c.l.b16 %v7752
    %v7987 = vunpack.c.l.b16 %v7753
    %v7988 = vunpack.c.l.b16 %v7754
    %v7989 = vunpack.c.l.b16 %v7755
    %v7990 = vunpack.c.l.b16 %v7756
    %v7991 = vunpack.c.l.b16 %v7757
    %v7992 = vunpack.c.l.b16 %v7758
    %v7993 = vunpack.c.l.b16 %v7759
    %v7994 = vunpack.c.l.b16 %v7760
    %v7995 = vpack.c.b16 %v7964, %v7963
    %v7996 = vpack.c.b16 %v7966, %v7965
    %v7997 = vpack.c.b16 %v7968, %v7967
    %v7998 = vpack.c.b16 %v7970, %v7969
    %v7999 = vpack.c.b16 %v7972, %v7971
    %v8000 = vpack.c.b16 %v7974, %v7973
    %v8001 = vpack.c.b16 %v7976, %v7975
    %v8002 = vpack.c.b16 %v7978, %v7977
    %v8003 = vpack.c.b16 %v7980, %v7979
    %v8004 = vpack.c.b16 %v7982, %v7981
    %v8005 = vpack.c.b16 %v7984, %v7983
    %v8006 = vpack.c.b16 %v7986, %v7985
    %v8007 = vpack.c.b16 %v7988, %v7987
    %v8008 = vpack.c.b16 %v7990, %v7989
    %v8009 = vpack.c.b16 %v7992, %v7991
    %v8010 = vpack.c.b16 %v7994, %v7993
    %8027 = vmatpush.bf16.msra.mxu0 %v8002
    %8028 = vmatpush.bf16.msra.mxu0 %v8001
    %8029 = vmatpush.bf16.msra.mxu0 %v8000
    %8030 = vmatpush.bf16.msra.mxu0 %v7999
    %8031 = vmatpush.bf16.msra.mxu0 %v7998
    %8032 = vmatpush.bf16.msra.mxu0 %v7997
    %8033 = vmatpush.bf16.msra.mxu0 %v7996
    %8034 = vmatpush.bf16.msra.mxu0 %v7995
    %8035 = vmatmul.bf16.gmra.mxu0 %v7725
    %v8036 = vpop.f32.mrf.mxu0
    %v8037 = vadd.f32 %v7922, %v8036
    %v8038 = vpop.f32.mrf.mxu0
    %v8039 = vadd.f32 %v7924, %v8038
    %8040 = vmatmul.bf16.gmra.mxu0 %v7727
    %v8041 = vpop.f32.mrf.mxu0
    %v8042 = vadd.f32 %v7927, %v8041
    %v8043 = vpop.f32.mrf.mxu0
    %v8044 = vadd.f32 %v7929, %v8043
    %8045 = vdwg.mxu0
    %8046 = vmatpush.bf16.msra.mxu0 %v8010
    %8047 = vmatpush.bf16.msra.mxu0 %v8009
    %8048 = vmatpush.bf16.msra.mxu0 %v8008
    %8049 = vmatpush.bf16.msra.mxu0 %v8007
    %8050 = vmatpush.bf16.msra.mxu0 %v8006
    %8051 = vmatpush.bf16.msra.mxu0 %v8005
    %8052 = vmatpush.bf16.msra.mxu0 %v8004
    %8053 = vmatpush.bf16.msra.mxu0 %v8003
    %8054 = vmatmul.bf16.gmra.mxu0 %v7726
    %v8055 = vpop.f32.mrf.mxu0
    %v8056 = vadd.f32 %v8037, %v8055
    %v8057 = vpop.f32.mrf.mxu0
    %v8058 = vadd.f32 %v8039, %v8057
    %8059 = vmatmul.bf16.gmra.mxu0 %v7728
    %v8060 = vpop.f32.mrf.mxu0
    %v8061 = vadd.f32 %v8042, %v8060
    %v8062 = vpop.f32.mrf.mxu0
    %v8063 = vadd.f32 %v8044, %v8062
    %8064 = vdwg.mxu0
    %v8065 = vpack.c.bf16 %v7719, %v7717
    %v8066 = vpack.c.bf16 %v7720, %v7718
    %v8067 = vpack.c.bf16 %v7723, %v7721
    %v8068 = vpack.c.bf16 %v7724, %v7722
    %v8069 = vld [vmem:[#allocation2 + $0x1050] sm:$0xf]
    %v8070 = vld [vmem:[#allocation2 + $0x1058] sm:$0xf]
    %v8071 = vld [vmem:[#allocation2 + $0x1060] sm:$0xf]
    %v8072 = vld [vmem:[#allocation2 + $0x1068] sm:$0xf]
    %v8073 = vld [vmem:[#allocation2 + $0x1070] sm:$0xf]
    %v8074 = vld [vmem:[#allocation2 + $0x1078] sm:$0xf]
    %v8075 = vld [vmem:[#allocation2 + $0x1080] sm:$0xf]
    %v8076 = vld [vmem:[#allocation2 + $0x1088] sm:$0xf]
    %v8077 = vld [vmem:[#allocation2 + $0x1090] sm:$0xf]
    %v8078 = vld [vmem:[#allocation2 + $0x1098] sm:$0xf]
    %v8079 = vld [vmem:[#allocation2 + $0x10a0] sm:$0xf]
    %v8080 = vld [vmem:[#allocation2 + $0x10a8] sm:$0xf]
    %v8081 = vld [vmem:[#allocation2 + $0x10b0] sm:$0xf]
    %v8082 = vld [vmem:[#allocation2 + $0x10b8] sm:$0xf]
    %v8083 = vld [vmem:[#allocation2 + $0x10c0] sm:$0xf]
    %v8084 = vld [vmem:[#allocation2 + $0x10c8] sm:$0xf]
    %v8085 = vld [vmem:[#allocation2 + $0x10d0] sm:$0xf]
    %v8086 = vld [vmem:[#allocation2 + $0x10d8] sm:$0xf]
    %v8087 = vld [vmem:[#allocation2 + $0x10e0] sm:$0xf]
    %v8088 = vld [vmem:[#allocation2 + $0x10e8] sm:$0xf]
    %v8089 = vld [vmem:[#allocation2 + $0x10f0] sm:$0xf]
    %v8090 = vld [vmem:[#allocation2 + $0x10f8] sm:$0xf]
    %v8091 = vld [vmem:[#allocation2 + $0x1100] sm:$0xf]
    %v8092 = vld [vmem:[#allocation2 + $0x1108] sm:$0xf]
    %v8093 = vld [vmem:[#allocation2 + $0x1110] sm:$0xf]
    %v8094 = vld [vmem:[#allocation2 + $0x1118] sm:$0xf]
    %v8095 = vld [vmem:[#allocation2 + $0x1120] sm:$0xf]
    %v8096 = vld [vmem:[#allocation2 + $0x1128] sm:$0xf]
    %v8097 = vld [vmem:[#allocation2 + $0x1130] sm:$0xf]
    %v8098 = vld [vmem:[#allocation2 + $0x1138] sm:$0xf]
    %v8099 = vld [vmem:[#allocation2 + $0x1140] sm:$0xf]
    %v8100 = vld [vmem:[#allocation2 + $0x1148] sm:$0xf]
    %v8133 = vunpack.c.l.b16 %v8069
    %v8134 = vunpack.c.l.b16 %v8070
    %v8135 = vunpack.c.l.b16 %v8071
    %v8136 = vunpack.c.l.b16 %v8072
    %v8137 = vunpack.c.l.b16 %v8073
    %v8138 = vunpack.c.l.b16 %v8074
    %v8139 = vunpack.c.l.b16 %v8075
    %v8140 = vunpack.c.l.b16 %v8076
    %v8141 = vunpack.c.l.b16 %v8077
    %v8142 = vunpack.c.l.b16 %v8078
    %v8143 = vunpack.c.l.b16 %v8079
    %v8144 = vunpack.c.l.b16 %v8080
    %v8145 = vunpack.c.l.b16 %v8081
    %v8146 = vunpack.c.l.b16 %v8082
    %v8147 = vunpack.c.l.b16 %v8083
    %v8148 = vunpack.c.l.b16 %v8084
    %v8149 = vunpack.c.l.b16 %v8085
    %v8150 = vunpack.c.l.b16 %v8086
    %v8151 = vunpack.c.l.b16 %v8087
    %v8152 = vunpack.c.l.b16 %v8088
    %v8153 = vunpack.c.l.b16 %v8089
    %v8154 = vunpack.c.l.b16 %v8090
    %v8155 = vunpack.c.l.b16 %v8091
    %v8156 = vunpack.c.l.b16 %v8092
    %v8157 = vunpack.c.l.b16 %v8093
    %v8158 = vunpack.c.l.b16 %v8094
    %v8159 = vunpack.c.l.b16 %v8095
    %v8160 = vunpack.c.l.b16 %v8096
    %v8161 = vunpack.c.l.b16 %v8097
    %v8162 = vunpack.c.l.b16 %v8098
    %v8163 = vunpack.c.l.b16 %v8099
    %v8164 = vunpack.c.l.b16 %v8100
    %v8165 = vpack.c.b16 %v8134, %v8133
    %v8166 = vpack.c.b16 %v8136, %v8135
    %v8167 = vpack.c.b16 %v8138, %v8137
    %v8168 = vpack.c.b16 %v8140, %v8139
    %v8169 = vpack.c.b16 %v8142, %v8141
    %v8170 = vpack.c.b16 %v8144, %v8143
    %v8171 = vpack.c.b16 %v8146, %v8145
    %v8172 = vpack.c.b16 %v8148, %v8147
    %v8173 = vpack.c.b16 %v8150, %v8149
    %v8174 = vpack.c.b16 %v8152, %v8151
    %v8175 = vpack.c.b16 %v8154, %v8153
    %v8176 = vpack.c.b16 %v8156, %v8155
    %v8177 = vpack.c.b16 %v8158, %v8157
    %v8178 = vpack.c.b16 %v8160, %v8159
    %v8179 = vpack.c.b16 %v8162, %v8161
    %v8180 = vpack.c.b16 %v8164, %v8163
    %8197 = vmatpush.bf16.msra.mxu0 %v8172
    %8198 = vmatpush.bf16.msra.mxu0 %v8171
    %8199 = vmatpush.bf16.msra.mxu0 %v8170
    %8200 = vmatpush.bf16.msra.mxu0 %v8169
    %8201 = vmatpush.bf16.msra.mxu0 %v8168
    %8202 = vmatpush.bf16.msra.mxu0 %v8167
    %8203 = vmatpush.bf16.msra.mxu0 %v8166
    %8204 = vmatpush.bf16.msra.mxu0 %v8165
    %8205 = vmatmul.bf16.gmra.mxu0 %v8065
    %v8206 = vpop.f32.mrf.mxu0
    %v8207 = vadd.f32 0.0, %v8206
    %v8208 = vpop.f32.mrf.mxu0
    %v8209 = vadd.f32 0.0, %v8208
    %8210 = vmatmul.bf16.gmra.mxu0 %v8067
    %v8211 = vpop.f32.mrf.mxu0
    %v8212 = vadd.f32 0.0, %v8211
    %v8213 = vpop.f32.mrf.mxu0
    %v8214 = vadd.f32 0.0, %v8213
    %8215 = vdwg.mxu0
    %8216 = vmatpush.bf16.msra.mxu0 %v8180
    %8217 = vmatpush.bf16.msra.mxu0 %v8179
    %8218 = vmatpush.bf16.msra.mxu0 %v8178
    %8219 = vmatpush.bf16.msra.mxu0 %v8177
    %8220 = vmatpush.bf16.msra.mxu0 %v8176
    %8221 = vmatpush.bf16.msra.mxu0 %v8175
    %8222 = vmatpush.bf16.msra.mxu0 %v8174
    %8223 = vmatpush.bf16.msra.mxu0 %v8173
    %8224 = vmatmul.bf16.gmra.mxu0 %v8066
    %v8225 = vpop.f32.mrf.mxu0
    %v8226 = vadd.f32 %v8207, %v8225
    %v8227 = vpop.f32.mrf.mxu0
    %v8228 = vadd.f32 %v8209, %v8227
    %8229 = vmatmul.bf16.gmra.mxu0 %v8068
    %v8230 = vpop.f32.mrf.mxu0
    %v8231 = vadd.f32 %v8212, %v8230
    %v8232 = vpop.f32.mrf.mxu0
    %v8233 = vadd.f32 %v8214, %v8232
    %8234 = vdwg.mxu0
    %v8235 = vadd.f32 %v8056, %v8226
    %v8236 = vadd.f32 %v8058, %v8228
    %v8237 = vadd.f32 %v8061, %v8231
    %v8238 = vadd.f32 %v8063, %v8233
    %v8239 = vld [vmem:[#allocation4 + $0x32] ss:$0 sm:$0xff]
    %v8240 = vadd.f32 %v8235, %v8239
    %v8241 = vadd.f32 %v8236, %v8239
    %v8242 = vadd.f32 %v8237, %v8239
    %v8243 = vadd.f32 %v8238, %v8239
    %v8244 = vadd.f32 %v8240, %v8241
    %v8245 = vadd.f32 %v8244, %v8242
    %v8246 = vadd.f32 %v8245, %v8243
    %v8247 = vrot.slane %v8246, 4
    %v8248 = vadd.f32 %v8246, %v8247
    %v8249 = vrot.slane %v8248, 2
    %v8250 = vadd.f32 %v8248, %v8249
    %v8251 = vrot.slane %v8250, 1
    %v8252 = vadd.f32 %v8250, %v8251
    %v8253 = vmul.f32 %v8252, %v1430
    %v8254 = vmul.f32 %v8240, %v8240
    %v8255 = vmul.f32 %v8241, %v8241
    %v8256 = vmul.f32 %v8242, %v8242
    %v8257 = vmul.f32 %v8243, %v8243
    %v8258 = vadd.f32 %v8254, %v8255
    %v8259 = vadd.f32 %v8258, %v8256
    %v8260 = vadd.f32 %v8259, %v8257
    %v8261 = vrot.slane %v8260, 4
    %v8262 = vadd.f32 %v8260, %v8261
    %v8263 = vrot.slane %v8262, 2
    %v8264 = vadd.f32 %v8262, %v8263
    %v8265 = vrot.slane %v8264, 1
    %v8266 = vadd.f32 %v8264, %v8265
    %v8267 = vmul.f32 %v8266, %v1430
    %v8268 = vmul.f32 %v8253, %v8253
    %v8269 = vsub.f32 %v8267, %v8268
    %v8270 = vmax.f32 %v8269, 0.0
    %v8271 = vld [vmem:[#allocation4 + $0x33] ss:$0 sm:$0xff]
    %v8272 = vadd.f32 %v8270, 1e-05
    %v8273 = vrsqrt.pop %v8272
    %v8274 = vmul.f32 %v8273, %v8272
    %v8275 = vmul.f32 %v8274, %v8273
    %v8276 = vmul.f32 0.5, %v8275
    %v8277 = vsub.f32 1.5, %v8276
    %v8278 = vmul.f32 %v8273, %v8277
    %vm8279 = vweird.f32 %v8272
    %vm8280 = vweird.f32 %v8273
    %vm8281 = vmor %vm8279, %vm8280
    %v8282 = vsel %vm8281, %v8273, %v8278
    %v8283 = vmul.f32 %v8271, %v8282
    %v8284 = vld [vmem:[#allocation4 + $0x34] ss:$0 sm:$0xff]
    %v8285 = vmul.f32 %v8253, %v8283
    %v8286 = vsub.f32 %v8284, %v8285
    %v8287 = vmul.f32 %v8240, %v8283
    %v8288 = vmul.f32 %v8241, %v8283
    %v8289 = vmul.f32 %v8242, %v8283
    %v8290 = vmul.f32 %v8243, %v8283
    %v8291 = vadd.f32 %v8287, %v8286
    %v8292 = vadd.f32 %v8288, %v8286
    %v8293 = vadd.f32 %v8289, %v8286
    %v8294 = vadd.f32 %v8290, %v8286
    %v8295 = vmul.f32 %v8291, 0.5
    %v8296 = vmul.f32 %v8292, 0.5
    %v8297 = vmul.f32 %v8293, 0.5
    %v8298 = vmul.f32 %v8294, 0.5
    %v8299 = vmul.f32 %v8291, 0.70710677
    %v8300 = vmul.f32 %v8292, 0.70710677
    %v8301 = vmul.f32 %v8293, 0.70710677
    %v8302 = vmul.f32 %v8294, 0.70710677
    %v8303 = vmul.f32 %v8299, %v8299
    %v8304 = vmin.f32 16.0, %v8303
    %v8305 = vmul.f32 %v8304, 2.1237322e-06
    %v8306 = vadd.f32 %v8305, 0.00028619796
    %v8307 = vmul.f32 %v8304, %v8306
    %v8308 = vadd.f32 %v8307, 0.0036580483
    %v8309 = vmul.f32 %v8304, %v8308
    %v8310 = vadd.f32 %v8309, 0.05243302
    %v8311 = vmul.f32 %v8304, %v8310
    %v8312 = vadd.f32 %v8311, 0.18741608
    %v8313 = vmul.f32 %v8304, %v8312
    %v8314 = vadd.f32 %v8313, 1.1283791
    %v8315 = vmul.f32 %v8299, %v8314
    %v8316 = vmul.f32 %v8304, 3.8918573e-05
    %v8317 = vadd.f32 %v8316, 0.001143296
    %v8318 = vmul.f32 %v8304, %v8317
    %v8319 = vadd.f32 %v8318, 0.014752088
    %v8320 = vmul.f32 %v8304, %v8319
    %v8321 = vadd.f32 %v8320, 0.112945676
    %v8322 = vmul.f32 %v8304, %v8321
    %v8323 = vadd.f32 %v8322, 0.4994258
    %v8324 = vmul.f32 %v8304, %v8323
    %v8325 = vadd.f32 %v8324, 1.0
    %v8326 = vrcp.pop %v8325
    %v8327 = vmul.f32 %v8325, %v8326
    %v8328 = vsub.f32 1.0, %v8327
    %v8329 = vmul.f32 %v8326, %v8328
    %v8330 = vadd.f32 %v8326, %v8329
    %vm8331 = vweird.f32 %v8325
    %vm8332 = vweird.f32 %v8326
    %vm8333 = vmor %vm8331, %vm8332
    %v8334 = vsel %vm8333, %v8326, %v8330
    %v8335 = vand.u32 2147483647, %v8325
    %vm8336 = vcmp.eq.f32.partialorder %v8335, 8.507059e+37
    %v8337 = vand.u32 %v8325, 2147483648
    %v8338 = vor.u32 1.1754944e-38, %v8337
    %v8339 = vsel %vm8336, %v8338, %v8334
    %v8340 = vmul.f32 %v8315, %v8339
    %v8341 = vmin.f32 %v8340, 1.0
    %v8342 = vmax.f32 %v8341, -1.0
    %v8343 = vmul.f32 %v8300, %v8300
    %v8344 = vmin.f32 16.0, %v8343
    %v8345 = vmul.f32 %v8344, 2.1237322e-06
    %v8346 = vadd.f32 %v8345, 0.00028619796
    %v8347 = vmul.f32 %v8344, %v8346
    %v8348 = vadd.f32 %v8347, 0.0036580483
    %v8349 = vmul.f32 %v8344, %v8348
    %v8350 = vadd.f32 %v8349, 0.05243302
    %v8351 = vmul.f32 %v8344, %v8350
    %v8352 = vadd.f32 %v8351, 0.18741608
    %v8353 = vmul.f32 %v8344, %v8352
    %v8354 = vadd.f32 %v8353, 1.1283791
    %v8355 = vmul.f32 %v8300, %v8354
    %v8356 = vmul.f32 %v8344, 3.8918573e-05
    %v8357 = vadd.f32 %v8356, 0.001143296
    %v8358 = vmul.f32 %v8344, %v8357
    %v8359 = vadd.f32 %v8358, 0.014752088
    %v8360 = vmul.f32 %v8344, %v8359
    %v8361 = vadd.f32 %v8360, 0.112945676
    %v8362 = vmul.f32 %v8344, %v8361
    %v8363 = vadd.f32 %v8362, 0.4994258
    %v8364 = vmul.f32 %v8344, %v8363
    %v8365 = vadd.f32 %v8364, 1.0
    %v8366 = vrcp.pop %v8365
    %v8367 = vmul.f32 %v8365, %v8366
    %v8368 = vsub.f32 1.0, %v8367
    %v8369 = vmul.f32 %v8366, %v8368
    %v8370 = vadd.f32 %v8366, %v8369
    %vm8371 = vweird.f32 %v8365
    %vm8372 = vweird.f32 %v8366
    %vm8373 = vmor %vm8371, %vm8372
    %v8374 = vsel %vm8373, %v8366, %v8370
    %v8375 = vand.u32 2147483647, %v8365
    %vm8376 = vcmp.eq.f32.partialorder %v8375, 8.507059e+37
    %v8377 = vand.u32 %v8365, 2147483648
    %v8378 = vor.u32 1.1754944e-38, %v8377
    %v8379 = vsel %vm8376, %v8378, %v8374
    %v8380 = vmul.f32 %v8355, %v8379
    %v8381 = vmin.f32 %v8380, 1.0
    %v8382 = vmax.f32 %v8381, -1.0
    %v8383 = vmul.f32 %v8301, %v8301
    %v8384 = vmin.f32 16.0, %v8383
    %v8385 = vmul.f32 %v8384, 2.1237322e-06
    %v8386 = vadd.f32 %v8385, 0.00028619796
    %v8387 = vmul.f32 %v8384, %v8386
    %v8388 = vadd.f32 %v8387, 0.0036580483
    %v8389 = vmul.f32 %v8384, %v8388
    %v8390 = vadd.f32 %v8389, 0.05243302
    %v8391 = vmul.f32 %v8384, %v8390
    %v8392 = vadd.f32 %v8391, 0.18741608
    %v8393 = vmul.f32 %v8384, %v8392
    %v8394 = vadd.f32 %v8393, 1.1283791
    %v8395 = vmul.f32 %v8301, %v8394
    %v8396 = vmul.f32 %v8384, 3.8918573e-05
    %v8397 = vadd.f32 %v8396, 0.001143296
    %v8398 = vmul.f32 %v8384, %v8397
    %v8399 = vadd.f32 %v8398, 0.014752088
    %v8400 = vmul.f32 %v8384, %v8399
    %v8401 = vadd.f32 %v8400, 0.112945676
    %v8402 = vmul.f32 %v8384, %v8401
    %v8403 = vadd.f32 %v8402, 0.4994258
    %v8404 = vmul.f32 %v8384, %v8403
    %v8405 = vadd.f32 %v8404, 1.0
    %v8406 = vrcp.pop %v8405
    %v8407 = vmul.f32 %v8405, %v8406
    %v8408 = vsub.f32 1.0, %v8407
    %v8409 = vmul.f32 %v8406, %v8408
    %v8410 = vadd.f32 %v8406, %v8409
    %vm8411 = vweird.f32 %v8405
    %vm8412 = vweird.f32 %v8406
    %vm8413 = vmor %vm8411, %vm8412
    %v8414 = vsel %vm8413, %v8406, %v8410
    %v8415 = vand.u32 2147483647, %v8405
    %vm8416 = vcmp.eq.f32.partialorder %v8415, 8.507059e+37
    %v8417 = vand.u32 %v8405, 2147483648
    %v8418 = vor.u32 1.1754944e-38, %v8417
    %v8419 = vsel %vm8416, %v8418, %v8414
    %v8420 = vmul.f32 %v8395, %v8419
    %v8421 = vmin.f32 %v8420, 1.0
    %v8422 = vmax.f32 %v8421, -1.0
    %v8423 = vmul.f32 %v8302, %v8302
    %v8424 = vmin.f32 16.0, %v8423
    %v8425 = vmul.f32 %v8424, 2.1237322e-06
    %v8426 = vadd.f32 %v8425, 0.00028619796
    %v8427 = vmul.f32 %v8424, %v8426
    %v8428 = vadd.f32 %v8427, 0.0036580483
    %v8429 = vmul.f32 %v8424, %v8428
    %v8430 = vadd.f32 %v8429, 0.05243302
    %v8431 = vmul.f32 %v8424, %v8430
    %v8432 = vadd.f32 %v8431, 0.18741608
    %v8433 = vmul.f32 %v8424, %v8432
    %v8434 = vadd.f32 %v8433, 1.1283791
    %v8435 = vmul.f32 %v8302, %v8434
    %v8436 = vmul.f32 %v8424, 3.8918573e-05
    %v8437 = vadd.f32 %v8436, 0.001143296
    %v8438 = vmul.f32 %v8424, %v8437
    %v8439 = vadd.f32 %v8438, 0.014752088
    %v8440 = vmul.f32 %v8424, %v8439
    %v8441 = vadd.f32 %v8440, 0.112945676
    %v8442 = vmul.f32 %v8424, %v8441
    %v8443 = vadd.f32 %v8442, 0.4994258
    %v8444 = vmul.f32 %v8424, %v8443
    %v8445 = vadd.f32 %v8444, 1.0
    %v8446 = vrcp.pop %v8445
    %v8447 = vmul.f32 %v8445, %v8446
    %v8448 = vsub.f32 1.0, %v8447
    %v8449 = vmul.f32 %v8446, %v8448
    %v8450 = vadd.f32 %v8446, %v8449
    %vm8451 = vweird.f32 %v8445
    %vm8452 = vweird.f32 %v8446
    %vm8453 = vmor %vm8451, %vm8452
    %v8454 = vsel %vm8453, %v8446, %v8450
    %v8455 = vand.u32 2147483647, %v8445
    %vm8456 = vcmp.eq.f32.partialorder %v8455, 8.507059e+37
    %v8457 = vand.u32 %v8445, 2147483648
    %v8458 = vor.u32 1.1754944e-38, %v8457
    %v8459 = vsel %vm8456, %v8458, %v8454
    %v8460 = vmul.f32 %v8435, %v8459
    %v8461 = vmin.f32 %v8460, 1.0
    %v8462 = vmax.f32 %v8461, -1.0
    %v8463 = vadd.f32 %v8342, 1.0
    %v8464 = vadd.f32 %v8382, 1.0
    %v8465 = vadd.f32 %v8422, 1.0
    %v8466 = vadd.f32 %v8462, 1.0
    %v8467 = vmul.f32 %v8295, %v8463
    %v8468 = vmul.f32 %v8296, %v8464
    %v8469 = vmul.f32 %v8297, %v8465
    %v8470 = vmul.f32 %v8298, %v8466
    %v8471 = vld [vmem:[#allocation4 + $0x35] ss:$0 sm:$0xff]
    %v8472 = vadd.f32 %v1030, %v8471
    %v8473 = vmul.f32 %v8472, 0.5
    %v8474 = vmul.f32 %v8472, 0.70710677
    %v8475 = vmul.f32 %v8474, %v8474
    %v8476 = vmin.f32 16.0, %v8475
    %v8477 = vmul.f32 %v8476, 2.1237322e-06
    %v8478 = vadd.f32 %v8477, 0.00028619796
    %v8479 = vmul.f32 %v8476, %v8478
    %v8480 = vadd.f32 %v8479, 0.0036580483
    %v8481 = vmul.f32 %v8476, %v8480
    %v8482 = vadd.f32 %v8481, 0.05243302
    %v8483 = vmul.f32 %v8476, %v8482
    %v8484 = vadd.f32 %v8483, 0.18741608
    %v8485 = vmul.f32 %v8476, %v8484
    %v8486 = vadd.f32 %v8485, 1.1283791
    %v8487 = vmul.f32 %v8474, %v8486
    %v8488 = vmul.f32 %v8476, 3.8918573e-05
    %v8489 = vadd.f32 %v8488, 0.001143296
    %v8490 = vmul.f32 %v8476, %v8489
    %v8491 = vadd.f32 %v8490, 0.014752088
    %v8492 = vmul.f32 %v8476, %v8491
    %v8493 = vadd.f32 %v8492, 0.112945676
    %v8494 = vmul.f32 %v8476, %v8493
    %v8495 = vadd.f32 %v8494, 0.4994258
    %v8496 = vmul.f32 %v8476, %v8495
    %v8497 = vadd.f32 %v8496, 1.0
    %v8498 = vrcp.pop %v8497
    %v8499 = vmul.f32 %v8497, %v8498
    %v8500 = vsub.f32 1.0, %v8499
    %v8501 = vmul.f32 %v8498, %v8500
    %v8502 = vadd.f32 %v8498, %v8501
    %vm8503 = vweird.f32 %v8497
    %vm8504 = vweird.f32 %v8498
    %vm8505 = vmor %vm8503, %vm8504
    %v8506 = vsel %vm8505, %v8498, %v8502
    %v8507 = vand.u32 2147483647, %v8497
    %vm8508 = vcmp.eq.f32.partialorder %v8507, 8.507059e+37
    %v8509 = vand.u32 %v8497, 2147483648
    %v8510 = vor.u32 1.1754944e-38, %v8509
    %v8511 = vsel %vm8508, %v8510, %v8506
    %v8512 = vmul.f32 %v8487, %v8511
    %v8513 = vmin.f32 %v8512, 1.0
    %v8514 = vmax.f32 %v8513, -1.0
    %v8515 = vadd.f32 %v8514, 1.0
    %v8516 = vmul.f32 %v8473, %v8515
    %v8518 = vrot.slane %v8516, 1
    %v8519 = vperm.slane %v8516, 0
    %v8520 = vperm.slane %v8518, 0
    %v8523 = vadd.f32 %v8467, %v8519
    %v8524 = vadd.f32 %v8468, %v8519
    %v8525 = vadd.f32 %v8469, %v8520
    %v8526 = vadd.f32 %v8470, %v8520
    %v8527 = vrot.slane %v8523, 7
    %v8528 = vrot.slane %v8524, 7
    %v8529 = vrot.slane %v8525, 7
    %v8530 = vrot.slane %v8526, 7
    %v8531 = vsel %vm1058, %v8529, %v8530
    %v8532 = vsel %vm1058, %v8528, %v8529
    %v8533 = vsel %vm1058, %v8527, %v8528
    %v8534 = vsel %vm1058, %v8530, %v8527
    %v8535 = vsel %vm1067, 0.0, %v8534
    %v8536 = vsel %vm1068, 0.0, %v8533
    %v8537 = vsel %vm1069, 0.0, %v8532
    %v8538 = vsel %vm1070, 0.0, %v8531
    %v8539 = vrot.slane %v8523, 1
    %v8540 = vrot.slane %v8524, 1
    %v8541 = vrot.slane %v8525, 1
    %v8542 = vrot.slane %v8526, 1
    %v8543 = vsel %vm1083, %v8541, %v8542
    %v8544 = vsel %vm1083, %v8540, %v8541
    %v8545 = vsel %vm1083, %v8539, %v8540
    %v8546 = vsel %vm1083, %v8542, %v8539
    %v8547 = vsel %vm1092, 0.0, %v8545
    %v8548 = vsel %vm1093, 0.0, %v8544
    %v8549 = vsel %vm1094, 0.0, %v8543
    %v8550 = vsel %vm1095, 0.0, %v8546
    %v8551 = vpack.c.bf16 %v8536, %v8535
    %v8552 = vpack.c.bf16 %v8538, %v8537
    %v8553 = vld [vmem:[#allocation2 + $0x1150] sm:$0xf]
    %v8554 = vld [vmem:[#allocation2 + $0x1158] sm:$0xf]
    %v8555 = vld [vmem:[#allocation2 + $0x1160] sm:$0xf]
    %v8556 = vld [vmem:[#allocation2 + $0x1168] sm:$0xf]
    %v8557 = vld [vmem:[#allocation2 + $0x1170] sm:$0xf]
    %v8558 = vld [vmem:[#allocation2 + $0x1178] sm:$0xf]
    %v8559 = vld [vmem:[#allocation2 + $0x1180] sm:$0xf]
    %v8560 = vld [vmem:[#allocation2 + $0x1188] sm:$0xf]
    %v8561 = vld [vmem:[#allocation2 + $0x1190] sm:$0xf]
    %v8562 = vld [vmem:[#allocation2 + $0x1198] sm:$0xf]
    %v8563 = vld [vmem:[#allocation2 + $0x11a0] sm:$0xf]
    %v8564 = vld [vmem:[#allocation2 + $0x11a8] sm:$0xf]
    %v8565 = vld [vmem:[#allocation2 + $0x11b0] sm:$0xf]
    %v8566 = vld [vmem:[#allocation2 + $0x11b8] sm:$0xf]
    %v8567 = vld [vmem:[#allocation2 + $0x11c0] sm:$0xf]
    %v8568 = vld [vmem:[#allocation2 + $0x11c8] sm:$0xf]
    %v8569 = vpack.c.bf16 %v8524, %v8523
    %v8570 = vpack.c.bf16 %v8526, %v8525
    %v8571 = vld [vmem:[#allocation2 + $0x11d0] sm:$0xf]
    %v8572 = vld [vmem:[#allocation2 + $0x11d8] sm:$0xf]
    %v8573 = vld [vmem:[#allocation2 + $0x11e0] sm:$0xf]
    %v8574 = vld [vmem:[#allocation2 + $0x11e8] sm:$0xf]
    %v8575 = vld [vmem:[#allocation2 + $0x11f0] sm:$0xf]
    %v8576 = vld [vmem:[#allocation2 + $0x11f8] sm:$0xf]
    %v8577 = vld [vmem:[#allocation2 + $0x1200] sm:$0xf]
    %v8578 = vld [vmem:[#allocation2 + $0x1208] sm:$0xf]
    %v8579 = vld [vmem:[#allocation2 + $0x1210] sm:$0xf]
    %v8580 = vld [vmem:[#allocation2 + $0x1218] sm:$0xf]
    %v8581 = vld [vmem:[#allocation2 + $0x1220] sm:$0xf]
    %v8582 = vld [vmem:[#allocation2 + $0x1228] sm:$0xf]
    %v8583 = vld [vmem:[#allocation2 + $0x1230] sm:$0xf]
    %v8584 = vld [vmem:[#allocation2 + $0x1238] sm:$0xf]
    %v8585 = vld [vmem:[#allocation2 + $0x1240] sm:$0xf]
    %v8586 = vld [vmem:[#allocation2 + $0x1248] sm:$0xf]
    %v8603 = vunpack.c.l.b16 %v8571
    %v8604 = vunpack.c.l.b16 %v8572
    %v8605 = vunpack.c.l.b16 %v8573
    %v8606 = vunpack.c.l.b16 %v8574
    %v8607 = vunpack.c.l.b16 %v8575
    %v8608 = vunpack.c.l.b16 %v8576
    %v8609 = vunpack.c.l.b16 %v8577
    %v8610 = vunpack.c.l.b16 %v8578
    %v8611 = vunpack.c.l.b16 %v8579
    %v8612 = vunpack.c.l.b16 %v8580
    %v8613 = vunpack.c.l.b16 %v8581
    %v8614 = vunpack.c.l.b16 %v8582
    %v8615 = vunpack.c.l.b16 %v8583
    %v8616 = vunpack.c.l.b16 %v8584
    %v8617 = vunpack.c.l.b16 %v8585
    %v8618 = vunpack.c.l.b16 %v8586
    %v8619 = vpack.c.b16 %v8604, %v8603
    %v8620 = vpack.c.b16 %v8606, %v8605
    %v8621 = vpack.c.b16 %v8608, %v8607
    %v8622 = vpack.c.b16 %v8610, %v8609
    %v8623 = vpack.c.b16 %v8612, %v8611
    %v8624 = vpack.c.b16 %v8614, %v8613
    %v8625 = vpack.c.b16 %v8616, %v8615
    %v8626 = vpack.c.b16 %v8618, %v8617
    %8635 = vmatpush.bf16.msra.mxu0 %v8626
    %8636 = vmatpush.bf16.msra.mxu0 %v8625
    %8637 = vmatpush.bf16.msra.mxu0 %v8624
    %8638 = vmatpush.bf16.msra.mxu0 %v8623
    %8639 = vmatpush.bf16.msra.mxu0 %v8622
    %8640 = vmatpush.bf16.msra.mxu0 %v8621
    %8641 = vmatpush.bf16.msra.mxu0 %v8620
    %8642 = vmatpush.bf16.msra.mxu0 %v8619
    %8643 = vmatmul.bf16.gmra.mxu0 %v8569
    %v8644 = vpop.f32.mrf.mxu0
    %v8645 = vadd.f32 0.0, %v8644
    %v8646 = vpop.f32.mrf.mxu0
    %v8647 = vadd.f32 0.0, %v8646
    %8648 = vmatmul.bf16.gmra.mxu0 %v8570
    %v8649 = vpop.f32.mrf.mxu0
    %v8650 = vadd.f32 0.0, %v8649
    %v8651 = vpop.f32.mrf.mxu0
    %v8652 = vadd.f32 0.0, %v8651
    %8653 = vdwg.mxu0
    %v8670 = vunpack.c.l.b16 %v8553
    %v8671 = vunpack.c.l.b16 %v8554
    %v8672 = vunpack.c.l.b16 %v8555
    %v8673 = vunpack.c.l.b16 %v8556
    %v8674 = vunpack.c.l.b16 %v8557
    %v8675 = vunpack.c.l.b16 %v8558
    %v8676 = vunpack.c.l.b16 %v8559
    %v8677 = vunpack.c.l.b16 %v8560
    %v8678 = vunpack.c.l.b16 %v8561
    %v8679 = vunpack.c.l.b16 %v8562
    %v8680 = vunpack.c.l.b16 %v8563
    %v8681 = vunpack.c.l.b16 %v8564
    %v8682 = vunpack.c.l.b16 %v8565
    %v8683 = vunpack.c.l.b16 %v8566
    %v8684 = vunpack.c.l.b16 %v8567
    %v8685 = vunpack.c.l.b16 %v8568
    %v8686 = vpack.c.b16 %v8671, %v8670
    %v8687 = vpack.c.b16 %v8673, %v8672
    %v8688 = vpack.c.b16 %v8675, %v8674
    %v8689 = vpack.c.b16 %v8677, %v8676
    %v8690 = vpack.c.b16 %v8679, %v8678
    %v8691 = vpack.c.b16 %v8681, %v8680
    %v8692 = vpack.c.b16 %v8683, %v8682
    %v8693 = vpack.c.b16 %v8685, %v8684
    %8702 = vmatpush.bf16.msra.mxu0 %v8693
    %8703 = vmatpush.bf16.msra.mxu0 %v8692
    %8704 = vmatpush.bf16.msra.mxu0 %v8691
    %8705 = vmatpush.bf16.msra.mxu0 %v8690
    %8706 = vmatpush.bf16.msra.mxu0 %v8689
    %8707 = vmatpush.bf16.msra.mxu0 %v8688
    %8708 = vmatpush.bf16.msra.mxu0 %v8687
    %8709 = vmatpush.bf16.msra.mxu0 %v8686
    %8710 = vmatmul.bf16.gmra.mxu0 %v8551
    %v8711 = vpop.f32.mrf.mxu0
    %v8712 = vadd.f32 %v8645, %v8711
    %v8713 = vpop.f32.mrf.mxu0
    %v8714 = vadd.f32 %v8647, %v8713
    %8715 = vmatmul.bf16.gmra.mxu0 %v8552
    %v8716 = vpop.f32.mrf.mxu0
    %v8717 = vadd.f32 %v8650, %v8716
    %v8718 = vpop.f32.mrf.mxu0
    %v8719 = vadd.f32 %v8652, %v8718
    %8720 = vdwg.mxu0
    %v8721 = vpack.c.bf16 %v8548, %v8547
    %v8722 = vpack.c.bf16 %v8550, %v8549
    %v8723 = vld [vmem:[#allocation2 + $0x1250] sm:$0xf]
    %v8724 = vld [vmem:[#allocation2 + $0x1258] sm:$0xf]
    %v8725 = vld [vmem:[#allocation2 + $0x1260] sm:$0xf]
    %v8726 = vld [vmem:[#allocation2 + $0x1268] sm:$0xf]
    %v8727 = vld [vmem:[#allocation2 + $0x1270] sm:$0xf]
    %v8728 = vld [vmem:[#allocation2 + $0x1278] sm:$0xf]
    %v8729 = vld [vmem:[#allocation2 + $0x1280] sm:$0xf]
    %v8730 = vld [vmem:[#allocation2 + $0x1288] sm:$0xf]
    %v8731 = vld [vmem:[#allocation2 + $0x1290] sm:$0xf]
    %v8732 = vld [vmem:[#allocation2 + $0x1298] sm:$0xf]
    %v8733 = vld [vmem:[#allocation2 + $0x12a0] sm:$0xf]
    %v8734 = vld [vmem:[#allocation2 + $0x12a8] sm:$0xf]
    %v8735 = vld [vmem:[#allocation2 + $0x12b0] sm:$0xf]
    %v8736 = vld [vmem:[#allocation2 + $0x12b8] sm:$0xf]
    %v8737 = vld [vmem:[#allocation2 + $0x12c0] sm:$0xf]
    %v8738 = vld [vmem:[#allocation2 + $0x12c8] sm:$0xf]
    %v8755 = vunpack.c.l.b16 %v8723
    %v8756 = vunpack.c.l.b16 %v8724
    %v8757 = vunpack.c.l.b16 %v8725
    %v8758 = vunpack.c.l.b16 %v8726
    %v8759 = vunpack.c.l.b16 %v8727
    %v8760 = vunpack.c.l.b16 %v8728
    %v8761 = vunpack.c.l.b16 %v8729
    %v8762 = vunpack.c.l.b16 %v8730
    %v8763 = vunpack.c.l.b16 %v8731
    %v8764 = vunpack.c.l.b16 %v8732
    %v8765 = vunpack.c.l.b16 %v8733
    %v8766 = vunpack.c.l.b16 %v8734
    %v8767 = vunpack.c.l.b16 %v8735
    %v8768 = vunpack.c.l.b16 %v8736
    %v8769 = vunpack.c.l.b16 %v8737
    %v8770 = vunpack.c.l.b16 %v8738
    %v8771 = vpack.c.b16 %v8756, %v8755
    %v8772 = vpack.c.b16 %v8758, %v8757
    %v8773 = vpack.c.b16 %v8760, %v8759
    %v8774 = vpack.c.b16 %v8762, %v8761
    %v8775 = vpack.c.b16 %v8764, %v8763
    %v8776 = vpack.c.b16 %v8766, %v8765
    %v8777 = vpack.c.b16 %v8768, %v8767
    %v8778 = vpack.c.b16 %v8770, %v8769
    %8787 = vmatpush.bf16.msra.mxu0 %v8778
    %8788 = vmatpush.bf16.msra.mxu0 %v8777
    %8789 = vmatpush.bf16.msra.mxu0 %v8776
    %8790 = vmatpush.bf16.msra.mxu0 %v8775
    %8791 = vmatpush.bf16.msra.mxu0 %v8774
    %8792 = vmatpush.bf16.msra.mxu0 %v8773
    %8793 = vmatpush.bf16.msra.mxu0 %v8772
    %8794 = vmatpush.bf16.msra.mxu0 %v8771
    %8795 = vmatmul.bf16.gmra.mxu0 %v8721
    %v8796 = vpop.f32.mrf.mxu0
    %v8797 = vadd.f32 0.0, %v8796
    %v8798 = vpop.f32.mrf.mxu0
    %v8799 = vadd.f32 0.0, %v8798
    %8800 = vmatmul.bf16.gmra.mxu0 %v8722
    %v8801 = vpop.f32.mrf.mxu0
    %v8802 = vadd.f32 0.0, %v8801
    %v8803 = vpop.f32.mrf.mxu0
    %v8804 = vadd.f32 0.0, %v8803
    %8805 = vdwg.mxu0
    %v8806 = vadd.f32 %v8712, %v8797
    %v8807 = vadd.f32 %v8714, %v8799
    %v8808 = vadd.f32 %v8717, %v8802
    %v8809 = vadd.f32 %v8719, %v8804
    %v8810 = vld [vmem:[#allocation4 + $0x36] ss:$0 sm:$0xff]
    %v8811 = vadd.f32 %v8806, %v8810
    %v8812 = vadd.f32 %v8807, %v8810
    %v8813 = vadd.f32 %v8808, %v8810
    %v8814 = vadd.f32 %v8809, %v8810
    %v8815 = vadd.f32 %v8811, %v8812
    %v8816 = vadd.f32 %v8815, %v8813
    %v8817 = vadd.f32 %v8816, %v8814
    %v8818 = vrot.slane %v8817, 4
    %v8819 = vadd.f32 %v8817, %v8818
    %v8820 = vrot.slane %v8819, 2
    %v8821 = vadd.f32 %v8819, %v8820
    %v8822 = vrot.slane %v8821, 1
    %v8823 = vadd.f32 %v8821, %v8822
    %v8824 = vmul.f32 %v8823, %v1430
    %v8825 = vmul.f32 %v8811, %v8811
    %v8826 = vmul.f32 %v8812, %v8812
    %v8827 = vmul.f32 %v8813, %v8813
    %v8828 = vmul.f32 %v8814, %v8814
    %v8829 = vadd.f32 %v8825, %v8826
    %v8830 = vadd.f32 %v8829, %v8827
    %v8831 = vadd.f32 %v8830, %v8828
    %v8832 = vrot.slane %v8831, 4
    %v8833 = vadd.f32 %v8831, %v8832
    %v8834 = vrot.slane %v8833, 2
    %v8835 = vadd.f32 %v8833, %v8834
    %v8836 = vrot.slane %v8835, 1
    %v8837 = vadd.f32 %v8835, %v8836
    %v8838 = vmul.f32 %v8837, %v1430
    %v8839 = vmul.f32 %v8824, %v8824
    %v8840 = vsub.f32 %v8838, %v8839
    %v8841 = vmax.f32 %v8840, 0.0
    %v8842 = vld [vmem:[#allocation4 + $0x37] ss:$0 sm:$0xff]
    %v8843 = vadd.f32 %v8841, 1e-05
    %v8844 = vrsqrt.pop %v8843
    %v8845 = vmul.f32 %v8844, %v8843
    %v8846 = vmul.f32 %v8845, %v8844
    %v8847 = vmul.f32 0.5, %v8846
    %v8848 = vsub.f32 1.5, %v8847
    %v8849 = vmul.f32 %v8844, %v8848
    %vm8850 = vweird.f32 %v8843
    %vm8851 = vweird.f32 %v8844
    %vm8852 = vmor %vm8850, %vm8851
    %v8853 = vsel %vm8852, %v8844, %v8849
    %v8854 = vmul.f32 %v8842, %v8853
    %v8855 = vld [vmem:[#allocation4 + $0x40] ss:$0 sm:$0xff]
    %v8856 = vmul.f32 %v8824, %v8854
    %v8857 = vsub.f32 %v8855, %v8856
    %v8858 = vmul.f32 %v8811, %v8854
    %v8859 = vmul.f32 %v8812, %v8854
    %v8860 = vmul.f32 %v8813, %v8854
    %v8861 = vmul.f32 %v8814, %v8854
    %v8862 = vadd.f32 %v8858, %v8857
    %v8863 = vadd.f32 %v8859, %v8857
    %v8864 = vadd.f32 %v8860, %v8857
    %v8865 = vadd.f32 %v8861, %v8857
    %v8866 = vmul.f32 %v8862, 0.5
    %v8867 = vmul.f32 %v8863, 0.5
    %v8868 = vmul.f32 %v8864, 0.5
    %v8869 = vmul.f32 %v8865, 0.5
    %v8870 = vmul.f32 %v8862, 0.70710677
    %v8871 = vmul.f32 %v8863, 0.70710677
    %v8872 = vmul.f32 %v8864, 0.70710677
    %v8873 = vmul.f32 %v8865, 0.70710677
    %v8874 = vmul.f32 %v8870, %v8870
    %v8875 = vmin.f32 16.0, %v8874
    %v8876 = vmul.f32 %v8875, 2.1237322e-06
    %v8877 = vadd.f32 %v8876, 0.00028619796
    %v8878 = vmul.f32 %v8875, %v8877
    %v8879 = vadd.f32 %v8878, 0.0036580483
    %v8880 = vmul.f32 %v8875, %v8879
    %v8881 = vadd.f32 %v8880, 0.05243302
    %v8882 = vmul.f32 %v8875, %v8881
    %v8883 = vadd.f32 %v8882, 0.18741608
    %v8884 = vmul.f32 %v8875, %v8883
    %v8885 = vadd.f32 %v8884, 1.1283791
    %v8886 = vmul.f32 %v8870, %v8885
    %v8887 = vmul.f32 %v8875, 3.8918573e-05
    %v8888 = vadd.f32 %v8887, 0.001143296
    %v8889 = vmul.f32 %v8875, %v8888
    %v8890 = vadd.f32 %v8889, 0.014752088
    %v8891 = vmul.f32 %v8875, %v8890
    %v8892 = vadd.f32 %v8891, 0.112945676
    %v8893 = vmul.f32 %v8875, %v8892
    %v8894 = vadd.f32 %v8893, 0.4994258
    %v8895 = vmul.f32 %v8875, %v8894
    %v8896 = vadd.f32 %v8895, 1.0
    %v8897 = vrcp.pop %v8896
    %v8898 = vmul.f32 %v8896, %v8897
    %v8899 = vsub.f32 1.0, %v8898
    %v8900 = vmul.f32 %v8897, %v8899
    %v8901 = vadd.f32 %v8897, %v8900
    %vm8902 = vweird.f32 %v8896
    %vm8903 = vweird.f32 %v8897
    %vm8904 = vmor %vm8902, %vm8903
    %v8905 = vsel %vm8904, %v8897, %v8901
    %v8906 = vand.u32 2147483647, %v8896
    %vm8907 = vcmp.eq.f32.partialorder %v8906, 8.507059e+37
    %v8908 = vand.u32 %v8896, 2147483648
    %v8909 = vor.u32 1.1754944e-38, %v8908
    %v8910 = vsel %vm8907, %v8909, %v8905
    %v8911 = vmul.f32 %v8886, %v8910
    %v8912 = vmin.f32 %v8911, 1.0
    %v8913 = vmax.f32 %v8912, -1.0
    %v8914 = vmul.f32 %v8871, %v8871
    %v8915 = vmin.f32 16.0, %v8914
    %v8916 = vmul.f32 %v8915, 2.1237322e-06
    %v8917 = vadd.f32 %v8916, 0.00028619796
    %v8918 = vmul.f32 %v8915, %v8917
    %v8919 = vadd.f32 %v8918, 0.0036580483
    %v8920 = vmul.f32 %v8915, %v8919
    %v8921 = vadd.f32 %v8920, 0.05243302
    %v8922 = vmul.f32 %v8915, %v8921
    %v8923 = vadd.f32 %v8922, 0.18741608
    %v8924 = vmul.f32 %v8915, %v8923
    %v8925 = vadd.f32 %v8924, 1.1283791
    %v8926 = vmul.f32 %v8871, %v8925
    %v8927 = vmul.f32 %v8915, 3.8918573e-05
    %v8928 = vadd.f32 %v8927, 0.001143296
    %v8929 = vmul.f32 %v8915, %v8928
    %v8930 = vadd.f32 %v8929, 0.014752088
    %v8931 = vmul.f32 %v8915, %v8930
    %v8932 = vadd.f32 %v8931, 0.112945676
    %v8933 = vmul.f32 %v8915, %v8932
    %v8934 = vadd.f32 %v8933, 0.4994258
    %v8935 = vmul.f32 %v8915, %v8934
    %v8936 = vadd.f32 %v8935, 1.0
    %v8937 = vrcp.pop %v8936
    %v8938 = vmul.f32 %v8936, %v8937
    %v8939 = vsub.f32 1.0, %v8938
    %v8940 = vmul.f32 %v8937, %v8939
    %v8941 = vadd.f32 %v8937, %v8940
    %vm8942 = vweird.f32 %v8936
    %vm8943 = vweird.f32 %v8937
    %vm8944 = vmor %vm8942, %vm8943
    %v8945 = vsel %vm8944, %v8937, %v8941
    %v8946 = vand.u32 2147483647, %v8936
    %vm8947 = vcmp.eq.f32.partialorder %v8946, 8.507059e+37
    %v8948 = vand.u32 %v8936, 2147483648
    %v8949 = vor.u32 1.1754944e-38, %v8948
    %v8950 = vsel %vm8947, %v8949, %v8945
    %v8951 = vmul.f32 %v8926, %v8950
    %v8952 = vmin.f32 %v8951, 1.0
    %v8953 = vmax.f32 %v8952, -1.0
    %v8954 = vmul.f32 %v8872, %v8872
    %v8955 = vmin.f32 16.0, %v8954
    %v8956 = vmul.f32 %v8955, 2.1237322e-06
    %v8957 = vadd.f32 %v8956, 0.00028619796
    %v8958 = vmul.f32 %v8955, %v8957
    %v8959 = vadd.f32 %v8958, 0.0036580483
    %v8960 = vmul.f32 %v8955, %v8959
    %v8961 = vadd.f32 %v8960, 0.05243302
    %v8962 = vmul.f32 %v8955, %v8961
    %v8963 = vadd.f32 %v8962, 0.18741608
    %v8964 = vmul.f32 %v8955, %v8963
    %v8965 = vadd.f32 %v8964, 1.1283791
    %v8966 = vmul.f32 %v8872, %v8965
    %v8967 = vmul.f32 %v8955, 3.8918573e-05
    %v8968 = vadd.f32 %v8967, 0.001143296
    %v8969 = vmul.f32 %v8955, %v8968
    %v8970 = vadd.f32 %v8969, 0.014752088
    %v8971 = vmul.f32 %v8955, %v8970
    %v8972 = vadd.f32 %v8971, 0.112945676
    %v8973 = vmul.f32 %v8955, %v8972
    %v8974 = vadd.f32 %v8973, 0.4994258
    %v8975 = vmul.f32 %v8955, %v8974
    %v8976 = vadd.f32 %v8975, 1.0
    %v8977 = vrcp.pop %v8976
    %v8978 = vmul.f32 %v8976, %v8977
    %v8979 = vsub.f32 1.0, %v8978
    %v8980 = vmul.f32 %v8977, %v8979
    %v8981 = vadd.f32 %v8977, %v8980
    %vm8982 = vweird.f32 %v8976
    %vm8983 = vweird.f32 %v8977
    %vm8984 = vmor %vm8982, %vm8983
    %v8985 = vsel %vm8984, %v8977, %v8981
    %v8986 = vand.u32 2147483647, %v8976
    %vm8987 = vcmp.eq.f32.partialorder %v8986, 8.507059e+37
    %v8988 = vand.u32 %v8976, 2147483648
    %v8989 = vor.u32 1.1754944e-38, %v8988
    %v8990 = vsel %vm8987, %v8989, %v8985
    %v8991 = vmul.f32 %v8966, %v8990
    %v8992 = vmin.f32 %v8991, 1.0
    %v8993 = vmax.f32 %v8992, -1.0
    %v8994 = vmul.f32 %v8873, %v8873
    %v8995 = vmin.f32 16.0, %v8994
    %v8996 = vmul.f32 %v8995, 2.1237322e-06
    %v8997 = vadd.f32 %v8996, 0.00028619796
    %v8998 = vmul.f32 %v8995, %v8997
    %v8999 = vadd.f32 %v8998, 0.0036580483
    %v9000 = vmul.f32 %v8995, %v8999
    %v9001 = vadd.f32 %v9000, 0.05243302
    %v9002 = vmul.f32 %v8995, %v9001
    %v9003 = vadd.f32 %v9002, 0.18741608
    %v9004 = vmul.f32 %v8995, %v9003
    %v9005 = vadd.f32 %v9004, 1.1283791
    %v9006 = vmul.f32 %v8873, %v9005
    %v9007 = vmul.f32 %v8995, 3.8918573e-05
    %v9008 = vadd.f32 %v9007, 0.001143296
    %v9009 = vmul.f32 %v8995, %v9008
    %v9010 = vadd.f32 %v9009, 0.014752088
    %v9011 = vmul.f32 %v8995, %v9010
    %v9012 = vadd.f32 %v9011, 0.112945676
    %v9013 = vmul.f32 %v8995, %v9012
    %v9014 = vadd.f32 %v9013, 0.4994258
    %v9015 = vmul.f32 %v8995, %v9014
    %v9016 = vadd.f32 %v9015, 1.0
    %v9017 = vrcp.pop %v9016
    %v9018 = vmul.f32 %v9016, %v9017
    %v9019 = vsub.f32 1.0, %v9018
    %v9020 = vmul.f32 %v9017, %v9019
    %v9021 = vadd.f32 %v9017, %v9020
    %vm9022 = vweird.f32 %v9016
    %vm9023 = vweird.f32 %v9017
    %vm9024 = vmor %vm9022, %vm9023
    %v9025 = vsel %vm9024, %v9017, %v9021
    %v9026 = vand.u32 2147483647, %v9016
    %vm9027 = vcmp.eq.f32.partialorder %v9026, 8.507059e+37
    %v9028 = vand.u32 %v9016, 2147483648
    %v9029 = vor.u32 1.1754944e-38, %v9028
    %v9030 = vsel %vm9027, %v9029, %v9025
    %v9031 = vmul.f32 %v9006, %v9030
    %v9032 = vmin.f32 %v9031, 1.0
    %v9033 = vmax.f32 %v9032, -1.0
    %v9034 = vadd.f32 %v8913, 1.0
    %v9035 = vadd.f32 %v8953, 1.0
    %v9036 = vadd.f32 %v8993, 1.0
    %v9037 = vadd.f32 %v9033, 1.0
    %v9038 = vmul.f32 %v8866, %v9034
    %v9039 = vmul.f32 %v8867, %v9035
    %v9040 = vmul.f32 %v8868, %v9036
    %v9041 = vmul.f32 %v8869, %v9037
    %v9042 = vld [vmem:[#allocation2 + $0x12d0] sm:$0xf]
    %v9043 = vld [vmem:[#allocation2 + $0x12d8] sm:$0xf]
    %v9044 = vld [vmem:[#allocation2 + $0x12e0] sm:$0xf]
    %v9045 = vld [vmem:[#allocation2 + $0x12e8] sm:$0xf]
    %v9046 = vld [vmem:[#allocation2 + $0x12f0] sm:$0xf]
    %v9047 = vld [vmem:[#allocation2 + $0x12f8] sm:$0xf]
    %v9048 = vld [vmem:[#allocation2 + $0x1300] sm:$0xf]
    %v9049 = vld [vmem:[#allocation2 + $0x1308] sm:$0xf]
    %v9050 = vld [vmem:[#allocation2 + $0x1310] sm:$0xf]
    %v9051 = vld [vmem:[#allocation2 + $0x1318] sm:$0xf]
    %v9052 = vld [vmem:[#allocation2 + $0x1320] sm:$0xf]
    %v9053 = vld [vmem:[#allocation2 + $0x1328] sm:$0xf]
    %v9054 = vld [vmem:[#allocation2 + $0x1330] sm:$0xf]
    %v9055 = vld [vmem:[#allocation2 + $0x1338] sm:$0xf]
    %v9056 = vld [vmem:[#allocation2 + $0x1340] sm:$0xf]
    %v9057 = vld [vmem:[#allocation2 + $0x1348] sm:$0xf]
    %v9058 = vld [vmem:[#allocation2 + $0x1350] sm:$0xf]
    %v9059 = vld [vmem:[#allocation2 + $0x1358] sm:$0xf]
    %v9060 = vld [vmem:[#allocation2 + $0x1360] sm:$0xf]
    %v9061 = vld [vmem:[#allocation2 + $0x1368] sm:$0xf]
    %v9062 = vld [vmem:[#allocation2 + $0x1370] sm:$0xf]
    %v9063 = vld [vmem:[#allocation2 + $0x1378] sm:$0xf]
    %v9064 = vld [vmem:[#allocation2 + $0x1380] sm:$0xf]
    %v9065 = vld [vmem:[#allocation2 + $0x1388] sm:$0xf]
    %v9066 = vld [vmem:[#allocation2 + $0x1390] sm:$0xf]
    %v9067 = vld [vmem:[#allocation2 + $0x1398] sm:$0xf]
    %v9068 = vld [vmem:[#allocation2 + $0x13a0] sm:$0xf]
    %v9069 = vld [vmem:[#allocation2 + $0x13a8] sm:$0xf]
    %v9070 = vld [vmem:[#allocation2 + $0x13b0] sm:$0xf]
    %v9071 = vld [vmem:[#allocation2 + $0x13b8] sm:$0xf]
    %v9072 = vld [vmem:[#allocation2 + $0x13c0] sm:$0xf]
    %v9073 = vld [vmem:[#allocation2 + $0x13c8] sm:$0xf]
    %v9074 = vld [vmem:[#allocation4 + $0x41] ss:$0 sm:$0xff]
    %v9107 = vunpack.c.l.b16 %v9042
    %v9108 = vunpack.c.l.b16 %v9043
    %v9109 = vunpack.c.l.b16 %v9044
    %v9110 = vunpack.c.l.b16 %v9045
    %v9111 = vunpack.c.l.b16 %v9046
    %v9112 = vunpack.c.l.b16 %v9047
    %v9113 = vunpack.c.l.b16 %v9048
    %v9114 = vunpack.c.l.b16 %v9049
    %v9115 = vunpack.c.l.b16 %v9050
    %v9116 = vunpack.c.l.b16 %v9051
    %v9117 = vunpack.c.l.b16 %v9052
    %v9118 = vunpack.c.l.b16 %v9053
    %v9119 = vunpack.c.l.b16 %v9054
    %v9120 = vunpack.c.l.b16 %v9055
    %v9121 = vunpack.c.l.b16 %v9056
    %v9122 = vunpack.c.l.b16 %v9057
    %v9123 = vunpack.c.l.b16 %v9058
    %v9124 = vunpack.c.l.b16 %v9059
    %v9125 = vunpack.c.l.b16 %v9060
    %v9126 = vunpack.c.l.b16 %v9061
    %v9127 = vunpack.c.l.b16 %v9062
    %v9128 = vunpack.c.l.b16 %v9063
    %v9129 = vunpack.c.l.b16 %v9064
    %v9130 = vunpack.c.l.b16 %v9065
    %v9131 = vunpack.c.l.b16 %v9066
    %v9132 = vunpack.c.l.b16 %v9067
    %v9133 = vunpack.c.l.b16 %v9068
    %v9134 = vunpack.c.l.b16 %v9069
    %v9135 = vunpack.c.l.b16 %v9070
    %v9136 = vunpack.c.l.b16 %v9071
    %v9137 = vunpack.c.l.b16 %v9072
    %v9138 = vunpack.c.l.b16 %v9073
    %v9139 = vpack.c.b16 %v9108, %v9107
    %v9140 = vpack.c.b16 %v9110, %v9109
    %v9141 = vpack.c.b16 %v9112, %v9111
    %v9142 = vpack.c.b16 %v9114, %v9113
    %v9143 = vpack.c.b16 %v9116, %v9115
    %v9144 = vpack.c.b16 %v9118, %v9117
    %v9145 = vpack.c.b16 %v9120, %v9119
    %v9146 = vpack.c.b16 %v9122, %v9121
    %v9147 = vpack.c.b16 %v9124, %v9123
    %v9148 = vpack.c.b16 %v9126, %v9125
    %v9149 = vpack.c.b16 %v9128, %v9127
    %v9150 = vpack.c.b16 %v9130, %v9129
    %v9151 = vpack.c.b16 %v9132, %v9131
    %v9152 = vpack.c.b16 %v9134, %v9133
    %v9153 = vpack.c.b16 %v9136, %v9135
    %v9154 = vpack.c.b16 %v9138, %v9137
    %9171 = vmatpush.bf16.msra.mxu0 %v9146
    %9172 = vmatpush.bf16.msra.mxu0 %v9145
    %9173 = vmatpush.bf16.msra.mxu0 %v9144
    %9174 = vmatpush.bf16.msra.mxu0 %v9143
    %9175 = vmatpush.bf16.msra.mxu0 %v9142
    %9176 = vmatpush.bf16.msra.mxu0 %v9141
    %9177 = vmatpush.bf16.msra.mxu0 %v9140
    %9178 = vmatpush.bf16.msra.mxu0 %v9139
    %9179 = vmatmul.bf16.gmra.mxu0 %v7761
    %v9180 = vpop.f32.mrf.mxu0
    %v9181 = vadd.f32 %v9074, %v9180
    %v9182 = vpop.f32.mrf.mxu0
    %v9183 = vadd.f32 %v9074, %v9182
    %9184 = vmatmul.bf16.gmra.mxu0 %v7763
    %v9185 = vpop.f32.mrf.mxu0
    %v9186 = vadd.f32 %v9074, %v9185
    %v9187 = vpop.f32.mrf.mxu0
    %v9188 = vadd.f32 %v9074, %v9187
    %9189 = vdwg.mxu0
    %9190 = vmatpush.bf16.msra.mxu0 %v9154
    %9191 = vmatpush.bf16.msra.mxu0 %v9153
    %9192 = vmatpush.bf16.msra.mxu0 %v9152
    %9193 = vmatpush.bf16.msra.mxu0 %v9151
    %9194 = vmatpush.bf16.msra.mxu0 %v9150
    %9195 = vmatpush.bf16.msra.mxu0 %v9149
    %9196 = vmatpush.bf16.msra.mxu0 %v9148
    %9197 = vmatpush.bf16.msra.mxu0 %v9147
    %9198 = vmatmul.bf16.gmra.mxu0 %v7762
    %v9199 = vpop.f32.mrf.mxu0
    %v9200 = vadd.f32 %v9181, %v9199
    %v9201 = vpop.f32.mrf.mxu0
    %v9202 = vadd.f32 %v9183, %v9201
    %9203 = vmatmul.bf16.gmra.mxu0 %v7764
    %v9204 = vpop.f32.mrf.mxu0
    %v9205 = vadd.f32 %v9186, %v9204
    %v9206 = vpop.f32.mrf.mxu0
    %v9207 = vadd.f32 %v9188, %v9206
    %9208 = vdwg.mxu0
    %v9209 = vadd.f32 %v9038, %v9200
    %v9210 = vadd.f32 %v9039, %v9202
    %v9211 = vadd.f32 %v9040, %v9205
    %v9212 = vadd.f32 %v9041, %v9207
    %v9213 = vrot.slane %v9209, 7
    %v9214 = vrot.slane %v9210, 7
    %v9215 = vrot.slane %v9211, 7
    %v9216 = vrot.slane %v9212, 7
    %v9217 = vsel %vm1058, %v9215, %v9216
    %v9218 = vsel %vm1058, %v9214, %v9215
    %v9219 = vsel %vm1058, %v9213, %v9214
    %v9220 = vsel %vm1058, %v9216, %v9213
    %v9221 = vsel %vm1067, 0.0, %v9220
    %v9222 = vsel %vm1068, 0.0, %v9219
    %v9223 = vsel %vm1069, 0.0, %v9218
    %v9224 = vsel %vm1070, 0.0, %v9217
    %v9225 = vrot.slane %v9209, 1
    %v9226 = vrot.slane %v9210, 1
    %v9227 = vrot.slane %v9211, 1
    %v9228 = vrot.slane %v9212, 1
    %v9229 = vsel %vm1083, %v9227, %v9228
    %v9230 = vsel %vm1083, %v9226, %v9227
    %v9231 = vsel %vm1083, %v9225, %v9226
    %v9232 = vsel %vm1083, %v9228, %v9225
    %v9233 = vsel %vm1092, 0.0, %v9231
    %v9234 = vsel %vm1093, 0.0, %v9230
    %v9235 = vsel %vm1094, 0.0, %v9229
    %v9236 = vsel %vm1095, 0.0, %v9232
    %v9237 = vpack.c.bf16 %v9222, %v9221
    %v9238 = vpack.c.bf16 %v9224, %v9223
    %v9239 = vld [vmem:[#allocation2 + $0x13d0] sm:$0xf]
    %v9240 = vld [vmem:[#allocation2 + $0x13d8] sm:$0xf]
    %v9241 = vld [vmem:[#allocation2 + $0x13e0] sm:$0xf]
    %v9242 = vld [vmem:[#allocation2 + $0x13e8] sm:$0xf]
    %v9243 = vld [vmem:[#allocation2 + $0x13f0] sm:$0xf]
    %v9244 = vld [vmem:[#allocation2 + $0x13f8] sm:$0xf]
    %v9245 = vld [vmem:[#allocation2 + $0x1400] sm:$0xf]
    %v9246 = vld [vmem:[#allocation2 + $0x1408] sm:$0xf]
    %v9247 = vld [vmem:[#allocation2 + $0x1410] sm:$0xf]
    %v9248 = vld [vmem:[#allocation2 + $0x1418] sm:$0xf]
    %v9249 = vld [vmem:[#allocation2 + $0x1420] sm:$0xf]
    %v9250 = vld [vmem:[#allocation2 + $0x1428] sm:$0xf]
    %v9251 = vld [vmem:[#allocation2 + $0x1430] sm:$0xf]
    %v9252 = vld [vmem:[#allocation2 + $0x1438] sm:$0xf]
    %v9253 = vld [vmem:[#allocation2 + $0x1440] sm:$0xf]
    %v9254 = vld [vmem:[#allocation2 + $0x1448] sm:$0xf]
    %v9255 = vpack.c.bf16 %v9210, %v9209
    %v9256 = vpack.c.bf16 %v9212, %v9211
    %v9257 = vld [vmem:[#allocation2 + $0x1450] sm:$0xf]
    %v9258 = vld [vmem:[#allocation2 + $0x1458] sm:$0xf]
    %v9259 = vld [vmem:[#allocation2 + $0x1460] sm:$0xf]
    %v9260 = vld [vmem:[#allocation2 + $0x1468] sm:$0xf]
    %v9261 = vld [vmem:[#allocation2 + $0x1470] sm:$0xf]
    %v9262 = vld [vmem:[#allocation2 + $0x1478] sm:$0xf]
    %v9263 = vld [vmem:[#allocation2 + $0x1480] sm:$0xf]
    %v9264 = vld [vmem:[#allocation2 + $0x1488] sm:$0xf]
    %v9265 = vld [vmem:[#allocation2 + $0x1490] sm:$0xf]
    %v9266 = vld [vmem:[#allocation2 + $0x1498] sm:$0xf]
    %v9267 = vld [vmem:[#allocation2 + $0x14a0] sm:$0xf]
    %v9268 = vld [vmem:[#allocation2 + $0x14a8] sm:$0xf]
    %v9269 = vld [vmem:[#allocation2 + $0x14b0] sm:$0xf]
    %v9270 = vld [vmem:[#allocation2 + $0x14b8] sm:$0xf]
    %v9271 = vld [vmem:[#allocation2 + $0x14c0] sm:$0xf]
    %v9272 = vld [vmem:[#allocation2 + $0x14c8] sm:$0xf]
    %v9289 = vunpack.c.l.b16 %v9257
    %v9290 = vunpack.c.l.b16 %v9258
    %v9291 = vunpack.c.l.b16 %v9259
    %v9292 = vunpack.c.l.b16 %v9260
    %v9293 = vunpack.c.l.b16 %v9261
    %v9294 = vunpack.c.l.b16 %v9262
    %v9295 = vunpack.c.l.b16 %v9263
    %v9296 = vunpack.c.l.b16 %v9264
    %v9297 = vunpack.c.l.b16 %v9265
    %v9298 = vunpack.c.l.b16 %v9266
    %v9299 = vunpack.c.l.b16 %v9267
    %v9300 = vunpack.c.l.b16 %v9268
    %v9301 = vunpack.c.l.b16 %v9269
    %v9302 = vunpack.c.l.b16 %v9270
    %v9303 = vunpack.c.l.b16 %v9271
    %v9304 = vunpack.c.l.b16 %v9272
    %v9305 = vpack.c.b16 %v9290, %v9289
    %v9306 = vpack.c.b16 %v9292, %v9291
    %v9307 = vpack.c.b16 %v9294, %v9293
    %v9308 = vpack.c.b16 %v9296, %v9295
    %v9309 = vpack.c.b16 %v9298, %v9297
    %v9310 = vpack.c.b16 %v9300, %v9299
    %v9311 = vpack.c.b16 %v9302, %v9301
    %v9312 = vpack.c.b16 %v9304, %v9303
    %9321 = vmatpush.bf16.msra.mxu0 %v9312
    %9322 = vmatpush.bf16.msra.mxu0 %v9311
    %9323 = vmatpush.bf16.msra.mxu0 %v9310
    %9324 = vmatpush.bf16.msra.mxu0 %v9309
    %9325 = vmatpush.bf16.msra.mxu0 %v9308
    %9326 = vmatpush.bf16.msra.mxu0 %v9307
    %9327 = vmatpush.bf16.msra.mxu0 %v9306
    %9328 = vmatpush.bf16.msra.mxu0 %v9305
    %9329 = vmatmul.bf16.gmra.mxu0 %v9255
    %v9330 = vpop.f32.mrf.mxu0
    %v9331 = vadd.f32 0.0, %v9330
    %v9332 = vpop.f32.mrf.mxu0
    %v9333 = vadd.f32 0.0, %v9332
    %9334 = vmatmul.bf16.gmra.mxu0 %v9256
    %v9335 = vpop.f32.mrf.mxu0
    %v9336 = vadd.f32 0.0, %v9335
    %v9337 = vpop.f32.mrf.mxu0
    %v9338 = vadd.f32 0.0, %v9337
    %9339 = vdwg.mxu0
    %v9356 = vunpack.c.l.b16 %v9239
    %v9357 = vunpack.c.l.b16 %v9240
    %v9358 = vunpack.c.l.b16 %v9241
    %v9359 = vunpack.c.l.b16 %v9242
    %v9360 = vunpack.c.l.b16 %v9243
    %v9361 = vunpack.c.l.b16 %v9244
    %v9362 = vunpack.c.l.b16 %v9245
    %v9363 = vunpack.c.l.b16 %v9246
    %v9364 = vunpack.c.l.b16 %v9247
    %v9365 = vunpack.c.l.b16 %v9248
    %v9366 = vunpack.c.l.b16 %v9249
    %v9367 = vunpack.c.l.b16 %v9250
    %v9368 = vunpack.c.l.b16 %v9251
    %v9369 = vunpack.c.l.b16 %v9252
    %v9370 = vunpack.c.l.b16 %v9253
    %v9371 = vunpack.c.l.b16 %v9254
    %v9372 = vpack.c.b16 %v9357, %v9356
    %v9373 = vpack.c.b16 %v9359, %v9358
    %v9374 = vpack.c.b16 %v9361, %v9360
    %v9375 = vpack.c.b16 %v9363, %v9362
    %v9376 = vpack.c.b16 %v9365, %v9364
    %v9377 = vpack.c.b16 %v9367, %v9366
    %v9378 = vpack.c.b16 %v9369, %v9368
    %v9379 = vpack.c.b16 %v9371, %v9370
    %9388 = vmatpush.bf16.msra.mxu0 %v9379
    %9389 = vmatpush.bf16.msra.mxu0 %v9378
    %9390 = vmatpush.bf16.msra.mxu0 %v9377
    %9391 = vmatpush.bf16.msra.mxu0 %v9376
    %9392 = vmatpush.bf16.msra.mxu0 %v9375
    %9393 = vmatpush.bf16.msra.mxu0 %v9374
    %9394 = vmatpush.bf16.msra.mxu0 %v9373
    %9395 = vmatpush.bf16.msra.mxu0 %v9372
    %9396 = vmatmul.bf16.gmra.mxu0 %v9237
    %v9397 = vpop.f32.mrf.mxu0
    %v9398 = vadd.f32 %v9331, %v9397
    %v9399 = vpop.f32.mrf.mxu0
    %v9400 = vadd.f32 %v9333, %v9399
    %9401 = vmatmul.bf16.gmra.mxu0 %v9238
    %v9402 = vpop.f32.mrf.mxu0
    %v9403 = vadd.f32 %v9336, %v9402
    %v9404 = vpop.f32.mrf.mxu0
    %v9405 = vadd.f32 %v9338, %v9404
    %9406 = vdwg.mxu0
    %v9407 = vpack.c.bf16 %v9234, %v9233
    %v9408 = vpack.c.bf16 %v9236, %v9235
    %v9409 = vld [vmem:[#allocation2 + $0x14d0] sm:$0xf]
    %v9410 = vld [vmem:[#allocation2 + $0x14d8] sm:$0xf]
    %v9411 = vld [vmem:[#allocation2 + $0x14e0] sm:$0xf]
    %v9412 = vld [vmem:[#allocation2 + $0x14e8] sm:$0xf]
    %v9413 = vld [vmem:[#allocation2 + $0x14f0] sm:$0xf]
    %v9414 = vld [vmem:[#allocation2 + $0x14f8] sm:$0xf]
    %v9415 = vld [vmem:[#allocation2 + $0x1500] sm:$0xf]
    %v9416 = vld [vmem:[#allocation2 + $0x1508] sm:$0xf]
    %v9417 = vld [vmem:[#allocation2 + $0x1510] sm:$0xf]
    %v9418 = vld [vmem:[#allocation2 + $0x1518] sm:$0xf]
    %v9419 = vld [vmem:[#allocation2 + $0x1520] sm:$0xf]
    %v9420 = vld [vmem:[#allocation2 + $0x1528] sm:$0xf]
    %v9421 = vld [vmem:[#allocation2 + $0x1530] sm:$0xf]
    %v9422 = vld [vmem:[#allocation2 + $0x1538] sm:$0xf]
    %v9423 = vld [vmem:[#allocation2 + $0x1540] sm:$0xf]
    %v9424 = vld [vmem:[#allocation2 + $0x1548] sm:$0xf]
    %v9441 = vunpack.c.l.b16 %v9409
    %v9442 = vunpack.c.l.b16 %v9410
    %v9443 = vunpack.c.l.b16 %v9411
    %v9444 = vunpack.c.l.b16 %v9412
    %v9445 = vunpack.c.l.b16 %v9413
    %v9446 = vunpack.c.l.b16 %v9414
    %v9447 = vunpack.c.l.b16 %v9415
    %v9448 = vunpack.c.l.b16 %v9416
    %v9449 = vunpack.c.l.b16 %v9417
    %v9450 = vunpack.c.l.b16 %v9418
    %v9451 = vunpack.c.l.b16 %v9419
    %v9452 = vunpack.c.l.b16 %v9420
    %v9453 = vunpack.c.l.b16 %v9421
    %v9454 = vunpack.c.l.b16 %v9422
    %v9455 = vunpack.c.l.b16 %v9423
    %v9456 = vunpack.c.l.b16 %v9424
    %v9457 = vpack.c.b16 %v9442, %v9441
    %v9458 = vpack.c.b16 %v9444, %v9443
    %v9459 = vpack.c.b16 %v9446, %v9445
    %v9460 = vpack.c.b16 %v9448, %v9447
    %v9461 = vpack.c.b16 %v9450, %v9449
    %v9462 = vpack.c.b16 %v9452, %v9451
    %v9463 = vpack.c.b16 %v9454, %v9453
    %v9464 = vpack.c.b16 %v9456, %v9455
    %9473 = vmatpush.bf16.msra.mxu0 %v9464
    %9474 = vmatpush.bf16.msra.mxu0 %v9463
    %9475 = vmatpush.bf16.msra.mxu0 %v9462
    %9476 = vmatpush.bf16.msra.mxu0 %v9461
    %9477 = vmatpush.bf16.msra.mxu0 %v9460
    %9478 = vmatpush.bf16.msra.mxu0 %v9459
    %9479 = vmatpush.bf16.msra.mxu0 %v9458
    %9480 = vmatpush.bf16.msra.mxu0 %v9457
    %9481 = vmatmul.bf16.gmra.mxu0 %v9407
    %v9482 = vpop.f32.mrf.mxu0
    %v9483 = vadd.f32 0.0, %v9482
    %v9484 = vpop.f32.mrf.mxu0
    %v9485 = vadd.f32 0.0, %v9484
    %9486 = vmatmul.bf16.gmra.mxu0 %v9408
    %v9487 = vpop.f32.mrf.mxu0
    %v9488 = vadd.f32 0.0, %v9487
    %v9489 = vpop.f32.mrf.mxu0
    %v9490 = vadd.f32 0.0, %v9489
    %9491 = vdwg.mxu0
    %v9492 = vadd.f32 %v9398, %v9483
    %v9493 = vadd.f32 %v9400, %v9485
    %v9494 = vadd.f32 %v9403, %v9488
    %v9495 = vadd.f32 %v9405, %v9490
    %v9496 = vld [vmem:[#allocation4 + $0x42] ss:$0 sm:$0xff]
    %v9497 = vadd.f32 %v9492, %v9496
    %v9498 = vadd.f32 %v9493, %v9496
    %v9499 = vadd.f32 %v9494, %v9496
    %v9500 = vadd.f32 %v9495, %v9496
    %v9501 = vsel %vm1272, %v9497, 0.0
    %v9502 = vsel %vm1272, %v9498, 0.0
    %v9503 = vadd.f32 %v9501, %v9502
    %v9504 = vsel %vm1272, %v9499, 0.0
    %v9505 = vadd.f32 %v9503, %v9504
    %v9506 = vsel %vm1272, %v9500, 0.0
    %v9507 = vadd.f32 %v9505, %v9506
    %v9508 = vrot.slane %v9507, 4
    %v9509 = vadd.f32 %v9507, %v9508
    %v9510 = vrot.slane %v9509, 2
    %v9511 = vadd.f32 %v9509, %v9510
    %v9512 = vrot.slane %v9511, 1
    %v9513 = vadd.f32 %v9511, %v9512
    %v9514 = vmul.f32 %v9513, %v1430
    %v9515 = vmul.f32 %v9497, %v9497
    %v9516 = vmul.f32 %v9498, %v9498
    %v9517 = vmul.f32 %v9499, %v9499
    %v9518 = vmul.f32 %v9500, %v9500
    %v9519 = vsel %vm1272, %v9515, 0.0
    %v9520 = vsel %vm1272, %v9516, 0.0
    %v9521 = vadd.f32 %v9519, %v9520
    %v9522 = vsel %vm1272, %v9517, 0.0
    %v9523 = vadd.f32 %v9521, %v9522
    %v9524 = vsel %vm1272, %v9518, 0.0
    %v9525 = vadd.f32 %v9523, %v9524
    %v9526 = vrot.slane %v9525, 4
    %v9527 = vadd.f32 %v9525, %v9526
    %v9528 = vrot.slane %v9527, 2
    %v9529 = vadd.f32 %v9527, %v9528
    %v9530 = vrot.slane %v9529, 1
    %v9531 = vadd.f32 %v9529, %v9530
    %v9532 = vmul.f32 %v9531, %v1430
    %v9533 = vmul.f32 %v9514, %v9514
    %v9534 = vsub.f32 %v9532, %v9533
    %v9535 = vmax.f32 %v9534, 0.0
    %v9536 = vld [vmem:[#allocation4 + $0x43] ss:$0 sm:$0xff]
    %v9537 = vadd.f32 %v9535, 1e-05
    %v9538 = vrsqrt.pop %v9537
    %v9539 = vmul.f32 %v9538, %v9537
    %v9540 = vmul.f32 %v9539, %v9538
    %v9541 = vmul.f32 0.5, %v9540
    %v9542 = vsub.f32 1.5, %v9541
    %v9543 = vmul.f32 %v9538, %v9542
    %vm9544 = vweird.f32 %v9537
    %vm9545 = vweird.f32 %v9538
    %vm9546 = vmor %vm9544, %vm9545
    %v9547 = vsel %vm9546, %v9538, %v9543
    %v9548 = vmul.f32 %v9536, %v9547
    %v9549 = vld [vmem:[#allocation4 + $0x44] ss:$0 sm:$0xff]
    %v9550 = vmul.f32 %v9514, %v9548
    %v9551 = vsub.f32 %v9549, %v9550
    %v9552 = vmul.f32 %v9497, %v9548
    %v9553 = vmul.f32 %v9498, %v9548
    %v9554 = vmul.f32 %v9499, %v9548
    %v9555 = vmul.f32 %v9500, %v9548
    %v9556 = vadd.f32 %v9552, %v9551
    %v9557 = vadd.f32 %v9553, %v9551
    %v9558 = vadd.f32 %v9554, %v9551
    %v9559 = vadd.f32 %v9555, %v9551
    %v9560 = vmul.f32 %v9556, 0.5
    %v9561 = vmul.f32 %v9557, 0.5
    %v9562 = vmul.f32 %v9558, 0.5
    %v9563 = vmul.f32 %v9559, 0.5
    %v9564 = vmul.f32 %v9556, 0.70710677
    %v9565 = vmul.f32 %v9557, 0.70710677
    %v9566 = vmul.f32 %v9558, 0.70710677
    %v9567 = vmul.f32 %v9559, 0.70710677
    %v9568 = vmul.f32 %v9564, %v9564
    %v9569 = vmin.f32 16.0, %v9568
    %v9570 = vmul.f32 %v9569, 2.1237322e-06
    %v9571 = vadd.f32 %v9570, 0.00028619796
    %v9572 = vmul.f32 %v9569, %v9571
    %v9573 = vadd.f32 %v9572, 0.0036580483
    %v9574 = vmul.f32 %v9569, %v9573
    %v9575 = vadd.f32 %v9574, 0.05243302
    %v9576 = vmul.f32 %v9569, %v9575
    %v9577 = vadd.f32 %v9576, 0.18741608
    %v9578 = vmul.f32 %v9569, %v9577
    %v9579 = vadd.f32 %v9578, 1.1283791
    %v9580 = vmul.f32 %v9564, %v9579
    %v9581 = vmul.f32 %v9569, 3.8918573e-05
    %v9582 = vadd.f32 %v9581, 0.001143296
    %v9583 = vmul.f32 %v9569, %v9582
    %v9584 = vadd.f32 %v9583, 0.014752088
    %v9585 = vmul.f32 %v9569, %v9584
    %v9586 = vadd.f32 %v9585, 0.112945676
    %v9587 = vmul.f32 %v9569, %v9586
    %v9588 = vadd.f32 %v9587, 0.4994258
    %v9589 = vmul.f32 %v9569, %v9588
    %v9590 = vadd.f32 %v9589, 1.0
    %v9591 = vrcp.pop %v9590
    %v9592 = vmul.f32 %v9590, %v9591
    %v9593 = vsub.f32 1.0, %v9592
    %v9594 = vmul.f32 %v9591, %v9593
    %v9595 = vadd.f32 %v9591, %v9594
    %vm9596 = vweird.f32 %v9590
    %vm9597 = vweird.f32 %v9591
    %vm9598 = vmor %vm9596, %vm9597
    %v9599 = vsel %vm9598, %v9591, %v9595
    %v9600 = vand.u32 2147483647, %v9590
    %vm9601 = vcmp.eq.f32.partialorder %v9600, 8.507059e+37
    %v9602 = vand.u32 %v9590, 2147483648
    %v9603 = vor.u32 1.1754944e-38, %v9602
    %v9604 = vsel %vm9601, %v9603, %v9599
    %v9605 = vmul.f32 %v9580, %v9604
    %v9606 = vmin.f32 %v9605, 1.0
    %v9607 = vmax.f32 %v9606, -1.0
    %v9608 = vmul.f32 %v9565, %v9565
    %v9609 = vmin.f32 16.0, %v9608
    %v9610 = vmul.f32 %v9609, 2.1237322e-06
    %v9611 = vadd.f32 %v9610, 0.00028619796
    %v9612 = vmul.f32 %v9609, %v9611
    %v9613 = vadd.f32 %v9612, 0.0036580483
    %v9614 = vmul.f32 %v9609, %v9613
    %v9615 = vadd.f32 %v9614, 0.05243302
    %v9616 = vmul.f32 %v9609, %v9615
    %v9617 = vadd.f32 %v9616, 0.18741608
    %v9618 = vmul.f32 %v9609, %v9617
    %v9619 = vadd.f32 %v9618, 1.1283791
    %v9620 = vmul.f32 %v9565, %v9619
    %v9621 = vmul.f32 %v9609, 3.8918573e-05
    %v9622 = vadd.f32 %v9621, 0.001143296
    %v9623 = vmul.f32 %v9609, %v9622
    %v9624 = vadd.f32 %v9623, 0.014752088
    %v9625 = vmul.f32 %v9609, %v9624
    %v9626 = vadd.f32 %v9625, 0.112945676
    %v9627 = vmul.f32 %v9609, %v9626
    %v9628 = vadd.f32 %v9627, 0.4994258
    %v9629 = vmul.f32 %v9609, %v9628
    %v9630 = vadd.f32 %v9629, 1.0
    %v9631 = vrcp.pop %v9630
    %v9632 = vmul.f32 %v9630, %v9631
    %v9633 = vsub.f32 1.0, %v9632
    %v9634 = vmul.f32 %v9631, %v9633
    %v9635 = vadd.f32 %v9631, %v9634
    %vm9636 = vweird.f32 %v9630
    %vm9637 = vweird.f32 %v9631
    %vm9638 = vmor %vm9636, %vm9637
    %v9639 = vsel %vm9638, %v9631, %v9635
    %v9640 = vand.u32 2147483647, %v9630
    %vm9641 = vcmp.eq.f32.partialorder %v9640, 8.507059e+37
    %v9642 = vand.u32 %v9630, 2147483648
    %v9643 = vor.u32 1.1754944e-38, %v9642
    %v9644 = vsel %vm9641, %v9643, %v9639
    %v9645 = vmul.f32 %v9620, %v9644
    %v9646 = vmin.f32 %v9645, 1.0
    %v9647 = vmax.f32 %v9646, -1.0
    %v9648 = vmul.f32 %v9566, %v9566
    %v9649 = vmin.f32 16.0, %v9648
    %v9650 = vmul.f32 %v9649, 2.1237322e-06
    %v9651 = vadd.f32 %v9650, 0.00028619796
    %v9652 = vmul.f32 %v9649, %v9651
    %v9653 = vadd.f32 %v9652, 0.0036580483
    %v9654 = vmul.f32 %v9649, %v9653
    %v9655 = vadd.f32 %v9654, 0.05243302
    %v9656 = vmul.f32 %v9649, %v9655
    %v9657 = vadd.f32 %v9656, 0.18741608
    %v9658 = vmul.f32 %v9649, %v9657
    %v9659 = vadd.f32 %v9658, 1.1283791
    %v9660 = vmul.f32 %v9566, %v9659
    %v9661 = vmul.f32 %v9649, 3.8918573e-05
    %v9662 = vadd.f32 %v9661, 0.001143296
    %v9663 = vmul.f32 %v9649, %v9662
    %v9664 = vadd.f32 %v9663, 0.014752088
    %v9665 = vmul.f32 %v9649, %v9664
    %v9666 = vadd.f32 %v9665, 0.112945676
    %v9667 = vmul.f32 %v9649, %v9666
    %v9668 = vadd.f32 %v9667, 0.4994258
    %v9669 = vmul.f32 %v9649, %v9668
    %v9670 = vadd.f32 %v9669, 1.0
    %v9671 = vrcp.pop %v9670
    %v9672 = vmul.f32 %v9670, %v9671
    %v9673 = vsub.f32 1.0, %v9672
    %v9674 = vmul.f32 %v9671, %v9673
    %v9675 = vadd.f32 %v9671, %v9674
    %vm9676 = vweird.f32 %v9670
    %vm9677 = vweird.f32 %v9671
    %vm9678 = vmor %vm9676, %vm9677
    %v9679 = vsel %vm9678, %v9671, %v9675
    %v9680 = vand.u32 2147483647, %v9670
    %vm9681 = vcmp.eq.f32.partialorder %v9680, 8.507059e+37
    %v9682 = vand.u32 %v9670, 2147483648
    %v9683 = vor.u32 1.1754944e-38, %v9682
    %v9684 = vsel %vm9681, %v9683, %v9679
    %v9685 = vmul.f32 %v9660, %v9684
    %v9686 = vmin.f32 %v9685, 1.0
    %v9687 = vmax.f32 %v9686, -1.0
    %v9688 = vmul.f32 %v9567, %v9567
    %v9689 = vmin.f32 16.0, %v9688
    %v9690 = vmul.f32 %v9689, 2.1237322e-06
    %v9691 = vadd.f32 %v9690, 0.00028619796
    %v9692 = vmul.f32 %v9689, %v9691
    %v9693 = vadd.f32 %v9692, 0.0036580483
    %v9694 = vmul.f32 %v9689, %v9693
    %v9695 = vadd.f32 %v9694, 0.05243302
    %v9696 = vmul.f32 %v9689, %v9695
    %v9697 = vadd.f32 %v9696, 0.18741608
    %v9698 = vmul.f32 %v9689, %v9697
    %v9699 = vadd.f32 %v9698, 1.1283791
    %v9700 = vmul.f32 %v9567, %v9699
    %v9701 = vmul.f32 %v9689, 3.8918573e-05
    %v9702 = vadd.f32 %v9701, 0.001143296
    %v9703 = vmul.f32 %v9689, %v9702
    %v9704 = vadd.f32 %v9703, 0.014752088
    %v9705 = vmul.f32 %v9689, %v9704
    %v9706 = vadd.f32 %v9705, 0.112945676
    %v9707 = vmul.f32 %v9689, %v9706
    %v9708 = vadd.f32 %v9707, 0.4994258
    %v9709 = vmul.f32 %v9689, %v9708
    %v9710 = vadd.f32 %v9709, 1.0
    %v9711 = vrcp.pop %v9710
    %v9712 = vmul.f32 %v9710, %v9711
    %v9713 = vsub.f32 1.0, %v9712
    %v9714 = vmul.f32 %v9711, %v9713
    %v9715 = vadd.f32 %v9711, %v9714
    %vm9716 = vweird.f32 %v9710
    %vm9717 = vweird.f32 %v9711
    %vm9718 = vmor %vm9716, %vm9717
    %v9719 = vsel %vm9718, %v9711, %v9715
    %v9720 = vand.u32 2147483647, %v9710
    %vm9721 = vcmp.eq.f32.partialorder %v9720, 8.507059e+37
    %v9722 = vand.u32 %v9710, 2147483648
    %v9723 = vor.u32 1.1754944e-38, %v9722
    %v9724 = vsel %vm9721, %v9723, %v9719
    %v9725 = vmul.f32 %v9700, %v9724
    %v9726 = vmin.f32 %v9725, 1.0
    %v9727 = vmax.f32 %v9726, -1.0
    %v9728 = vadd.f32 %v9607, 1.0
    %v9729 = vadd.f32 %v9647, 1.0
    %v9730 = vadd.f32 %v9687, 1.0
    %v9731 = vadd.f32 %v9727, 1.0
    %v9732 = vmul.f32 %v9560, %v9728
    %v9733 = vmul.f32 %v9561, %v9729
    %v9734 = vmul.f32 %v9562, %v9730
    %v9735 = vmul.f32 %v9563, %v9731
    %v9736 = vld [vmem:[#allocation4 + $0x45] ss:$0 sm:$0xff]
    %v9737 = vadd.f32 %v1043, %v9736
    %v9738 = vmul.f32 %v9737, 0.5
    %v9739 = vmul.f32 %v9737, 0.70710677
    %v9740 = vmul.f32 %v9739, %v9739
    %v9741 = vmin.f32 16.0, %v9740
    %v9742 = vmul.f32 %v9741, 2.1237322e-06
    %v9743 = vadd.f32 %v9742, 0.00028619796
    %v9744 = vmul.f32 %v9741, %v9743
    %v9745 = vadd.f32 %v9744, 0.0036580483
    %v9746 = vmul.f32 %v9741, %v9745
    %v9747 = vadd.f32 %v9746, 0.05243302
    %v9748 = vmul.f32 %v9741, %v9747
    %v9749 = vadd.f32 %v9748, 0.18741608
    %v9750 = vmul.f32 %v9741, %v9749
    %v9751 = vadd.f32 %v9750, 1.1283791
    %v9752 = vmul.f32 %v9739, %v9751
    %v9753 = vmul.f32 %v9741, 3.8918573e-05
    %v9754 = vadd.f32 %v9753, 0.001143296
    %v9755 = vmul.f32 %v9741, %v9754
    %v9756 = vadd.f32 %v9755, 0.014752088
    %v9757 = vmul.f32 %v9741, %v9756
    %v9758 = vadd.f32 %v9757, 0.112945676
    %v9759 = vmul.f32 %v9741, %v9758
    %v9760 = vadd.f32 %v9759, 0.4994258
    %v9761 = vmul.f32 %v9741, %v9760
    %v9762 = vadd.f32 %v9761, 1.0
    %v9763 = vrcp.pop %v9762
    %v9764 = vmul.f32 %v9762, %v9763
    %v9765 = vsub.f32 1.0, %v9764
    %v9766 = vmul.f32 %v9763, %v9765
    %v9767 = vadd.f32 %v9763, %v9766
    %vm9768 = vweird.f32 %v9762
    %vm9769 = vweird.f32 %v9763
    %vm9770 = vmor %vm9768, %vm9769
    %v9771 = vsel %vm9770, %v9763, %v9767
    %v9772 = vand.u32 2147483647, %v9762
    %vm9773 = vcmp.eq.f32.partialorder %v9772, 8.507059e+37
    %v9774 = vand.u32 %v9762, 2147483648
    %v9775 = vor.u32 1.1754944e-38, %v9774
    %v9776 = vsel %vm9773, %v9775, %v9771
    %v9777 = vmul.f32 %v9752, %v9776
    %v9778 = vmin.f32 %v9777, 1.0
    %v9779 = vmax.f32 %v9778, -1.0
    %v9780 = vadd.f32 %v9779, 1.0
    %v9781 = vmul.f32 %v9738, %v9780
    %v9783 = vrot.slane %v9781, 1
    %v9784 = vperm.slane %v9781, 0
    %v9785 = vperm.slane %v9783, 0
    %v9788 = vadd.f32 %v9732, %v9784
    %v9789 = vadd.f32 %v9733, %v9784
    %v9790 = vadd.f32 %v9734, %v9785
    %v9791 = vadd.f32 %v9735, %v9785
    %v9792 = vrot.slane %v9788, 7
    %v9793 = vrot.slane %v9789, 7
    %v9794 = vrot.slane %v9790, 7
    %v9795 = vrot.slane %v9791, 7
    %v9796 = vsel %vm1058, %v9794, %v9795
    %v9797 = vsel %vm1058, %v9793, %v9794
    %v9798 = vsel %vm1058, %v9792, %v9793
    %v9799 = vsel %vm1058, %v9795, %v9792
    %v9800 = vsel %vm1067, 0.0, %v9799
    %v9801 = vsel %vm1068, 0.0, %v9798
    %v9802 = vsel %vm1069, 0.0, %v9797
    %v9803 = vsel %vm1070, 0.0, %v9796
    %v9804 = vrot.slane %v9788, 1
    %v9805 = vrot.slane %v9789, 1
    %v9806 = vrot.slane %v9790, 1
    %v9807 = vrot.slane %v9791, 1
    %v9808 = vsel %vm1083, %v9806, %v9807
    %v9809 = vsel %vm1083, %v9805, %v9806
    %v9810 = vsel %vm1083, %v9804, %v9805
    %v9811 = vsel %vm1083, %v9807, %v9804
    %v9812 = vsel %vm1092, 0.0, %v9810
    %v9813 = vsel %vm1093, 0.0, %v9809
    %v9814 = vsel %vm1094, 0.0, %v9808
    %v9815 = vsel %vm1095, 0.0, %v9811
    %v9816 = vpack.c.bf16 %v9801, %v9800
    %v9817 = vpack.c.bf16 %v9803, %v9802
    %v9818 = vld [vmem:[#allocation2 + $0x1550] sm:$0xf]
    %v9819 = vld [vmem:[#allocation2 + $0x1558] sm:$0xf]
    %v9820 = vld [vmem:[#allocation2 + $0x1560] sm:$0xf]
    %v9821 = vld [vmem:[#allocation2 + $0x1568] sm:$0xf]
    %v9822 = vld [vmem:[#allocation2 + $0x1570] sm:$0xf]
    %v9823 = vld [vmem:[#allocation2 + $0x1578] sm:$0xf]
    %v9824 = vld [vmem:[#allocation2 + $0x1580] sm:$0xf]
    %v9825 = vld [vmem:[#allocation2 + $0x1588] sm:$0xf]
    %v9826 = vpack.c.bf16 %v9789, %v9788
    %v9827 = vpack.c.bf16 %v9791, %v9790
    %v9828 = vld [vmem:[#allocation2 + $0x1590] sm:$0xf]
    %v9829 = vld [vmem:[#allocation2 + $0x1598] sm:$0xf]
    %v9830 = vld [vmem:[#allocation2 + $0x15a0] sm:$0xf]
    %v9831 = vld [vmem:[#allocation2 + $0x15a8] sm:$0xf]
    %v9832 = vld [vmem:[#allocation2 + $0x15b0] sm:$0xf]
    %v9833 = vld [vmem:[#allocation2 + $0x15b8] sm:$0xf]
    %v9834 = vld [vmem:[#allocation2 + $0x15c0] sm:$0xf]
    %v9835 = vld [vmem:[#allocation2 + $0x15c8] sm:$0xf]
    %v9844 = vunpack.c.l.b16 %v9828
    %v9845 = vunpack.c.l.b16 %v9829
    %v9846 = vunpack.c.l.b16 %v9830
    %v9847 = vunpack.c.l.b16 %v9831
    %v9848 = vunpack.c.l.b16 %v9832
    %v9849 = vunpack.c.l.b16 %v9833
    %v9850 = vunpack.c.l.b16 %v9834
    %v9851 = vunpack.c.l.b16 %v9835
    %v9852 = vpack.c.b16 %v9845, %v9844
    %v9853 = vpack.c.b16 %v9847, %v9846
    %v9854 = vpack.c.b16 %v9849, %v9848
    %v9855 = vpack.c.b16 %v9851, %v9850
    %v9861 = vsel %vm1272, %v9826, 0
    %v9864 = vsel %vm1272, %v9827, 0
    %9866 = vmatpush.bf16.msra.mxu0 0
    %9867 = vmatpush.bf16.msra.mxu0 0
    %9868 = vmatpush.bf16.msra.mxu0 0
    %9869 = vmatpush.bf16.msra.mxu0 0
    %9870 = vmatpush.bf16.msra.mxu0 %v9855
    %9871 = vmatpush.bf16.msra.mxu0 %v9854
    %9872 = vmatpush.bf16.msra.mxu0 %v9853
    %9873 = vmatpush.bf16.msra.mxu0 %v9852
    %9874 = vmatmul.bf16.gmra.mxu0 %v9861
    %v9875 = vpop.f32.mrf.mxu0
    %v9876 = vadd.f32 0.0, %v9875
    %v9877 = vpop.f32.mrf.mxu0
    %v9878 = vadd.f32 0.0, %v9877
    %9879 = vmatmul.bf16.gmra.mxu0 %v9864
    %v9880 = vpop.f32.mrf.mxu0
    %v9881 = vadd.f32 0.0, %v9880
    %v9882 = vpop.f32.mrf.mxu0
    %v9883 = vadd.f32 0.0, %v9882
    %9884 = vdwg.mxu0
    %v9893 = vunpack.c.l.b16 %v9818
    %v9894 = vunpack.c.l.b16 %v9819
    %v9895 = vunpack.c.l.b16 %v9820
    %v9896 = vunpack.c.l.b16 %v9821
    %v9897 = vunpack.c.l.b16 %v9822
    %v9898 = vunpack.c.l.b16 %v9823
    %v9899 = vunpack.c.l.b16 %v9824
    %v9900 = vunpack.c.l.b16 %v9825
    %v9901 = vpack.c.b16 %v9894, %v9893
    %v9902 = vpack.c.b16 %v9896, %v9895
    %v9903 = vpack.c.b16 %v9898, %v9897
    %v9904 = vpack.c.b16 %v9900, %v9899
    %v9910 = vsel %vm1272, %v9816, 0
    %v9913 = vsel %vm1272, %v9817, 0
    %9915 = vmatpush.bf16.msra.mxu0 0
    %9916 = vmatpush.bf16.msra.mxu0 0
    %9917 = vmatpush.bf16.msra.mxu0 0
    %9918 = vmatpush.bf16.msra.mxu0 0
    %9919 = vmatpush.bf16.msra.mxu0 %v9904
    %9920 = vmatpush.bf16.msra.mxu0 %v9903
    %9921 = vmatpush.bf16.msra.mxu0 %v9902
    %9922 = vmatpush.bf16.msra.mxu0 %v9901
    %9923 = vmatmul.bf16.gmra.mxu0 %v9910
    %v9924 = vpop.f32.mrf.mxu0
    %v9925 = vadd.f32 %v9876, %v9924
    %v9926 = vpop.f32.mrf.mxu0
    %v9927 = vadd.f32 %v9878, %v9926
    %9928 = vmatmul.bf16.gmra.mxu0 %v9913
    %v9929 = vpop.f32.mrf.mxu0
    %v9930 = vadd.f32 %v9881, %v9929
    %v9931 = vpop.f32.mrf.mxu0
    %v9932 = vadd.f32 %v9883, %v9931
    %9933 = vdwg.mxu0
    %v9934 = vpack.c.bf16 %v9813, %v9812
    %v9935 = vpack.c.bf16 %v9815, %v9814
    %v9936 = vld [vmem:[#allocation2 + $0x15d0] sm:$0xf]
    %v9937 = vld [vmem:[#allocation2 + $0x15d8] sm:$0xf]
    %v9938 = vld [vmem:[#allocation2 + $0x15e0] sm:$0xf]
    %v9939 = vld [vmem:[#allocation2 + $0x15e8] sm:$0xf]
    %v9940 = vld [vmem:[#allocation2 + $0x15f0] sm:$0xf]
    %v9941 = vld [vmem:[#allocation2 + $0x15f8] sm:$0xf]
    %v9942 = vld [vmem:[#allocation2 + $0x1600] sm:$0xf]
    %v9943 = vld [vmem:[#allocation2 + $0x1608] sm:$0xf]
    %v9952 = vunpack.c.l.b16 %v9936
    %v9953 = vunpack.c.l.b16 %v9937
    %v9954 = vunpack.c.l.b16 %v9938
    %v9955 = vunpack.c.l.b16 %v9939
    %v9956 = vunpack.c.l.b16 %v9940
    %v9957 = vunpack.c.l.b16 %v9941
    %v9958 = vunpack.c.l.b16 %v9942
    %v9959 = vunpack.c.l.b16 %v9943
    %v9960 = vpack.c.b16 %v9953, %v9952
    %v9961 = vpack.c.b16 %v9955, %v9954
    %v9962 = vpack.c.b16 %v9957, %v9956
    %v9963 = vpack.c.b16 %v9959, %v9958
    %v9969 = vsel %vm1272, %v9934, 0
    %v9972 = vsel %vm1272, %v9935, 0
    %9974 = vmatpush.bf16.msra.mxu0 0
    %9975 = vmatpush.bf16.msra.mxu0 0
    %9976 = vmatpush.bf16.msra.mxu0 0
    %9977 = vmatpush.bf16.msra.mxu0 0
    %9978 = vmatpush.bf16.msra.mxu0 %v9963
    %9979 = vmatpush.bf16.msra.mxu0 %v9962
    %9980 = vmatpush.bf16.msra.mxu0 %v9961
    %9981 = vmatpush.bf16.msra.mxu0 %v9960
    %9982 = vmatmul.bf16.gmra.mxu0 %v9969
    %v9983 = vpop.f32.mrf.mxu0
    %v9984 = vadd.f32 0.0, %v9983
    %v9985 = vpop.f32.mrf.mxu0
    %v9986 = vadd.f32 0.0, %v9985
    %9987 = vmatmul.bf16.gmra.mxu0 %v9972
    %v9988 = vpop.f32.mrf.mxu0
    %v9989 = vadd.f32 0.0, %v9988
    %v9990 = vpop.f32.mrf.mxu0
    %v9991 = vadd.f32 0.0, %v9990
    %9992 = vdwg.mxu0
    %v9993 = vadd.f32 %v9925, %v9984
    %v9994 = vadd.f32 %v9927, %v9986
    %v9995 = vadd.f32 %v9930, %v9989
    %v9996 = vadd.f32 %v9932, %v9991
    %v9997 = vld [vmem:[#allocation4 + $0x46] ss:$0 sm:$0xff]
    %v9998 = vadd.f32 %v9993, %v9997
    %v9999 = vadd.f32 %v9994, %v9997
    %v10000 = vadd.f32 %v9995, %v9997
    %v10001 = vadd.f32 %v9996, %v9997
    %v10002 = vsel %vm1272, %v9998, 0.0
    %v10003 = vsel %vm1272, %v9999, 0.0
    %v10004 = vadd.f32 %v10002, %v10003
    %v10005 = vsel %vm1272, %v10000, 0.0
    %v10006 = vadd.f32 %v10004, %v10005
    %v10007 = vsel %vm1272, %v10001, 0.0
    %v10008 = vadd.f32 %v10006, %v10007
    %v10009 = vrot.slane %v10008, 4
    %v10010 = vadd.f32 %v10008, %v10009
    %v10011 = vrot.slane %v10010, 2
    %v10012 = vadd.f32 %v10010, %v10011
    %v10013 = vrot.slane %v10012, 1
    %v10014 = vadd.f32 %v10012, %v10013
    %v10015 = vmul.f32 %v10014, %v1430
    %v10016 = vmul.f32 %v9998, %v9998
    %v10017 = vmul.f32 %v9999, %v9999
    %v10018 = vmul.f32 %v10000, %v10000
    %v10019 = vmul.f32 %v10001, %v10001
    %v10020 = vsel %vm1272, %v10016, 0.0
    %v10021 = vsel %vm1272, %v10017, 0.0
    %v10022 = vadd.f32 %v10020, %v10021
    %v10023 = vsel %vm1272, %v10018, 0.0
    %v10024 = vadd.f32 %v10022, %v10023
    %v10025 = vsel %vm1272, %v10019, 0.0
    %v10026 = vadd.f32 %v10024, %v10025
    %v10027 = vrot.slane %v10026, 4
    %v10028 = vadd.f32 %v10026, %v10027
    %v10029 = vrot.slane %v10028, 2
    %v10030 = vadd.f32 %v10028, %v10029
    %v10031 = vrot.slane %v10030, 1
    %v10032 = vadd.f32 %v10030, %v10031
    %v10033 = vmul.f32 %v10032, %v1430
    %v10034 = vmul.f32 %v10015, %v10015
    %v10035 = vsub.f32 %v10033, %v10034
    %v10036 = vmax.f32 %v10035, 0.0
    %v10037 = vld [vmem:[#allocation4 + $0x47] ss:$0 sm:$0xff]
    %v10038 = vadd.f32 %v10036, 1e-05
    %v10039 = vrsqrt.pop %v10038
    %v10040 = vmul.f32 %v10039, %v10038
    %v10041 = vmul.f32 %v10040, %v10039
    %v10042 = vmul.f32 0.5, %v10041
    %v10043 = vsub.f32 1.5, %v10042
    %v10044 = vmul.f32 %v10039, %v10043
    %vm10045 = vweird.f32 %v10038
    %vm10046 = vweird.f32 %v10039
    %vm10047 = vmor %vm10045, %vm10046
    %v10048 = vsel %vm10047, %v10039, %v10044
    %v10049 = vmul.f32 %v10037, %v10048
    %v10050 = vld [vmem:[#allocation4 + $0x50] ss:$0 sm:$0xff]
    %v10051 = vmul.f32 %v10015, %v10049
    %v10052 = vsub.f32 %v10050, %v10051
    %v10053 = vmul.f32 %v9998, %v10049
    %v10054 = vmul.f32 %v9999, %v10049
    %v10055 = vmul.f32 %v10000, %v10049
    %v10056 = vmul.f32 %v10001, %v10049
    %v10057 = vadd.f32 %v10053, %v10052
    %v10058 = vadd.f32 %v10054, %v10052
    %v10059 = vadd.f32 %v10055, %v10052
    %v10060 = vadd.f32 %v10056, %v10052
    %v10061 = vmul.f32 %v10057, 0.5
    %v10062 = vmul.f32 %v10058, 0.5
    %v10063 = vmul.f32 %v10059, 0.5
    %v10064 = vmul.f32 %v10060, 0.5
    %v10065 = vmul.f32 %v10057, 0.70710677
    %v10066 = vmul.f32 %v10058, 0.70710677
    %v10067 = vmul.f32 %v10059, 0.70710677
    %v10068 = vmul.f32 %v10060, 0.70710677
    %v10069 = vmul.f32 %v10065, %v10065
    %v10070 = vmin.f32 16.0, %v10069
    %v10071 = vmul.f32 %v10070, 2.1237322e-06
    %v10072 = vadd.f32 %v10071, 0.00028619796
    %v10073 = vmul.f32 %v10070, %v10072
    %v10074 = vadd.f32 %v10073, 0.0036580483
    %v10075 = vmul.f32 %v10070, %v10074
    %v10076 = vadd.f32 %v10075, 0.05243302
    %v10077 = vmul.f32 %v10070, %v10076
    %v10078 = vadd.f32 %v10077, 0.18741608
    %v10079 = vmul.f32 %v10070, %v10078
    %v10080 = vadd.f32 %v10079, 1.1283791
    %v10081 = vmul.f32 %v10065, %v10080
    %v10082 = vmul.f32 %v10070, 3.8918573e-05
    %v10083 = vadd.f32 %v10082, 0.001143296
    %v10084 = vmul.f32 %v10070, %v10083
    %v10085 = vadd.f32 %v10084, 0.014752088
    %v10086 = vmul.f32 %v10070, %v10085
    %v10087 = vadd.f32 %v10086, 0.112945676
    %v10088 = vmul.f32 %v10070, %v10087
    %v10089 = vadd.f32 %v10088, 0.4994258
    %v10090 = vmul.f32 %v10070, %v10089
    %v10091 = vadd.f32 %v10090, 1.0
    %v10092 = vrcp.pop %v10091
    %v10093 = vmul.f32 %v10091, %v10092
    %v10094 = vsub.f32 1.0, %v10093
    %v10095 = vmul.f32 %v10092, %v10094
    %v10096 = vadd.f32 %v10092, %v10095
    %vm10097 = vweird.f32 %v10091
    %vm10098 = vweird.f32 %v10092
    %vm10099 = vmor %vm10097, %vm10098
    %v10100 = vsel %vm10099, %v10092, %v10096
    %v10101 = vand.u32 2147483647, %v10091
    %vm10102 = vcmp.eq.f32.partialorder %v10101, 8.507059e+37
    %v10103 = vand.u32 %v10091, 2147483648
    %v10104 = vor.u32 1.1754944e-38, %v10103
    %v10105 = vsel %vm10102, %v10104, %v10100
    %v10106 = vmul.f32 %v10081, %v10105
    %v10107 = vmin.f32 %v10106, 1.0
    %v10108 = vmax.f32 %v10107, -1.0
    %v10109 = vmul.f32 %v10066, %v10066
    %v10110 = vmin.f32 16.0, %v10109
    %v10111 = vmul.f32 %v10110, 2.1237322e-06
    %v10112 = vadd.f32 %v10111, 0.00028619796
    %v10113 = vmul.f32 %v10110, %v10112
    %v10114 = vadd.f32 %v10113, 0.0036580483
    %v10115 = vmul.f32 %v10110, %v10114
    %v10116 = vadd.f32 %v10115, 0.05243302
    %v10117 = vmul.f32 %v10110, %v10116
    %v10118 = vadd.f32 %v10117, 0.18741608
    %v10119 = vmul.f32 %v10110, %v10118
    %v10120 = vadd.f32 %v10119, 1.1283791
    %v10121 = vmul.f32 %v10066, %v10120
    %v10122 = vmul.f32 %v10110, 3.8918573e-05
    %v10123 = vadd.f32 %v10122, 0.001143296
    %v10124 = vmul.f32 %v10110, %v10123
    %v10125 = vadd.f32 %v10124, 0.014752088
    %v10126 = vmul.f32 %v10110, %v10125
    %v10127 = vadd.f32 %v10126, 0.112945676
    %v10128 = vmul.f32 %v10110, %v10127
    %v10129 = vadd.f32 %v10128, 0.4994258
    %v10130 = vmul.f32 %v10110, %v10129
    %v10131 = vadd.f32 %v10130, 1.0
    %v10132 = vrcp.pop %v10131
    %v10133 = vmul.f32 %v10131, %v10132
    %v10134 = vsub.f32 1.0, %v10133
    %v10135 = vmul.f32 %v10132, %v10134
    %v10136 = vadd.f32 %v10132, %v10135
    %vm10137 = vweird.f32 %v10131
    %vm10138 = vweird.f32 %v10132
    %vm10139 = vmor %vm10137, %vm10138
    %v10140 = vsel %vm10139, %v10132, %v10136
    %v10141 = vand.u32 2147483647, %v10131
    %vm10142 = vcmp.eq.f32.partialorder %v10141, 8.507059e+37
    %v10143 = vand.u32 %v10131, 2147483648
    %v10144 = vor.u32 1.1754944e-38, %v10143
    %v10145 = vsel %vm10142, %v10144, %v10140
    %v10146 = vmul.f32 %v10121, %v10145
    %v10147 = vmin.f32 %v10146, 1.0
    %v10148 = vmax.f32 %v10147, -1.0
    %v10149 = vmul.f32 %v10067, %v10067
    %v10150 = vmin.f32 16.0, %v10149
    %v10151 = vmul.f32 %v10150, 2.1237322e-06
    %v10152 = vadd.f32 %v10151, 0.00028619796
    %v10153 = vmul.f32 %v10150, %v10152
    %v10154 = vadd.f32 %v10153, 0.0036580483
    %v10155 = vmul.f32 %v10150, %v10154
    %v10156 = vadd.f32 %v10155, 0.05243302
    %v10157 = vmul.f32 %v10150, %v10156
    %v10158 = vadd.f32 %v10157, 0.18741608
    %v10159 = vmul.f32 %v10150, %v10158
    %v10160 = vadd.f32 %v10159, 1.1283791
    %v10161 = vmul.f32 %v10067, %v10160
    %v10162 = vmul.f32 %v10150, 3.8918573e-05
    %v10163 = vadd.f32 %v10162, 0.001143296
    %v10164 = vmul.f32 %v10150, %v10163
    %v10165 = vadd.f32 %v10164, 0.014752088
    %v10166 = vmul.f32 %v10150, %v10165
    %v10167 = vadd.f32 %v10166, 0.112945676
    %v10168 = vmul.f32 %v10150, %v10167
    %v10169 = vadd.f32 %v10168, 0.4994258
    %v10170 = vmul.f32 %v10150, %v10169
    %v10171 = vadd.f32 %v10170, 1.0
    %v10172 = vrcp.pop %v10171
    %v10173 = vmul.f32 %v10171, %v10172
    %v10174 = vsub.f32 1.0, %v10173
    %v10175 = vmul.f32 %v10172, %v10174
    %v10176 = vadd.f32 %v10172, %v10175
    %vm10177 = vweird.f32 %v10171
    %vm10178 = vweird.f32 %v10172
    %vm10179 = vmor %vm10177, %vm10178
    %v10180 = vsel %vm10179, %v10172, %v10176
    %v10181 = vand.u32 2147483647, %v10171
    %vm10182 = vcmp.eq.f32.partialorder %v10181, 8.507059e+37
    %v10183 = vand.u32 %v10171, 2147483648
    %v10184 = vor.u32 1.1754944e-38, %v10183
    %v10185 = vsel %vm10182, %v10184, %v10180
    %v10186 = vmul.f32 %v10161, %v10185
    %v10187 = vmin.f32 %v10186, 1.0
    %v10188 = vmax.f32 %v10187, -1.0
    %v10189 = vmul.f32 %v10068, %v10068
    %v10190 = vmin.f32 16.0, %v10189
    %v10191 = vmul.f32 %v10190, 2.1237322e-06
    %v10192 = vadd.f32 %v10191, 0.00028619796
    %v10193 = vmul.f32 %v10190, %v10192
    %v10194 = vadd.f32 %v10193, 0.0036580483
    %v10195 = vmul.f32 %v10190, %v10194
    %v10196 = vadd.f32 %v10195, 0.05243302
    %v10197 = vmul.f32 %v10190, %v10196
    %v10198 = vadd.f32 %v10197, 0.18741608
    %v10199 = vmul.f32 %v10190, %v10198
    %v10200 = vadd.f32 %v10199, 1.1283791
    %v10201 = vmul.f32 %v10068, %v10200
    %v10202 = vmul.f32 %v10190, 3.8918573e-05
    %v10203 = vadd.f32 %v10202, 0.001143296
    %v10204 = vmul.f32 %v10190, %v10203
    %v10205 = vadd.f32 %v10204, 0.014752088
    %v10206 = vmul.f32 %v10190, %v10205
    %v10207 = vadd.f32 %v10206, 0.112945676
    %v10208 = vmul.f32 %v10190, %v10207
    %v10209 = vadd.f32 %v10208, 0.4994258
    %v10210 = vmul.f32 %v10190, %v10209
    %v10211 = vadd.f32 %v10210, 1.0
    %v10212 = vrcp.pop %v10211
    %v10213 = vmul.f32 %v10211, %v10212
    %v10214 = vsub.f32 1.0, %v10213
    %v10215 = vmul.f32 %v10212, %v10214
    %v10216 = vadd.f32 %v10212, %v10215
    %vm10217 = vweird.f32 %v10211
    %vm10218 = vweird.f32 %v10212
    %vm10219 = vmor %vm10217, %vm10218
    %v10220 = vsel %vm10219, %v10212, %v10216
    %v10221 = vand.u32 2147483647, %v10211
    %vm10222 = vcmp.eq.f32.partialorder %v10221, 8.507059e+37
    %v10223 = vand.u32 %v10211, 2147483648
    %v10224 = vor.u32 1.1754944e-38, %v10223
    %v10225 = vsel %vm10222, %v10224, %v10220
    %v10226 = vmul.f32 %v10201, %v10225
    %v10227 = vmin.f32 %v10226, 1.0
    %v10228 = vmax.f32 %v10227, -1.0
    %v10229 = vadd.f32 %v10108, 1.0
    %v10230 = vadd.f32 %v10148, 1.0
    %v10231 = vadd.f32 %v10188, 1.0
    %v10232 = vadd.f32 %v10228, 1.0
    %v10233 = vmul.f32 %v10061, %v10229
    %v10234 = vmul.f32 %v10062, %v10230
    %v10235 = vmul.f32 %v10063, %v10231
    %v10236 = vmul.f32 %v10064, %v10232
    %v10237 = vld [vmem:[#allocation2 + $0x1610] sm:$0xf]
    %v10238 = vld [vmem:[#allocation2 + $0x1618] sm:$0xf]
    %v10239 = vld [vmem:[#allocation2 + $0x1620] sm:$0xf]
    %v10240 = vld [vmem:[#allocation2 + $0x1628] sm:$0xf]
    %v10241 = vld [vmem:[#allocation2 + $0x1630] sm:$0xf]
    %v10242 = vld [vmem:[#allocation2 + $0x1638] sm:$0xf]
    %v10243 = vld [vmem:[#allocation2 + $0x1640] sm:$0xf]
    %v10244 = vld [vmem:[#allocation2 + $0x1648] sm:$0xf]
    %v10245 = vld [vmem:[#allocation2 + $0x1650] sm:$0xf]
    %v10246 = vld [vmem:[#allocation2 + $0x1658] sm:$0xf]
    %v10247 = vld [vmem:[#allocation2 + $0x1660] sm:$0xf]
    %v10248 = vld [vmem:[#allocation2 + $0x1668] sm:$0xf]
    %v10249 = vld [vmem:[#allocation2 + $0x1670] sm:$0xf]
    %v10250 = vld [vmem:[#allocation2 + $0x1678] sm:$0xf]
    %v10251 = vld [vmem:[#allocation2 + $0x1680] sm:$0xf]
    %v10252 = vld [vmem:[#allocation2 + $0x1688] sm:$0xf]
    %v10253 = vld [vmem:[#allocation4 + $0x51] ss:$0 sm:$0xff]
    %v10270 = vunpack.c.l.b16 %v10237
    %v10271 = vunpack.c.l.b16 %v10238
    %v10272 = vunpack.c.l.b16 %v10239
    %v10273 = vunpack.c.l.b16 %v10240
    %v10274 = vunpack.c.l.b16 %v10241
    %v10275 = vunpack.c.l.b16 %v10242
    %v10276 = vunpack.c.l.b16 %v10243
    %v10277 = vunpack.c.l.b16 %v10244
    %v10278 = vunpack.c.l.b16 %v10245
    %v10279 = vunpack.c.l.b16 %v10246
    %v10280 = vunpack.c.l.b16 %v10247
    %v10281 = vunpack.c.l.b16 %v10248
    %v10282 = vunpack.c.l.b16 %v10249
    %v10283 = vunpack.c.l.b16 %v10250
    %v10284 = vunpack.c.l.b16 %v10251
    %v10285 = vunpack.c.l.b16 %v10252
    %v10286 = vpack.c.b16 %v10271, %v10270
    %v10287 = vpack.c.b16 %v10273, %v10272
    %v10288 = vpack.c.b16 %v10275, %v10274
    %v10289 = vpack.c.b16 %v10277, %v10276
    %v10290 = vpack.c.b16 %v10279, %v10278
    %v10291 = vpack.c.b16 %v10281, %v10280
    %v10292 = vpack.c.b16 %v10283, %v10282
    %v10293 = vpack.c.b16 %v10285, %v10284
    %10302 = vmatpush.bf16.msra.mxu0 %v10293
    %10303 = vmatpush.bf16.msra.mxu0 %v10292
    %10304 = vmatpush.bf16.msra.mxu0 %v10291
    %10305 = vmatpush.bf16.msra.mxu0 %v10290
    %10306 = vmatpush.bf16.msra.mxu0 %v10289
    %10307 = vmatpush.bf16.msra.mxu0 %v10288
    %10308 = vmatpush.bf16.msra.mxu0 %v10287
    %10309 = vmatpush.bf16.msra.mxu0 %v10286
    %10310 = vmatmul.bf16.gmra.mxu0 %v9255
    %v10311 = vpop.f32.mrf.mxu0
    %v10312 = vadd.f32 %v10253, %v10311
    %v10313 = vpop.f32.mrf.mxu0
    %v10314 = vadd.f32 %v10253, %v10313
    %10315 = vmatmul.bf16.gmra.mxu0 %v9256
    %v10316 = vpop.f32.mrf.mxu0
    %v10317 = vadd.f32 %v10253, %v10316
    %v10318 = vpop.f32.mrf.mxu0
    %v10319 = vadd.f32 %v10253, %v10318
    %10320 = vdwg.mxu0
    %v10321 = vadd.f32 %v10233, %v10312
    %v10322 = vadd.f32 %v10234, %v10314
    %v10323 = vadd.f32 %v10235, %v10317
    %v10324 = vadd.f32 %v10236, %v10319
    %v10325 = vrot.slane %v10321, 7
    %v10326 = vrot.slane %v10322, 7
    %v10327 = vrot.slane %v10323, 7
    %v10328 = vrot.slane %v10324, 7
    %v10329 = vsel %vm1058, %v10327, %v10328
    %v10330 = vsel %vm1058, %v10326, %v10327
    %v10331 = vsel %vm1058, %v10325, %v10326
    %v10332 = vsel %vm1058, %v10328, %v10325
    %v10333 = vsel %vm1067, 0.0, %v10332
    %v10334 = vsel %vm1068, 0.0, %v10331
    %v10335 = vsel %vm1069, 0.0, %v10330
    %v10336 = vsel %vm1070, 0.0, %v10329
    %v10337 = vrot.slane %v10321, 1
    %v10338 = vrot.slane %v10322, 1
    %v10339 = vrot.slane %v10323, 1
    %v10340 = vrot.slane %v10324, 1
    %v10341 = vsel %vm1083, %v10339, %v10340
    %v10342 = vsel %vm1083, %v10338, %v10339
    %v10343 = vsel %vm1083, %v10337, %v10338
    %v10344 = vsel %vm1083, %v10340, %v10337
    %v10345 = vsel %vm1092, 0.0, %v10343
    %v10346 = vsel %vm1093, 0.0, %v10342
    %v10347 = vsel %vm1094, 0.0, %v10341
    %v10348 = vsel %vm1095, 0.0, %v10344
    %v10349 = vpack.c.bf16 %v10334, %v10333
    %v10350 = vpack.c.bf16 %v10336, %v10335
    %v10351 = vld [vmem:[#allocation2 + $0x1690] sm:$0xf]
    %v10352 = vld [vmem:[#allocation2 + $0x1698] sm:$0xf]
    %v10353 = vld [vmem:[#allocation2 + $0x16a0] sm:$0xf]
    %v10354 = vld [vmem:[#allocation2 + $0x16a8] sm:$0xf]
    %v10355 = vld [vmem:[#allocation2 + $0x16b0] sm:$0xf]
    %v10356 = vld [vmem:[#allocation2 + $0x16b8] sm:$0xf]
    %v10357 = vld [vmem:[#allocation2 + $0x16c0] sm:$0xf]
    %v10358 = vld [vmem:[#allocation2 + $0x16c8] sm:$0xf]
    %v10359 = vpack.c.bf16 %v10322, %v10321
    %v10360 = vpack.c.bf16 %v10324, %v10323
    %v10361 = vld [vmem:[#allocation2 + $0x16d0] sm:$0xf]
    %v10362 = vld [vmem:[#allocation2 + $0x16d8] sm:$0xf]
    %v10363 = vld [vmem:[#allocation2 + $0x16e0] sm:$0xf]
    %v10364 = vld [vmem:[#allocation2 + $0x16e8] sm:$0xf]
    %v10365 = vld [vmem:[#allocation2 + $0x16f0] sm:$0xf]
    %v10366 = vld [vmem:[#allocation2 + $0x16f8] sm:$0xf]
    %v10367 = vld [vmem:[#allocation2 + $0x1700] sm:$0xf]
    %v10368 = vld [vmem:[#allocation2 + $0x1708] sm:$0xf]
    %v10377 = vunpack.c.l.b16 %v10361
    %v10378 = vunpack.c.l.b16 %v10362
    %v10379 = vunpack.c.l.b16 %v10363
    %v10380 = vunpack.c.l.b16 %v10364
    %v10381 = vunpack.c.l.b16 %v10365
    %v10382 = vunpack.c.l.b16 %v10366
    %v10383 = vunpack.c.l.b16 %v10367
    %v10384 = vunpack.c.l.b16 %v10368
    %v10385 = vpack.c.b16 %v10378, %v10377
    %v10386 = vpack.c.b16 %v10380, %v10379
    %v10387 = vpack.c.b16 %v10382, %v10381
    %v10388 = vpack.c.b16 %v10384, %v10383
    %v10394 = vsel %vm1272, %v10359, 0
    %v10397 = vsel %vm1272, %v10360, 0
    %10399 = vmatpush.bf16.msra.mxu0 0
    %10400 = vmatpush.bf16.msra.mxu0 0
    %10401 = vmatpush.bf16.msra.mxu0 0
    %10402 = vmatpush.bf16.msra.mxu0 0
    %10403 = vmatpush.bf16.msra.mxu0 %v10388
    %10404 = vmatpush.bf16.msra.mxu0 %v10387
    %10405 = vmatpush.bf16.msra.mxu0 %v10386
    %10406 = vmatpush.bf16.msra.mxu0 %v10385
    %10407 = vmatmul.bf16.gmra.mxu0 %v10394
    %v10408 = vpop.f32.mrf.mxu0
    %v10409 = vadd.f32 0.0, %v10408
    %v10410 = vpop.f32.mrf.mxu0
    %v10411 = vadd.f32 0.0, %v10410
    %10412 = vmatmul.bf16.gmra.mxu0 %v10397
    %v10413 = vpop.f32.mrf.mxu0
    %v10414 = vadd.f32 0.0, %v10413
    %v10415 = vpop.f32.mrf.mxu0
    %v10416 = vadd.f32 0.0, %v10415
    %10417 = vdwg.mxu0
    %v10426 = vunpack.c.l.b16 %v10351
    %v10427 = vunpack.c.l.b16 %v10352
    %v10428 = vunpack.c.l.b16 %v10353
    %v10429 = vunpack.c.l.b16 %v10354
    %v10430 = vunpack.c.l.b16 %v10355
    %v10431 = vunpack.c.l.b16 %v10356
    %v10432 = vunpack.c.l.b16 %v10357
    %v10433 = vunpack.c.l.b16 %v10358
    %v10434 = vpack.c.b16 %v10427, %v10426
    %v10435 = vpack.c.b16 %v10429, %v10428
    %v10436 = vpack.c.b16 %v10431, %v10430
    %v10437 = vpack.c.b16 %v10433, %v10432
    %v10443 = vsel %vm1272, %v10349, 0
    %v10446 = vsel %vm1272, %v10350, 0
    %10448 = vmatpush.bf16.msra.mxu0 0
    %10449 = vmatpush.bf16.msra.mxu0 0
    %10450 = vmatpush.bf16.msra.mxu0 0
    %10451 = vmatpush.bf16.msra.mxu0 0
    %10452 = vmatpush.bf16.msra.mxu0 %v10437
    %10453 = vmatpush.bf16.msra.mxu0 %v10436
    %10454 = vmatpush.bf16.msra.mxu0 %v10435
    %10455 = vmatpush.bf16.msra.mxu0 %v10434
    %10456 = vmatmul.bf16.gmra.mxu0 %v10443
    %v10457 = vpop.f32.mrf.mxu0
    %v10458 = vadd.f32 %v10409, %v10457
    %v10459 = vpop.f32.mrf.mxu0
    %v10460 = vadd.f32 %v10411, %v10459
    %10461 = vmatmul.bf16.gmra.mxu0 %v10446
    %v10462 = vpop.f32.mrf.mxu0
    %v10463 = vadd.f32 %v10414, %v10462
    %v10464 = vpop.f32.mrf.mxu0
    %v10465 = vadd.f32 %v10416, %v10464
    %10466 = vdwg.mxu0
    %v10467 = vpack.c.bf16 %v10346, %v10345
    %v10468 = vpack.c.bf16 %v10348, %v10347
    %v10469 = vld [vmem:[#allocation2 + $0x1710] sm:$0xf]
    %v10470 = vld [vmem:[#allocation2 + $0x1718] sm:$0xf]
    %v10471 = vld [vmem:[#allocation2 + $0x1720] sm:$0xf]
    %v10472 = vld [vmem:[#allocation2 + $0x1728] sm:$0xf]
    %v10473 = vld [vmem:[#allocation2 + $0x1730] sm:$0xf]
    %v10474 = vld [vmem:[#allocation2 + $0x1738] sm:$0xf]
    %v10475 = vld [vmem:[#allocation2 + $0x1740] sm:$0xf]
    %v10476 = vld [vmem:[#allocation2 + $0x1748] sm:$0xf]
    %v10485 = vunpack.c.l.b16 %v10469
    %v10486 = vunpack.c.l.b16 %v10470
    %v10487 = vunpack.c.l.b16 %v10471
    %v10488 = vunpack.c.l.b16 %v10472
    %v10489 = vunpack.c.l.b16 %v10473
    %v10490 = vunpack.c.l.b16 %v10474
    %v10491 = vunpack.c.l.b16 %v10475
    %v10492 = vunpack.c.l.b16 %v10476
    %v10493 = vpack.c.b16 %v10486, %v10485
    %v10494 = vpack.c.b16 %v10488, %v10487
    %v10495 = vpack.c.b16 %v10490, %v10489
    %v10496 = vpack.c.b16 %v10492, %v10491
    %v10502 = vsel %vm1272, %v10467, 0
    %v10505 = vsel %vm1272, %v10468, 0
    %10507 = vmatpush.bf16.msra.mxu0 0
    %10508 = vmatpush.bf16.msra.mxu0 0
    %10509 = vmatpush.bf16.msra.mxu0 0
    %10510 = vmatpush.bf16.msra.mxu0 0
    %10511 = vmatpush.bf16.msra.mxu0 %v10496
    %10512 = vmatpush.bf16.msra.mxu0 %v10495
    %10513 = vmatpush.bf16.msra.mxu0 %v10494
    %10514 = vmatpush.bf16.msra.mxu0 %v10493
    %10515 = vmatmul.bf16.gmra.mxu0 %v10502
    %v10516 = vpop.f32.mrf.mxu0
    %v10517 = vadd.f32 0.0, %v10516
    %v10518 = vpop.f32.mrf.mxu0
    %v10519 = vadd.f32 0.0, %v10518
    %10520 = vmatmul.bf16.gmra.mxu0 %v10505
    %v10521 = vpop.f32.mrf.mxu0
    %v10522 = vadd.f32 0.0, %v10521
    %v10523 = vpop.f32.mrf.mxu0
    %v10524 = vadd.f32 0.0, %v10523
    %10525 = vdwg.mxu0
    %v10526 = vadd.f32 %v10458, %v10517
    %v10527 = vadd.f32 %v10460, %v10519
    %v10528 = vadd.f32 %v10463, %v10522
    %v10529 = vadd.f32 %v10465, %v10524
    %v10530 = vld [vmem:[#allocation4 + $0x52] ss:$0 sm:$0xff]
    %v10531 = vadd.f32 %v10526, %v10530
    %v10532 = vadd.f32 %v10527, %v10530
    %v10533 = vadd.f32 %v10528, %v10530
    %v10534 = vadd.f32 %v10529, %v10530
    %10535 = vst.msk [vmem:[%s5] sm:$0xff] %vm1106, %v10531
    %10536 = vst.msk [vmem:[%s5 + $0x8] sm:$0xff] %vm1106, %v10532
    %10537 = vst.msk [vmem:[%s5 + $0x10] sm:$0xff] %vm1106, %v10533
    %10538 = vst.msk [vmem:[%s5 + $0x18] sm:$0xff] %vm1106, %v10534
    // Predicated region
    $region30: #{diffusion_forward.1} parent=1 // pred_check
      _
    $region31: #{diffusion_forward.1} parent=1 // pred_check_branch
      %10540 = sbr.rel (0) target = $region33
    $region32: #{diffusion_forward.1} parent=1 // pred_region
      _
    $region33: #{diffusion_forward.1} parent=1 // pred_fallthru
      _
    // Predicated region
    $region34: #{diffusion_forward.1} parent=1 // pred_check
      _
    $region35: #{diffusion_forward.1} parent=1 // pred_check_branch
      %10542 = sbr.rel (0) target = $region37
    $region36: #{diffusion_forward.1} parent=1 // pred_region
      _
    $region37: #{diffusion_forward.1} parent=1 // pred_fallthru
      _
    %10543 = vsyncpa [#allocation3], 1
    %10544 = vsyncpa [#allocation5], 1

</llo_original>
